<compile_context>
chip_gen: v7x
topology: tpu7x:2x2x1
jax: 0.10.0
libtpu: 0.0.40
codegen_flags: <defaults>
</compile_context>

<pallas_src>
import math
import jax
import jax.numpy as jnp
from jax.experimental import pallas as pl
from jax.experimental.pallas import tpu as pltpu

_BN_EPS = 1e-5
_HIGHEST = jax.lax.Precision.HIGHEST


def _fold_bn(bn):
    gamma, beta, mean, var = bn
    scale = gamma / jnp.sqrt(var + _BN_EPS)
    shift = beta - mean * scale
    return scale, shift


# ---------------------------------------------------------------------------
# Fused bottleneck forward (single pallas_call per image)
# ---------------------------------------------------------------------------
def bottleneck_forward(x_nchw, params):
    N, Cin, H, W = x_nchw.shape
    w1 = params["conv1_w"]                    # (planes, inplanes, 1, 1)
    P = w1.shape[0]                           # planes
    w3 = params["conv3_w"]                    # (planes*4, planes, 1, 1)
    Cout = w3.shape[0]
    assert Cin == Cout, "identity residual requires inplanes == planes*expansion"

    # Sublane-aligned padded row pitch (review: align kh*Wpad tap offsets).
    Wpad = ((W + 2 + 7) // 8) * 8             # e.g. 24 for W=16
    HpT = H + 3                               # 1 top pad + H rows + 2 bottom pad rows
    L = H * Wpad                              # flat output "j-grid" length
    Lx = HpT * Wpad                           # flat padded-input length (covers all taps)
    assert Lx >= L + 2 * Wpad + 2

    # --- fold BN scale into weights, keep only the shift for the kernel -----
    s1, b1 = _fold_bn(params["bn1"])
    s2, b2 = _fold_bn(params["bn2"])
    s3, b3 = _fold_bn(params["bn3"])

    w1m = (jnp.transpose(w1[:, :, 0, 0], (1, 0)) * s1[None, :]).astype(jnp.float32)
    # (kh, kw, cin, cout) -> (9*cin, cout): row k*P + cin matches im2col column k*P + cin.
    w2m = (jnp.transpose(params["conv2_w"], (2, 3, 1, 0)).reshape(9 * P, P)
           * s2[None, :]).astype(jnp.float32)
    w3m = (jnp.transpose(w3[:, :, 0, 0], (1, 0)) * s3[None, :]).astype(jnp.float32)
    b1v = b1.reshape(1, P).astype(jnp.float32)
    b2v = b2.reshape(1, P).astype(jnp.float32)
    b3v = b3.reshape(1, Cout).astype(jnp.float32)

    # --- host-side layout prep (fuses under jit with the entry transpose) ---
    x_nhwc = jnp.transpose(x_nchw, (0, 2, 3, 1))                         # (N,H,W,Cin)
    xp = jnp.pad(x_nhwc, ((0, 0), (1, 2), (1, Wpad - W - 1), (0, 0)))    # (N,HpT,Wpad,Cin)
    xp = xp.reshape(N, Lx, Cin).astype(jnp.float32)

    # interior mask: 1 for real pixels of the padded grid, 0 on borders/extra rows
    j = jnp.arange(Lx, dtype=jnp.int32)
    row, col = j // Wpad, j % Wpad
    interior = (row >= 1) & (row <= H) & (col >= 1) & (col <= W)
    mask = interior.astype(jnp.float32).reshape(Lx, 1)

    # --- fused kernel --------------------------------------------------------
    def kernel(xp_ref, mask_ref,
               w1_ref, b1_ref, w2_ref, b2_ref, w3_ref, b3_ref,
               o_ref, t1s_ref):
        # conv1 (1x1) + folded BN + ReLU over the whole padded grid; the mask
        # restores exact zeros on the padding ring so conv2's zero-padding
        # semantics hold.
        t1 = jnp.dot(xp_ref[0], w1_ref[...],
                     preferred_element_type=jnp.float32, precision=_HIGHEST)
        t1s_ref[...] = jnp.maximum(t1 + b1_ref[...], 0.0) * mask_ref[...]

        # conv2 (3x3, pad=1) as ONE im2col matmul (K = 9*P): the 9 taps are
        # statically-shifted VMEM slices of the conv1 scratch.
        cols = [t1s_ref[kh * Wpad + kw: kh * Wpad + kw + L, :]
                for kh in range(3) for kw in range(3)]
        im2col = jnp.concatenate(cols, axis=1)                      # (L, 9*P)
        t2 = jnp.dot(im2col, w2_ref[...],
                     preferred_element_type=jnp.float32, precision=_HIGHEST)
        t2 = jnp.maximum(t2 + b2_ref[...], 0.0)

        # conv3 (1x1) + folded BN + identity residual (re-sliced from the
        # already-loaded padded input: res[j] == xp[j + Wpad + 1]) + ReLU.
        y = jnp.dot(t2, w3_ref[...],
                    preferred_element_type=jnp.float32, precision=_HIGHEST)
        res = xp_ref[0, Wpad + 1: Wpad + 1 + L, :]
        o_ref[0] = jnp.maximum(y + b3_ref[...] + res, 0.0).astype(o_ref.dtype)

    out_flat = pl.pallas_call(
        kernel,
        out_shape=jax.ShapeDtypeStruct((N, L, Cout), jnp.float32),
        grid_spec=pltpu.PrefetchScalarGridSpec(
            num_scalar_prefetch=0,
            grid=(N,),
            in_specs=[
                pl.BlockSpec((1, Lx, Cin), lambda n: (n, 0, 0)),   # padded input
                pl.BlockSpec((Lx, 1), lambda n: (0, 0)),           # interior mask
                pl.BlockSpec((Cin, P), lambda n: (0, 0)),          # w1 (scale-folded)
                pl.BlockSpec((1, P), lambda n: (0, 0)),            # bn1 shift
                pl.BlockSpec((9 * P, P), lambda n: (0, 0)),        # w2 im2col matrix
                pl.BlockSpec((1, P), lambda n: (0, 0)),            # bn2 shift
                pl.BlockSpec((P, Cout), lambda n: (0, 0)),         # w3
                pl.BlockSpec((1, Cout), lambda n: (0, 0)),         # bn3 shift
            ],
            out_specs=pl.BlockSpec((1, L, Cout), lambda n: (n, 0, 0)),
            scratch_shapes=[pltpu.VMEM((Lx, P), jnp.float32)],
        ),
        compiler_params=pltpu.CompilerParams(dimension_semantics=("parallel",)),
    )(xp, mask, w1m, b1v, w2m, b2v, w3m, b3v)

    # drop the Wpad-padding columns (fuses with the exit transpose) -> NCHW
    out = out_flat.reshape(N, H, Wpad, Cout)[:, :, :W, :]
    return jnp.transpose(out, (0, 3, 1, 2))


# ---------------------------------------------------------------------------
# Pure-JAX f32 reference (truth)
# ---------------------------------------------------------------------------
def bottleneck_reference(x, params):
    def conv(x, w, pad=0):
        return jax.lax.conv_general_dilated(
            x, w, (1, 1), [(pad, pad), (pad, pad)],
            dimension_numbers=("NCHW", "OIHW", "NCHW"),
            precision=_HIGHEST)

    def bn(x, p):
        g, b, m, v = p
        g, b, m, v = (t[None, :, None, None] for t in (g, b, m, v))
        return (x - m) / jnp.sqrt(v + _BN_EPS) * g + b

    out = jax.nn.relu(bn(conv(x, params["conv1_w"]), params["bn1"]))
    out = jax.nn.relu(bn(conv(out, params["conv2_w"], pad=1), params["bn2"]))
    out = bn(conv(out, params["conv3_w"]), params["bn3"])
    return jax.nn.relu(out + x)


# ---------------------------------------------------------------------------
# Deterministic parameter construction
# ---------------------------------------------------------------------------
def make_params(key, inplanes, planes):
    expansion = 4
    ks = jax.random.split(key, 9)

    def conv_w(k, cout, cin, kh, kw):
        fan_in = cin * kh * kw
        return jax.random.normal(k, (cout, cin, kh, kw), jnp.float32) * math.sqrt(2.0 / fan_in)

    def bn_p(k, c):
        k1, k2, k3 = jax.random.split(k, 3)
        gamma = 0.5 + jax.random.uniform(k1, (c,), jnp.float32)
        beta = 0.1 * jax.random.normal(k2, (c,), jnp.float32)
        mean = 0.1 * jax.random.normal(k3, (c,), jnp.float32)
        var = 0.5 + jax.random.uniform(jax.random.fold_in(k, 7), (c,), jnp.float32)
        return (gamma, beta, mean, var)

    return {
        "conv1_w": conv_w(ks[0], planes, inplanes, 1, 1),
        "bn1": bn_p(ks[1], planes),
        "conv2_w": conv_w(ks[2], planes, planes, 3, 3),
        "bn2": bn_p(ks[3], planes),
        "conv3_w": conv_w(ks[4], planes * expansion, planes, 1, 1),
        "bn3": bn_p(ks[5], planes * expansion),
    }


if __name__ == "__main__":
    key = jax.random.PRNGKey(0)
    k_x, k_p = jax.random.split(key)

    # Identity bottleneck: inplanes == planes * expansion so residual adds cleanly.
    N, planes, H, W = 2, 8, 16, 16
    inplanes = planes * 4
    x = jax.random.normal(k_x, (N, inplanes, H, W), jnp.float32)
    params = make_params(k_p, inplanes, planes)

    fwd = jax.jit(bottleneck_forward)
    out = jax.block_until_ready(fwd(x, params))
    ref = jax.block_until_ready(bottleneck_reference(x, params))

    assert out.shape == (N, planes * 4, H, W), out.shape
    assert bool(jnp.all(jnp.isfinite(out)))
    max_err = float(jnp.max(jnp.abs(out - ref)))
    # f32 activations/weights, HIGHEST-precision matmuls -> tight tolerance.
    assert jnp.allclose(out, ref, rtol=2e-3, atol=2e-3), max_err
    print("KERNEL_OK")
</pallas_src>

<mosaic_0001>
module attributes {stable_mosaic.version = 11 : i64} {
  func.func @kernel(%arg0: i32, %arg1: memref<1x456x32xf32, #tpu.memory_space<vmem>>, %arg2: memref<456x1xf32, #tpu.memory_space<vmem>>, %arg3: memref<32x8xf32, #tpu.memory_space<vmem>>, %arg4: memref<1x8xf32, #tpu.memory_space<vmem>>, %arg5: memref<72x8xf32, #tpu.memory_space<vmem>>, %arg6: memref<1x8xf32, #tpu.memory_space<vmem>>, %arg7: memref<8x32xf32, #tpu.memory_space<vmem>>, %arg8: memref<1x32xf32, #tpu.memory_space<vmem>>, %arg9: memref<1x384x32xf32, #tpu.memory_space<vmem>>, %arg10: memref<456x8xf32, #tpu.memory_space<vmem>>) attributes {dimension_semantics = [#tpu.dimension_semantics<parallel>], iteration_bounds = array<i64: 2>, scalar_prefetch = 0 : i64, scratch_operands = 1 : i64, tpu.core_type = #tpu.core_type<tc>, window_params = [{transform_indices = @transform_0, window_bounds = array<i64: 1, 456, 32>}, {pipeline_mode = #tpu.pipeline_mode<synchronous>, transform_indices = @transform_1, window_bounds = array<i64: 456, 1>}, {pipeline_mode = #tpu.pipeline_mode<synchronous>, transform_indices = @transform_2, window_bounds = array<i64: 32, 8>}, {pipeline_mode = #tpu.pipeline_mode<synchronous>, transform_indices = @transform_3, window_bounds = array<i64: 1, 8>}, {pipeline_mode = #tpu.pipeline_mode<synchronous>, transform_indices = @transform_4, window_bounds = array<i64: 72, 8>}, {pipeline_mode = #tpu.pipeline_mode<synchronous>, transform_indices = @transform_5, window_bounds = array<i64: 1, 8>}, {pipeline_mode = #tpu.pipeline_mode<synchronous>, transform_indices = @transform_6, window_bounds = array<i64: 8, 32>}, {pipeline_mode = #tpu.pipeline_mode<synchronous>, transform_indices = @transform_7, window_bounds = array<i64: 1, 32>}, {transform_indices = @transform_8, window_bounds = array<i64: 1, 384, 32>}]} {
    %c0 = arith.constant 0 : index
    %c0_0 = arith.constant 0 : index
    %c0_1 = arith.constant 0 : index
    %0 = vector.load %arg1[%c0, %c0_0, %c0_1] : memref<1x456x32xf32, #tpu.memory_space<vmem>>, vector<1x456x32xf32>
    %1 = vector.shape_cast %0 : vector<1x456x32xf32> to vector<456x32xf32>
    %c0_2 = arith.constant 0 : index
    %c0_3 = arith.constant 0 : index
    %2 = vector.load %arg3[%c0_2, %c0_3] : memref<32x8xf32, #tpu.memory_space<vmem>>, vector<32x8xf32>
    %cst = arith.constant dense<0.000000e+00> : vector<456x8xf32>
    %3 = tpu.matmul %1, %2, %cst {dimension_numbers = #tpu.dot_dimension_numbers<[1], [0], [0], [1], [0, 0, 1, 1], [], []>, precision = #tpu.contract_precision<fp32>} : vector<456x32xf32>, vector<32x8xf32>, vector<456x8xf32> -> vector<456x8xf32>
    %c0_4 = arith.constant 0 : index
    %c0_5 = arith.constant 0 : index
    %4 = vector.load %arg4[%c0_4, %c0_5] : memref<1x8xf32, #tpu.memory_space<vmem>>, vector<1x8xf32>
    %5 = vector.broadcast %4 : vector<1x8xf32> to vector<456x8xf32>
    %6 = arith.addf %3, %5 : vector<456x8xf32>
    %cst_6 = arith.constant 0.000000e+00 : f32
    %7 = vector.broadcast %cst_6 : f32 to vector<456x8xf32>
    %8 = arith.maximumf %6, %7 : vector<456x8xf32>
    %c0_7 = arith.constant 0 : index
    %c0_8 = arith.constant 0 : index
    %9 = vector.load %arg2[%c0_7, %c0_8] : memref<456x1xf32, #tpu.memory_space<vmem>>, vector<456x1xf32>
    %10 = vector.broadcast %9 : vector<456x1xf32> to vector<456x8xf32>
    %11 = arith.mulf %8, %10 : vector<456x8xf32>
    %c0_9 = arith.constant 0 : index
    %c0_10 = arith.constant 0 : index
    %12 = vector.load %arg10[%c0_9, %c0_10] : memref<456x8xf32, #tpu.memory_space<vmem>>, vector<456x8xf32>
    tpu.vector_store %arg10[%c0_9, %c0_10], %11 {strides = array<i32>} : memref<456x8xf32, #tpu.memory_space<vmem>>, vector<456x8xf32>,
    %c0_11 = arith.constant 0 : index
    %c0_12 = arith.constant 0 : index
    %13 = vector.load %arg10[%c0_11, %c0_12] : memref<456x8xf32, #tpu.memory_space<vmem>>, vector<384x8xf32>
    %c1 = arith.constant 1 : index
    %c0_13 = arith.constant 0 : index
    %14 = vector.load %arg10[%c1, %c0_13] : memref<456x8xf32, #tpu.memory_space<vmem>>, vector<384x8xf32>
    %c2 = arith.constant 2 : index
    %c0_14 = arith.constant 0 : index
    %15 = vector.load %arg10[%c2, %c0_14] : memref<456x8xf32, #tpu.memory_space<vmem>>, vector<384x8xf32>
    %c24 = arith.constant 24 : index
    %c0_15 = arith.constant 0 : index
    %16 = vector.load %arg10[%c24, %c0_15] : memref<456x8xf32, #tpu.memory_space<vmem>>, vector<384x8xf32>
    %c25 = arith.constant 25 : index
    %c0_16 = arith.constant 0 : index
    %17 = vector.load %arg10[%c25, %c0_16] : memref<456x8xf32, #tpu.memory_space<vmem>>, vector<384x8xf32>
    %c26 = arith.constant 26 : index
    %c0_17 = arith.constant 0 : index
    %18 = vector.load %arg10[%c26, %c0_17] : memref<456x8xf32, #tpu.memory_space<vmem>>, vector<384x8xf32>
    %c48 = arith.constant 48 : index
    %c0_18 = arith.constant 0 : index
    %19 = vector.load %arg10[%c48, %c0_18] : memref<456x8xf32, #tpu.memory_space<vmem>>, vector<384x8xf32>
    %c49 = arith.constant 49 : index
    %c0_19 = arith.constant 0 : index
    %20 = vector.load %arg10[%c49, %c0_19] : memref<456x8xf32, #tpu.memory_space<vmem>>, vector<384x8xf32>
    %c50 = arith.constant 50 : index
    %c0_20 = arith.constant 0 : index
    %21 = vector.load %arg10[%c50, %c0_20] : memref<456x8xf32, #tpu.memory_space<vmem>>, vector<384x8xf32>
    %22 = tpu.concatenate %13, %14, %15, %16, %17, %18, %19, %20, %21 in 1 : vector<384x8xf32>, vector<384x8xf32>, vector<384x8xf32>, vector<384x8xf32>, vector<384x8xf32>, vector<384x8xf32>, vector<384x8xf32>, vector<384x8xf32>, vector<384x8xf32> -> vector<384x72xf32>
    %c0_21 = arith.constant 0 : index
    %c0_22 = arith.constant 0 : index
    %23 = vector.load %arg5[%c0_21, %c0_22] : memref<72x8xf32, #tpu.memory_space<vmem>>, vector<72x8xf32>
    %cst_23 = arith.constant dense<0.000000e+00> : vector<384x8xf32>
    %24 = tpu.matmul %22, %23, %cst_23 {dimension_numbers = #tpu.dot_dimension_numbers<[1], [0], [0], [1], [0, 0, 1, 1], [], []>, precision = #tpu.contract_precision<fp32>} : vector<384x72xf32>, vector<72x8xf32>, vector<384x8xf32> -> vector<384x8xf32>
    %c0_24 = arith.constant 0 : index
    %c0_25 = arith.constant 0 : index
    %25 = vector.load %arg6[%c0_24, %c0_25] : memref<1x8xf32, #tpu.memory_space<vmem>>, vector<1x8xf32>
    %26 = vector.broadcast %25 : vector<1x8xf32> to vector<384x8xf32>
    %27 = arith.addf %24, %26 : vector<384x8xf32>
    %cst_26 = arith.constant 0.000000e+00 : f32
    %28 = vector.broadcast %cst_26 : f32 to vector<384x8xf32>
    %29 = arith.maximumf %27, %28 : vector<384x8xf32>
    %c0_27 = arith.constant 0 : index
    %c0_28 = arith.constant 0 : index
    %30 = vector.load %arg7[%c0_27, %c0_28] : memref<8x32xf32, #tpu.memory_space<vmem>>, vector<8x32xf32>
    %cst_29 = arith.constant dense<0.000000e+00> : vector<384x32xf32>
    %31 = tpu.matmul %29, %30, %cst_29 {dimension_numbers = #tpu.dot_dimension_numbers<[1], [0], [0], [1], [0, 0, 1, 1], [], []>, precision = #tpu.contract_precision<fp32>} : vector<384x8xf32>, vector<8x32xf32>, vector<384x32xf32> -> vector<384x32xf32>
    %c0_30 = arith.constant 0 : index
    %c25_31 = arith.constant 25 : index
    %c0_32 = arith.constant 0 : index
    %32 = vector.load %arg1[%c0_30, %c25_31, %c0_32] : memref<1x456x32xf32, #tpu.memory_space<vmem>>, vector<1x384x32xf32>
    %33 = vector.shape_cast %32 : vector<1x384x32xf32> to vector<384x32xf32>
    %c0_33 = arith.constant 0 : index
    %c0_34 = arith.constant 0 : index
    %34 = vector.load %arg8[%c0_33, %c0_34] : memref<1x32xf32, #tpu.memory_space<vmem>>, vector<1x32xf32>
    %35 = vector.broadcast %34 : vector<1x32xf32> to vector<384x32xf32>
    %36 = arith.addf %31, %35 : vector<384x32xf32>
    %37 = arith.addf %36, %33 : vector<384x32xf32>
    %cst_35 = arith.constant 0.000000e+00 : f32
    %38 = vector.broadcast %cst_35 : f32 to vector<384x32xf32>
    %39 = arith.maximumf %37, %38 : vector<384x32xf32>
    %c0_36 = arith.constant 0 : index
    %c0_37 = arith.constant 0 : index
    %c0_38 = arith.constant 0 : index
    %40 = vector.load %arg9[%c0_36, %c0_37, %c0_38] : memref<1x384x32xf32, #tpu.memory_space<vmem>>, vector<1x384x32xf32>
    %41 = vector.shape_cast %40 : vector<1x384x32xf32> to vector<384x32xf32>
    %42 = vector.shape_cast %39 : vector<384x32xf32> to vector<1x384x32xf32>
    tpu.vector_store %arg9[%c0_36, %c0_37, %c0_38], %42 {strides = array<i32>} : memref<1x384x32xf32, #tpu.memory_space<vmem>>, vector<1x384x32xf32>,
    return
  }
  func.func @transform_0(%arg0: i32) -> (i32, i32, i32) {
    %c0_i32 = arith.constant 0 : i32
    %c0_i32_0 = arith.constant 0 : i32
    %c0_i32_1 = arith.constant 0 : i32
    return %arg0, %c0_i32, %c0_i32_0 : i32, i32, i32
  }
  func.func @transform_1(%arg0: i32) -> (i32, i32) {
    %c0_i32 = arith.constant 0 : i32
    %c0_i32_0 = arith.constant 0 : i32
    %c0_i32_1 = arith.constant 0 : i32
    return %c0_i32, %c0_i32_0 : i32, i32
  }
  func.func @transform_2(%arg0: i32) -> (i32, i32) {
    %c0_i32 = arith.constant 0 : i32
    %c0_i32_0 = arith.constant 0 : i32
    %c0_i32_1 = arith.constant 0 : i32
    return %c0_i32, %c0_i32_0 : i32, i32
  }
  func.func @transform_3(%arg0: i32) -> (i32, i32) {
    %c0_i32 = arith.constant 0 : i32
    %c0_i32_0 = arith.constant 0 : i32
    %c0_i32_1 = arith.constant 0 : i32
    return %c0_i32, %c0_i32_0 : i32, i32
  }
  func.func @transform_4(%arg0: i32) -> (i32, i32) {
    %c0_i32 = arith.constant 0 : i32
    %c0_i32_0 = arith.constant 0 : i32
    %c0_i32_1 = arith.constant 0 : i32
    return %c0_i32, %c0_i32_0 : i32, i32
  }
  func.func @transform_5(%arg0: i32) -> (i32, i32) {
    %c0_i32 = arith.constant 0 : i32
    %c0_i32_0 = arith.constant 0 : i32
    %c0_i32_1 = arith.constant 0 : i32
    return %c0_i32, %c0_i32_0 : i32, i32
  }
  func.func @transform_6(%arg0: i32) -> (i32, i32) {
    %c0_i32 = arith.constant 0 : i32
    %c0_i32_0 = arith.constant 0 : i32
    %c0_i32_1 = arith.constant 0 : i32
    return %c0_i32, %c0_i32_0 : i32, i32
  }
  func.func @transform_7(%arg0: i32) -> (i32, i32) {
    %c0_i32 = arith.constant 0 : i32
    %c0_i32_0 = arith.constant 0 : i32
    %c0_i32_1 = arith.constant 0 : i32
    return %c0_i32, %c0_i32_0 : i32, i32
  }
  func.func @transform_8(%arg0: i32) -> (i32, i32, i32) {
    %c0_i32 = arith.constant 0 : i32
    %c0_i32_0 = arith.constant 0 : i32
    %c0_i32_1 = arith.constant 0 : i32
    return %arg0, %c0_i32, %c0_i32_0 : i32, i32, i32
  }
}

</mosaic_0001>

<llo_original>
// kernel: bottleneck_forward.1
$region0: #{bottleneck_forward.1}
  #allocation0 [shape = 'u32[]', space=smem, size = 0x4, offset = 0x4, fixed_abs, tag = 'smem constant byte address 0x4 - core index']
  #allocation1 [shape = 'u32[144,128]{1,0:T(1,128)}', space=vmem, size = 0x12000, scoped, tag = 'internal scratch']
  #allocation2 [shape = 'f32[456,8]{1,0:T(8,128)}', space=vmem, size = 0x39000, scoped, tag = 'scratch operand']
  %s0 = inlined_call_operand.vmem [shape: f32[2,456,32], index: 0, kind: input, shape index: {}]
  %s1 = inlined_call_operand.vmem [shape: f32[456,1], index: 1, kind: input, shape index: {}]
  %s2 = inlined_call_operand.vmem [shape: f32[32,8], index: 2, kind: input, shape index: {}]
  %s3 = inlined_call_operand.vmem [shape: f32[1,8], index: 3, kind: input, shape index: {}]
  %s4 = inlined_call_operand.vmem [shape: f32[72,8], index: 4, kind: input, shape index: {}]
  %s5 = inlined_call_operand.vmem [shape: f32[1,8], index: 5, kind: input, shape index: {}]
  %s6 = inlined_call_operand.vmem [shape: f32[8,32], index: 6, kind: input, shape index: {}]
  %s7 = inlined_call_operand.vmem [shape: f32[1,32], index: 7, kind: input, shape index: {}]
  %s8 = inlined_call_operand.vmem [shape: f32[2,384,32], index: 8, kind: output, shape index: {}]
  %s9 = sld [smem:[#allocation0]]
  $region65: #{bottleneck_forward.1} parent=0
    _
  %s11 = ssub.s32 1, %s9
  %s12 = scalar_select 0, %s11, %s9
  loop: start=0, step=1, limit=4
  $region2: #{bottleneck_forward.1} parent=0 // loop_pre_header
    _
  $region3: #{bottleneck_forward.1} parent=0 // loop_header
    %s14 = sphi 0, %s18
    %p15 = scmp.ge.s32.totalorder %s14, 4
    %s24 = sphi 0, %s26
    %s27 = sphi 0, %s24
    %s28 = sphi 0, %s27
    %s44 = sphi 0, %s28
    %s48 = sphi 0, %s48
    %s50 = sphi 0, %s48
    %s51 = sphi 0, %s50
    %s65 = sphi 0, %s51
    %s69 = sphi 0, %s69
    %s71 = sphi 0, %s69
    %s72 = sphi 0, %s71
    %s86 = sphi 0, %s72
    %s90 = sphi 0, %s90
    %s92 = sphi 0, %s90
    %s93 = sphi 0, %s92
    %s107 = sphi 0, %s93
    %s111 = sphi 0, %s111
    %s113 = sphi 0, %s111
    %s114 = sphi 0, %s113
    %s128 = sphi 0, %s114
    %s132 = sphi 0, %s132
    %s134 = sphi 0, %s132
    %s135 = sphi 0, %s134
    %s149 = sphi 0, %s135
    %s153 = sphi 0, %s153
    %s155 = sphi 0, %s153
    %s156 = sphi 0, %s155
    %s170 = sphi 0, %s156
    %s174 = sphi 0, %s174
    %s176 = sphi 0, %s174
    %s177 = sphi 0, %s176
    %s191 = sphi 0, %s177
    %s197 = sphi 0, %s199
    %s200 = sphi 0, %s197
    %s201 = sphi 0, %s200
    %s217 = sphi 0, %s201
  $region4: #{bottleneck_forward.1} parent=0 // loop_header_branch
    %17 = sbr.rel (%p15) target = $region8
  $region5: #{bottleneck_forward.1} parent=0 // loop_body
    %s19 = ssub.s32 %s14, 1
    %s20 = ssub.s32 %s14, 2
    %s21 = sadd.s32 %s14, 1
    %s22 = ssub.s32 %s14, %s21
    %p23 = scmp.eq.s32.totalorder %s22, 0
    %s25 = sadd.s32 %s24, 1
    %s26 = scalar_select %p23, %s24, %s25
    %p29 = pneg %p23
    %p30 = scmp.eq.s32.totalorder %s14, 1
    %p31 = por %p29, %p30
    %p32 = scmp.ne.s32.totalorder %s24, %s27
    %p33 = scmp.eq.s32.totalorder %s14, 0
    %p34 = por %p32, %p33
    %p35 = scmp.ne.s32.totalorder %s24, %s27
    %p36 = scmp.eq.s32.totalorder %s19, 1
    %p37 = por %p35, %p36
    %p38 = scmp.ne.s32.totalorder %s27, %s28
    %p39 = scmp.eq.s32.totalorder %s19, 0
    %p40 = por %p38, %p39
    %p41 = scmp.ne.s32.totalorder %s27, %s28
    %p42 = scmp.eq.s32.totalorder %s20, 1
    %p43 = por %p41, %p42
    %p45 = scmp.ne.s32.totalorder %s28, %s44
    %p46 = scmp.eq.s32.totalorder %s20, 0
    %p47 = por %p45, %p46
    %s49 = sadd.s32 %s48, 1
    %p52 = scmp.eq.s32.totalorder %s14, 1
    %p53 = scmp.ne.s32.totalorder %s48, %s50
    %p54 = scmp.eq.s32.totalorder %s14, 0
    %p55 = por %p53, %p54
    %p56 = scmp.ne.s32.totalorder %s48, %s50
    %p57 = scmp.eq.s32.totalorder %s19, 1
    %p58 = por %p56, %p57
    %p59 = scmp.ne.s32.totalorder %s50, %s51
    %p60 = scmp.eq.s32.totalorder %s19, 0
    %p61 = por %p59, %p60
    %p62 = scmp.ne.s32.totalorder %s50, %s51
    %p63 = scmp.eq.s32.totalorder %s20, 1
    %p64 = por %p62, %p63
    %p66 = scmp.ne.s32.totalorder %s51, %s65
    %p67 = scmp.eq.s32.totalorder %s20, 0
    %p68 = por %p66, %p67
    %s70 = sadd.s32 %s69, 1
    %p73 = scmp.eq.s32.totalorder %s14, 1
    %p74 = scmp.ne.s32.totalorder %s69, %s71
    %p75 = scmp.eq.s32.totalorder %s14, 0
    %p76 = por %p74, %p75
    %p77 = scmp.ne.s32.totalorder %s69, %s71
    %p78 = scmp.eq.s32.totalorder %s19, 1
    %p79 = por %p77, %p78
    %p80 = scmp.ne.s32.totalorder %s71, %s72
    %p81 = scmp.eq.s32.totalorder %s19, 0
    %p82 = por %p80, %p81
    %p83 = scmp.ne.s32.totalorder %s71, %s72
    %p84 = scmp.eq.s32.totalorder %s20, 1
    %p85 = por %p83, %p84
    %p87 = scmp.ne.s32.totalorder %s72, %s86
    %p88 = scmp.eq.s32.totalorder %s20, 0
    %p89 = por %p87, %p88
    %s91 = sadd.s32 %s90, 1
    %p94 = scmp.eq.s32.totalorder %s14, 1
    %p95 = scmp.ne.s32.totalorder %s90, %s92
    %p96 = scmp.eq.s32.totalorder %s14, 0
    %p97 = por %p95, %p96
    %p98 = scmp.ne.s32.totalorder %s90, %s92
    %p99 = scmp.eq.s32.totalorder %s19, 1
    %p100 = por %p98, %p99
    %p101 = scmp.ne.s32.totalorder %s92, %s93
    %p102 = scmp.eq.s32.totalorder %s19, 0
    %p103 = por %p101, %p102
    %p104 = scmp.ne.s32.totalorder %s92, %s93
    %p105 = scmp.eq.s32.totalorder %s20, 1
    %p106 = por %p104, %p105
    %p108 = scmp.ne.s32.totalorder %s93, %s107
    %p109 = scmp.eq.s32.totalorder %s20, 0
    %p110 = por %p108, %p109
    %s112 = sadd.s32 %s111, 1
    %p115 = scmp.eq.s32.totalorder %s14, 1
    %p116 = scmp.ne.s32.totalorder %s111, %s113
    %p117 = scmp.eq.s32.totalorder %s14, 0
    %p118 = por %p116, %p117
    %p119 = scmp.ne.s32.totalorder %s111, %s113
    %p120 = scmp.eq.s32.totalorder %s19, 1
    %p121 = por %p119, %p120
    %p122 = scmp.ne.s32.totalorder %s113, %s114
    %p123 = scmp.eq.s32.totalorder %s19, 0
    %p124 = por %p122, %p123
    %p125 = scmp.ne.s32.totalorder %s113, %s114
    %p126 = scmp.eq.s32.totalorder %s20, 1
    %p127 = por %p125, %p126
    %p129 = scmp.ne.s32.totalorder %s114, %s128
    %p130 = scmp.eq.s32.totalorder %s20, 0
    %p131 = por %p129, %p130
    %s133 = sadd.s32 %s132, 1
    %p136 = scmp.eq.s32.totalorder %s14, 1
    %p137 = scmp.ne.s32.totalorder %s132, %s134
    %p138 = scmp.eq.s32.totalorder %s14, 0
    %p139 = por %p137, %p138
    %p140 = scmp.ne.s32.totalorder %s132, %s134
    %p141 = scmp.eq.s32.totalorder %s19, 1
    %p142 = por %p140, %p141
    %p143 = scmp.ne.s32.totalorder %s134, %s135
    %p144 = scmp.eq.s32.totalorder %s19, 0
    %p145 = por %p143, %p144
    %p146 = scmp.ne.s32.totalorder %s134, %s135
    %p147 = scmp.eq.s32.totalorder %s20, 1
    %p148 = por %p146, %p147
    %p150 = scmp.ne.s32.totalorder %s135, %s149
    %p151 = scmp.eq.s32.totalorder %s20, 0
    %p152 = por %p150, %p151
    %s154 = sadd.s32 %s153, 1
    %p157 = scmp.eq.s32.totalorder %s14, 1
    %p158 = scmp.ne.s32.totalorder %s153, %s155
    %p159 = scmp.eq.s32.totalorder %s14, 0
    %p160 = por %p158, %p159
    %p161 = scmp.ne.s32.totalorder %s153, %s155
    %p162 = scmp.eq.s32.totalorder %s19, 1
    %p163 = por %p161, %p162
    %p164 = scmp.ne.s32.totalorder %s155, %s156
    %p165 = scmp.eq.s32.totalorder %s19, 0
    %p166 = por %p164, %p165
    %p167 = scmp.ne.s32.totalorder %s155, %s156
    %p168 = scmp.eq.s32.totalorder %s20, 1
    %p169 = por %p167, %p168
    %p171 = scmp.ne.s32.totalorder %s156, %s170
    %p172 = scmp.eq.s32.totalorder %s20, 0
    %p173 = por %p171, %p172
    %s175 = sadd.s32 %s174, 1
    %p178 = scmp.eq.s32.totalorder %s14, 1
    %p179 = scmp.ne.s32.totalorder %s174, %s176
    %p180 = scmp.eq.s32.totalorder %s14, 0
    %p181 = por %p179, %p180
    %p182 = scmp.ne.s32.totalorder %s174, %s176
    %p183 = scmp.eq.s32.totalorder %s19, 1
    %p184 = por %p182, %p183
    %p185 = scmp.ne.s32.totalorder %s176, %s177
    %p186 = scmp.eq.s32.totalorder %s19, 0
    %p187 = por %p185, %p186
    %p188 = scmp.ne.s32.totalorder %s176, %s177
    %p189 = scmp.eq.s32.totalorder %s20, 1
    %p190 = por %p188, %p189
    %p192 = scmp.ne.s32.totalorder %s177, %s191
    %p193 = scmp.eq.s32.totalorder %s20, 0
    %p194 = por %p192, %p193
    %s195 = ssub.s32 %s14, %s21
    %p196 = scmp.eq.s32.totalorder %s195, 0
    %s198 = sadd.s32 %s197, 1
    %s199 = scalar_select %p196, %s197, %s198
    %p202 = pneg %p196
    %p203 = scmp.eq.s32.totalorder %s14, 1
    %p204 = por %p202, %p203
    %p205 = scmp.ne.s32.totalorder %s197, %s200
    %p206 = scmp.eq.s32.totalorder %s14, 0
    %p207 = por %p205, %p206
    %p208 = scmp.ne.s32.totalorder %s197, %s200
    %p209 = scmp.eq.s32.totalorder %s19, 1
    %p210 = por %p208, %p209
    %p211 = scmp.ne.s32.totalorder %s200, %s201
    %p212 = scmp.eq.s32.totalorder %s19, 0
    %p213 = por %p211, %p212
    %p214 = scmp.ne.s32.totalorder %s200, %s201
    %p215 = scmp.eq.s32.totalorder %s20, 1
    %p216 = por %p214, %p215
    %p218 = scmp.ne.s32.totalorder %s201, %s217
    %p219 = scmp.eq.s32.totalorder %s20, 0
    %p220 = por %p218, %p219
    %p221 = scmp.le.s32.totalorder 1, %s14
    %p222 = scmp.lt.s32.totalorder %s14, 3
    %p223 = pnand %p221, %p222
    %p224 = pneg %p223
    // Predicated region
    $region9: #{bottleneck_forward.1} parent=5 // pred_check
      _
    $region10: #{bottleneck_forward.1} parent=5 // pred_check_branch
      %226 = sbr.rel (%p223) target = $region12
    $region11: #{bottleneck_forward.1} parent=5 // pred_region
      %s227 = ssub.s32 %s14, 1
      // Predicated region
      $region13: #{bottleneck_forward.1} parent=11 // pred_check
        %p228 = pneg %p61
      $region14: #{bottleneck_forward.1} parent=11 // pred_check_branch
        %230 = sbr.rel (%p228) target = $region16
      $region15: #{bottleneck_forward.1} parent=11 // pred_region
        _
      $region16: #{bottleneck_forward.1} parent=11 // pred_fallthru
        _
      // Predicated region
      $region17: #{bottleneck_forward.1} parent=11 // pred_check
        %p231 = pneg %p82
      $region18: #{bottleneck_forward.1} parent=11 // pred_check_branch
        %233 = sbr.rel (%p231) target = $region20
      $region19: #{bottleneck_forward.1} parent=11 // pred_region
        _
      $region20: #{bottleneck_forward.1} parent=11 // pred_fallthru
        _
      // Predicated region
      $region21: #{bottleneck_forward.1} parent=11 // pred_check
        %p234 = pneg %p103
      $region22: #{bottleneck_forward.1} parent=11 // pred_check_branch
        %236 = sbr.rel (%p234) target = $region24
      $region23: #{bottleneck_forward.1} parent=11 // pred_region
        _
      $region24: #{bottleneck_forward.1} parent=11 // pred_fallthru
        _
      // Predicated region
      $region25: #{bottleneck_forward.1} parent=11 // pred_check
        %p237 = pneg %p124
      $region26: #{bottleneck_forward.1} parent=11 // pred_check_branch
        %239 = sbr.rel (%p237) target = $region28
      $region27: #{bottleneck_forward.1} parent=11 // pred_region
        _
      $region28: #{bottleneck_forward.1} parent=11 // pred_fallthru
        _
      // Predicated region
      $region29: #{bottleneck_forward.1} parent=11 // pred_check
        %p240 = pneg %p145
      $region30: #{bottleneck_forward.1} parent=11 // pred_check_branch
        %242 = sbr.rel (%p240) target = $region32
      $region31: #{bottleneck_forward.1} parent=11 // pred_region
        _
      $region32: #{bottleneck_forward.1} parent=11 // pred_fallthru
        _
      // Predicated region
      $region33: #{bottleneck_forward.1} parent=11 // pred_check
        %p243 = pneg %p166
      $region34: #{bottleneck_forward.1} parent=11 // pred_check_branch
        %245 = sbr.rel (%p243) target = $region36
      $region35: #{bottleneck_forward.1} parent=11 // pred_region
        _
      $region36: #{bottleneck_forward.1} parent=11 // pred_fallthru
        _
      // Predicated region
      $region37: #{bottleneck_forward.1} parent=11 // pred_check
        %p246 = pneg %p187
      $region38: #{bottleneck_forward.1} parent=11 // pred_check_branch
        %248 = sbr.rel (%p246) target = $region40
      $region39: #{bottleneck_forward.1} parent=11 // pred_region
        _
      $region40: #{bottleneck_forward.1} parent=11 // pred_fallthru
        _
    $region12: #{bottleneck_forward.1} parent=5 // pred_fallthru
      _
    %p249 = scmp.lt.s32.totalorder %s14, 2
    // Predicated region
    $region41: #{bottleneck_forward.1} parent=5 // pred_check
      %p250 = pneg %p249
    $region42: #{bottleneck_forward.1} parent=5 // pred_check_branch
      %252 = sbr.rel (%p250) target = $region44
    $region43: #{bottleneck_forward.1} parent=5 // pred_region
      // Predicated region
      $region45: #{bottleneck_forward.1} parent=43 // pred_check
        %p253 = pneg %p34
      $region46: #{bottleneck_forward.1} parent=43 // pred_check_branch
        %255 = sbr.rel (%p253) target = $region48
      $region47: #{bottleneck_forward.1} parent=43 // pred_region
        %p256 = scmp.lt.s32.totalorder %s14, 1
        %s257 = scalar_select %p256, %s14, 1
        %s258 = smul.addr %s257, 57
        %s259 = smul.addr %s258, 8
        %s260 = scalar_lea.vmem %s0, %s259
      $region48: #{bottleneck_forward.1} parent=43 // pred_fallthru
        _
    $region44: #{bottleneck_forward.1} parent=5 // pred_fallthru
      _
    %p261 = scmp.le.s32.totalorder 1, %s14
    %p262 = scmp.lt.s32.totalorder %s14, 3
    %p263 = pnand %p261, %p262
    %p264 = pneg %p263
    // Predicated region
    $region49: #{bottleneck_forward.1} parent=5 // pred_check
      _
    $region50: #{bottleneck_forward.1} parent=5 // pred_check_branch
      %266 = sbr.rel (%p263) target = $region52
    $region51: #{bottleneck_forward.1} parent=5 // pred_region
      %s267 = ssub.s32 %s14, 1
      %p268 = scmp.lt.s32.totalorder %s19, 1
      %s269 = scalar_select %p268, %s19, 1
      %s270 = smul.addr %s269, 57
      %s271 = smul.addr %s270, 8
      %s272 = scalar_lea.vmem %s0, %s271
      %p273 = pneg %p40
      %p274 = pneg %p37
      %p275 = pneg %p61
      %p276 = pneg %p58
      %p277 = pneg %p82
      %p278 = pneg %p79
      %p279 = pneg %p103
      %p280 = pneg %p100
      %p281 = pneg %p124
      %p282 = pneg %p121
      %p283 = pneg %p145
      %p284 = pneg %p142
      %p285 = pneg %p166
      %p286 = pneg %p163
      %p287 = pneg %p187
      %p288 = pneg %p184
      %p289 = pneg %p213
      %p290 = pneg %p210
      %p291 = scmp.lt.s32.totalorder %s19, 1
      %s292 = scalar_select %p291, %s19, 1
      %s293 = smul.addr %s292, 48
      %s294 = smul.addr %s293, 8
      %s295 = scalar_lea.vmem %s8, %s294
      %p296 = scmp.lt.s32.totalorder %s19, 1
      %s297 = scalar_select %p296, %s19, 1
      %s298 = smul.addr %s297, 57
      %s299 = smul.addr %s298, 8
      %s300 = scalar_lea.vmem %s0, %s299
      %p301 = scmp.lt.s32.totalorder %s19, 1
      %s302 = scalar_select %p301, %s19, 1
      %s303 = smul.addr %s302, 48
      %s304 = smul.addr %s303, 8
      %s305 = scalar_lea.vmem %s8, %s304
      %v306 = vld [vmem:[%s300] sm:$0xff]
      %v307 = vld [vmem:[%s300 + $0x8] sm:$0xff]
      %v308 = vld [vmem:[%s300 + $0x10] sm:$0xff]
      %v309 = vld [vmem:[%s300 + $0x18] sm:$0xff]
      %v310 = vld [vmem:[%s300 + $0x20] sm:$0xff]
      %v311 = vld [vmem:[%s300 + $0x28] sm:$0xff]
      %v312 = vld [vmem:[%s300 + $0x30] sm:$0xff]
      %v313 = vld [vmem:[%s300 + $0x38] sm:$0xff]
      %v314 = vld [vmem:[%s300 + $0x40] sm:$0xff]
      %v315 = vld [vmem:[%s300 + $0x48] sm:$0xff]
      %v316 = vld [vmem:[%s300 + $0x50] sm:$0xff]
      %v317 = vld [vmem:[%s300 + $0x58] sm:$0xff]
      %v318 = vld [vmem:[%s300 + $0x60] sm:$0xff]
      %v319 = vld [vmem:[%s300 + $0x68] sm:$0xff]
      %v320 = vld [vmem:[%s300 + $0x70] sm:$0xff]
      %v321 = vld [vmem:[%s300 + $0x78] sm:$0xff]
      %v322 = vld [vmem:[%s300 + $0x80] sm:$0xff]
      %v323 = vld [vmem:[%s300 + $0x88] sm:$0xff]
      %v324 = vld [vmem:[%s300 + $0x90] sm:$0xff]
      %v325 = vld [vmem:[%s300 + $0x98] sm:$0xff]
      %v326 = vld [vmem:[%s300 + $0xa0] sm:$0xff]
      %v327 = vld [vmem:[%s300 + $0xa8] sm:$0xff]
      %v328 = vld [vmem:[%s300 + $0xb0] sm:$0xff]
      %v329 = vld [vmem:[%s300 + $0xb8] sm:$0xff]
      %v330 = vld [vmem:[%s300 + $0xc0] sm:$0xff]
      %v331 = vld [vmem:[%s300 + $0xc8] sm:$0xff]
      %v332 = vld [vmem:[%s300 + $0xd0] sm:$0xff]
      %v333 = vld [vmem:[%s300 + $0xd8] sm:$0xff]
      %v334 = vld [vmem:[%s300 + $0xe0] sm:$0xff]
      %v335 = vld [vmem:[%s300 + $0xe8] sm:$0xff]
      %v336 = vld [vmem:[%s300 + $0xf0] sm:$0xff]
      %v337 = vld [vmem:[%s300 + $0xf8] sm:$0xff]
      %v338 = vld [vmem:[%s300 + $0x100] sm:$0xff]
      %v339 = vld [vmem:[%s300 + $0x108] sm:$0xff]
      %v340 = vld [vmem:[%s300 + $0x110] sm:$0xff]
      %v341 = vld [vmem:[%s300 + $0x118] sm:$0xff]
      %v342 = vld [vmem:[%s300 + $0x120] sm:$0xff]
      %v343 = vld [vmem:[%s300 + $0x128] sm:$0xff]
      %v344 = vld [vmem:[%s300 + $0x130] sm:$0xff]
      %v345 = vld [vmem:[%s300 + $0x138] sm:$0xff]
      %v346 = vld [vmem:[%s300 + $0x140] sm:$0xff]
      %v347 = vld [vmem:[%s300 + $0x148] sm:$0xff]
      %v348 = vld [vmem:[%s300 + $0x150] sm:$0xff]
      %v349 = vld [vmem:[%s300 + $0x158] sm:$0xff]
      %v350 = vld [vmem:[%s300 + $0x160] sm:$0xff]
      %v351 = vld [vmem:[%s300 + $0x168] sm:$0xff]
      %v352 = vld [vmem:[%s300 + $0x170] sm:$0xff]
      %v353 = vld [vmem:[%s300 + $0x178] sm:$0xff]
      %v354 = vld [vmem:[%s300 + $0x180] sm:$0xff]
      %v355 = vld [vmem:[%s300 + $0x188] sm:$0xff]
      %v356 = vld [vmem:[%s300 + $0x190] sm:$0xff]
      %v357 = vld [vmem:[%s300 + $0x198] sm:$0xff]
      %v358 = vld [vmem:[%s300 + $0x1a0] sm:$0xff]
      %v359 = vld [vmem:[%s300 + $0x1a8] sm:$0xff]
      %v360 = vld [vmem:[%s300 + $0x1b0] sm:$0xff]
      %v361 = vld [vmem:[%s300 + $0x1b8] sm:$0xff]
      %v362 = vld [vmem:[%s300 + $0x1c0] sm:$0xff]
      %v363 = vld [vmem:[%s2] sm:$0xff]
      %v364 = vld [vmem:[%s2 + $0x8] sm:$0xff]
      %v365 = vld [vmem:[%s2 + $0x10] sm:$0xff]
      %v366 = vld [vmem:[%s2 + $0x18] sm:$0xff]
      %v367 = vld [vmem:[%s3] sm:$0x1]
      %v369 = vlaneseq
      %v370 = vshrl.u32 %v369, 7
      %v371 = vsub.s32 0, %v370
      %v372 = vrot.slane %v367, %v371
      %vm374 = vcmask 261120
      %v376 = vsel %vm374, %v306, 0
      %v379 = vsel %vm374, %v307, 0
      %v382 = vsel %vm374, %v308, 0
      %v385 = vsel %vm374, %v309, 0
      %v388 = vsel %vm374, %v310, 0
      %v391 = vsel %vm374, %v311, 0
      %v394 = vsel %vm374, %v312, 0
      %v397 = vsel %vm374, %v313, 0
      %v400 = vsel %vm374, %v314, 0
      %v403 = vsel %vm374, %v315, 0
      %v406 = vsel %vm374, %v316, 0
      %v409 = vsel %vm374, %v317, 0
      %v412 = vsel %vm374, %v318, 0
      %v415 = vsel %vm374, %v319, 0
      %v418 = vsel %vm374, %v320, 0
      %v421 = vsel %vm374, %v321, 0
      %v424 = vsel %vm374, %v322, 0
      %v427 = vsel %vm374, %v323, 0
      %v430 = vsel %vm374, %v324, 0
      %v433 = vsel %vm374, %v325, 0
      %v436 = vsel %vm374, %v326, 0
      %v439 = vsel %vm374, %v327, 0
      %v442 = vsel %vm374, %v328, 0
      %v445 = vsel %vm374, %v329, 0
      %v448 = vsel %vm374, %v330, 0
      %v451 = vsel %vm374, %v331, 0
      %v454 = vsel %vm374, %v332, 0
      %v457 = vsel %vm374, %v333, 0
      %v460 = vsel %vm374, %v334, 0
      %v463 = vsel %vm374, %v335, 0
      %v466 = vsel %vm374, %v336, 0
      %v469 = vsel %vm374, %v337, 0
      %v472 = vsel %vm374, %v338, 0
      %v475 = vsel %vm374, %v339, 0
      %v478 = vsel %vm374, %v340, 0
      %v481 = vsel %vm374, %v341, 0
      %v484 = vsel %vm374, %v342, 0
      %v487 = vsel %vm374, %v343, 0
      %v490 = vsel %vm374, %v344, 0
      %v493 = vsel %vm374, %v345, 0
      %v496 = vsel %vm374, %v346, 0
      %v499 = vsel %vm374, %v347, 0
      %v502 = vsel %vm374, %v348, 0
      %v505 = vsel %vm374, %v349, 0
      %v508 = vsel %vm374, %v350, 0
      %v511 = vsel %vm374, %v351, 0
      %v514 = vsel %vm374, %v352, 0
      %v517 = vsel %vm374, %v353, 0
      %v520 = vsel %vm374, %v354, 0
      %v523 = vsel %vm374, %v355, 0
      %v526 = vsel %vm374, %v356, 0
      %v529 = vsel %vm374, %v357, 0
      %v532 = vsel %vm374, %v358, 0
      %v535 = vsel %vm374, %v359, 0
      %v538 = vsel %vm374, %v360, 0
      %v541 = vsel %vm374, %v361, 0
      %v544 = vsel %vm374, %v362, 0
      %546 = vmatprep.subr.mxu0 0.0
      %v547 = vand.u32 %v363, 4294901760
      %548 = vmatpush1.msra.mxu0 %v547
      %549 = vmatprep.subr.mxu0 0.0
      %v550 = vand.u32 %v364, 4294901760
      %551 = vmatpush1.msra.mxu0 %v550
      %552 = vmatprep.subr.mxu0 0.0
      %v553 = vand.u32 %v365, 4294901760
      %554 = vmatpush1.msra.mxu0 %v553
      %555 = vmatprep.subr.mxu0 0.0
      %v556 = vand.u32 %v366, 4294901760
      %557 = vmatpush1.msra.mxu0 %v556
      %558 = vmatprep.subr.mxu0 0.0
      %559 = vmatpush1.msra.mxu0 0.0
      %560 = vmatprep.subr.mxu0 0.0
      %561 = vmatpush1.msra.mxu0 0.0
      %562 = vmatprep.subr.mxu0 0.0
      %563 = vmatpush1.msra.mxu0 0.0
      %564 = vmatprep.subr.mxu0 0.0
      %565 = vmatpush1.msra.mxu0 0.0
      %566 = vmatprep.subr.mxu0 0.0
      %567 = vmatpush1.msra.mxu0 0.0
      %568 = vmatprep.subr.mxu0 0.0
      %569 = vmatpush1.msra.mxu0 0.0
      %570 = vmatprep.subr.mxu0 0.0
      %571 = vmatpush1.msra.mxu0 0.0
      %572 = vmatprep.subr.mxu0 0.0
      %573 = vmatpush1.msra.mxu0 0.0
      %574 = vmatprep.subr.mxu0 0.0
      %575 = vmatpush1.msra.mxu0 0.0
      %576 = vmatprep.subr.mxu0 0.0
      %577 = vmatpush1.msra.mxu0 0.0
      %578 = vmatprep.subr.mxu0 0.0
      %579 = vmatpush1.msra.mxu0 0.0
      %580 = vmatprep.subr.mxu0 0.0
      %581 = vmatpush1.msra.mxu0 0.0
      %582 = vmatprep.subr.mxu0 0.0
      %583 = vmatpush1.msra.mxu0 0.0
      %584 = vmatprep.subr.mxu0 0.0
      %585 = vmatpush1.msra.mxu0 0.0
      %586 = vmatprep.subr.mxu0 0.0
      %587 = vmatpush1.msra.mxu0 0.0
      %588 = vmatprep.subr.mxu0 0.0
      %589 = vmatpush1.msra.mxu0 0.0
      %590 = vmatprep.subr.mxu0 0.0
      %591 = vmatpush1.msra.mxu0 0.0
      %592 = vmatprep.subr.mxu0 0.0
      %593 = vmatpush1.msra.mxu0 0.0
      %594 = vmatprep.subr.mxu0 0.0
      %595 = vmatpush1.msra.mxu0 0.0
      %596 = vmatprep.subr.mxu0 0.0
      %597 = vmatpush1.msra.mxu0 0.0
      %598 = vmatprep.subr.mxu0 0.0
      %599 = vmatpush1.msra.mxu0 0.0
      %600 = vmatprep.subr.mxu0 0.0
      %601 = vmatpush1.msra.mxu0 0.0
      %602 = vmatprep.subr.mxu0 0.0
      %603 = vmatpush1.msra.mxu0 0.0
      %604 = vmatprep.subr.mxu0 0.0
      %605 = vmatpush1.msra.mxu0 0.0
      %606 = vmatprep.subr.mxu0 0.0
      %607 = vmatpush1.msra.mxu0 0.0
      %608 = vmatprep.subr.mxu0 0.0
      %609 = vmatpush1.msra.mxu0 0.0
      %610 = vmatprep.subr.mxu0 0.0
      %611 = vmatpush1.msra.mxu0 0.0
      %612 = vmatprep.subr.mxu0 0.0
      %613 = vmatpush1.msra.mxu0 0.0
      %614 = vmatprep.mubr.f32.mxu0 0.0
      %v615 = vand.u32 %v376, 4294901760
      %v616 = vsub.f32 %v376, %v615
      %v617 = vand.u32 %v616, 4294901760
      %v618 = vsub.f32 %v616, %v617
      %v619 = vand.u32 %v618, 4294901760
      %620 = vmatmul.mubr.f32.gmra.mrb[0].mxu0 %v619
      %v621 = vpop.f32.mrb[0].mxu0
      %v622 = vadd.f32 %v372, %v621
      %v623 = vpop.f32.mrb[0].mxu0
      %624 = vmatprep.mubr.f32.mxu0 0.0
      %v625 = vand.u32 %v379, 4294901760
      %v626 = vsub.f32 %v379, %v625
      %v627 = vand.u32 %v626, 4294901760
      %v628 = vsub.f32 %v626, %v627
      %v629 = vand.u32 %v628, 4294901760
      %630 = vmatmul.mubr.f32.gmra.mrb[0].mxu0 %v629
      %v631 = vpop.f32.mrb[0].mxu0
      %v632 = vadd.f32 %v372, %v631
      %v633 = vpop.f32.mrb[0].mxu0
      %634 = vmatprep.mubr.f32.mxu0 0.0
      %v635 = vand.u32 %v382, 4294901760
      %v636 = vsub.f32 %v382, %v635
      %v637 = vand.u32 %v636, 4294901760
      %v638 = vsub.f32 %v636, %v637
      %v639 = vand.u32 %v638, 4294901760
      %640 = vmatmul.mubr.f32.gmra.mrb[0].mxu0 %v639
      %v641 = vpop.f32.mrb[0].mxu0
      %v642 = vadd.f32 %v372, %v641
      %v643 = vpop.f32.mrb[0].mxu0
      %644 = vmatprep.mubr.f32.mxu0 0.0
      %v645 = vand.u32 %v385, 4294901760
      %v646 = vsub.f32 %v385, %v645
      %v647 = vand.u32 %v646, 4294901760
      %v648 = vsub.f32 %v646, %v647
      %v649 = vand.u32 %v648, 4294901760
      %650 = vmatmul.mubr.f32.gmra.mrb[0].mxu0 %v649
      %v651 = vpop.f32.mrb[0].mxu0
      %v652 = vadd.f32 %v372, %v651
      %v653 = vpop.f32.mrb[0].mxu0
      %654 = vmatprep.mubr.f32.mxu0 0.0
      %v655 = vand.u32 %v388, 4294901760
      %v656 = vsub.f32 %v388, %v655
      %v657 = vand.u32 %v656, 4294901760
      %v658 = vsub.f32 %v656, %v657
      %v659 = vand.u32 %v658, 4294901760
      %660 = vmatmul.mubr.f32.gmra.mrb[0].mxu0 %v659
      %v661 = vpop.f32.mrb[0].mxu0
      %v662 = vadd.f32 %v372, %v661
      %v663 = vpop.f32.mrb[0].mxu0
      %664 = vmatprep.mubr.f32.mxu0 0.0
      %v665 = vand.u32 %v391, 4294901760
      %v666 = vsub.f32 %v391, %v665
      %v667 = vand.u32 %v666, 4294901760
      %v668 = vsub.f32 %v666, %v667
      %v669 = vand.u32 %v668, 4294901760
      %670 = vmatmul.mubr.f32.gmra.mrb[0].mxu0 %v669
      %v671 = vpop.f32.mrb[0].mxu0
      %v672 = vadd.f32 %v372, %v671
      %v673 = vpop.f32.mrb[0].mxu0
      %674 = vmatprep.mubr.f32.mxu0 0.0
      %v675 = vand.u32 %v394, 4294901760
      %v676 = vsub.f32 %v394, %v675
      %v677 = vand.u32 %v676, 4294901760
      %v678 = vsub.f32 %v676, %v677
      %v679 = vand.u32 %v678, 4294901760
      %680 = vmatmul.mubr.f32.gmra.mrb[0].mxu0 %v679
      %v681 = vpop.f32.mrb[0].mxu0
      %v682 = vadd.f32 %v372, %v681
      %v683 = vpop.f32.mrb[0].mxu0
      %684 = vmatprep.mubr.f32.mxu0 0.0
      %v685 = vand.u32 %v397, 4294901760
      %v686 = vsub.f32 %v397, %v685
      %v687 = vand.u32 %v686, 4294901760
      %v688 = vsub.f32 %v686, %v687
      %v689 = vand.u32 %v688, 4294901760
      %690 = vmatmul.mubr.f32.gmra.mrb[0].mxu0 %v689
      %v691 = vpop.f32.mrb[0].mxu0
      %v692 = vadd.f32 %v372, %v691
      %v693 = vpop.f32.mrb[0].mxu0
      %694 = vmatprep.mubr.f32.mxu0 0.0
      %v695 = vand.u32 %v400, 4294901760
      %v696 = vsub.f32 %v400, %v695
      %v697 = vand.u32 %v696, 4294901760
      %v698 = vsub.f32 %v696, %v697
      %v699 = vand.u32 %v698, 4294901760
      %700 = vmatmul.mubr.f32.gmra.mrb[0].mxu0 %v699
      %v701 = vpop.f32.mrb[0].mxu0
      %v702 = vadd.f32 %v372, %v701
      %v703 = vpop.f32.mrb[0].mxu0
      %704 = vmatprep.mubr.f32.mxu0 0.0
      %v705 = vand.u32 %v403, 4294901760
      %v706 = vsub.f32 %v403, %v705
      %v707 = vand.u32 %v706, 4294901760
      %v708 = vsub.f32 %v706, %v707
      %v709 = vand.u32 %v708, 4294901760
      %710 = vmatmul.mubr.f32.gmra.mrb[0].mxu0 %v709
      %v711 = vpop.f32.mrb[0].mxu0
      %v712 = vadd.f32 %v372, %v711
      %v713 = vpop.f32.mrb[0].mxu0
      %714 = vmatprep.mubr.f32.mxu0 0.0
      %v715 = vand.u32 %v406, 4294901760
      %v716 = vsub.f32 %v406, %v715
      %v717 = vand.u32 %v716, 4294901760
      %v718 = vsub.f32 %v716, %v717
      %v719 = vand.u32 %v718, 4294901760
      %720 = vmatmul.mubr.f32.gmra.mrb[0].mxu0 %v719
      %v721 = vpop.f32.mrb[0].mxu0
      %v722 = vadd.f32 %v372, %v721
      %v723 = vpop.f32.mrb[0].mxu0
      %724 = vmatprep.mubr.f32.mxu0 0.0
      %v725 = vand.u32 %v409, 4294901760
      %v726 = vsub.f32 %v409, %v725
      %v727 = vand.u32 %v726, 4294901760
      %v728 = vsub.f32 %v726, %v727
      %v729 = vand.u32 %v728, 4294901760
      %730 = vmatmul.mubr.f32.gmra.mrb[0].mxu0 %v729
      %v731 = vpop.f32.mrb[0].mxu0
      %v732 = vadd.f32 %v372, %v731
      %v733 = vpop.f32.mrb[0].mxu0
      %734 = vmatprep.mubr.f32.mxu0 0.0
      %v735 = vand.u32 %v412, 4294901760
      %v736 = vsub.f32 %v412, %v735
      %v737 = vand.u32 %v736, 4294901760
      %v738 = vsub.f32 %v736, %v737
      %v739 = vand.u32 %v738, 4294901760
      %740 = vmatmul.mubr.f32.gmra.mrb[0].mxu0 %v739
      %v741 = vpop.f32.mrb[0].mxu0
      %v742 = vadd.f32 %v372, %v741
      %v743 = vpop.f32.mrb[0].mxu0
      %744 = vmatprep.mubr.f32.mxu0 0.0
      %v745 = vand.u32 %v415, 4294901760
      %v746 = vsub.f32 %v415, %v745
      %v747 = vand.u32 %v746, 4294901760
      %v748 = vsub.f32 %v746, %v747
      %v749 = vand.u32 %v748, 4294901760
      %750 = vmatmul.mubr.f32.gmra.mrb[0].mxu0 %v749
      %v751 = vpop.f32.mrb[0].mxu0
      %v752 = vadd.f32 %v372, %v751
      %v753 = vpop.f32.mrb[0].mxu0
      %754 = vmatprep.mubr.f32.mxu0 0.0
      %v755 = vand.u32 %v418, 4294901760
      %v756 = vsub.f32 %v418, %v755
      %v757 = vand.u32 %v756, 4294901760
      %v758 = vsub.f32 %v756, %v757
      %v759 = vand.u32 %v758, 4294901760
      %760 = vmatmul.mubr.f32.gmra.mrb[0].mxu0 %v759
      %v761 = vpop.f32.mrb[0].mxu0
      %v762 = vadd.f32 %v372, %v761
      %v763 = vpop.f32.mrb[0].mxu0
      %764 = vmatprep.mubr.f32.mxu0 0.0
      %v765 = vand.u32 %v421, 4294901760
      %v766 = vsub.f32 %v421, %v765
      %v767 = vand.u32 %v766, 4294901760
      %v768 = vsub.f32 %v766, %v767
      %v769 = vand.u32 %v768, 4294901760
      %770 = vmatmul.mubr.f32.gmra.mrb[0].mxu0 %v769
      %v771 = vpop.f32.mrb[0].mxu0
      %v772 = vadd.f32 %v372, %v771
      %v773 = vpop.f32.mrb[0].mxu0
      %774 = vmatprep.mubr.f32.mxu0 0.0
      %v775 = vand.u32 %v424, 4294901760
      %v776 = vsub.f32 %v424, %v775
      %v777 = vand.u32 %v776, 4294901760
      %v778 = vsub.f32 %v776, %v777
      %v779 = vand.u32 %v778, 4294901760
      %780 = vmatmul.mubr.f32.gmra.mrb[0].mxu0 %v779
      %v781 = vpop.f32.mrb[0].mxu0
      %v782 = vadd.f32 %v372, %v781
      %v783 = vpop.f32.mrb[0].mxu0
      %784 = vmatprep.mubr.f32.mxu0 0.0
      %v785 = vand.u32 %v427, 4294901760
      %v786 = vsub.f32 %v427, %v785
      %v787 = vand.u32 %v786, 4294901760
      %v788 = vsub.f32 %v786, %v787
      %v789 = vand.u32 %v788, 4294901760
      %790 = vmatmul.mubr.f32.gmra.mrb[0].mxu0 %v789
      %v791 = vpop.f32.mrb[0].mxu0
      %v792 = vadd.f32 %v372, %v791
      %v793 = vpop.f32.mrb[0].mxu0
      %794 = vmatprep.mubr.f32.mxu0 0.0
      %v795 = vand.u32 %v430, 4294901760
      %v796 = vsub.f32 %v430, %v795
      %v797 = vand.u32 %v796, 4294901760
      %v798 = vsub.f32 %v796, %v797
      %v799 = vand.u32 %v798, 4294901760
      %800 = vmatmul.mubr.f32.gmra.mrb[0].mxu0 %v799
      %v801 = vpop.f32.mrb[0].mxu0
      %v802 = vadd.f32 %v372, %v801
      %v803 = vpop.f32.mrb[0].mxu0
      %804 = vmatprep.mubr.f32.mxu0 0.0
      %v805 = vand.u32 %v433, 4294901760
      %v806 = vsub.f32 %v433, %v805
      %v807 = vand.u32 %v806, 4294901760
      %v808 = vsub.f32 %v806, %v807
      %v809 = vand.u32 %v808, 4294901760
      %810 = vmatmul.mubr.f32.gmra.mrb[0].mxu0 %v809
      %v811 = vpop.f32.mrb[0].mxu0
      %v812 = vadd.f32 %v372, %v811
      %v813 = vpop.f32.mrb[0].mxu0
      %814 = vmatprep.mubr.f32.mxu0 0.0
      %v815 = vand.u32 %v436, 4294901760
      %v816 = vsub.f32 %v436, %v815
      %v817 = vand.u32 %v816, 4294901760
      %v818 = vsub.f32 %v816, %v817
      %v819 = vand.u32 %v818, 4294901760
      %820 = vmatmul.mubr.f32.gmra.mrb[0].mxu0 %v819
      %v821 = vpop.f32.mrb[0].mxu0
      %v822 = vadd.f32 %v372, %v821
      %v823 = vpop.f32.mrb[0].mxu0
      %824 = vmatprep.mubr.f32.mxu0 0.0
      %v825 = vand.u32 %v439, 4294901760
      %v826 = vsub.f32 %v439, %v825
      %v827 = vand.u32 %v826, 4294901760
      %v828 = vsub.f32 %v826, %v827
      %v829 = vand.u32 %v828, 4294901760
      %830 = vmatmul.mubr.f32.gmra.mrb[0].mxu0 %v829
      %v831 = vpop.f32.mrb[0].mxu0
      %v832 = vadd.f32 %v372, %v831
      %v833 = vpop.f32.mrb[0].mxu0
      %834 = vmatprep.mubr.f32.mxu0 0.0
      %v835 = vand.u32 %v442, 4294901760
      %v836 = vsub.f32 %v442, %v835
      %v837 = vand.u32 %v836, 4294901760
      %v838 = vsub.f32 %v836, %v837
      %v839 = vand.u32 %v838, 4294901760
      %840 = vmatmul.mubr.f32.gmra.mrb[0].mxu0 %v839
      %v841 = vpop.f32.mrb[0].mxu0
      %v842 = vadd.f32 %v372, %v841
      %v843 = vpop.f32.mrb[0].mxu0
      %844 = vmatprep.mubr.f32.mxu0 0.0
      %v845 = vand.u32 %v445, 4294901760
      %v846 = vsub.f32 %v445, %v845
      %v847 = vand.u32 %v846, 4294901760
      %v848 = vsub.f32 %v846, %v847
      %v849 = vand.u32 %v848, 4294901760
      %850 = vmatmul.mubr.f32.gmra.mrb[0].mxu0 %v849
      %v851 = vpop.f32.mrb[0].mxu0
      %v852 = vadd.f32 %v372, %v851
      %v853 = vpop.f32.mrb[0].mxu0
      %854 = vmatprep.mubr.f32.mxu0 0.0
      %v855 = vand.u32 %v448, 4294901760
      %v856 = vsub.f32 %v448, %v855
      %v857 = vand.u32 %v856, 4294901760
      %v858 = vsub.f32 %v856, %v857
      %v859 = vand.u32 %v858, 4294901760
      %860 = vmatmul.mubr.f32.gmra.mrb[0].mxu0 %v859
      %v861 = vpop.f32.mrb[0].mxu0
      %v862 = vadd.f32 %v372, %v861
      %v863 = vpop.f32.mrb[0].mxu0
      %864 = vmatprep.mubr.f32.mxu0 0.0
      %v865 = vand.u32 %v451, 4294901760
      %v866 = vsub.f32 %v451, %v865
      %v867 = vand.u32 %v866, 4294901760
      %v868 = vsub.f32 %v866, %v867
      %v869 = vand.u32 %v868, 4294901760
      %870 = vmatmul.mubr.f32.gmra.mrb[0].mxu0 %v869
      %v871 = vpop.f32.mrb[0].mxu0
      %v872 = vadd.f32 %v372, %v871
      %v873 = vpop.f32.mrb[0].mxu0
      %874 = vmatprep.mubr.f32.mxu0 0.0
      %v875 = vand.u32 %v454, 4294901760
      %v876 = vsub.f32 %v454, %v875
      %v877 = vand.u32 %v876, 4294901760
      %v878 = vsub.f32 %v876, %v877
      %v879 = vand.u32 %v878, 4294901760
      %880 = vmatmul.mubr.f32.gmra.mrb[0].mxu0 %v879
      %v881 = vpop.f32.mrb[0].mxu0
      %v882 = vadd.f32 %v372, %v881
      %v883 = vpop.f32.mrb[0].mxu0
      %884 = vmatprep.mubr.f32.mxu0 0.0
      %v885 = vand.u32 %v457, 4294901760
      %v886 = vsub.f32 %v457, %v885
      %v887 = vand.u32 %v886, 4294901760
      %v888 = vsub.f32 %v886, %v887
      %v889 = vand.u32 %v888, 4294901760
      %890 = vmatmul.mubr.f32.gmra.mrb[0].mxu0 %v889
      %v891 = vpop.f32.mrb[0].mxu0
      %v892 = vadd.f32 %v372, %v891
      %v893 = vpop.f32.mrb[0].mxu0
      %894 = vmatprep.mubr.f32.mxu0 0.0
      %v895 = vand.u32 %v460, 4294901760
      %v896 = vsub.f32 %v460, %v895
      %v897 = vand.u32 %v896, 4294901760
      %v898 = vsub.f32 %v896, %v897
      %v899 = vand.u32 %v898, 4294901760
      %900 = vmatmul.mubr.f32.gmra.mrb[0].mxu0 %v899
      %v901 = vpop.f32.mrb[0].mxu0
      %v902 = vadd.f32 %v372, %v901
      %v903 = vpop.f32.mrb[0].mxu0
      %904 = vmatprep.mubr.f32.mxu0 0.0
      %v905 = vand.u32 %v463, 4294901760
      %v906 = vsub.f32 %v463, %v905
      %v907 = vand.u32 %v906, 4294901760
      %v908 = vsub.f32 %v906, %v907
      %v909 = vand.u32 %v908, 4294901760
      %910 = vmatmul.mubr.f32.gmra.mrb[0].mxu0 %v909
      %v911 = vpop.f32.mrb[0].mxu0
      %v912 = vadd.f32 %v372, %v911
      %v913 = vpop.f32.mrb[0].mxu0
      %914 = vmatprep.mubr.f32.mxu0 0.0
      %v915 = vand.u32 %v466, 4294901760
      %v916 = vsub.f32 %v466, %v915
      %v917 = vand.u32 %v916, 4294901760
      %v918 = vsub.f32 %v916, %v917
      %v919 = vand.u32 %v918, 4294901760
      %920 = vmatmul.mubr.f32.gmra.mrb[0].mxu0 %v919
      %v921 = vpop.f32.mrb[0].mxu0
      %v922 = vadd.f32 %v372, %v921
      %v923 = vpop.f32.mrb[0].mxu0
      %924 = vmatprep.mubr.f32.mxu0 0.0
      %v925 = vand.u32 %v469, 4294901760
      %v926 = vsub.f32 %v469, %v925
      %v927 = vand.u32 %v926, 4294901760
      %v928 = vsub.f32 %v926, %v927
      %v929 = vand.u32 %v928, 4294901760
      %930 = vmatmul.mubr.f32.gmra.mrb[0].mxu0 %v929
      %v931 = vpop.f32.mrb[0].mxu0
      %v932 = vadd.f32 %v372, %v931
      %v933 = vpop.f32.mrb[0].mxu0
      %934 = vmatprep.mubr.f32.mxu0 0.0
      %v935 = vand.u32 %v472, 4294901760
      %v936 = vsub.f32 %v472, %v935
      %v937 = vand.u32 %v936, 4294901760
      %v938 = vsub.f32 %v936, %v937
      %v939 = vand.u32 %v938, 4294901760
      %940 = vmatmul.mubr.f32.gmra.mrb[0].mxu0 %v939
      %v941 = vpop.f32.mrb[0].mxu0
      %v942 = vadd.f32 %v372, %v941
      %v943 = vpop.f32.mrb[0].mxu0
      %944 = vmatprep.mubr.f32.mxu0 0.0
      %v945 = vand.u32 %v475, 4294901760
      %v946 = vsub.f32 %v475, %v945
      %v947 = vand.u32 %v946, 4294901760
      %v948 = vsub.f32 %v946, %v947
      %v949 = vand.u32 %v948, 4294901760
      %950 = vmatmul.mubr.f32.gmra.mrb[0].mxu0 %v949
      %v951 = vpop.f32.mrb[0].mxu0
      %v952 = vadd.f32 %v372, %v951
      %v953 = vpop.f32.mrb[0].mxu0
      %954 = vmatprep.mubr.f32.mxu0 0.0
      %v955 = vand.u32 %v478, 4294901760
      %v956 = vsub.f32 %v478, %v955
      %v957 = vand.u32 %v956, 4294901760
      %v958 = vsub.f32 %v956, %v957
      %v959 = vand.u32 %v958, 4294901760
      %960 = vmatmul.mubr.f32.gmra.mrb[0].mxu0 %v959
      %v961 = vpop.f32.mrb[0].mxu0
      %v962 = vadd.f32 %v372, %v961
      %v963 = vpop.f32.mrb[0].mxu0
      %964 = vmatprep.mubr.f32.mxu0 0.0
      %v965 = vand.u32 %v481, 4294901760
      %v966 = vsub.f32 %v481, %v965
      %v967 = vand.u32 %v966, 4294901760
      %v968 = vsub.f32 %v966, %v967
      %v969 = vand.u32 %v968, 4294901760
      %970 = vmatmul.mubr.f32.gmra.mrb[0].mxu0 %v969
      %v971 = vpop.f32.mrb[0].mxu0
      %v972 = vadd.f32 %v372, %v971
      %v973 = vpop.f32.mrb[0].mxu0
      %974 = vmatprep.mubr.f32.mxu0 0.0
      %v975 = vand.u32 %v484, 4294901760
      %v976 = vsub.f32 %v484, %v975
      %v977 = vand.u32 %v976, 4294901760
      %v978 = vsub.f32 %v976, %v977
      %v979 = vand.u32 %v978, 4294901760
      %980 = vmatmul.mubr.f32.gmra.mrb[0].mxu0 %v979
      %v981 = vpop.f32.mrb[0].mxu0
      %v982 = vadd.f32 %v372, %v981
      %v983 = vpop.f32.mrb[0].mxu0
      %984 = vmatprep.mubr.f32.mxu0 0.0
      %v985 = vand.u32 %v487, 4294901760
      %v986 = vsub.f32 %v487, %v985
      %v987 = vand.u32 %v986, 4294901760
      %v988 = vsub.f32 %v986, %v987
      %v989 = vand.u32 %v988, 4294901760
      %990 = vmatmul.mubr.f32.gmra.mrb[0].mxu0 %v989
      %v991 = vpop.f32.mrb[0].mxu0
      %v992 = vadd.f32 %v372, %v991
      %v993 = vpop.f32.mrb[0].mxu0
      %994 = vmatprep.mubr.f32.mxu0 0.0
      %v995 = vand.u32 %v490, 4294901760
      %v996 = vsub.f32 %v490, %v995
      %v997 = vand.u32 %v996, 4294901760
      %v998 = vsub.f32 %v996, %v997
      %v999 = vand.u32 %v998, 4294901760
      %1000 = vmatmul.mubr.f32.gmra.mrb[0].mxu0 %v999
      %v1001 = vpop.f32.mrb[0].mxu0
      %v1002 = vadd.f32 %v372, %v1001
      %v1003 = vpop.f32.mrb[0].mxu0
      %1004 = vmatprep.mubr.f32.mxu0 0.0
      %v1005 = vand.u32 %v493, 4294901760
      %v1006 = vsub.f32 %v493, %v1005
      %v1007 = vand.u32 %v1006, 4294901760
      %v1008 = vsub.f32 %v1006, %v1007
      %v1009 = vand.u32 %v1008, 4294901760
      %1010 = vmatmul.mubr.f32.gmra.mrb[0].mxu0 %v1009
      %v1011 = vpop.f32.mrb[0].mxu0
      %v1012 = vadd.f32 %v372, %v1011
      %v1013 = vpop.f32.mrb[0].mxu0
      %1014 = vmatprep.mubr.f32.mxu0 0.0
      %v1015 = vand.u32 %v496, 4294901760
      %v1016 = vsub.f32 %v496, %v1015
      %v1017 = vand.u32 %v1016, 4294901760
      %v1018 = vsub.f32 %v1016, %v1017
      %v1019 = vand.u32 %v1018, 4294901760
      %1020 = vmatmul.mubr.f32.gmra.mrb[0].mxu0 %v1019
      %v1021 = vpop.f32.mrb[0].mxu0
      %v1022 = vadd.f32 %v372, %v1021
      %v1023 = vpop.f32.mrb[0].mxu0
      %1024 = vmatprep.mubr.f32.mxu0 0.0
      %v1025 = vand.u32 %v499, 4294901760
      %v1026 = vsub.f32 %v499, %v1025
      %v1027 = vand.u32 %v1026, 4294901760
      %v1028 = vsub.f32 %v1026, %v1027
      %v1029 = vand.u32 %v1028, 4294901760
      %1030 = vmatmul.mubr.f32.gmra.mrb[0].mxu0 %v1029
      %v1031 = vpop.f32.mrb[0].mxu0
      %v1032 = vadd.f32 %v372, %v1031
      %v1033 = vpop.f32.mrb[0].mxu0
      %1034 = vmatprep.mubr.f32.mxu0 0.0
      %v1035 = vand.u32 %v502, 4294901760
      %v1036 = vsub.f32 %v502, %v1035
      %v1037 = vand.u32 %v1036, 4294901760
      %v1038 = vsub.f32 %v1036, %v1037
      %v1039 = vand.u32 %v1038, 4294901760
      %1040 = vmatmul.mubr.f32.gmra.mrb[0].mxu0 %v1039
      %v1041 = vpop.f32.mrb[0].mxu0
      %v1042 = vadd.f32 %v372, %v1041
      %v1043 = vpop.f32.mrb[0].mxu0
      %1044 = vmatprep.mubr.f32.mxu0 0.0
      %v1045 = vand.u32 %v505, 4294901760
      %v1046 = vsub.f32 %v505, %v1045
      %v1047 = vand.u32 %v1046, 4294901760
      %v1048 = vsub.f32 %v1046, %v1047
      %v1049 = vand.u32 %v1048, 4294901760
      %1050 = vmatmul.mubr.f32.gmra.mrb[0].mxu0 %v1049
      %v1051 = vpop.f32.mrb[0].mxu0
      %v1052 = vadd.f32 %v372, %v1051
      %v1053 = vpop.f32.mrb[0].mxu0
      %1054 = vmatprep.mubr.f32.mxu0 0.0
      %v1055 = vand.u32 %v508, 4294901760
      %v1056 = vsub.f32 %v508, %v1055
      %v1057 = vand.u32 %v1056, 4294901760
      %v1058 = vsub.f32 %v1056, %v1057
      %v1059 = vand.u32 %v1058, 4294901760
      %1060 = vmatmul.mubr.f32.gmra.mrb[0].mxu0 %v1059
      %v1061 = vpop.f32.mrb[0].mxu0
      %v1062 = vadd.f32 %v372, %v1061
      %v1063 = vpop.f32.mrb[0].mxu0
      %1064 = vmatprep.mubr.f32.mxu0 0.0
      %v1065 = vand.u32 %v511, 4294901760
      %v1066 = vsub.f32 %v511, %v1065
      %v1067 = vand.u32 %v1066, 4294901760
      %v1068 = vsub.f32 %v1066, %v1067
      %v1069 = vand.u32 %v1068, 4294901760
      %1070 = vmatmul.mubr.f32.gmra.mrb[0].mxu0 %v1069
      %v1071 = vpop.f32.mrb[0].mxu0
      %v1072 = vadd.f32 %v372, %v1071
      %v1073 = vpop.f32.mrb[0].mxu0
      %1074 = vmatprep.mubr.f32.mxu0 0.0
      %v1075 = vand.u32 %v514, 4294901760
      %v1076 = vsub.f32 %v514, %v1075
      %v1077 = vand.u32 %v1076, 4294901760
      %v1078 = vsub.f32 %v1076, %v1077
      %v1079 = vand.u32 %v1078, 4294901760
      %1080 = vmatmul.mubr.f32.gmra.mrb[0].mxu0 %v1079
      %v1081 = vpop.f32.mrb[0].mxu0
      %v1082 = vadd.f32 %v372, %v1081
      %v1083 = vpop.f32.mrb[0].mxu0
      %1084 = vmatprep.mubr.f32.mxu0 0.0
      %v1085 = vand.u32 %v517, 4294901760
      %v1086 = vsub.f32 %v517, %v1085
      %v1087 = vand.u32 %v1086, 4294901760
      %v1088 = vsub.f32 %v1086, %v1087
      %v1089 = vand.u32 %v1088, 4294901760
      %1090 = vmatmul.mubr.f32.gmra.mrb[0].mxu0 %v1089
      %v1091 = vpop.f32.mrb[0].mxu0
      %v1092 = vadd.f32 %v372, %v1091
      %v1093 = vpop.f32.mrb[0].mxu0
      %1094 = vmatprep.mubr.f32.mxu0 0.0
      %v1095 = vand.u32 %v520, 4294901760
      %v1096 = vsub.f32 %v520, %v1095
      %v1097 = vand.u32 %v1096, 4294901760
      %v1098 = vsub.f32 %v1096, %v1097
      %v1099 = vand.u32 %v1098, 4294901760
      %1100 = vmatmul.mubr.f32.gmra.mrb[0].mxu0 %v1099
      %v1101 = vpop.f32.mrb[0].mxu0
      %v1102 = vadd.f32 %v372, %v1101
      %v1103 = vpop.f32.mrb[0].mxu0
      %1104 = vmatprep.mubr.f32.mxu0 0.0
      %v1105 = vand.u32 %v523, 4294901760
      %v1106 = vsub.f32 %v523, %v1105
      %v1107 = vand.u32 %v1106, 4294901760
      %v1108 = vsub.f32 %v1106, %v1107
      %v1109 = vand.u32 %v1108, 4294901760
      %1110 = vmatmul.mubr.f32.gmra.mrb[0].mxu0 %v1109
      %v1111 = vpop.f32.mrb[0].mxu0
      %v1112 = vadd.f32 %v372, %v1111
      %v1113 = vpop.f32.mrb[0].mxu0
      %1114 = vmatprep.mubr.f32.mxu0 0.0
      %v1115 = vand.u32 %v526, 4294901760
      %v1116 = vsub.f32 %v526, %v1115
      %v1117 = vand.u32 %v1116, 4294901760
      %v1118 = vsub.f32 %v1116, %v1117
      %v1119 = vand.u32 %v1118, 4294901760
      %1120 = vmatmul.mubr.f32.gmra.mrb[0].mxu0 %v1119
      %v1121 = vpop.f32.mrb[0].mxu0
      %v1122 = vadd.f32 %v372, %v1121
      %v1123 = vpop.f32.mrb[0].mxu0
      %1124 = vmatprep.mubr.f32.mxu0 0.0
      %v1125 = vand.u32 %v529, 4294901760
      %v1126 = vsub.f32 %v529, %v1125
      %v1127 = vand.u32 %v1126, 4294901760
      %v1128 = vsub.f32 %v1126, %v1127
      %v1129 = vand.u32 %v1128, 4294901760
      %1130 = vmatmul.mubr.f32.gmra.mrb[0].mxu0 %v1129
      %v1131 = vpop.f32.mrb[0].mxu0
      %v1132 = vadd.f32 %v372, %v1131
      %v1133 = vpop.f32.mrb[0].mxu0
      %1134 = vmatprep.mubr.f32.mxu0 0.0
      %v1135 = vand.u32 %v532, 4294901760
      %v1136 = vsub.f32 %v532, %v1135
      %v1137 = vand.u32 %v1136, 4294901760
      %v1138 = vsub.f32 %v1136, %v1137
      %v1139 = vand.u32 %v1138, 4294901760
      %1140 = vmatmul.mubr.f32.gmra.mrb[0].mxu0 %v1139
      %v1141 = vpop.f32.mrb[0].mxu0
      %v1142 = vadd.f32 %v372, %v1141
      %v1143 = vpop.f32.mrb[0].mxu0
      %1144 = vmatprep.mubr.f32.mxu0 0.0
      %v1145 = vand.u32 %v535, 4294901760
      %v1146 = vsub.f32 %v535, %v1145
      %v1147 = vand.u32 %v1146, 4294901760
      %v1148 = vsub.f32 %v1146, %v1147
      %v1149 = vand.u32 %v1148, 4294901760
      %1150 = vmatmul.mubr.f32.gmra.mrb[0].mxu0 %v1149
      %v1151 = vpop.f32.mrb[0].mxu0
      %v1152 = vadd.f32 %v372, %v1151
      %v1153 = vpop.f32.mrb[0].mxu0
      %1154 = vmatprep.mubr.f32.mxu0 0.0
      %v1155 = vand.u32 %v538, 4294901760
      %v1156 = vsub.f32 %v538, %v1155
      %v1157 = vand.u32 %v1156, 4294901760
      %v1158 = vsub.f32 %v1156, %v1157
      %v1159 = vand.u32 %v1158, 4294901760
      %1160 = vmatmul.mubr.f32.gmra.mrb[0].mxu0 %v1159
      %v1161 = vpop.f32.mrb[0].mxu0
      %v1162 = vadd.f32 %v372, %v1161
      %v1163 = vpop.f32.mrb[0].mxu0
      %1164 = vmatprep.mubr.f32.mxu0 0.0
      %v1165 = vand.u32 %v541, 4294901760
      %v1166 = vsub.f32 %v541, %v1165
      %v1167 = vand.u32 %v1166, 4294901760
      %v1168 = vsub.f32 %v1166, %v1167
      %v1169 = vand.u32 %v1168, 4294901760
      %1170 = vmatmul.mubr.f32.gmra.mrb[0].mxu0 %v1169
      %v1171 = vpop.f32.mrb[0].mxu0
      %v1172 = vadd.f32 %v372, %v1171
      %v1173 = vpop.f32.mrb[0].mxu0
      %1174 = vmatprep.mubr.f32.mxu0 0.0
      %v1175 = vand.u32 %v544, 4294901760
      %v1176 = vsub.f32 %v544, %v1175
      %v1177 = vand.u32 %v1176, 4294901760
      %v1178 = vsub.f32 %v1176, %v1177
      %v1179 = vand.u32 %v1178, 4294901760
      %1180 = vmatmul.mubr.f32.gmra.mrb[0].mxu0 %v1179
      %v1181 = vpop.f32.mrb[0].mxu0
      %v1182 = vadd.f32 %v372, %v1181
      %v1183 = vpop.f32.mrb[0].mxu0
      %1184 = vdwg.mxu0
      %1185 = vmatprep.subr.mxu0 0.0
      %v1186 = vand.u32 %v363, 4294901760
      %v1187 = vsub.f32 %v363, %v1186
      %v1188 = vand.u32 %v1187, 4294901760
      %v1189 = vsub.f32 %v1187, %v1188
      %v1190 = vand.u32 %v1189, 4294901760
      %1191 = vmatpush1.msra.mxu0 %v1190
      %1192 = vmatprep.subr.mxu0 0.0
      %v1193 = vand.u32 %v364, 4294901760
      %v1194 = vsub.f32 %v364, %v1193
      %v1195 = vand.u32 %v1194, 4294901760
      %v1196 = vsub.f32 %v1194, %v1195
      %v1197 = vand.u32 %v1196, 4294901760
      %1198 = vmatpush1.msra.mxu0 %v1197
      %1199 = vmatprep.subr.mxu0 0.0
      %v1200 = vand.u32 %v365, 4294901760
      %v1201 = vsub.f32 %v365, %v1200
      %v1202 = vand.u32 %v1201, 4294901760
      %v1203 = vsub.f32 %v1201, %v1202
      %v1204 = vand.u32 %v1203, 4294901760
      %1205 = vmatpush1.msra.mxu0 %v1204
      %1206 = vmatprep.subr.mxu0 0.0
      %v1207 = vand.u32 %v366, 4294901760
      %v1208 = vsub.f32 %v366, %v1207
      %v1209 = vand.u32 %v1208, 4294901760
      %v1210 = vsub.f32 %v1208, %v1209
      %v1211 = vand.u32 %v1210, 4294901760
      %1212 = vmatpush1.msra.mxu0 %v1211
      %1213 = vmatprep.subr.mxu0 0.0
      %1214 = vmatpush1.msra.mxu0 0.0
      %1215 = vmatprep.subr.mxu0 0.0
      %1216 = vmatpush1.msra.mxu0 0.0
      %1217 = vmatprep.subr.mxu0 0.0
      %1218 = vmatpush1.msra.mxu0 0.0
      %1219 = vmatprep.subr.mxu0 0.0
      %1220 = vmatpush1.msra.mxu0 0.0
      %1221 = vmatprep.subr.mxu0 0.0
      %1222 = vmatpush1.msra.mxu0 0.0
      %1223 = vmatprep.subr.mxu0 0.0
      %1224 = vmatpush1.msra.mxu0 0.0
      %1225 = vmatprep.subr.mxu0 0.0
      %1226 = vmatpush1.msra.mxu0 0.0
      %1227 = vmatprep.subr.mxu0 0.0
      %1228 = vmatpush1.msra.mxu0 0.0
      %1229 = vmatprep.subr.mxu0 0.0
      %1230 = vmatpush1.msra.mxu0 0.0
      %1231 = vmatprep.subr.mxu0 0.0
      %1232 = vmatpush1.msra.mxu0 0.0
      %1233 = vmatprep.subr.mxu0 0.0
      %1234 = vmatpush1.msra.mxu0 0.0
      %1235 = vmatprep.subr.mxu0 0.0
      %1236 = vmatpush1.msra.mxu0 0.0
      %1237 = vmatprep.subr.mxu0 0.0
      %1238 = vmatpush1.msra.mxu0 0.0
      %1239 = vmatprep.subr.mxu0 0.0
      %1240 = vmatpush1.msra.mxu0 0.0
      %1241 = vmatprep.subr.mxu0 0.0
      %1242 = vmatpush1.msra.mxu0 0.0
      %1243 = vmatprep.subr.mxu0 0.0
      %1244 = vmatpush1.msra.mxu0 0.0
      %1245 = vmatprep.subr.mxu0 0.0
      %1246 = vmatpush1.msra.mxu0 0.0
      %1247 = vmatprep.subr.mxu0 0.0
      %1248 = vmatpush1.msra.mxu0 0.0
      %1249 = vmatprep.subr.mxu0 0.0
      %1250 = vmatpush1.msra.mxu0 0.0
      %1251 = vmatprep.subr.mxu0 0.0
      %1252 = vmatpush1.msra.mxu0 0.0
      %1253 = vmatprep.subr.mxu0 0.0
      %1254 = vmatpush1.msra.mxu0 0.0
      %1255 = vmatprep.subr.mxu0 0.0
      %1256 = vmatpush1.msra.mxu0 0.0
      %1257 = vmatprep.subr.mxu0 0.0
      %1258 = vmatpush1.msra.mxu0 0.0
      %1259 = vmatprep.subr.mxu0 0.0
      %1260 = vmatpush1.msra.mxu0 0.0
      %1261 = vmatprep.subr.mxu0 0.0
      %1262 = vmatpush1.msra.mxu0 0.0
      %1263 = vmatprep.subr.mxu0 0.0
      %1264 = vmatpush1.msra.mxu0 0.0
      %1265 = vmatprep.subr.mxu0 0.0
      %1266 = vmatpush1.msra.mxu0 0.0
      %1267 = vmatprep.subr.mxu0 0.0
      %1268 = vmatpush1.msra.mxu0 0.0
      %1269 = vmatprep.mubr.f32.mxu0 0.0
      %v1270 = vand.u32 %v376, 4294901760
      %1271 = vmatmul.mubr.f32.gmra.mrb[0].mxu0 %v1270
      %v1272 = vpop.f32.mrb[0].mxu0
      %v1273 = vadd.f32 %v622, %v1272
      %v1274 = vpop.f32.mrb[0].mxu0
      %1275 = vmatprep.mubr.f32.mxu0 0.0
      %v1276 = vand.u32 %v379, 4294901760
      %1277 = vmatmul.mubr.f32.gmra.mrb[0].mxu0 %v1276
      %v1278 = vpop.f32.mrb[0].mxu0
      %v1279 = vadd.f32 %v632, %v1278
      %v1280 = vpop.f32.mrb[0].mxu0
      %1281 = vmatprep.mubr.f32.mxu0 0.0
      %v1282 = vand.u32 %v382, 4294901760
      %1283 = vmatmul.mubr.f32.gmra.mrb[0].mxu0 %v1282
      %v1284 = vpop.f32.mrb[0].mxu0
      %v1285 = vadd.f32 %v642, %v1284
      %v1286 = vpop.f32.mrb[0].mxu0
      %1287 = vmatprep.mubr.f32.mxu0 0.0
      %v1288 = vand.u32 %v385, 4294901760
      %1289 = vmatmul.mubr.f32.gmra.mrb[0].mxu0 %v1288
      %v1290 = vpop.f32.mrb[0].mxu0
      %v1291 = vadd.f32 %v652, %v1290
      %v1292 = vpop.f32.mrb[0].mxu0
      %1293 = vmatprep.mubr.f32.mxu0 0.0
      %v1294 = vand.u32 %v388, 4294901760
      %1295 = vmatmul.mubr.f32.gmra.mrb[0].mxu0 %v1294
      %v1296 = vpop.f32.mrb[0].mxu0
      %v1297 = vadd.f32 %v662, %v1296
      %v1298 = vpop.f32.mrb[0].mxu0
      %1299 = vmatprep.mubr.f32.mxu0 0.0
      %v1300 = vand.u32 %v391, 4294901760
      %1301 = vmatmul.mubr.f32.gmra.mrb[0].mxu0 %v1300
      %v1302 = vpop.f32.mrb[0].mxu0
      %v1303 = vadd.f32 %v672, %v1302
      %v1304 = vpop.f32.mrb[0].mxu0
      %1305 = vmatprep.mubr.f32.mxu0 0.0
      %v1306 = vand.u32 %v394, 4294901760
      %1307 = vmatmul.mubr.f32.gmra.mrb[0].mxu0 %v1306
      %v1308 = vpop.f32.mrb[0].mxu0
      %v1309 = vadd.f32 %v682, %v1308
      %v1310 = vpop.f32.mrb[0].mxu0
      %1311 = vmatprep.mubr.f32.mxu0 0.0
      %v1312 = vand.u32 %v397, 4294901760
      %1313 = vmatmul.mubr.f32.gmra.mrb[0].mxu0 %v1312
      %v1314 = vpop.f32.mrb[0].mxu0
      %v1315 = vadd.f32 %v692, %v1314
      %v1316 = vpop.f32.mrb[0].mxu0
      %1317 = vmatprep.mubr.f32.mxu0 0.0
      %v1318 = vand.u32 %v400, 4294901760
      %1319 = vmatmul.mubr.f32.gmra.mrb[0].mxu0 %v1318
      %v1320 = vpop.f32.mrb[0].mxu0
      %v1321 = vadd.f32 %v702, %v1320
      %v1322 = vpop.f32.mrb[0].mxu0
      %1323 = vmatprep.mubr.f32.mxu0 0.0
      %v1324 = vand.u32 %v403, 4294901760
      %1325 = vmatmul.mubr.f32.gmra.mrb[0].mxu0 %v1324
      %v1326 = vpop.f32.mrb[0].mxu0
      %v1327 = vadd.f32 %v712, %v1326
      %v1328 = vpop.f32.mrb[0].mxu0
      %1329 = vmatprep.mubr.f32.mxu0 0.0
      %v1330 = vand.u32 %v406, 4294901760
      %1331 = vmatmul.mubr.f32.gmra.mrb[0].mxu0 %v1330
      %v1332 = vpop.f32.mrb[0].mxu0
      %v1333 = vadd.f32 %v722, %v1332
      %v1334 = vpop.f32.mrb[0].mxu0
      %1335 = vmatprep.mubr.f32.mxu0 0.0
      %v1336 = vand.u32 %v409, 4294901760
      %1337 = vmatmul.mubr.f32.gmra.mrb[0].mxu0 %v1336
      %v1338 = vpop.f32.mrb[0].mxu0
      %v1339 = vadd.f32 %v732, %v1338
      %v1340 = vpop.f32.mrb[0].mxu0
      %1341 = vmatprep.mubr.f32.mxu0 0.0
      %v1342 = vand.u32 %v412, 4294901760
      %1343 = vmatmul.mubr.f32.gmra.mrb[0].mxu0 %v1342
      %v1344 = vpop.f32.mrb[0].mxu0
      %v1345 = vadd.f32 %v742, %v1344
      %v1346 = vpop.f32.mrb[0].mxu0
      %1347 = vmatprep.mubr.f32.mxu0 0.0
      %v1348 = vand.u32 %v415, 4294901760
      %1349 = vmatmul.mubr.f32.gmra.mrb[0].mxu0 %v1348
      %v1350 = vpop.f32.mrb[0].mxu0
      %v1351 = vadd.f32 %v752, %v1350
      %v1352 = vpop.f32.mrb[0].mxu0
      %1353 = vmatprep.mubr.f32.mxu0 0.0
      %v1354 = vand.u32 %v418, 4294901760
      %1355 = vmatmul.mubr.f32.gmra.mrb[0].mxu0 %v1354
      %v1356 = vpop.f32.mrb[0].mxu0
      %v1357 = vadd.f32 %v762, %v1356
      %v1358 = vpop.f32.mrb[0].mxu0
      %1359 = vmatprep.mubr.f32.mxu0 0.0
      %v1360 = vand.u32 %v421, 4294901760
      %1361 = vmatmul.mubr.f32.gmra.mrb[0].mxu0 %v1360
      %v1362 = vpop.f32.mrb[0].mxu0
      %v1363 = vadd.f32 %v772, %v1362
      %v1364 = vpop.f32.mrb[0].mxu0
      %1365 = vmatprep.mubr.f32.mxu0 0.0
      %v1366 = vand.u32 %v424, 4294901760
      %1367 = vmatmul.mubr.f32.gmra.mrb[0].mxu0 %v1366
      %v1368 = vpop.f32.mrb[0].mxu0
      %v1369 = vadd.f32 %v782, %v1368
      %v1370 = vpop.f32.mrb[0].mxu0
      %1371 = vmatprep.mubr.f32.mxu0 0.0
      %v1372 = vand.u32 %v427, 4294901760
      %1373 = vmatmul.mubr.f32.gmra.mrb[0].mxu0 %v1372
      %v1374 = vpop.f32.mrb[0].mxu0
      %v1375 = vadd.f32 %v792, %v1374
      %v1376 = vpop.f32.mrb[0].mxu0
      %1377 = vmatprep.mubr.f32.mxu0 0.0
      %v1378 = vand.u32 %v430, 4294901760
      %1379 = vmatmul.mubr.f32.gmra.mrb[0].mxu0 %v1378
      %v1380 = vpop.f32.mrb[0].mxu0
      %v1381 = vadd.f32 %v802, %v1380
      %v1382 = vpop.f32.mrb[0].mxu0
      %1383 = vmatprep.mubr.f32.mxu0 0.0
      %v1384 = vand.u32 %v433, 4294901760
      %1385 = vmatmul.mubr.f32.gmra.mrb[0].mxu0 %v1384
      %v1386 = vpop.f32.mrb[0].mxu0
      %v1387 = vadd.f32 %v812, %v1386
      %v1388 = vpop.f32.mrb[0].mxu0
      %1389 = vmatprep.mubr.f32.mxu0 0.0
      %v1390 = vand.u32 %v436, 4294901760
      %1391 = vmatmul.mubr.f32.gmra.mrb[0].mxu0 %v1390
      %v1392 = vpop.f32.mrb[0].mxu0
      %v1393 = vadd.f32 %v822, %v1392
      %v1394 = vpop.f32.mrb[0].mxu0
      %1395 = vmatprep.mubr.f32.mxu0 0.0
      %v1396 = vand.u32 %v439, 4294901760
      %1397 = vmatmul.mubr.f32.gmra.mrb[0].mxu0 %v1396
      %v1398 = vpop.f32.mrb[0].mxu0
      %v1399 = vadd.f32 %v832, %v1398
      %v1400 = vpop.f32.mrb[0].mxu0
      %1401 = vmatprep.mubr.f32.mxu0 0.0
      %v1402 = vand.u32 %v442, 4294901760
      %1403 = vmatmul.mubr.f32.gmra.mrb[0].mxu0 %v1402
      %v1404 = vpop.f32.mrb[0].mxu0
      %v1405 = vadd.f32 %v842, %v1404
      %v1406 = vpop.f32.mrb[0].mxu0
      %1407 = vmatprep.mubr.f32.mxu0 0.0
      %v1408 = vand.u32 %v445, 4294901760
      %1409 = vmatmul.mubr.f32.gmra.mrb[0].mxu0 %v1408
      %v1410 = vpop.f32.mrb[0].mxu0
      %v1411 = vadd.f32 %v852, %v1410
      %v1412 = vpop.f32.mrb[0].mxu0
      %1413 = vmatprep.mubr.f32.mxu0 0.0
      %v1414 = vand.u32 %v448, 4294901760
      %1415 = vmatmul.mubr.f32.gmra.mrb[0].mxu0 %v1414
      %v1416 = vpop.f32.mrb[0].mxu0
      %v1417 = vadd.f32 %v862, %v1416
      %v1418 = vpop.f32.mrb[0].mxu0
      %1419 = vmatprep.mubr.f32.mxu0 0.0
      %v1420 = vand.u32 %v451, 4294901760
      %1421 = vmatmul.mubr.f32.gmra.mrb[0].mxu0 %v1420
      %v1422 = vpop.f32.mrb[0].mxu0
      %v1423 = vadd.f32 %v872, %v1422
      %v1424 = vpop.f32.mrb[0].mxu0
      %1425 = vmatprep.mubr.f32.mxu0 0.0
      %v1426 = vand.u32 %v454, 4294901760
      %1427 = vmatmul.mubr.f32.gmra.mrb[0].mxu0 %v1426
      %v1428 = vpop.f32.mrb[0].mxu0
      %v1429 = vadd.f32 %v882, %v1428
      %v1430 = vpop.f32.mrb[0].mxu0
      %1431 = vmatprep.mubr.f32.mxu0 0.0
      %v1432 = vand.u32 %v457, 4294901760
      %1433 = vmatmul.mubr.f32.gmra.mrb[0].mxu0 %v1432
      %v1434 = vpop.f32.mrb[0].mxu0
      %v1435 = vadd.f32 %v892, %v1434
      %v1436 = vpop.f32.mrb[0].mxu0
      %1437 = vmatprep.mubr.f32.mxu0 0.0
      %v1438 = vand.u32 %v460, 4294901760
      %1439 = vmatmul.mubr.f32.gmra.mrb[0].mxu0 %v1438
      %v1440 = vpop.f32.mrb[0].mxu0
      %v1441 = vadd.f32 %v902, %v1440
      %v1442 = vpop.f32.mrb[0].mxu0
      %1443 = vmatprep.mubr.f32.mxu0 0.0
      %v1444 = vand.u32 %v463, 4294901760
      %1445 = vmatmul.mubr.f32.gmra.mrb[0].mxu0 %v1444
      %v1446 = vpop.f32.mrb[0].mxu0
      %v1447 = vadd.f32 %v912, %v1446
      %v1448 = vpop.f32.mrb[0].mxu0
      %1449 = vmatprep.mubr.f32.mxu0 0.0
      %v1450 = vand.u32 %v466, 4294901760
      %1451 = vmatmul.mubr.f32.gmra.mrb[0].mxu0 %v1450
      %v1452 = vpop.f32.mrb[0].mxu0
      %v1453 = vadd.f32 %v922, %v1452
      %v1454 = vpop.f32.mrb[0].mxu0
      %1455 = vmatprep.mubr.f32.mxu0 0.0
      %v1456 = vand.u32 %v469, 4294901760
      %1457 = vmatmul.mubr.f32.gmra.mrb[0].mxu0 %v1456
      %v1458 = vpop.f32.mrb[0].mxu0
      %v1459 = vadd.f32 %v932, %v1458
      %v1460 = vpop.f32.mrb[0].mxu0
      %1461 = vmatprep.mubr.f32.mxu0 0.0
      %v1462 = vand.u32 %v472, 4294901760
      %1463 = vmatmul.mubr.f32.gmra.mrb[0].mxu0 %v1462
      %v1464 = vpop.f32.mrb[0].mxu0
      %v1465 = vadd.f32 %v942, %v1464
      %v1466 = vpop.f32.mrb[0].mxu0
      %1467 = vmatprep.mubr.f32.mxu0 0.0
      %v1468 = vand.u32 %v475, 4294901760
      %1469 = vmatmul.mubr.f32.gmra.mrb[0].mxu0 %v1468
      %v1470 = vpop.f32.mrb[0].mxu0
      %v1471 = vadd.f32 %v952, %v1470
      %v1472 = vpop.f32.mrb[0].mxu0
      %1473 = vmatprep.mubr.f32.mxu0 0.0
      %v1474 = vand.u32 %v478, 4294901760
      %1475 = vmatmul.mubr.f32.gmra.mrb[0].mxu0 %v1474
      %v1476 = vpop.f32.mrb[0].mxu0
      %v1477 = vadd.f32 %v962, %v1476
      %v1478 = vpop.f32.mrb[0].mxu0
      %1479 = vmatprep.mubr.f32.mxu0 0.0
      %v1480 = vand.u32 %v481, 4294901760
      %1481 = vmatmul.mubr.f32.gmra.mrb[0].mxu0 %v1480
      %v1482 = vpop.f32.mrb[0].mxu0
      %v1483 = vadd.f32 %v972, %v1482
      %v1484 = vpop.f32.mrb[0].mxu0
      %1485 = vmatprep.mubr.f32.mxu0 0.0
      %v1486 = vand.u32 %v484, 4294901760
      %1487 = vmatmul.mubr.f32.gmra.mrb[0].mxu0 %v1486
      %v1488 = vpop.f32.mrb[0].mxu0
      %v1489 = vadd.f32 %v982, %v1488
      %v1490 = vpop.f32.mrb[0].mxu0
      %1491 = vmatprep.mubr.f32.mxu0 0.0
      %v1492 = vand.u32 %v487, 4294901760
      %1493 = vmatmul.mubr.f32.gmra.mrb[0].mxu0 %v1492
      %v1494 = vpop.f32.mrb[0].mxu0
      %v1495 = vadd.f32 %v992, %v1494
      %v1496 = vpop.f32.mrb[0].mxu0
      %1497 = vmatprep.mubr.f32.mxu0 0.0
      %v1498 = vand.u32 %v490, 4294901760
      %1499 = vmatmul.mubr.f32.gmra.mrb[0].mxu0 %v1498
      %v1500 = vpop.f32.mrb[0].mxu0
      %v1501 = vadd.f32 %v1002, %v1500
      %v1502 = vpop.f32.mrb[0].mxu0
      %1503 = vmatprep.mubr.f32.mxu0 0.0
      %v1504 = vand.u32 %v493, 4294901760
      %1505 = vmatmul.mubr.f32.gmra.mrb[0].mxu0 %v1504
      %v1506 = vpop.f32.mrb[0].mxu0
      %v1507 = vadd.f32 %v1012, %v1506
      %v1508 = vpop.f32.mrb[0].mxu0
      %1509 = vmatprep.mubr.f32.mxu0 0.0
      %v1510 = vand.u32 %v496, 4294901760
      %1511 = vmatmul.mubr.f32.gmra.mrb[0].mxu0 %v1510
      %v1512 = vpop.f32.mrb[0].mxu0
      %v1513 = vadd.f32 %v1022, %v1512
      %v1514 = vpop.f32.mrb[0].mxu0
      %1515 = vmatprep.mubr.f32.mxu0 0.0
      %v1516 = vand.u32 %v499, 4294901760
      %1517 = vmatmul.mubr.f32.gmra.mrb[0].mxu0 %v1516
      %v1518 = vpop.f32.mrb[0].mxu0
      %v1519 = vadd.f32 %v1032, %v1518
      %v1520 = vpop.f32.mrb[0].mxu0
      %1521 = vmatprep.mubr.f32.mxu0 0.0
      %v1522 = vand.u32 %v502, 4294901760
      %1523 = vmatmul.mubr.f32.gmra.mrb[0].mxu0 %v1522
      %v1524 = vpop.f32.mrb[0].mxu0
      %v1525 = vadd.f32 %v1042, %v1524
      %v1526 = vpop.f32.mrb[0].mxu0
      %1527 = vmatprep.mubr.f32.mxu0 0.0
      %v1528 = vand.u32 %v505, 4294901760
      %1529 = vmatmul.mubr.f32.gmra.mrb[0].mxu0 %v1528
      %v1530 = vpop.f32.mrb[0].mxu0
      %v1531 = vadd.f32 %v1052, %v1530
      %v1532 = vpop.f32.mrb[0].mxu0
      %1533 = vmatprep.mubr.f32.mxu0 0.0
      %v1534 = vand.u32 %v508, 4294901760
      %1535 = vmatmul.mubr.f32.gmra.mrb[0].mxu0 %v1534
      %v1536 = vpop.f32.mrb[0].mxu0
      %v1537 = vadd.f32 %v1062, %v1536
      %v1538 = vpop.f32.mrb[0].mxu0
      %1539 = vmatprep.mubr.f32.mxu0 0.0
      %v1540 = vand.u32 %v511, 4294901760
      %1541 = vmatmul.mubr.f32.gmra.mrb[0].mxu0 %v1540
      %v1542 = vpop.f32.mrb[0].mxu0
      %v1543 = vadd.f32 %v1072, %v1542
      %v1544 = vpop.f32.mrb[0].mxu0
      %1545 = vmatprep.mubr.f32.mxu0 0.0
      %v1546 = vand.u32 %v514, 4294901760
      %1547 = vmatmul.mubr.f32.gmra.mrb[0].mxu0 %v1546
      %v1548 = vpop.f32.mrb[0].mxu0
      %v1549 = vadd.f32 %v1082, %v1548
      %v1550 = vpop.f32.mrb[0].mxu0
      %1551 = vmatprep.mubr.f32.mxu0 0.0
      %v1552 = vand.u32 %v517, 4294901760
      %1553 = vmatmul.mubr.f32.gmra.mrb[0].mxu0 %v1552
      %v1554 = vpop.f32.mrb[0].mxu0
      %v1555 = vadd.f32 %v1092, %v1554
      %v1556 = vpop.f32.mrb[0].mxu0
      %1557 = vmatprep.mubr.f32.mxu0 0.0
      %v1558 = vand.u32 %v520, 4294901760
      %1559 = vmatmul.mubr.f32.gmra.mrb[0].mxu0 %v1558
      %v1560 = vpop.f32.mrb[0].mxu0
      %v1561 = vadd.f32 %v1102, %v1560
      %v1562 = vpop.f32.mrb[0].mxu0
      %1563 = vmatprep.mubr.f32.mxu0 0.0
      %v1564 = vand.u32 %v523, 4294901760
      %1565 = vmatmul.mubr.f32.gmra.mrb[0].mxu0 %v1564
      %v1566 = vpop.f32.mrb[0].mxu0
      %v1567 = vadd.f32 %v1112, %v1566
      %v1568 = vpop.f32.mrb[0].mxu0
      %1569 = vmatprep.mubr.f32.mxu0 0.0
      %v1570 = vand.u32 %v526, 4294901760
      %1571 = vmatmul.mubr.f32.gmra.mrb[0].mxu0 %v1570
      %v1572 = vpop.f32.mrb[0].mxu0
      %v1573 = vadd.f32 %v1122, %v1572
      %v1574 = vpop.f32.mrb[0].mxu0
      %1575 = vmatprep.mubr.f32.mxu0 0.0
      %v1576 = vand.u32 %v529, 4294901760
      %1577 = vmatmul.mubr.f32.gmra.mrb[0].mxu0 %v1576
      %v1578 = vpop.f32.mrb[0].mxu0
      %v1579 = vadd.f32 %v1132, %v1578
      %v1580 = vpop.f32.mrb[0].mxu0
      %1581 = vmatprep.mubr.f32.mxu0 0.0
      %v1582 = vand.u32 %v532, 4294901760
      %1583 = vmatmul.mubr.f32.gmra.mrb[0].mxu0 %v1582
      %v1584 = vpop.f32.mrb[0].mxu0
      %v1585 = vadd.f32 %v1142, %v1584
      %v1586 = vpop.f32.mrb[0].mxu0
      %1587 = vmatprep.mubr.f32.mxu0 0.0
      %v1588 = vand.u32 %v535, 4294901760
      %1589 = vmatmul.mubr.f32.gmra.mrb[0].mxu0 %v1588
      %v1590 = vpop.f32.mrb[0].mxu0
      %v1591 = vadd.f32 %v1152, %v1590
      %v1592 = vpop.f32.mrb[0].mxu0
      %1593 = vmatprep.mubr.f32.mxu0 0.0
      %v1594 = vand.u32 %v538, 4294901760
      %1595 = vmatmul.mubr.f32.gmra.mrb[0].mxu0 %v1594
      %v1596 = vpop.f32.mrb[0].mxu0
      %v1597 = vadd.f32 %v1162, %v1596
      %v1598 = vpop.f32.mrb[0].mxu0
      %1599 = vmatprep.mubr.f32.mxu0 0.0
      %v1600 = vand.u32 %v541, 4294901760
      %1601 = vmatmul.mubr.f32.gmra.mrb[0].mxu0 %v1600
      %v1602 = vpop.f32.mrb[0].mxu0
      %v1603 = vadd.f32 %v1172, %v1602
      %v1604 = vpop.f32.mrb[0].mxu0
      %1605 = vmatprep.mubr.f32.mxu0 0.0
      %v1606 = vand.u32 %v544, 4294901760
      %1607 = vmatmul.mubr.f32.gmra.mrb[0].mxu0 %v1606
      %v1608 = vpop.f32.mrb[0].mxu0
      %v1609 = vadd.f32 %v1182, %v1608
      %v1610 = vpop.f32.mrb[0].mxu0
      %1611 = vdwg.mxu0
      %1612 = vmatprep.subr.mxu0 0.0
      %v1613 = vand.u32 %v363, 4294901760
      %v1614 = vsub.f32 %v363, %v1613
      %1615 = vmatpush1.msra.mxu0 %v1614
      %1616 = vmatprep.subr.mxu0 0.0
      %v1617 = vand.u32 %v364, 4294901760
      %v1618 = vsub.f32 %v364, %v1617
      %1619 = vmatpush1.msra.mxu0 %v1618
      %1620 = vmatprep.subr.mxu0 0.0
      %v1621 = vand.u32 %v365, 4294901760
      %v1622 = vsub.f32 %v365, %v1621
      %1623 = vmatpush1.msra.mxu0 %v1622
      %1624 = vmatprep.subr.mxu0 0.0
      %v1625 = vand.u32 %v366, 4294901760
      %v1626 = vsub.f32 %v366, %v1625
      %1627 = vmatpush1.msra.mxu0 %v1626
      %1628 = vmatprep.subr.mxu0 0.0
      %1629 = vmatpush1.msra.mxu0 0.0
      %1630 = vmatprep.subr.mxu0 0.0
      %1631 = vmatpush1.msra.mxu0 0.0
      %1632 = vmatprep.subr.mxu0 0.0
      %1633 = vmatpush1.msra.mxu0 0.0
      %1634 = vmatprep.subr.mxu0 0.0
      %1635 = vmatpush1.msra.mxu0 0.0
      %1636 = vmatprep.subr.mxu0 0.0
      %1637 = vmatpush1.msra.mxu0 0.0
      %1638 = vmatprep.subr.mxu0 0.0
      %1639 = vmatpush1.msra.mxu0 0.0
      %1640 = vmatprep.subr.mxu0 0.0
      %1641 = vmatpush1.msra.mxu0 0.0
      %1642 = vmatprep.subr.mxu0 0.0
      %1643 = vmatpush1.msra.mxu0 0.0
      %1644 = vmatprep.subr.mxu0 0.0
      %1645 = vmatpush1.msra.mxu0 0.0
      %1646 = vmatprep.subr.mxu0 0.0
      %1647 = vmatpush1.msra.mxu0 0.0
      %1648 = vmatprep.subr.mxu0 0.0
      %1649 = vmatpush1.msra.mxu0 0.0
      %1650 = vmatprep.subr.mxu0 0.0
      %1651 = vmatpush1.msra.mxu0 0.0
      %1652 = vmatprep.subr.mxu0 0.0
      %1653 = vmatpush1.msra.mxu0 0.0
      %1654 = vmatprep.subr.mxu0 0.0
      %1655 = vmatpush1.msra.mxu0 0.0
      %1656 = vmatprep.subr.mxu0 0.0
      %1657 = vmatpush1.msra.mxu0 0.0
      %1658 = vmatprep.subr.mxu0 0.0
      %1659 = vmatpush1.msra.mxu0 0.0
      %1660 = vmatprep.subr.mxu0 0.0
      %1661 = vmatpush1.msra.mxu0 0.0
      %1662 = vmatprep.subr.mxu0 0.0
      %1663 = vmatpush1.msra.mxu0 0.0
      %1664 = vmatprep.subr.mxu0 0.0
      %1665 = vmatpush1.msra.mxu0 0.0
      %1666 = vmatprep.subr.mxu0 0.0
      %1667 = vmatpush1.msra.mxu0 0.0
      %1668 = vmatprep.subr.mxu0 0.0
      %1669 = vmatpush1.msra.mxu0 0.0
      %1670 = vmatprep.subr.mxu0 0.0
      %1671 = vmatpush1.msra.mxu0 0.0
      %1672 = vmatprep.subr.mxu0 0.0
      %1673 = vmatpush1.msra.mxu0 0.0
      %1674 = vmatprep.subr.mxu0 0.0
      %1675 = vmatpush1.msra.mxu0 0.0
      %1676 = vmatprep.subr.mxu0 0.0
      %1677 = vmatpush1.msra.mxu0 0.0
      %1678 = vmatprep.subr.mxu0 0.0
      %1679 = vmatpush1.msra.mxu0 0.0
      %1680 = vmatprep.subr.mxu0 0.0
      %1681 = vmatpush1.msra.mxu0 0.0
      %1682 = vmatprep.subr.mxu0 0.0
      %1683 = vmatpush1.msra.mxu0 0.0
      %1684 = vmatprep.mubr.f32.mxu0 0.0
      %v1685 = vand.u32 %v376, 4294901760
      %v1686 = vsub.f32 %v376, %v1685
      %1687 = vmatmul.mubr.f32.gmra.mrb[0].mxu0 %v1686
      %v1688 = vpop.f32.mrb[0].mxu0
      %v1689 = vadd.f32 %v1273, %v1688
      %v1690 = vpop.f32.mrb[0].mxu0
      %1691 = vmatprep.mubr.f32.mxu0 0.0
      %v1692 = vand.u32 %v379, 4294901760
      %v1693 = vsub.f32 %v379, %v1692
      %1694 = vmatmul.mubr.f32.gmra.mrb[0].mxu0 %v1693
      %v1695 = vpop.f32.mrb[0].mxu0
      %v1696 = vadd.f32 %v1279, %v1695
      %v1697 = vpop.f32.mrb[0].mxu0
      %1698 = vmatprep.mubr.f32.mxu0 0.0
      %v1699 = vand.u32 %v382, 4294901760
      %v1700 = vsub.f32 %v382, %v1699
      %1701 = vmatmul.mubr.f32.gmra.mrb[0].mxu0 %v1700
      %v1702 = vpop.f32.mrb[0].mxu0
      %v1703 = vadd.f32 %v1285, %v1702
      %v1704 = vpop.f32.mrb[0].mxu0
      %1705 = vmatprep.mubr.f32.mxu0 0.0
      %v1706 = vand.u32 %v385, 4294901760
      %v1707 = vsub.f32 %v385, %v1706
      %1708 = vmatmul.mubr.f32.gmra.mrb[0].mxu0 %v1707
      %v1709 = vpop.f32.mrb[0].mxu0
      %v1710 = vadd.f32 %v1291, %v1709
      %v1711 = vpop.f32.mrb[0].mxu0
      %1712 = vmatprep.mubr.f32.mxu0 0.0
      %v1713 = vand.u32 %v388, 4294901760
      %v1714 = vsub.f32 %v388, %v1713
      %1715 = vmatmul.mubr.f32.gmra.mrb[0].mxu0 %v1714
      %v1716 = vpop.f32.mrb[0].mxu0
      %v1717 = vadd.f32 %v1297, %v1716
      %v1718 = vpop.f32.mrb[0].mxu0
      %1719 = vmatprep.mubr.f32.mxu0 0.0
      %v1720 = vand.u32 %v391, 4294901760
      %v1721 = vsub.f32 %v391, %v1720
      %1722 = vmatmul.mubr.f32.gmra.mrb[0].mxu0 %v1721
      %v1723 = vpop.f32.mrb[0].mxu0
      %v1724 = vadd.f32 %v1303, %v1723
      %v1725 = vpop.f32.mrb[0].mxu0
      %1726 = vmatprep.mubr.f32.mxu0 0.0
      %v1727 = vand.u32 %v394, 4294901760
      %v1728 = vsub.f32 %v394, %v1727
      %1729 = vmatmul.mubr.f32.gmra.mrb[0].mxu0 %v1728
      %v1730 = vpop.f32.mrb[0].mxu0
      %v1731 = vadd.f32 %v1309, %v1730
      %v1732 = vpop.f32.mrb[0].mxu0
      %1733 = vmatprep.mubr.f32.mxu0 0.0
      %v1734 = vand.u32 %v397, 4294901760
      %v1735 = vsub.f32 %v397, %v1734
      %1736 = vmatmul.mubr.f32.gmra.mrb[0].mxu0 %v1735
      %v1737 = vpop.f32.mrb[0].mxu0
      %v1738 = vadd.f32 %v1315, %v1737
      %v1739 = vpop.f32.mrb[0].mxu0
      %1740 = vmatprep.mubr.f32.mxu0 0.0
      %v1741 = vand.u32 %v400, 4294901760
      %v1742 = vsub.f32 %v400, %v1741
      %1743 = vmatmul.mubr.f32.gmra.mrb[0].mxu0 %v1742
      %v1744 = vpop.f32.mrb[0].mxu0
      %v1745 = vadd.f32 %v1321, %v1744
      %v1746 = vpop.f32.mrb[0].mxu0
      %1747 = vmatprep.mubr.f32.mxu0 0.0
      %v1748 = vand.u32 %v403, 4294901760
      %v1749 = vsub.f32 %v403, %v1748
      %1750 = vmatmul.mubr.f32.gmra.mrb[0].mxu0 %v1749
      %v1751 = vpop.f32.mrb[0].mxu0
      %v1752 = vadd.f32 %v1327, %v1751
      %v1753 = vpop.f32.mrb[0].mxu0
      %1754 = vmatprep.mubr.f32.mxu0 0.0
      %v1755 = vand.u32 %v406, 4294901760
      %v1756 = vsub.f32 %v406, %v1755
      %1757 = vmatmul.mubr.f32.gmra.mrb[0].mxu0 %v1756
      %v1758 = vpop.f32.mrb[0].mxu0
      %v1759 = vadd.f32 %v1333, %v1758
      %v1760 = vpop.f32.mrb[0].mxu0
      %1761 = vmatprep.mubr.f32.mxu0 0.0
      %v1762 = vand.u32 %v409, 4294901760
      %v1763 = vsub.f32 %v409, %v1762
      %1764 = vmatmul.mubr.f32.gmra.mrb[0].mxu0 %v1763
      %v1765 = vpop.f32.mrb[0].mxu0
      %v1766 = vadd.f32 %v1339, %v1765
      %v1767 = vpop.f32.mrb[0].mxu0
      %1768 = vmatprep.mubr.f32.mxu0 0.0
      %v1769 = vand.u32 %v412, 4294901760
      %v1770 = vsub.f32 %v412, %v1769
      %1771 = vmatmul.mubr.f32.gmra.mrb[0].mxu0 %v1770
      %v1772 = vpop.f32.mrb[0].mxu0
      %v1773 = vadd.f32 %v1345, %v1772
      %v1774 = vpop.f32.mrb[0].mxu0
      %1775 = vmatprep.mubr.f32.mxu0 0.0
      %v1776 = vand.u32 %v415, 4294901760
      %v1777 = vsub.f32 %v415, %v1776
      %1778 = vmatmul.mubr.f32.gmra.mrb[0].mxu0 %v1777
      %v1779 = vpop.f32.mrb[0].mxu0
      %v1780 = vadd.f32 %v1351, %v1779
      %v1781 = vpop.f32.mrb[0].mxu0
      %1782 = vmatprep.mubr.f32.mxu0 0.0
      %v1783 = vand.u32 %v418, 4294901760
      %v1784 = vsub.f32 %v418, %v1783
      %1785 = vmatmul.mubr.f32.gmra.mrb[0].mxu0 %v1784
      %v1786 = vpop.f32.mrb[0].mxu0
      %v1787 = vadd.f32 %v1357, %v1786
      %v1788 = vpop.f32.mrb[0].mxu0
      %1789 = vmatprep.mubr.f32.mxu0 0.0
      %v1790 = vand.u32 %v421, 4294901760
      %v1791 = vsub.f32 %v421, %v1790
      %1792 = vmatmul.mubr.f32.gmra.mrb[0].mxu0 %v1791
      %v1793 = vpop.f32.mrb[0].mxu0
      %v1794 = vadd.f32 %v1363, %v1793
      %v1795 = vpop.f32.mrb[0].mxu0
      %1796 = vmatprep.mubr.f32.mxu0 0.0
      %v1797 = vand.u32 %v424, 4294901760
      %v1798 = vsub.f32 %v424, %v1797
      %1799 = vmatmul.mubr.f32.gmra.mrb[0].mxu0 %v1798
      %v1800 = vpop.f32.mrb[0].mxu0
      %v1801 = vadd.f32 %v1369, %v1800
      %v1802 = vpop.f32.mrb[0].mxu0
      %1803 = vmatprep.mubr.f32.mxu0 0.0
      %v1804 = vand.u32 %v427, 4294901760
      %v1805 = vsub.f32 %v427, %v1804
      %1806 = vmatmul.mubr.f32.gmra.mrb[0].mxu0 %v1805
      %v1807 = vpop.f32.mrb[0].mxu0
      %v1808 = vadd.f32 %v1375, %v1807
      %v1809 = vpop.f32.mrb[0].mxu0
      %1810 = vmatprep.mubr.f32.mxu0 0.0
      %v1811 = vand.u32 %v430, 4294901760
      %v1812 = vsub.f32 %v430, %v1811
      %1813 = vmatmul.mubr.f32.gmra.mrb[0].mxu0 %v1812
      %v1814 = vpop.f32.mrb[0].mxu0
      %v1815 = vadd.f32 %v1381, %v1814
      %v1816 = vpop.f32.mrb[0].mxu0
      %1817 = vmatprep.mubr.f32.mxu0 0.0
      %v1818 = vand.u32 %v433, 4294901760
      %v1819 = vsub.f32 %v433, %v1818
      %1820 = vmatmul.mubr.f32.gmra.mrb[0].mxu0 %v1819
      %v1821 = vpop.f32.mrb[0].mxu0
      %v1822 = vadd.f32 %v1387, %v1821
      %v1823 = vpop.f32.mrb[0].mxu0
      %1824 = vmatprep.mubr.f32.mxu0 0.0
      %v1825 = vand.u32 %v436, 4294901760
      %v1826 = vsub.f32 %v436, %v1825
      %1827 = vmatmul.mubr.f32.gmra.mrb[0].mxu0 %v1826
      %v1828 = vpop.f32.mrb[0].mxu0
      %v1829 = vadd.f32 %v1393, %v1828
      %v1830 = vpop.f32.mrb[0].mxu0
      %1831 = vmatprep.mubr.f32.mxu0 0.0
      %v1832 = vand.u32 %v439, 4294901760
      %v1833 = vsub.f32 %v439, %v1832
      %1834 = vmatmul.mubr.f32.gmra.mrb[0].mxu0 %v1833
      %v1835 = vpop.f32.mrb[0].mxu0
      %v1836 = vadd.f32 %v1399, %v1835
      %v1837 = vpop.f32.mrb[0].mxu0
      %1838 = vmatprep.mubr.f32.mxu0 0.0
      %v1839 = vand.u32 %v442, 4294901760
      %v1840 = vsub.f32 %v442, %v1839
      %1841 = vmatmul.mubr.f32.gmra.mrb[0].mxu0 %v1840
      %v1842 = vpop.f32.mrb[0].mxu0
      %v1843 = vadd.f32 %v1405, %v1842
      %v1844 = vpop.f32.mrb[0].mxu0
      %1845 = vmatprep.mubr.f32.mxu0 0.0
      %v1846 = vand.u32 %v445, 4294901760
      %v1847 = vsub.f32 %v445, %v1846
      %1848 = vmatmul.mubr.f32.gmra.mrb[0].mxu0 %v1847
      %v1849 = vpop.f32.mrb[0].mxu0
      %v1850 = vadd.f32 %v1411, %v1849
      %v1851 = vpop.f32.mrb[0].mxu0
      %1852 = vmatprep.mubr.f32.mxu0 0.0
      %v1853 = vand.u32 %v448, 4294901760
      %v1854 = vsub.f32 %v448, %v1853
      %1855 = vmatmul.mubr.f32.gmra.mrb[0].mxu0 %v1854
      %v1856 = vpop.f32.mrb[0].mxu0
      %v1857 = vadd.f32 %v1417, %v1856
      %v1858 = vpop.f32.mrb[0].mxu0
      %1859 = vmatprep.mubr.f32.mxu0 0.0
      %v1860 = vand.u32 %v451, 4294901760
      %v1861 = vsub.f32 %v451, %v1860
      %1862 = vmatmul.mubr.f32.gmra.mrb[0].mxu0 %v1861
      %v1863 = vpop.f32.mrb[0].mxu0
      %v1864 = vadd.f32 %v1423, %v1863
      %v1865 = vpop.f32.mrb[0].mxu0
      %1866 = vmatprep.mubr.f32.mxu0 0.0
      %v1867 = vand.u32 %v454, 4294901760
      %v1868 = vsub.f32 %v454, %v1867
      %1869 = vmatmul.mubr.f32.gmra.mrb[0].mxu0 %v1868
      %v1870 = vpop.f32.mrb[0].mxu0
      %v1871 = vadd.f32 %v1429, %v1870
      %v1872 = vpop.f32.mrb[0].mxu0
      %1873 = vmatprep.mubr.f32.mxu0 0.0
      %v1874 = vand.u32 %v457, 4294901760
      %v1875 = vsub.f32 %v457, %v1874
      %1876 = vmatmul.mubr.f32.gmra.mrb[0].mxu0 %v1875
      %v1877 = vpop.f32.mrb[0].mxu0
      %v1878 = vadd.f32 %v1435, %v1877
      %v1879 = vpop.f32.mrb[0].mxu0
      %1880 = vmatprep.mubr.f32.mxu0 0.0
      %v1881 = vand.u32 %v460, 4294901760
      %v1882 = vsub.f32 %v460, %v1881
      %1883 = vmatmul.mubr.f32.gmra.mrb[0].mxu0 %v1882
      %v1884 = vpop.f32.mrb[0].mxu0
      %v1885 = vadd.f32 %v1441, %v1884
      %v1886 = vpop.f32.mrb[0].mxu0
      %1887 = vmatprep.mubr.f32.mxu0 0.0
      %v1888 = vand.u32 %v463, 4294901760
      %v1889 = vsub.f32 %v463, %v1888
      %1890 = vmatmul.mubr.f32.gmra.mrb[0].mxu0 %v1889
      %v1891 = vpop.f32.mrb[0].mxu0
      %v1892 = vadd.f32 %v1447, %v1891
      %v1893 = vpop.f32.mrb[0].mxu0
      %1894 = vmatprep.mubr.f32.mxu0 0.0
      %v1895 = vand.u32 %v466, 4294901760
      %v1896 = vsub.f32 %v466, %v1895
      %1897 = vmatmul.mubr.f32.gmra.mrb[0].mxu0 %v1896
      %v1898 = vpop.f32.mrb[0].mxu0
      %v1899 = vadd.f32 %v1453, %v1898
      %v1900 = vpop.f32.mrb[0].mxu0
      %1901 = vmatprep.mubr.f32.mxu0 0.0
      %v1902 = vand.u32 %v469, 4294901760
      %v1903 = vsub.f32 %v469, %v1902
      %1904 = vmatmul.mubr.f32.gmra.mrb[0].mxu0 %v1903
      %v1905 = vpop.f32.mrb[0].mxu0
      %v1906 = vadd.f32 %v1459, %v1905
      %v1907 = vpop.f32.mrb[0].mxu0
      %1908 = vmatprep.mubr.f32.mxu0 0.0
      %v1909 = vand.u32 %v472, 4294901760
      %v1910 = vsub.f32 %v472, %v1909
      %1911 = vmatmul.mubr.f32.gmra.mrb[0].mxu0 %v1910
      %v1912 = vpop.f32.mrb[0].mxu0
      %v1913 = vadd.f32 %v1465, %v1912
      %v1914 = vpop.f32.mrb[0].mxu0
      %1915 = vmatprep.mubr.f32.mxu0 0.0
      %v1916 = vand.u32 %v475, 4294901760
      %v1917 = vsub.f32 %v475, %v1916
      %1918 = vmatmul.mubr.f32.gmra.mrb[0].mxu0 %v1917
      %v1919 = vpop.f32.mrb[0].mxu0
      %v1920 = vadd.f32 %v1471, %v1919
      %v1921 = vpop.f32.mrb[0].mxu0
      %1922 = vmatprep.mubr.f32.mxu0 0.0
      %v1923 = vand.u32 %v478, 4294901760
      %v1924 = vsub.f32 %v478, %v1923
      %1925 = vmatmul.mubr.f32.gmra.mrb[0].mxu0 %v1924
      %v1926 = vpop.f32.mrb[0].mxu0
      %v1927 = vadd.f32 %v1477, %v1926
      %v1928 = vpop.f32.mrb[0].mxu0
      %1929 = vmatprep.mubr.f32.mxu0 0.0
      %v1930 = vand.u32 %v481, 4294901760
      %v1931 = vsub.f32 %v481, %v1930
      %1932 = vmatmul.mubr.f32.gmra.mrb[0].mxu0 %v1931
      %v1933 = vpop.f32.mrb[0].mxu0
      %v1934 = vadd.f32 %v1483, %v1933
      %v1935 = vpop.f32.mrb[0].mxu0
      %1936 = vmatprep.mubr.f32.mxu0 0.0
      %v1937 = vand.u32 %v484, 4294901760
      %v1938 = vsub.f32 %v484, %v1937
      %1939 = vmatmul.mubr.f32.gmra.mrb[0].mxu0 %v1938
      %v1940 = vpop.f32.mrb[0].mxu0
      %v1941 = vadd.f32 %v1489, %v1940
      %v1942 = vpop.f32.mrb[0].mxu0
      %1943 = vmatprep.mubr.f32.mxu0 0.0
      %v1944 = vand.u32 %v487, 4294901760
      %v1945 = vsub.f32 %v487, %v1944
      %1946 = vmatmul.mubr.f32.gmra.mrb[0].mxu0 %v1945
      %v1947 = vpop.f32.mrb[0].mxu0
      %v1948 = vadd.f32 %v1495, %v1947
      %v1949 = vpop.f32.mrb[0].mxu0
      %1950 = vmatprep.mubr.f32.mxu0 0.0
      %v1951 = vand.u32 %v490, 4294901760
      %v1952 = vsub.f32 %v490, %v1951
      %1953 = vmatmul.mubr.f32.gmra.mrb[0].mxu0 %v1952
      %v1954 = vpop.f32.mrb[0].mxu0
      %v1955 = vadd.f32 %v1501, %v1954
      %v1956 = vpop.f32.mrb[0].mxu0
      %1957 = vmatprep.mubr.f32.mxu0 0.0
      %v1958 = vand.u32 %v493, 4294901760
      %v1959 = vsub.f32 %v493, %v1958
      %1960 = vmatmul.mubr.f32.gmra.mrb[0].mxu0 %v1959
      %v1961 = vpop.f32.mrb[0].mxu0
      %v1962 = vadd.f32 %v1507, %v1961
      %v1963 = vpop.f32.mrb[0].mxu0
      %1964 = vmatprep.mubr.f32.mxu0 0.0
      %v1965 = vand.u32 %v496, 4294901760
      %v1966 = vsub.f32 %v496, %v1965
      %1967 = vmatmul.mubr.f32.gmra.mrb[0].mxu0 %v1966
      %v1968 = vpop.f32.mrb[0].mxu0
      %v1969 = vadd.f32 %v1513, %v1968
      %v1970 = vpop.f32.mrb[0].mxu0
      %1971 = vmatprep.mubr.f32.mxu0 0.0
      %v1972 = vand.u32 %v499, 4294901760
      %v1973 = vsub.f32 %v499, %v1972
      %1974 = vmatmul.mubr.f32.gmra.mrb[0].mxu0 %v1973
      %v1975 = vpop.f32.mrb[0].mxu0
      %v1976 = vadd.f32 %v1519, %v1975
      %v1977 = vpop.f32.mrb[0].mxu0
      %1978 = vmatprep.mubr.f32.mxu0 0.0
      %v1979 = vand.u32 %v502, 4294901760
      %v1980 = vsub.f32 %v502, %v1979
      %1981 = vmatmul.mubr.f32.gmra.mrb[0].mxu0 %v1980
      %v1982 = vpop.f32.mrb[0].mxu0
      %v1983 = vadd.f32 %v1525, %v1982
      %v1984 = vpop.f32.mrb[0].mxu0
      %1985 = vmatprep.mubr.f32.mxu0 0.0
      %v1986 = vand.u32 %v505, 4294901760
      %v1987 = vsub.f32 %v505, %v1986
      %1988 = vmatmul.mubr.f32.gmra.mrb[0].mxu0 %v1987
      %v1989 = vpop.f32.mrb[0].mxu0
      %v1990 = vadd.f32 %v1531, %v1989
      %v1991 = vpop.f32.mrb[0].mxu0
      %1992 = vmatprep.mubr.f32.mxu0 0.0
      %v1993 = vand.u32 %v508, 4294901760
      %v1994 = vsub.f32 %v508, %v1993
      %1995 = vmatmul.mubr.f32.gmra.mrb[0].mxu0 %v1994
      %v1996 = vpop.f32.mrb[0].mxu0
      %v1997 = vadd.f32 %v1537, %v1996
      %v1998 = vpop.f32.mrb[0].mxu0
      %1999 = vmatprep.mubr.f32.mxu0 0.0
      %v2000 = vand.u32 %v511, 4294901760
      %v2001 = vsub.f32 %v511, %v2000
      %2002 = vmatmul.mubr.f32.gmra.mrb[0].mxu0 %v2001
      %v2003 = vpop.f32.mrb[0].mxu0
      %v2004 = vadd.f32 %v1543, %v2003
      %v2005 = vpop.f32.mrb[0].mxu0
      %2006 = vmatprep.mubr.f32.mxu0 0.0
      %v2007 = vand.u32 %v514, 4294901760
      %v2008 = vsub.f32 %v514, %v2007
      %2009 = vmatmul.mubr.f32.gmra.mrb[0].mxu0 %v2008
      %v2010 = vpop.f32.mrb[0].mxu0
      %v2011 = vadd.f32 %v1549, %v2010
      %v2012 = vpop.f32.mrb[0].mxu0
      %2013 = vmatprep.mubr.f32.mxu0 0.0
      %v2014 = vand.u32 %v517, 4294901760
      %v2015 = vsub.f32 %v517, %v2014
      %2016 = vmatmul.mubr.f32.gmra.mrb[0].mxu0 %v2015
      %v2017 = vpop.f32.mrb[0].mxu0
      %v2018 = vadd.f32 %v1555, %v2017
      %v2019 = vpop.f32.mrb[0].mxu0
      %2020 = vmatprep.mubr.f32.mxu0 0.0
      %v2021 = vand.u32 %v520, 4294901760
      %v2022 = vsub.f32 %v520, %v2021
      %2023 = vmatmul.mubr.f32.gmra.mrb[0].mxu0 %v2022
      %v2024 = vpop.f32.mrb[0].mxu0
      %v2025 = vadd.f32 %v1561, %v2024
      %v2026 = vpop.f32.mrb[0].mxu0
      %2027 = vmatprep.mubr.f32.mxu0 0.0
      %v2028 = vand.u32 %v523, 4294901760
      %v2029 = vsub.f32 %v523, %v2028
      %2030 = vmatmul.mubr.f32.gmra.mrb[0].mxu0 %v2029
      %v2031 = vpop.f32.mrb[0].mxu0
      %v2032 = vadd.f32 %v1567, %v2031
      %v2033 = vpop.f32.mrb[0].mxu0
      %2034 = vmatprep.mubr.f32.mxu0 0.0
      %v2035 = vand.u32 %v526, 4294901760
      %v2036 = vsub.f32 %v526, %v2035
      %2037 = vmatmul.mubr.f32.gmra.mrb[0].mxu0 %v2036
      %v2038 = vpop.f32.mrb[0].mxu0
      %v2039 = vadd.f32 %v1573, %v2038
      %v2040 = vpop.f32.mrb[0].mxu0
      %2041 = vmatprep.mubr.f32.mxu0 0.0
      %v2042 = vand.u32 %v529, 4294901760
      %v2043 = vsub.f32 %v529, %v2042
      %2044 = vmatmul.mubr.f32.gmra.mrb[0].mxu0 %v2043
      %v2045 = vpop.f32.mrb[0].mxu0
      %v2046 = vadd.f32 %v1579, %v2045
      %v2047 = vpop.f32.mrb[0].mxu0
      %2048 = vmatprep.mubr.f32.mxu0 0.0
      %v2049 = vand.u32 %v532, 4294901760
      %v2050 = vsub.f32 %v532, %v2049
      %2051 = vmatmul.mubr.f32.gmra.mrb[0].mxu0 %v2050
      %v2052 = vpop.f32.mrb[0].mxu0
      %v2053 = vadd.f32 %v1585, %v2052
      %v2054 = vpop.f32.mrb[0].mxu0
      %2055 = vmatprep.mubr.f32.mxu0 0.0
      %v2056 = vand.u32 %v535, 4294901760
      %v2057 = vsub.f32 %v535, %v2056
      %2058 = vmatmul.mubr.f32.gmra.mrb[0].mxu0 %v2057
      %v2059 = vpop.f32.mrb[0].mxu0
      %v2060 = vadd.f32 %v1591, %v2059
      %v2061 = vpop.f32.mrb[0].mxu0
      %2062 = vmatprep.mubr.f32.mxu0 0.0
      %v2063 = vand.u32 %v538, 4294901760
      %v2064 = vsub.f32 %v538, %v2063
      %2065 = vmatmul.mubr.f32.gmra.mrb[0].mxu0 %v2064
      %v2066 = vpop.f32.mrb[0].mxu0
      %v2067 = vadd.f32 %v1597, %v2066
      %v2068 = vpop.f32.mrb[0].mxu0
      %2069 = vmatprep.mubr.f32.mxu0 0.0
      %v2070 = vand.u32 %v541, 4294901760
      %v2071 = vsub.f32 %v541, %v2070
      %2072 = vmatmul.mubr.f32.gmra.mrb[0].mxu0 %v2071
      %v2073 = vpop.f32.mrb[0].mxu0
      %v2074 = vadd.f32 %v1603, %v2073
      %v2075 = vpop.f32.mrb[0].mxu0
      %2076 = vmatprep.mubr.f32.mxu0 0.0
      %v2077 = vand.u32 %v544, 4294901760
      %v2078 = vsub.f32 %v544, %v2077
      %2079 = vmatmul.mubr.f32.gmra.mrb[0].mxu0 %v2078
      %v2080 = vpop.f32.mrb[0].mxu0
      %v2081 = vadd.f32 %v1609, %v2080
      %v2082 = vpop.f32.mrb[0].mxu0
      %2083 = vdwg.mxu0
      %2084 = vmatprep.subr.mxu0 0.0
      %v2085 = vand.u32 %v363, 4294901760
      %2086 = vmatpush1.msra.mxu0 %v2085
      %2087 = vmatprep.subr.mxu0 0.0
      %v2088 = vand.u32 %v364, 4294901760
      %2089 = vmatpush1.msra.mxu0 %v2088
      %2090 = vmatprep.subr.mxu0 0.0
      %v2091 = vand.u32 %v365, 4294901760
      %2092 = vmatpush1.msra.mxu0 %v2091
      %2093 = vmatprep.subr.mxu0 0.0
      %v2094 = vand.u32 %v366, 4294901760
      %2095 = vmatpush1.msra.mxu0 %v2094
      %2096 = vmatprep.subr.mxu0 0.0
      %2097 = vmatpush1.msra.mxu0 0.0
      %2098 = vmatprep.subr.mxu0 0.0
      %2099 = vmatpush1.msra.mxu0 0.0
      %2100 = vmatprep.subr.mxu0 0.0
      %2101 = vmatpush1.msra.mxu0 0.0
      %2102 = vmatprep.subr.mxu0 0.0
      %2103 = vmatpush1.msra.mxu0 0.0
      %2104 = vmatprep.subr.mxu0 0.0
      %2105 = vmatpush1.msra.mxu0 0.0
      %2106 = vmatprep.subr.mxu0 0.0
      %2107 = vmatpush1.msra.mxu0 0.0
      %2108 = vmatprep.subr.mxu0 0.0
      %2109 = vmatpush1.msra.mxu0 0.0
      %2110 = vmatprep.subr.mxu0 0.0
      %2111 = vmatpush1.msra.mxu0 0.0
      %2112 = vmatprep.subr.mxu0 0.0
      %2113 = vmatpush1.msra.mxu0 0.0
      %2114 = vmatprep.subr.mxu0 0.0
      %2115 = vmatpush1.msra.mxu0 0.0
      %2116 = vmatprep.subr.mxu0 0.0
      %2117 = vmatpush1.msra.mxu0 0.0
      %2118 = vmatprep.subr.mxu0 0.0
      %2119 = vmatpush1.msra.mxu0 0.0
      %2120 = vmatprep.subr.mxu0 0.0
      %2121 = vmatpush1.msra.mxu0 0.0
      %2122 = vmatprep.subr.mxu0 0.0
      %2123 = vmatpush1.msra.mxu0 0.0
      %2124 = vmatprep.subr.mxu0 0.0
      %2125 = vmatpush1.msra.mxu0 0.0
      %2126 = vmatprep.subr.mxu0 0.0
      %2127 = vmatpush1.msra.mxu0 0.0
      %2128 = vmatprep.subr.mxu0 0.0
      %2129 = vmatpush1.msra.mxu0 0.0
      %2130 = vmatprep.subr.mxu0 0.0
      %2131 = vmatpush1.msra.mxu0 0.0
      %2132 = vmatprep.subr.mxu0 0.0
      %2133 = vmatpush1.msra.mxu0 0.0
      %2134 = vmatprep.subr.mxu0 0.0
      %2135 = vmatpush1.msra.mxu0 0.0
      %2136 = vmatprep.subr.mxu0 0.0
      %2137 = vmatpush1.msra.mxu0 0.0
      %2138 = vmatprep.subr.mxu0 0.0
      %2139 = vmatpush1.msra.mxu0 0.0
      %2140 = vmatprep.subr.mxu0 0.0
      %2141 = vmatpush1.msra.mxu0 0.0
      %2142 = vmatprep.subr.mxu0 0.0
      %2143 = vmatpush1.msra.mxu0 0.0
      %2144 = vmatprep.subr.mxu0 0.0
      %2145 = vmatpush1.msra.mxu0 0.0
      %2146 = vmatprep.subr.mxu0 0.0
      %2147 = vmatpush1.msra.mxu0 0.0
      %2148 = vmatprep.subr.mxu0 0.0
      %2149 = vmatpush1.msra.mxu0 0.0
      %2150 = vmatprep.subr.mxu0 0.0
      %2151 = vmatpush1.msra.mxu0 0.0
      %2152 = vmatprep.mubr.f32.mxu0 0.0
      %v2153 = vand.u32 %v376, 4294901760
      %v2154 = vsub.f32 %v376, %v2153
      %v2155 = vand.u32 %v2154, 4294901760
      %2156 = vmatmul.mubr.f32.gmra.mrb[0].mxu0 %v2155
      %v2157 = vpop.f32.mrb[0].mxu0
      %v2158 = vadd.f32 %v1689, %v2157
      %v2159 = vpop.f32.mrb[0].mxu0
      %2160 = vmatprep.mubr.f32.mxu0 0.0
      %v2161 = vand.u32 %v379, 4294901760
      %v2162 = vsub.f32 %v379, %v2161
      %v2163 = vand.u32 %v2162, 4294901760
      %2164 = vmatmul.mubr.f32.gmra.mrb[0].mxu0 %v2163
      %v2165 = vpop.f32.mrb[0].mxu0
      %v2166 = vadd.f32 %v1696, %v2165
      %v2167 = vpop.f32.mrb[0].mxu0
      %2168 = vmatprep.mubr.f32.mxu0 0.0
      %v2169 = vand.u32 %v382, 4294901760
      %v2170 = vsub.f32 %v382, %v2169
      %v2171 = vand.u32 %v2170, 4294901760
      %2172 = vmatmul.mubr.f32.gmra.mrb[0].mxu0 %v2171
      %v2173 = vpop.f32.mrb[0].mxu0
      %v2174 = vadd.f32 %v1703, %v2173
      %v2175 = vpop.f32.mrb[0].mxu0
      %2176 = vmatprep.mubr.f32.mxu0 0.0
      %v2177 = vand.u32 %v385, 4294901760
      %v2178 = vsub.f32 %v385, %v2177
      %v2179 = vand.u32 %v2178, 4294901760
      %2180 = vmatmul.mubr.f32.gmra.mrb[0].mxu0 %v2179
      %v2181 = vpop.f32.mrb[0].mxu0
      %v2182 = vadd.f32 %v1710, %v2181
      %v2183 = vpop.f32.mrb[0].mxu0
      %2184 = vmatprep.mubr.f32.mxu0 0.0
      %v2185 = vand.u32 %v388, 4294901760
      %v2186 = vsub.f32 %v388, %v2185
      %v2187 = vand.u32 %v2186, 4294901760
      %2188 = vmatmul.mubr.f32.gmra.mrb[0].mxu0 %v2187
      %v2189 = vpop.f32.mrb[0].mxu0
      %v2190 = vadd.f32 %v1717, %v2189
      %v2191 = vpop.f32.mrb[0].mxu0
      %2192 = vmatprep.mubr.f32.mxu0 0.0
      %v2193 = vand.u32 %v391, 4294901760
      %v2194 = vsub.f32 %v391, %v2193
      %v2195 = vand.u32 %v2194, 4294901760
      %2196 = vmatmul.mubr.f32.gmra.mrb[0].mxu0 %v2195
      %v2197 = vpop.f32.mrb[0].mxu0
      %v2198 = vadd.f32 %v1724, %v2197
      %v2199 = vpop.f32.mrb[0].mxu0
      %2200 = vmatprep.mubr.f32.mxu0 0.0
      %v2201 = vand.u32 %v394, 4294901760
      %v2202 = vsub.f32 %v394, %v2201
      %v2203 = vand.u32 %v2202, 4294901760
      %2204 = vmatmul.mubr.f32.gmra.mrb[0].mxu0 %v2203
      %v2205 = vpop.f32.mrb[0].mxu0
      %v2206 = vadd.f32 %v1731, %v2205
      %v2207 = vpop.f32.mrb[0].mxu0
      %2208 = vmatprep.mubr.f32.mxu0 0.0
      %v2209 = vand.u32 %v397, 4294901760
      %v2210 = vsub.f32 %v397, %v2209
      %v2211 = vand.u32 %v2210, 4294901760
      %2212 = vmatmul.mubr.f32.gmra.mrb[0].mxu0 %v2211
      %v2213 = vpop.f32.mrb[0].mxu0
      %v2214 = vadd.f32 %v1738, %v2213
      %v2215 = vpop.f32.mrb[0].mxu0
      %2216 = vmatprep.mubr.f32.mxu0 0.0
      %v2217 = vand.u32 %v400, 4294901760
      %v2218 = vsub.f32 %v400, %v2217
      %v2219 = vand.u32 %v2218, 4294901760
      %2220 = vmatmul.mubr.f32.gmra.mrb[0].mxu0 %v2219
      %v2221 = vpop.f32.mrb[0].mxu0
      %v2222 = vadd.f32 %v1745, %v2221
      %v2223 = vpop.f32.mrb[0].mxu0
      %2224 = vmatprep.mubr.f32.mxu0 0.0
      %v2225 = vand.u32 %v403, 4294901760
      %v2226 = vsub.f32 %v403, %v2225
      %v2227 = vand.u32 %v2226, 4294901760
      %2228 = vmatmul.mubr.f32.gmra.mrb[0].mxu0 %v2227
      %v2229 = vpop.f32.mrb[0].mxu0
      %v2230 = vadd.f32 %v1752, %v2229
      %v2231 = vpop.f32.mrb[0].mxu0
      %2232 = vmatprep.mubr.f32.mxu0 0.0
      %v2233 = vand.u32 %v406, 4294901760
      %v2234 = vsub.f32 %v406, %v2233
      %v2235 = vand.u32 %v2234, 4294901760
      %2236 = vmatmul.mubr.f32.gmra.mrb[0].mxu0 %v2235
      %v2237 = vpop.f32.mrb[0].mxu0
      %v2238 = vadd.f32 %v1759, %v2237
      %v2239 = vpop.f32.mrb[0].mxu0
      %2240 = vmatprep.mubr.f32.mxu0 0.0
      %v2241 = vand.u32 %v409, 4294901760
      %v2242 = vsub.f32 %v409, %v2241
      %v2243 = vand.u32 %v2242, 4294901760
      %2244 = vmatmul.mubr.f32.gmra.mrb[0].mxu0 %v2243
      %v2245 = vpop.f32.mrb[0].mxu0
      %v2246 = vadd.f32 %v1766, %v2245
      %v2247 = vpop.f32.mrb[0].mxu0
      %2248 = vmatprep.mubr.f32.mxu0 0.0
      %v2249 = vand.u32 %v412, 4294901760
      %v2250 = vsub.f32 %v412, %v2249
      %v2251 = vand.u32 %v2250, 4294901760
      %2252 = vmatmul.mubr.f32.gmra.mrb[0].mxu0 %v2251
      %v2253 = vpop.f32.mrb[0].mxu0
      %v2254 = vadd.f32 %v1773, %v2253
      %v2255 = vpop.f32.mrb[0].mxu0
      %2256 = vmatprep.mubr.f32.mxu0 0.0
      %v2257 = vand.u32 %v415, 4294901760
      %v2258 = vsub.f32 %v415, %v2257
      %v2259 = vand.u32 %v2258, 4294901760
      %2260 = vmatmul.mubr.f32.gmra.mrb[0].mxu0 %v2259
      %v2261 = vpop.f32.mrb[0].mxu0
      %v2262 = vadd.f32 %v1780, %v2261
      %v2263 = vpop.f32.mrb[0].mxu0
      %2264 = vmatprep.mubr.f32.mxu0 0.0
      %v2265 = vand.u32 %v418, 4294901760
      %v2266 = vsub.f32 %v418, %v2265
      %v2267 = vand.u32 %v2266, 4294901760
      %2268 = vmatmul.mubr.f32.gmra.mrb[0].mxu0 %v2267
      %v2269 = vpop.f32.mrb[0].mxu0
      %v2270 = vadd.f32 %v1787, %v2269
      %v2271 = vpop.f32.mrb[0].mxu0
      %2272 = vmatprep.mubr.f32.mxu0 0.0
      %v2273 = vand.u32 %v421, 4294901760
      %v2274 = vsub.f32 %v421, %v2273
      %v2275 = vand.u32 %v2274, 4294901760
      %2276 = vmatmul.mubr.f32.gmra.mrb[0].mxu0 %v2275
      %v2277 = vpop.f32.mrb[0].mxu0
      %v2278 = vadd.f32 %v1794, %v2277
      %v2279 = vpop.f32.mrb[0].mxu0
      %2280 = vmatprep.mubr.f32.mxu0 0.0
      %v2281 = vand.u32 %v424, 4294901760
      %v2282 = vsub.f32 %v424, %v2281
      %v2283 = vand.u32 %v2282, 4294901760
      %2284 = vmatmul.mubr.f32.gmra.mrb[0].mxu0 %v2283
      %v2285 = vpop.f32.mrb[0].mxu0
      %v2286 = vadd.f32 %v1801, %v2285
      %v2287 = vpop.f32.mrb[0].mxu0
      %2288 = vmatprep.mubr.f32.mxu0 0.0
      %v2289 = vand.u32 %v427, 4294901760
      %v2290 = vsub.f32 %v427, %v2289
      %v2291 = vand.u32 %v2290, 4294901760
      %2292 = vmatmul.mubr.f32.gmra.mrb[0].mxu0 %v2291
      %v2293 = vpop.f32.mrb[0].mxu0
      %v2294 = vadd.f32 %v1808, %v2293
      %v2295 = vpop.f32.mrb[0].mxu0
      %2296 = vmatprep.mubr.f32.mxu0 0.0
      %v2297 = vand.u32 %v430, 4294901760
      %v2298 = vsub.f32 %v430, %v2297
      %v2299 = vand.u32 %v2298, 4294901760
      %2300 = vmatmul.mubr.f32.gmra.mrb[0].mxu0 %v2299
      %v2301 = vpop.f32.mrb[0].mxu0
      %v2302 = vadd.f32 %v1815, %v2301
      %v2303 = vpop.f32.mrb[0].mxu0
      %2304 = vmatprep.mubr.f32.mxu0 0.0
      %v2305 = vand.u32 %v433, 4294901760
      %v2306 = vsub.f32 %v433, %v2305
      %v2307 = vand.u32 %v2306, 4294901760
      %2308 = vmatmul.mubr.f32.gmra.mrb[0].mxu0 %v2307
      %v2309 = vpop.f32.mrb[0].mxu0
      %v2310 = vadd.f32 %v1822, %v2309
      %v2311 = vpop.f32.mrb[0].mxu0
      %2312 = vmatprep.mubr.f32.mxu0 0.0
      %v2313 = vand.u32 %v436, 4294901760
      %v2314 = vsub.f32 %v436, %v2313
      %v2315 = vand.u32 %v2314, 4294901760
      %2316 = vmatmul.mubr.f32.gmra.mrb[0].mxu0 %v2315
      %v2317 = vpop.f32.mrb[0].mxu0
      %v2318 = vadd.f32 %v1829, %v2317
      %v2319 = vpop.f32.mrb[0].mxu0
      %2320 = vmatprep.mubr.f32.mxu0 0.0
      %v2321 = vand.u32 %v439, 4294901760
      %v2322 = vsub.f32 %v439, %v2321
      %v2323 = vand.u32 %v2322, 4294901760
      %2324 = vmatmul.mubr.f32.gmra.mrb[0].mxu0 %v2323
      %v2325 = vpop.f32.mrb[0].mxu0
      %v2326 = vadd.f32 %v1836, %v2325
      %v2327 = vpop.f32.mrb[0].mxu0
      %2328 = vmatprep.mubr.f32.mxu0 0.0
      %v2329 = vand.u32 %v442, 4294901760
      %v2330 = vsub.f32 %v442, %v2329
      %v2331 = vand.u32 %v2330, 4294901760
      %2332 = vmatmul.mubr.f32.gmra.mrb[0].mxu0 %v2331
      %v2333 = vpop.f32.mrb[0].mxu0
      %v2334 = vadd.f32 %v1843, %v2333
      %v2335 = vpop.f32.mrb[0].mxu0
      %2336 = vmatprep.mubr.f32.mxu0 0.0
      %v2337 = vand.u32 %v445, 4294901760
      %v2338 = vsub.f32 %v445, %v2337
      %v2339 = vand.u32 %v2338, 4294901760
      %2340 = vmatmul.mubr.f32.gmra.mrb[0].mxu0 %v2339
      %v2341 = vpop.f32.mrb[0].mxu0
      %v2342 = vadd.f32 %v1850, %v2341
      %v2343 = vpop.f32.mrb[0].mxu0
      %2344 = vmatprep.mubr.f32.mxu0 0.0
      %v2345 = vand.u32 %v448, 4294901760
      %v2346 = vsub.f32 %v448, %v2345
      %v2347 = vand.u32 %v2346, 4294901760
      %2348 = vmatmul.mubr.f32.gmra.mrb[0].mxu0 %v2347
      %v2349 = vpop.f32.mrb[0].mxu0
      %v2350 = vadd.f32 %v1857, %v2349
      %v2351 = vpop.f32.mrb[0].mxu0
      %2352 = vmatprep.mubr.f32.mxu0 0.0
      %v2353 = vand.u32 %v451, 4294901760
      %v2354 = vsub.f32 %v451, %v2353
      %v2355 = vand.u32 %v2354, 4294901760
      %2356 = vmatmul.mubr.f32.gmra.mrb[0].mxu0 %v2355
      %v2357 = vpop.f32.mrb[0].mxu0
      %v2358 = vadd.f32 %v1864, %v2357
      %v2359 = vpop.f32.mrb[0].mxu0
      %2360 = vmatprep.mubr.f32.mxu0 0.0
      %v2361 = vand.u32 %v454, 4294901760
      %v2362 = vsub.f32 %v454, %v2361
      %v2363 = vand.u32 %v2362, 4294901760
      %2364 = vmatmul.mubr.f32.gmra.mrb[0].mxu0 %v2363
      %v2365 = vpop.f32.mrb[0].mxu0
      %v2366 = vadd.f32 %v1871, %v2365
      %v2367 = vpop.f32.mrb[0].mxu0
      %2368 = vmatprep.mubr.f32.mxu0 0.0
      %v2369 = vand.u32 %v457, 4294901760
      %v2370 = vsub.f32 %v457, %v2369
      %v2371 = vand.u32 %v2370, 4294901760
      %2372 = vmatmul.mubr.f32.gmra.mrb[0].mxu0 %v2371
      %v2373 = vpop.f32.mrb[0].mxu0
      %v2374 = vadd.f32 %v1878, %v2373
      %v2375 = vpop.f32.mrb[0].mxu0
      %2376 = vmatprep.mubr.f32.mxu0 0.0
      %v2377 = vand.u32 %v460, 4294901760
      %v2378 = vsub.f32 %v460, %v2377
      %v2379 = vand.u32 %v2378, 4294901760
      %2380 = vmatmul.mubr.f32.gmra.mrb[0].mxu0 %v2379
      %v2381 = vpop.f32.mrb[0].mxu0
      %v2382 = vadd.f32 %v1885, %v2381
      %v2383 = vpop.f32.mrb[0].mxu0
      %2384 = vmatprep.mubr.f32.mxu0 0.0
      %v2385 = vand.u32 %v463, 4294901760
      %v2386 = vsub.f32 %v463, %v2385
      %v2387 = vand.u32 %v2386, 4294901760
      %2388 = vmatmul.mubr.f32.gmra.mrb[0].mxu0 %v2387
      %v2389 = vpop.f32.mrb[0].mxu0
      %v2390 = vadd.f32 %v1892, %v2389
      %v2391 = vpop.f32.mrb[0].mxu0
      %2392 = vmatprep.mubr.f32.mxu0 0.0
      %v2393 = vand.u32 %v466, 4294901760
      %v2394 = vsub.f32 %v466, %v2393
      %v2395 = vand.u32 %v2394, 4294901760
      %2396 = vmatmul.mubr.f32.gmra.mrb[0].mxu0 %v2395
      %v2397 = vpop.f32.mrb[0].mxu0
      %v2398 = vadd.f32 %v1899, %v2397
      %v2399 = vpop.f32.mrb[0].mxu0
      %2400 = vmatprep.mubr.f32.mxu0 0.0
      %v2401 = vand.u32 %v469, 4294901760
      %v2402 = vsub.f32 %v469, %v2401
      %v2403 = vand.u32 %v2402, 4294901760
      %2404 = vmatmul.mubr.f32.gmra.mrb[0].mxu0 %v2403
      %v2405 = vpop.f32.mrb[0].mxu0
      %v2406 = vadd.f32 %v1906, %v2405
      %v2407 = vpop.f32.mrb[0].mxu0
      %2408 = vmatprep.mubr.f32.mxu0 0.0
      %v2409 = vand.u32 %v472, 4294901760
      %v2410 = vsub.f32 %v472, %v2409
      %v2411 = vand.u32 %v2410, 4294901760
      %2412 = vmatmul.mubr.f32.gmra.mrb[0].mxu0 %v2411
      %v2413 = vpop.f32.mrb[0].mxu0
      %v2414 = vadd.f32 %v1913, %v2413
      %v2415 = vpop.f32.mrb[0].mxu0
      %2416 = vmatprep.mubr.f32.mxu0 0.0
      %v2417 = vand.u32 %v475, 4294901760
      %v2418 = vsub.f32 %v475, %v2417
      %v2419 = vand.u32 %v2418, 4294901760
      %2420 = vmatmul.mubr.f32.gmra.mrb[0].mxu0 %v2419
      %v2421 = vpop.f32.mrb[0].mxu0
      %v2422 = vadd.f32 %v1920, %v2421
      %v2423 = vpop.f32.mrb[0].mxu0
      %2424 = vmatprep.mubr.f32.mxu0 0.0
      %v2425 = vand.u32 %v478, 4294901760
      %v2426 = vsub.f32 %v478, %v2425
      %v2427 = vand.u32 %v2426, 4294901760
      %2428 = vmatmul.mubr.f32.gmra.mrb[0].mxu0 %v2427
      %v2429 = vpop.f32.mrb[0].mxu0
      %v2430 = vadd.f32 %v1927, %v2429
      %v2431 = vpop.f32.mrb[0].mxu0
      %2432 = vmatprep.mubr.f32.mxu0 0.0
      %v2433 = vand.u32 %v481, 4294901760
      %v2434 = vsub.f32 %v481, %v2433
      %v2435 = vand.u32 %v2434, 4294901760
      %2436 = vmatmul.mubr.f32.gmra.mrb[0].mxu0 %v2435
      %v2437 = vpop.f32.mrb[0].mxu0
      %v2438 = vadd.f32 %v1934, %v2437
      %v2439 = vpop.f32.mrb[0].mxu0
      %2440 = vmatprep.mubr.f32.mxu0 0.0
      %v2441 = vand.u32 %v484, 4294901760
      %v2442 = vsub.f32 %v484, %v2441
      %v2443 = vand.u32 %v2442, 4294901760
      %2444 = vmatmul.mubr.f32.gmra.mrb[0].mxu0 %v2443
      %v2445 = vpop.f32.mrb[0].mxu0
      %v2446 = vadd.f32 %v1941, %v2445
      %v2447 = vpop.f32.mrb[0].mxu0
      %2448 = vmatprep.mubr.f32.mxu0 0.0
      %v2449 = vand.u32 %v487, 4294901760
      %v2450 = vsub.f32 %v487, %v2449
      %v2451 = vand.u32 %v2450, 4294901760
      %2452 = vmatmul.mubr.f32.gmra.mrb[0].mxu0 %v2451
      %v2453 = vpop.f32.mrb[0].mxu0
      %v2454 = vadd.f32 %v1948, %v2453
      %v2455 = vpop.f32.mrb[0].mxu0
      %2456 = vmatprep.mubr.f32.mxu0 0.0
      %v2457 = vand.u32 %v490, 4294901760
      %v2458 = vsub.f32 %v490, %v2457
      %v2459 = vand.u32 %v2458, 4294901760
      %2460 = vmatmul.mubr.f32.gmra.mrb[0].mxu0 %v2459
      %v2461 = vpop.f32.mrb[0].mxu0
      %v2462 = vadd.f32 %v1955, %v2461
      %v2463 = vpop.f32.mrb[0].mxu0
      %2464 = vmatprep.mubr.f32.mxu0 0.0
      %v2465 = vand.u32 %v493, 4294901760
      %v2466 = vsub.f32 %v493, %v2465
      %v2467 = vand.u32 %v2466, 4294901760
      %2468 = vmatmul.mubr.f32.gmra.mrb[0].mxu0 %v2467
      %v2469 = vpop.f32.mrb[0].mxu0
      %v2470 = vadd.f32 %v1962, %v2469
      %v2471 = vpop.f32.mrb[0].mxu0
      %2472 = vmatprep.mubr.f32.mxu0 0.0
      %v2473 = vand.u32 %v496, 4294901760
      %v2474 = vsub.f32 %v496, %v2473
      %v2475 = vand.u32 %v2474, 4294901760
      %2476 = vmatmul.mubr.f32.gmra.mrb[0].mxu0 %v2475
      %v2477 = vpop.f32.mrb[0].mxu0
      %v2478 = vadd.f32 %v1969, %v2477
      %v2479 = vpop.f32.mrb[0].mxu0
      %2480 = vmatprep.mubr.f32.mxu0 0.0
      %v2481 = vand.u32 %v499, 4294901760
      %v2482 = vsub.f32 %v499, %v2481
      %v2483 = vand.u32 %v2482, 4294901760
      %2484 = vmatmul.mubr.f32.gmra.mrb[0].mxu0 %v2483
      %v2485 = vpop.f32.mrb[0].mxu0
      %v2486 = vadd.f32 %v1976, %v2485
      %v2487 = vpop.f32.mrb[0].mxu0
      %2488 = vmatprep.mubr.f32.mxu0 0.0
      %v2489 = vand.u32 %v502, 4294901760
      %v2490 = vsub.f32 %v502, %v2489
      %v2491 = vand.u32 %v2490, 4294901760
      %2492 = vmatmul.mubr.f32.gmra.mrb[0].mxu0 %v2491
      %v2493 = vpop.f32.mrb[0].mxu0
      %v2494 = vadd.f32 %v1983, %v2493
      %v2495 = vpop.f32.mrb[0].mxu0
      %2496 = vmatprep.mubr.f32.mxu0 0.0
      %v2497 = vand.u32 %v505, 4294901760
      %v2498 = vsub.f32 %v505, %v2497
      %v2499 = vand.u32 %v2498, 4294901760
      %2500 = vmatmul.mubr.f32.gmra.mrb[0].mxu0 %v2499
      %v2501 = vpop.f32.mrb[0].mxu0
      %v2502 = vadd.f32 %v1990, %v2501
      %v2503 = vpop.f32.mrb[0].mxu0
      %2504 = vmatprep.mubr.f32.mxu0 0.0
      %v2505 = vand.u32 %v508, 4294901760
      %v2506 = vsub.f32 %v508, %v2505
      %v2507 = vand.u32 %v2506, 4294901760
      %2508 = vmatmul.mubr.f32.gmra.mrb[0].mxu0 %v2507
      %v2509 = vpop.f32.mrb[0].mxu0
      %v2510 = vadd.f32 %v1997, %v2509
      %v2511 = vpop.f32.mrb[0].mxu0
      %2512 = vmatprep.mubr.f32.mxu0 0.0
      %v2513 = vand.u32 %v511, 4294901760
      %v2514 = vsub.f32 %v511, %v2513
      %v2515 = vand.u32 %v2514, 4294901760
      %2516 = vmatmul.mubr.f32.gmra.mrb[0].mxu0 %v2515
      %v2517 = vpop.f32.mrb[0].mxu0
      %v2518 = vadd.f32 %v2004, %v2517
      %v2519 = vpop.f32.mrb[0].mxu0
      %2520 = vmatprep.mubr.f32.mxu0 0.0
      %v2521 = vand.u32 %v514, 4294901760
      %v2522 = vsub.f32 %v514, %v2521
      %v2523 = vand.u32 %v2522, 4294901760
      %2524 = vmatmul.mubr.f32.gmra.mrb[0].mxu0 %v2523
      %v2525 = vpop.f32.mrb[0].mxu0
      %v2526 = vadd.f32 %v2011, %v2525
      %v2527 = vpop.f32.mrb[0].mxu0
      %2528 = vmatprep.mubr.f32.mxu0 0.0
      %v2529 = vand.u32 %v517, 4294901760
      %v2530 = vsub.f32 %v517, %v2529
      %v2531 = vand.u32 %v2530, 4294901760
      %2532 = vmatmul.mubr.f32.gmra.mrb[0].mxu0 %v2531
      %v2533 = vpop.f32.mrb[0].mxu0
      %v2534 = vadd.f32 %v2018, %v2533
      %v2535 = vpop.f32.mrb[0].mxu0
      %2536 = vmatprep.mubr.f32.mxu0 0.0
      %v2537 = vand.u32 %v520, 4294901760
      %v2538 = vsub.f32 %v520, %v2537
      %v2539 = vand.u32 %v2538, 4294901760
      %2540 = vmatmul.mubr.f32.gmra.mrb[0].mxu0 %v2539
      %v2541 = vpop.f32.mrb[0].mxu0
      %v2542 = vadd.f32 %v2025, %v2541
      %v2543 = vpop.f32.mrb[0].mxu0
      %2544 = vmatprep.mubr.f32.mxu0 0.0
      %v2545 = vand.u32 %v523, 4294901760
      %v2546 = vsub.f32 %v523, %v2545
      %v2547 = vand.u32 %v2546, 4294901760
      %2548 = vmatmul.mubr.f32.gmra.mrb[0].mxu0 %v2547
      %v2549 = vpop.f32.mrb[0].mxu0
      %v2550 = vadd.f32 %v2032, %v2549
      %v2551 = vpop.f32.mrb[0].mxu0
      %2552 = vmatprep.mubr.f32.mxu0 0.0
      %v2553 = vand.u32 %v526, 4294901760
      %v2554 = vsub.f32 %v526, %v2553
      %v2555 = vand.u32 %v2554, 4294901760
      %2556 = vmatmul.mubr.f32.gmra.mrb[0].mxu0 %v2555
      %v2557 = vpop.f32.mrb[0].mxu0
      %v2558 = vadd.f32 %v2039, %v2557
      %v2559 = vpop.f32.mrb[0].mxu0
      %2560 = vmatprep.mubr.f32.mxu0 0.0
      %v2561 = vand.u32 %v529, 4294901760
      %v2562 = vsub.f32 %v529, %v2561
      %v2563 = vand.u32 %v2562, 4294901760
      %2564 = vmatmul.mubr.f32.gmra.mrb[0].mxu0 %v2563
      %v2565 = vpop.f32.mrb[0].mxu0
      %v2566 = vadd.f32 %v2046, %v2565
      %v2567 = vpop.f32.mrb[0].mxu0
      %2568 = vmatprep.mubr.f32.mxu0 0.0
      %v2569 = vand.u32 %v532, 4294901760
      %v2570 = vsub.f32 %v532, %v2569
      %v2571 = vand.u32 %v2570, 4294901760
      %2572 = vmatmul.mubr.f32.gmra.mrb[0].mxu0 %v2571
      %v2573 = vpop.f32.mrb[0].mxu0
      %v2574 = vadd.f32 %v2053, %v2573
      %v2575 = vpop.f32.mrb[0].mxu0
      %2576 = vmatprep.mubr.f32.mxu0 0.0
      %v2577 = vand.u32 %v535, 4294901760
      %v2578 = vsub.f32 %v535, %v2577
      %v2579 = vand.u32 %v2578, 4294901760
      %2580 = vmatmul.mubr.f32.gmra.mrb[0].mxu0 %v2579
      %v2581 = vpop.f32.mrb[0].mxu0
      %v2582 = vadd.f32 %v2060, %v2581
      %v2583 = vpop.f32.mrb[0].mxu0
      %2584 = vmatprep.mubr.f32.mxu0 0.0
      %v2585 = vand.u32 %v538, 4294901760
      %v2586 = vsub.f32 %v538, %v2585
      %v2587 = vand.u32 %v2586, 4294901760
      %2588 = vmatmul.mubr.f32.gmra.mrb[0].mxu0 %v2587
      %v2589 = vpop.f32.mrb[0].mxu0
      %v2590 = vadd.f32 %v2067, %v2589
      %v2591 = vpop.f32.mrb[0].mxu0
      %2592 = vmatprep.mubr.f32.mxu0 0.0
      %v2593 = vand.u32 %v541, 4294901760
      %v2594 = vsub.f32 %v541, %v2593
      %v2595 = vand.u32 %v2594, 4294901760
      %2596 = vmatmul.mubr.f32.gmra.mrb[0].mxu0 %v2595
      %v2597 = vpop.f32.mrb[0].mxu0
      %v2598 = vadd.f32 %v2074, %v2597
      %v2599 = vpop.f32.mrb[0].mxu0
      %2600 = vmatprep.mubr.f32.mxu0 0.0
      %v2601 = vand.u32 %v544, 4294901760
      %v2602 = vsub.f32 %v544, %v2601
      %v2603 = vand.u32 %v2602, 4294901760
      %2604 = vmatmul.mubr.f32.gmra.mrb[0].mxu0 %v2603
      %v2605 = vpop.f32.mrb[0].mxu0
      %v2606 = vadd.f32 %v2081, %v2605
      %v2607 = vpop.f32.mrb[0].mxu0
      %2608 = vdwg.mxu0
      %2609 = vmatprep.subr.mxu0 0.0
      %v2610 = vand.u32 %v363, 4294901760
      %v2611 = vsub.f32 %v363, %v2610
      %v2612 = vand.u32 %v2611, 4294901760
      %2613 = vmatpush1.msra.mxu0 %v2612
      %2614 = vmatprep.subr.mxu0 0.0
      %v2615 = vand.u32 %v364, 4294901760
      %v2616 = vsub.f32 %v364, %v2615
      %v2617 = vand.u32 %v2616, 4294901760
      %2618 = vmatpush1.msra.mxu0 %v2617
      %2619 = vmatprep.subr.mxu0 0.0
      %v2620 = vand.u32 %v365, 4294901760
      %v2621 = vsub.f32 %v365, %v2620
      %v2622 = vand.u32 %v2621, 4294901760
      %2623 = vmatpush1.msra.mxu0 %v2622
      %2624 = vmatprep.subr.mxu0 0.0
      %v2625 = vand.u32 %v366, 4294901760
      %v2626 = vsub.f32 %v366, %v2625
      %v2627 = vand.u32 %v2626, 4294901760
      %2628 = vmatpush1.msra.mxu0 %v2627
      %2629 = vmatprep.subr.mxu0 0.0
      %2630 = vmatpush1.msra.mxu0 0.0
      %2631 = vmatprep.subr.mxu0 0.0
      %2632 = vmatpush1.msra.mxu0 0.0
      %2633 = vmatprep.subr.mxu0 0.0
      %2634 = vmatpush1.msra.mxu0 0.0
      %2635 = vmatprep.subr.mxu0 0.0
      %2636 = vmatpush1.msra.mxu0 0.0
      %2637 = vmatprep.subr.mxu0 0.0
      %2638 = vmatpush1.msra.mxu0 0.0
      %2639 = vmatprep.subr.mxu0 0.0
      %2640 = vmatpush1.msra.mxu0 0.0
      %2641 = vmatprep.subr.mxu0 0.0
      %2642 = vmatpush1.msra.mxu0 0.0
      %2643 = vmatprep.subr.mxu0 0.0
      %2644 = vmatpush1.msra.mxu0 0.0
      %2645 = vmatprep.subr.mxu0 0.0
      %2646 = vmatpush1.msra.mxu0 0.0
      %2647 = vmatprep.subr.mxu0 0.0
      %2648 = vmatpush1.msra.mxu0 0.0
      %2649 = vmatprep.subr.mxu0 0.0
      %2650 = vmatpush1.msra.mxu0 0.0
      %2651 = vmatprep.subr.mxu0 0.0
      %2652 = vmatpush1.msra.mxu0 0.0
      %2653 = vmatprep.subr.mxu0 0.0
      %2654 = vmatpush1.msra.mxu0 0.0
      %2655 = vmatprep.subr.mxu0 0.0
      %2656 = vmatpush1.msra.mxu0 0.0
      %2657 = vmatprep.subr.mxu0 0.0
      %2658 = vmatpush1.msra.mxu0 0.0
      %2659 = vmatprep.subr.mxu0 0.0
      %2660 = vmatpush1.msra.mxu0 0.0
      %2661 = vmatprep.subr.mxu0 0.0
      %2662 = vmatpush1.msra.mxu0 0.0
      %2663 = vmatprep.subr.mxu0 0.0
      %2664 = vmatpush1.msra.mxu0 0.0
      %2665 = vmatprep.subr.mxu0 0.0
      %2666 = vmatpush1.msra.mxu0 0.0
      %2667 = vmatprep.subr.mxu0 0.0
      %2668 = vmatpush1.msra.mxu0 0.0
      %2669 = vmatprep.subr.mxu0 0.0
      %2670 = vmatpush1.msra.mxu0 0.0
      %2671 = vmatprep.subr.mxu0 0.0
      %2672 = vmatpush1.msra.mxu0 0.0
      %2673 = vmatprep.subr.mxu0 0.0
      %2674 = vmatpush1.msra.mxu0 0.0
      %2675 = vmatprep.subr.mxu0 0.0
      %2676 = vmatpush1.msra.mxu0 0.0
      %2677 = vmatprep.subr.mxu0 0.0
      %2678 = vmatpush1.msra.mxu0 0.0
      %2679 = vmatprep.subr.mxu0 0.0
      %2680 = vmatpush1.msra.mxu0 0.0
      %2681 = vmatprep.subr.mxu0 0.0
      %2682 = vmatpush1.msra.mxu0 0.0
      %2683 = vmatprep.subr.mxu0 0.0
      %2684 = vmatpush1.msra.mxu0 0.0
      %2685 = vmatprep.mubr.f32.mxu0 0.0
      %v2686 = vand.u32 %v376, 4294901760
      %2687 = vmatmul.mubr.f32.gmra.mrb[0].mxu0 %v2686
      %v2688 = vpop.f32.mrb[0].mxu0
      %v2689 = vadd.f32 %v2158, %v2688
      %v2690 = vpop.f32.mrb[0].mxu0
      %2691 = vmatprep.mubr.f32.mxu0 0.0
      %v2692 = vand.u32 %v379, 4294901760
      %2693 = vmatmul.mubr.f32.gmra.mrb[0].mxu0 %v2692
      %v2694 = vpop.f32.mrb[0].mxu0
      %v2695 = vadd.f32 %v2166, %v2694
      %v2696 = vpop.f32.mrb[0].mxu0
      %2697 = vmatprep.mubr.f32.mxu0 0.0
      %v2698 = vand.u32 %v382, 4294901760
      %2699 = vmatmul.mubr.f32.gmra.mrb[0].mxu0 %v2698
      %v2700 = vpop.f32.mrb[0].mxu0
      %v2701 = vadd.f32 %v2174, %v2700
      %v2702 = vpop.f32.mrb[0].mxu0
      %2703 = vmatprep.mubr.f32.mxu0 0.0
      %v2704 = vand.u32 %v385, 4294901760
      %2705 = vmatmul.mubr.f32.gmra.mrb[0].mxu0 %v2704
      %v2706 = vpop.f32.mrb[0].mxu0
      %v2707 = vadd.f32 %v2182, %v2706
      %v2708 = vpop.f32.mrb[0].mxu0
      %2709 = vmatprep.mubr.f32.mxu0 0.0
      %v2710 = vand.u32 %v388, 4294901760
      %2711 = vmatmul.mubr.f32.gmra.mrb[0].mxu0 %v2710
      %v2712 = vpop.f32.mrb[0].mxu0
      %v2713 = vadd.f32 %v2190, %v2712
      %v2714 = vpop.f32.mrb[0].mxu0
      %2715 = vmatprep.mubr.f32.mxu0 0.0
      %v2716 = vand.u32 %v391, 4294901760
      %2717 = vmatmul.mubr.f32.gmra.mrb[0].mxu0 %v2716
      %v2718 = vpop.f32.mrb[0].mxu0
      %v2719 = vadd.f32 %v2198, %v2718
      %v2720 = vpop.f32.mrb[0].mxu0
      %2721 = vmatprep.mubr.f32.mxu0 0.0
      %v2722 = vand.u32 %v394, 4294901760
      %2723 = vmatmul.mubr.f32.gmra.mrb[0].mxu0 %v2722
      %v2724 = vpop.f32.mrb[0].mxu0
      %v2725 = vadd.f32 %v2206, %v2724
      %v2726 = vpop.f32.mrb[0].mxu0
      %2727 = vmatprep.mubr.f32.mxu0 0.0
      %v2728 = vand.u32 %v397, 4294901760
      %2729 = vmatmul.mubr.f32.gmra.mrb[0].mxu0 %v2728
      %v2730 = vpop.f32.mrb[0].mxu0
      %v2731 = vadd.f32 %v2214, %v2730
      %v2732 = vpop.f32.mrb[0].mxu0
      %2733 = vmatprep.mubr.f32.mxu0 0.0
      %v2734 = vand.u32 %v400, 4294901760
      %2735 = vmatmul.mubr.f32.gmra.mrb[0].mxu0 %v2734
      %v2736 = vpop.f32.mrb[0].mxu0
      %v2737 = vadd.f32 %v2222, %v2736
      %v2738 = vpop.f32.mrb[0].mxu0
      %2739 = vmatprep.mubr.f32.mxu0 0.0
      %v2740 = vand.u32 %v403, 4294901760
      %2741 = vmatmul.mubr.f32.gmra.mrb[0].mxu0 %v2740
      %v2742 = vpop.f32.mrb[0].mxu0
      %v2743 = vadd.f32 %v2230, %v2742
      %v2744 = vpop.f32.mrb[0].mxu0
      %2745 = vmatprep.mubr.f32.mxu0 0.0
      %v2746 = vand.u32 %v406, 4294901760
      %2747 = vmatmul.mubr.f32.gmra.mrb[0].mxu0 %v2746
      %v2748 = vpop.f32.mrb[0].mxu0
      %v2749 = vadd.f32 %v2238, %v2748
      %v2750 = vpop.f32.mrb[0].mxu0
      %2751 = vmatprep.mubr.f32.mxu0 0.0
      %v2752 = vand.u32 %v409, 4294901760
      %2753 = vmatmul.mubr.f32.gmra.mrb[0].mxu0 %v2752
      %v2754 = vpop.f32.mrb[0].mxu0
      %v2755 = vadd.f32 %v2246, %v2754
      %v2756 = vpop.f32.mrb[0].mxu0
      %2757 = vmatprep.mubr.f32.mxu0 0.0
      %v2758 = vand.u32 %v412, 4294901760
      %2759 = vmatmul.mubr.f32.gmra.mrb[0].mxu0 %v2758
      %v2760 = vpop.f32.mrb[0].mxu0
      %v2761 = vadd.f32 %v2254, %v2760
      %v2762 = vpop.f32.mrb[0].mxu0
      %2763 = vmatprep.mubr.f32.mxu0 0.0
      %v2764 = vand.u32 %v415, 4294901760
      %2765 = vmatmul.mubr.f32.gmra.mrb[0].mxu0 %v2764
      %v2766 = vpop.f32.mrb[0].mxu0
      %v2767 = vadd.f32 %v2262, %v2766
      %v2768 = vpop.f32.mrb[0].mxu0
      %2769 = vmatprep.mubr.f32.mxu0 0.0
      %v2770 = vand.u32 %v418, 4294901760
      %2771 = vmatmul.mubr.f32.gmra.mrb[0].mxu0 %v2770
      %v2772 = vpop.f32.mrb[0].mxu0
      %v2773 = vadd.f32 %v2270, %v2772
      %v2774 = vpop.f32.mrb[0].mxu0
      %2775 = vmatprep.mubr.f32.mxu0 0.0
      %v2776 = vand.u32 %v421, 4294901760
      %2777 = vmatmul.mubr.f32.gmra.mrb[0].mxu0 %v2776
      %v2778 = vpop.f32.mrb[0].mxu0
      %v2779 = vadd.f32 %v2278, %v2778
      %v2780 = vpop.f32.mrb[0].mxu0
      %2781 = vmatprep.mubr.f32.mxu0 0.0
      %v2782 = vand.u32 %v424, 4294901760
      %2783 = vmatmul.mubr.f32.gmra.mrb[0].mxu0 %v2782
      %v2784 = vpop.f32.mrb[0].mxu0
      %v2785 = vadd.f32 %v2286, %v2784
      %v2786 = vpop.f32.mrb[0].mxu0
      %2787 = vmatprep.mubr.f32.mxu0 0.0
      %v2788 = vand.u32 %v427, 4294901760
      %2789 = vmatmul.mubr.f32.gmra.mrb[0].mxu0 %v2788
      %v2790 = vpop.f32.mrb[0].mxu0
      %v2791 = vadd.f32 %v2294, %v2790
      %v2792 = vpop.f32.mrb[0].mxu0
      %2793 = vmatprep.mubr.f32.mxu0 0.0
      %v2794 = vand.u32 %v430, 4294901760
      %2795 = vmatmul.mubr.f32.gmra.mrb[0].mxu0 %v2794
      %v2796 = vpop.f32.mrb[0].mxu0
      %v2797 = vadd.f32 %v2302, %v2796
      %v2798 = vpop.f32.mrb[0].mxu0
      %2799 = vmatprep.mubr.f32.mxu0 0.0
      %v2800 = vand.u32 %v433, 4294901760
      %2801 = vmatmul.mubr.f32.gmra.mrb[0].mxu0 %v2800
      %v2802 = vpop.f32.mrb[0].mxu0
      %v2803 = vadd.f32 %v2310, %v2802
      %v2804 = vpop.f32.mrb[0].mxu0
      %2805 = vmatprep.mubr.f32.mxu0 0.0
      %v2806 = vand.u32 %v436, 4294901760
      %2807 = vmatmul.mubr.f32.gmra.mrb[0].mxu0 %v2806
      %v2808 = vpop.f32.mrb[0].mxu0
      %v2809 = vadd.f32 %v2318, %v2808
      %v2810 = vpop.f32.mrb[0].mxu0
      %2811 = vmatprep.mubr.f32.mxu0 0.0
      %v2812 = vand.u32 %v439, 4294901760
      %2813 = vmatmul.mubr.f32.gmra.mrb[0].mxu0 %v2812
      %v2814 = vpop.f32.mrb[0].mxu0
      %v2815 = vadd.f32 %v2326, %v2814
      %v2816 = vpop.f32.mrb[0].mxu0
      %2817 = vmatprep.mubr.f32.mxu0 0.0
      %v2818 = vand.u32 %v442, 4294901760
      %2819 = vmatmul.mubr.f32.gmra.mrb[0].mxu0 %v2818
      %v2820 = vpop.f32.mrb[0].mxu0
      %v2821 = vadd.f32 %v2334, %v2820
      %v2822 = vpop.f32.mrb[0].mxu0
      %2823 = vmatprep.mubr.f32.mxu0 0.0
      %v2824 = vand.u32 %v445, 4294901760
      %2825 = vmatmul.mubr.f32.gmra.mrb[0].mxu0 %v2824
      %v2826 = vpop.f32.mrb[0].mxu0
      %v2827 = vadd.f32 %v2342, %v2826
      %v2828 = vpop.f32.mrb[0].mxu0
      %2829 = vmatprep.mubr.f32.mxu0 0.0
      %v2830 = vand.u32 %v448, 4294901760
      %2831 = vmatmul.mubr.f32.gmra.mrb[0].mxu0 %v2830
      %v2832 = vpop.f32.mrb[0].mxu0
      %v2833 = vadd.f32 %v2350, %v2832
      %v2834 = vpop.f32.mrb[0].mxu0
      %2835 = vmatprep.mubr.f32.mxu0 0.0
      %v2836 = vand.u32 %v451, 4294901760
      %2837 = vmatmul.mubr.f32.gmra.mrb[0].mxu0 %v2836
      %v2838 = vpop.f32.mrb[0].mxu0
      %v2839 = vadd.f32 %v2358, %v2838
      %v2840 = vpop.f32.mrb[0].mxu0
      %2841 = vmatprep.mubr.f32.mxu0 0.0
      %v2842 = vand.u32 %v454, 4294901760
      %2843 = vmatmul.mubr.f32.gmra.mrb[0].mxu0 %v2842
      %v2844 = vpop.f32.mrb[0].mxu0
      %v2845 = vadd.f32 %v2366, %v2844
      %v2846 = vpop.f32.mrb[0].mxu0
      %2847 = vmatprep.mubr.f32.mxu0 0.0
      %v2848 = vand.u32 %v457, 4294901760
      %2849 = vmatmul.mubr.f32.gmra.mrb[0].mxu0 %v2848
      %v2850 = vpop.f32.mrb[0].mxu0
      %v2851 = vadd.f32 %v2374, %v2850
      %v2852 = vpop.f32.mrb[0].mxu0
      %2853 = vmatprep.mubr.f32.mxu0 0.0
      %v2854 = vand.u32 %v460, 4294901760
      %2855 = vmatmul.mubr.f32.gmra.mrb[0].mxu0 %v2854
      %v2856 = vpop.f32.mrb[0].mxu0
      %v2857 = vadd.f32 %v2382, %v2856
      %v2858 = vpop.f32.mrb[0].mxu0
      %2859 = vmatprep.mubr.f32.mxu0 0.0
      %v2860 = vand.u32 %v463, 4294901760
      %2861 = vmatmul.mubr.f32.gmra.mrb[0].mxu0 %v2860
      %v2862 = vpop.f32.mrb[0].mxu0
      %v2863 = vadd.f32 %v2390, %v2862
      %v2864 = vpop.f32.mrb[0].mxu0
      %2865 = vmatprep.mubr.f32.mxu0 0.0
      %v2866 = vand.u32 %v466, 4294901760
      %2867 = vmatmul.mubr.f32.gmra.mrb[0].mxu0 %v2866
      %v2868 = vpop.f32.mrb[0].mxu0
      %v2869 = vadd.f32 %v2398, %v2868
      %v2870 = vpop.f32.mrb[0].mxu0
      %2871 = vmatprep.mubr.f32.mxu0 0.0
      %v2872 = vand.u32 %v469, 4294901760
      %2873 = vmatmul.mubr.f32.gmra.mrb[0].mxu0 %v2872
      %v2874 = vpop.f32.mrb[0].mxu0
      %v2875 = vadd.f32 %v2406, %v2874
      %v2876 = vpop.f32.mrb[0].mxu0
      %2877 = vmatprep.mubr.f32.mxu0 0.0
      %v2878 = vand.u32 %v472, 4294901760
      %2879 = vmatmul.mubr.f32.gmra.mrb[0].mxu0 %v2878
      %v2880 = vpop.f32.mrb[0].mxu0
      %v2881 = vadd.f32 %v2414, %v2880
      %v2882 = vpop.f32.mrb[0].mxu0
      %2883 = vmatprep.mubr.f32.mxu0 0.0
      %v2884 = vand.u32 %v475, 4294901760
      %2885 = vmatmul.mubr.f32.gmra.mrb[0].mxu0 %v2884
      %v2886 = vpop.f32.mrb[0].mxu0
      %v2887 = vadd.f32 %v2422, %v2886
      %v2888 = vpop.f32.mrb[0].mxu0
      %2889 = vmatprep.mubr.f32.mxu0 0.0
      %v2890 = vand.u32 %v478, 4294901760
      %2891 = vmatmul.mubr.f32.gmra.mrb[0].mxu0 %v2890
      %v2892 = vpop.f32.mrb[0].mxu0
      %v2893 = vadd.f32 %v2430, %v2892
      %v2894 = vpop.f32.mrb[0].mxu0
      %2895 = vmatprep.mubr.f32.mxu0 0.0
      %v2896 = vand.u32 %v481, 4294901760
      %2897 = vmatmul.mubr.f32.gmra.mrb[0].mxu0 %v2896
      %v2898 = vpop.f32.mrb[0].mxu0
      %v2899 = vadd.f32 %v2438, %v2898
      %v2900 = vpop.f32.mrb[0].mxu0
      %2901 = vmatprep.mubr.f32.mxu0 0.0
      %v2902 = vand.u32 %v484, 4294901760
      %2903 = vmatmul.mubr.f32.gmra.mrb[0].mxu0 %v2902
      %v2904 = vpop.f32.mrb[0].mxu0
      %v2905 = vadd.f32 %v2446, %v2904
      %v2906 = vpop.f32.mrb[0].mxu0
      %2907 = vmatprep.mubr.f32.mxu0 0.0
      %v2908 = vand.u32 %v487, 4294901760
      %2909 = vmatmul.mubr.f32.gmra.mrb[0].mxu0 %v2908
      %v2910 = vpop.f32.mrb[0].mxu0
      %v2911 = vadd.f32 %v2454, %v2910
      %v2912 = vpop.f32.mrb[0].mxu0
      %2913 = vmatprep.mubr.f32.mxu0 0.0
      %v2914 = vand.u32 %v490, 4294901760
      %2915 = vmatmul.mubr.f32.gmra.mrb[0].mxu0 %v2914
      %v2916 = vpop.f32.mrb[0].mxu0
      %v2917 = vadd.f32 %v2462, %v2916
      %v2918 = vpop.f32.mrb[0].mxu0
      %2919 = vmatprep.mubr.f32.mxu0 0.0
      %v2920 = vand.u32 %v493, 4294901760
      %2921 = vmatmul.mubr.f32.gmra.mrb[0].mxu0 %v2920
      %v2922 = vpop.f32.mrb[0].mxu0
      %v2923 = vadd.f32 %v2470, %v2922
      %v2924 = vpop.f32.mrb[0].mxu0
      %2925 = vmatprep.mubr.f32.mxu0 0.0
      %v2926 = vand.u32 %v496, 4294901760
      %2927 = vmatmul.mubr.f32.gmra.mrb[0].mxu0 %v2926
      %v2928 = vpop.f32.mrb[0].mxu0
      %v2929 = vadd.f32 %v2478, %v2928
      %v2930 = vpop.f32.mrb[0].mxu0
      %2931 = vmatprep.mubr.f32.mxu0 0.0
      %v2932 = vand.u32 %v499, 4294901760
      %2933 = vmatmul.mubr.f32.gmra.mrb[0].mxu0 %v2932
      %v2934 = vpop.f32.mrb[0].mxu0
      %v2935 = vadd.f32 %v2486, %v2934
      %v2936 = vpop.f32.mrb[0].mxu0
      %2937 = vmatprep.mubr.f32.mxu0 0.0
      %v2938 = vand.u32 %v502, 4294901760
      %2939 = vmatmul.mubr.f32.gmra.mrb[0].mxu0 %v2938
      %v2940 = vpop.f32.mrb[0].mxu0
      %v2941 = vadd.f32 %v2494, %v2940
      %v2942 = vpop.f32.mrb[0].mxu0
      %2943 = vmatprep.mubr.f32.mxu0 0.0
      %v2944 = vand.u32 %v505, 4294901760
      %2945 = vmatmul.mubr.f32.gmra.mrb[0].mxu0 %v2944
      %v2946 = vpop.f32.mrb[0].mxu0
      %v2947 = vadd.f32 %v2502, %v2946
      %v2948 = vpop.f32.mrb[0].mxu0
      %2949 = vmatprep.mubr.f32.mxu0 0.0
      %v2950 = vand.u32 %v508, 4294901760
      %2951 = vmatmul.mubr.f32.gmra.mrb[0].mxu0 %v2950
      %v2952 = vpop.f32.mrb[0].mxu0
      %v2953 = vadd.f32 %v2510, %v2952
      %v2954 = vpop.f32.mrb[0].mxu0
      %2955 = vmatprep.mubr.f32.mxu0 0.0
      %v2956 = vand.u32 %v511, 4294901760
      %2957 = vmatmul.mubr.f32.gmra.mrb[0].mxu0 %v2956
      %v2958 = vpop.f32.mrb[0].mxu0
      %v2959 = vadd.f32 %v2518, %v2958
      %v2960 = vpop.f32.mrb[0].mxu0
      %2961 = vmatprep.mubr.f32.mxu0 0.0
      %v2962 = vand.u32 %v514, 4294901760
      %2963 = vmatmul.mubr.f32.gmra.mrb[0].mxu0 %v2962
      %v2964 = vpop.f32.mrb[0].mxu0
      %v2965 = vadd.f32 %v2526, %v2964
      %v2966 = vpop.f32.mrb[0].mxu0
      %2967 = vmatprep.mubr.f32.mxu0 0.0
      %v2968 = vand.u32 %v517, 4294901760
      %2969 = vmatmul.mubr.f32.gmra.mrb[0].mxu0 %v2968
      %v2970 = vpop.f32.mrb[0].mxu0
      %v2971 = vadd.f32 %v2534, %v2970
      %v2972 = vpop.f32.mrb[0].mxu0
      %2973 = vmatprep.mubr.f32.mxu0 0.0
      %v2974 = vand.u32 %v520, 4294901760
      %2975 = vmatmul.mubr.f32.gmra.mrb[0].mxu0 %v2974
      %v2976 = vpop.f32.mrb[0].mxu0
      %v2977 = vadd.f32 %v2542, %v2976
      %v2978 = vpop.f32.mrb[0].mxu0
      %2979 = vmatprep.mubr.f32.mxu0 0.0
      %v2980 = vand.u32 %v523, 4294901760
      %2981 = vmatmul.mubr.f32.gmra.mrb[0].mxu0 %v2980
      %v2982 = vpop.f32.mrb[0].mxu0
      %v2983 = vadd.f32 %v2550, %v2982
      %v2984 = vpop.f32.mrb[0].mxu0
      %2985 = vmatprep.mubr.f32.mxu0 0.0
      %v2986 = vand.u32 %v526, 4294901760
      %2987 = vmatmul.mubr.f32.gmra.mrb[0].mxu0 %v2986
      %v2988 = vpop.f32.mrb[0].mxu0
      %v2989 = vadd.f32 %v2558, %v2988
      %v2990 = vpop.f32.mrb[0].mxu0
      %2991 = vmatprep.mubr.f32.mxu0 0.0
      %v2992 = vand.u32 %v529, 4294901760
      %2993 = vmatmul.mubr.f32.gmra.mrb[0].mxu0 %v2992
      %v2994 = vpop.f32.mrb[0].mxu0
      %v2995 = vadd.f32 %v2566, %v2994
      %v2996 = vpop.f32.mrb[0].mxu0
      %2997 = vmatprep.mubr.f32.mxu0 0.0
      %v2998 = vand.u32 %v532, 4294901760
      %2999 = vmatmul.mubr.f32.gmra.mrb[0].mxu0 %v2998
      %v3000 = vpop.f32.mrb[0].mxu0
      %v3001 = vadd.f32 %v2574, %v3000
      %v3002 = vpop.f32.mrb[0].mxu0
      %3003 = vmatprep.mubr.f32.mxu0 0.0
      %v3004 = vand.u32 %v535, 4294901760
      %3005 = vmatmul.mubr.f32.gmra.mrb[0].mxu0 %v3004
      %v3006 = vpop.f32.mrb[0].mxu0
      %v3007 = vadd.f32 %v2582, %v3006
      %v3008 = vpop.f32.mrb[0].mxu0
      %3009 = vmatprep.mubr.f32.mxu0 0.0
      %v3010 = vand.u32 %v538, 4294901760
      %3011 = vmatmul.mubr.f32.gmra.mrb[0].mxu0 %v3010
      %v3012 = vpop.f32.mrb[0].mxu0
      %v3013 = vadd.f32 %v2590, %v3012
      %v3014 = vpop.f32.mrb[0].mxu0
      %3015 = vmatprep.mubr.f32.mxu0 0.0
      %v3016 = vand.u32 %v541, 4294901760
      %3017 = vmatmul.mubr.f32.gmra.mrb[0].mxu0 %v3016
      %v3018 = vpop.f32.mrb[0].mxu0
      %v3019 = vadd.f32 %v2598, %v3018
      %v3020 = vpop.f32.mrb[0].mxu0
      %3021 = vmatprep.mubr.f32.mxu0 0.0
      %v3022 = vand.u32 %v544, 4294901760
      %3023 = vmatmul.mubr.f32.gmra.mrb[0].mxu0 %v3022
      %v3024 = vpop.f32.mrb[0].mxu0
      %v3025 = vadd.f32 %v2606, %v3024
      %v3026 = vpop.f32.mrb[0].mxu0
      %3027 = vdwg.mxu0
      %3028 = vmatprep.subr.mxu0 0.0
      %v3029 = vand.u32 %v363, 4294901760
      %3030 = vmatpush1.msra.mxu0 %v3029
      %3031 = vmatprep.subr.mxu0 0.0
      %v3032 = vand.u32 %v364, 4294901760
      %3033 = vmatpush1.msra.mxu0 %v3032
      %3034 = vmatprep.subr.mxu0 0.0
      %v3035 = vand.u32 %v365, 4294901760
      %3036 = vmatpush1.msra.mxu0 %v3035
      %3037 = vmatprep.subr.mxu0 0.0
      %v3038 = vand.u32 %v366, 4294901760
      %3039 = vmatpush1.msra.mxu0 %v3038
      %3040 = vmatprep.subr.mxu0 0.0
      %3041 = vmatpush1.msra.mxu0 0.0
      %3042 = vmatprep.subr.mxu0 0.0
      %3043 = vmatpush1.msra.mxu0 0.0
      %3044 = vmatprep.subr.mxu0 0.0
      %3045 = vmatpush1.msra.mxu0 0.0
      %3046 = vmatprep.subr.mxu0 0.0
      %3047 = vmatpush1.msra.mxu0 0.0
      %3048 = vmatprep.subr.mxu0 0.0
      %3049 = vmatpush1.msra.mxu0 0.0
      %3050 = vmatprep.subr.mxu0 0.0
      %3051 = vmatpush1.msra.mxu0 0.0
      %3052 = vmatprep.subr.mxu0 0.0
      %3053 = vmatpush1.msra.mxu0 0.0
      %3054 = vmatprep.subr.mxu0 0.0
      %3055 = vmatpush1.msra.mxu0 0.0
      %3056 = vmatprep.subr.mxu0 0.0
      %3057 = vmatpush1.msra.mxu0 0.0
      %3058 = vmatprep.subr.mxu0 0.0
      %3059 = vmatpush1.msra.mxu0 0.0
      %3060 = vmatprep.subr.mxu0 0.0
      %3061 = vmatpush1.msra.mxu0 0.0
      %3062 = vmatprep.subr.mxu0 0.0
      %3063 = vmatpush1.msra.mxu0 0.0
      %3064 = vmatprep.subr.mxu0 0.0
      %3065 = vmatpush1.msra.mxu0 0.0
      %3066 = vmatprep.subr.mxu0 0.0
      %3067 = vmatpush1.msra.mxu0 0.0
      %3068 = vmatprep.subr.mxu0 0.0
      %3069 = vmatpush1.msra.mxu0 0.0
      %3070 = vmatprep.subr.mxu0 0.0
      %3071 = vmatpush1.msra.mxu0 0.0
      %3072 = vmatprep.subr.mxu0 0.0
      %3073 = vmatpush1.msra.mxu0 0.0
      %3074 = vmatprep.subr.mxu0 0.0
      %3075 = vmatpush1.msra.mxu0 0.0
      %3076 = vmatprep.subr.mxu0 0.0
      %3077 = vmatpush1.msra.mxu0 0.0
      %3078 = vmatprep.subr.mxu0 0.0
      %3079 = vmatpush1.msra.mxu0 0.0
      %3080 = vmatprep.subr.mxu0 0.0
      %3081 = vmatpush1.msra.mxu0 0.0
      %3082 = vmatprep.subr.mxu0 0.0
      %3083 = vmatpush1.msra.mxu0 0.0
      %3084 = vmatprep.subr.mxu0 0.0
      %3085 = vmatpush1.msra.mxu0 0.0
      %3086 = vmatprep.subr.mxu0 0.0
      %3087 = vmatpush1.msra.mxu0 0.0
      %3088 = vmatprep.subr.mxu0 0.0
      %3089 = vmatpush1.msra.mxu0 0.0
      %3090 = vmatprep.subr.mxu0 0.0
      %3091 = vmatpush1.msra.mxu0 0.0
      %3092 = vmatprep.subr.mxu0 0.0
      %3093 = vmatpush1.msra.mxu0 0.0
      %3094 = vmatprep.subr.mxu0 0.0
      %3095 = vmatpush1.msra.mxu0 0.0
      %3096 = vmatprep.mubr.f32.mxu0 0.0
      %v3097 = vand.u32 %v376, 4294901760
      %3098 = vmatmul.mubr.f32.gmra.mrb[0].mxu0 %v3097
      %v3099 = vpop.f32.mrb[0].mxu0
      %v3100 = vadd.f32 %v2689, %v3099
      %v3101 = vpop.f32.mrb[0].mxu0
      %3102 = vmatprep.mubr.f32.mxu0 0.0
      %v3103 = vand.u32 %v379, 4294901760
      %3104 = vmatmul.mubr.f32.gmra.mrb[0].mxu0 %v3103
      %v3105 = vpop.f32.mrb[0].mxu0
      %v3106 = vadd.f32 %v2695, %v3105
      %v3107 = vpop.f32.mrb[0].mxu0
      %3108 = vmatprep.mubr.f32.mxu0 0.0
      %v3109 = vand.u32 %v382, 4294901760
      %3110 = vmatmul.mubr.f32.gmra.mrb[0].mxu0 %v3109
      %v3111 = vpop.f32.mrb[0].mxu0
      %v3112 = vadd.f32 %v2701, %v3111
      %v3113 = vpop.f32.mrb[0].mxu0
      %3114 = vmatprep.mubr.f32.mxu0 0.0
      %v3115 = vand.u32 %v385, 4294901760
      %3116 = vmatmul.mubr.f32.gmra.mrb[0].mxu0 %v3115
      %v3117 = vpop.f32.mrb[0].mxu0
      %v3118 = vadd.f32 %v2707, %v3117
      %v3119 = vpop.f32.mrb[0].mxu0
      %3120 = vmatprep.mubr.f32.mxu0 0.0
      %v3121 = vand.u32 %v388, 4294901760
      %3122 = vmatmul.mubr.f32.gmra.mrb[0].mxu0 %v3121
      %v3123 = vpop.f32.mrb[0].mxu0
      %v3124 = vadd.f32 %v2713, %v3123
      %v3125 = vpop.f32.mrb[0].mxu0
      %3126 = vmatprep.mubr.f32.mxu0 0.0
      %v3127 = vand.u32 %v391, 4294901760
      %3128 = vmatmul.mubr.f32.gmra.mrb[0].mxu0 %v3127
      %v3129 = vpop.f32.mrb[0].mxu0
      %v3130 = vadd.f32 %v2719, %v3129
      %v3131 = vpop.f32.mrb[0].mxu0
      %3132 = vmatprep.mubr.f32.mxu0 0.0
      %v3133 = vand.u32 %v394, 4294901760
      %3134 = vmatmul.mubr.f32.gmra.mrb[0].mxu0 %v3133
      %v3135 = vpop.f32.mrb[0].mxu0
      %v3136 = vadd.f32 %v2725, %v3135
      %v3137 = vpop.f32.mrb[0].mxu0
      %3138 = vmatprep.mubr.f32.mxu0 0.0
      %v3139 = vand.u32 %v397, 4294901760
      %3140 = vmatmul.mubr.f32.gmra.mrb[0].mxu0 %v3139
      %v3141 = vpop.f32.mrb[0].mxu0
      %v3142 = vadd.f32 %v2731, %v3141
      %v3143 = vpop.f32.mrb[0].mxu0
      %3144 = vmatprep.mubr.f32.mxu0 0.0
      %v3145 = vand.u32 %v400, 4294901760
      %3146 = vmatmul.mubr.f32.gmra.mrb[0].mxu0 %v3145
      %v3147 = vpop.f32.mrb[0].mxu0
      %v3148 = vadd.f32 %v2737, %v3147
      %v3149 = vpop.f32.mrb[0].mxu0
      %3150 = vmatprep.mubr.f32.mxu0 0.0
      %v3151 = vand.u32 %v403, 4294901760
      %3152 = vmatmul.mubr.f32.gmra.mrb[0].mxu0 %v3151
      %v3153 = vpop.f32.mrb[0].mxu0
      %v3154 = vadd.f32 %v2743, %v3153
      %v3155 = vpop.f32.mrb[0].mxu0
      %3156 = vmatprep.mubr.f32.mxu0 0.0
      %v3157 = vand.u32 %v406, 4294901760
      %3158 = vmatmul.mubr.f32.gmra.mrb[0].mxu0 %v3157
      %v3159 = vpop.f32.mrb[0].mxu0
      %v3160 = vadd.f32 %v2749, %v3159
      %v3161 = vpop.f32.mrb[0].mxu0
      %3162 = vmatprep.mubr.f32.mxu0 0.0
      %v3163 = vand.u32 %v409, 4294901760
      %3164 = vmatmul.mubr.f32.gmra.mrb[0].mxu0 %v3163
      %v3165 = vpop.f32.mrb[0].mxu0
      %v3166 = vadd.f32 %v2755, %v3165
      %v3167 = vpop.f32.mrb[0].mxu0
      %3168 = vmatprep.mubr.f32.mxu0 0.0
      %v3169 = vand.u32 %v412, 4294901760
      %3170 = vmatmul.mubr.f32.gmra.mrb[0].mxu0 %v3169
      %v3171 = vpop.f32.mrb[0].mxu0
      %v3172 = vadd.f32 %v2761, %v3171
      %v3173 = vpop.f32.mrb[0].mxu0
      %3174 = vmatprep.mubr.f32.mxu0 0.0
      %v3175 = vand.u32 %v415, 4294901760
      %3176 = vmatmul.mubr.f32.gmra.mrb[0].mxu0 %v3175
      %v3177 = vpop.f32.mrb[0].mxu0
      %v3178 = vadd.f32 %v2767, %v3177
      %v3179 = vpop.f32.mrb[0].mxu0
      %3180 = vmatprep.mubr.f32.mxu0 0.0
      %v3181 = vand.u32 %v418, 4294901760
      %3182 = vmatmul.mubr.f32.gmra.mrb[0].mxu0 %v3181
      %v3183 = vpop.f32.mrb[0].mxu0
      %v3184 = vadd.f32 %v2773, %v3183
      %v3185 = vpop.f32.mrb[0].mxu0
      %3186 = vmatprep.mubr.f32.mxu0 0.0
      %v3187 = vand.u32 %v421, 4294901760
      %3188 = vmatmul.mubr.f32.gmra.mrb[0].mxu0 %v3187
      %v3189 = vpop.f32.mrb[0].mxu0
      %v3190 = vadd.f32 %v2779, %v3189
      %v3191 = vpop.f32.mrb[0].mxu0
      %3192 = vmatprep.mubr.f32.mxu0 0.0
      %v3193 = vand.u32 %v424, 4294901760
      %3194 = vmatmul.mubr.f32.gmra.mrb[0].mxu0 %v3193
      %v3195 = vpop.f32.mrb[0].mxu0
      %v3196 = vadd.f32 %v2785, %v3195
      %v3197 = vpop.f32.mrb[0].mxu0
      %3198 = vmatprep.mubr.f32.mxu0 0.0
      %v3199 = vand.u32 %v427, 4294901760
      %3200 = vmatmul.mubr.f32.gmra.mrb[0].mxu0 %v3199
      %v3201 = vpop.f32.mrb[0].mxu0
      %v3202 = vadd.f32 %v2791, %v3201
      %v3203 = vpop.f32.mrb[0].mxu0
      %3204 = vmatprep.mubr.f32.mxu0 0.0
      %v3205 = vand.u32 %v430, 4294901760
      %3206 = vmatmul.mubr.f32.gmra.mrb[0].mxu0 %v3205
      %v3207 = vpop.f32.mrb[0].mxu0
      %v3208 = vadd.f32 %v2797, %v3207
      %v3209 = vpop.f32.mrb[0].mxu0
      %3210 = vmatprep.mubr.f32.mxu0 0.0
      %v3211 = vand.u32 %v433, 4294901760
      %3212 = vmatmul.mubr.f32.gmra.mrb[0].mxu0 %v3211
      %v3213 = vpop.f32.mrb[0].mxu0
      %v3214 = vadd.f32 %v2803, %v3213
      %v3215 = vpop.f32.mrb[0].mxu0
      %3216 = vmatprep.mubr.f32.mxu0 0.0
      %v3217 = vand.u32 %v436, 4294901760
      %3218 = vmatmul.mubr.f32.gmra.mrb[0].mxu0 %v3217
      %v3219 = vpop.f32.mrb[0].mxu0
      %v3220 = vadd.f32 %v2809, %v3219
      %v3221 = vpop.f32.mrb[0].mxu0
      %3222 = vmatprep.mubr.f32.mxu0 0.0
      %v3223 = vand.u32 %v439, 4294901760
      %3224 = vmatmul.mubr.f32.gmra.mrb[0].mxu0 %v3223
      %v3225 = vpop.f32.mrb[0].mxu0
      %v3226 = vadd.f32 %v2815, %v3225
      %v3227 = vpop.f32.mrb[0].mxu0
      %3228 = vmatprep.mubr.f32.mxu0 0.0
      %v3229 = vand.u32 %v442, 4294901760
      %3230 = vmatmul.mubr.f32.gmra.mrb[0].mxu0 %v3229
      %v3231 = vpop.f32.mrb[0].mxu0
      %v3232 = vadd.f32 %v2821, %v3231
      %v3233 = vpop.f32.mrb[0].mxu0
      %3234 = vmatprep.mubr.f32.mxu0 0.0
      %v3235 = vand.u32 %v445, 4294901760
      %3236 = vmatmul.mubr.f32.gmra.mrb[0].mxu0 %v3235
      %v3237 = vpop.f32.mrb[0].mxu0
      %v3238 = vadd.f32 %v2827, %v3237
      %v3239 = vpop.f32.mrb[0].mxu0
      %3240 = vmatprep.mubr.f32.mxu0 0.0
      %v3241 = vand.u32 %v448, 4294901760
      %3242 = vmatmul.mubr.f32.gmra.mrb[0].mxu0 %v3241
      %v3243 = vpop.f32.mrb[0].mxu0
      %v3244 = vadd.f32 %v2833, %v3243
      %v3245 = vpop.f32.mrb[0].mxu0
      %3246 = vmatprep.mubr.f32.mxu0 0.0
      %v3247 = vand.u32 %v451, 4294901760
      %3248 = vmatmul.mubr.f32.gmra.mrb[0].mxu0 %v3247
      %v3249 = vpop.f32.mrb[0].mxu0
      %v3250 = vadd.f32 %v2839, %v3249
      %v3251 = vpop.f32.mrb[0].mxu0
      %3252 = vmatprep.mubr.f32.mxu0 0.0
      %v3253 = vand.u32 %v454, 4294901760
      %3254 = vmatmul.mubr.f32.gmra.mrb[0].mxu0 %v3253
      %v3255 = vpop.f32.mrb[0].mxu0
      %v3256 = vadd.f32 %v2845, %v3255
      %v3257 = vpop.f32.mrb[0].mxu0
      %3258 = vmatprep.mubr.f32.mxu0 0.0
      %v3259 = vand.u32 %v457, 4294901760
      %3260 = vmatmul.mubr.f32.gmra.mrb[0].mxu0 %v3259
      %v3261 = vpop.f32.mrb[0].mxu0
      %v3262 = vadd.f32 %v2851, %v3261
      %v3263 = vpop.f32.mrb[0].mxu0
      %3264 = vmatprep.mubr.f32.mxu0 0.0
      %v3265 = vand.u32 %v460, 4294901760
      %3266 = vmatmul.mubr.f32.gmra.mrb[0].mxu0 %v3265
      %v3267 = vpop.f32.mrb[0].mxu0
      %v3268 = vadd.f32 %v2857, %v3267
      %v3269 = vpop.f32.mrb[0].mxu0
      %3270 = vmatprep.mubr.f32.mxu0 0.0
      %v3271 = vand.u32 %v463, 4294901760
      %3272 = vmatmul.mubr.f32.gmra.mrb[0].mxu0 %v3271
      %v3273 = vpop.f32.mrb[0].mxu0
      %v3274 = vadd.f32 %v2863, %v3273
      %v3275 = vpop.f32.mrb[0].mxu0
      %3276 = vmatprep.mubr.f32.mxu0 0.0
      %v3277 = vand.u32 %v466, 4294901760
      %3278 = vmatmul.mubr.f32.gmra.mrb[0].mxu0 %v3277
      %v3279 = vpop.f32.mrb[0].mxu0
      %v3280 = vadd.f32 %v2869, %v3279
      %v3281 = vpop.f32.mrb[0].mxu0
      %3282 = vmatprep.mubr.f32.mxu0 0.0
      %v3283 = vand.u32 %v469, 4294901760
      %3284 = vmatmul.mubr.f32.gmra.mrb[0].mxu0 %v3283
      %v3285 = vpop.f32.mrb[0].mxu0
      %v3286 = vadd.f32 %v2875, %v3285
      %v3287 = vpop.f32.mrb[0].mxu0
      %3288 = vmatprep.mubr.f32.mxu0 0.0
      %v3289 = vand.u32 %v472, 4294901760
      %3290 = vmatmul.mubr.f32.gmra.mrb[0].mxu0 %v3289
      %v3291 = vpop.f32.mrb[0].mxu0
      %v3292 = vadd.f32 %v2881, %v3291
      %v3293 = vpop.f32.mrb[0].mxu0
      %3294 = vmatprep.mubr.f32.mxu0 0.0
      %v3295 = vand.u32 %v475, 4294901760
      %3296 = vmatmul.mubr.f32.gmra.mrb[0].mxu0 %v3295
      %v3297 = vpop.f32.mrb[0].mxu0
      %v3298 = vadd.f32 %v2887, %v3297
      %v3299 = vpop.f32.mrb[0].mxu0
      %3300 = vmatprep.mubr.f32.mxu0 0.0
      %v3301 = vand.u32 %v478, 4294901760
      %3302 = vmatmul.mubr.f32.gmra.mrb[0].mxu0 %v3301
      %v3303 = vpop.f32.mrb[0].mxu0
      %v3304 = vadd.f32 %v2893, %v3303
      %v3305 = vpop.f32.mrb[0].mxu0
      %3306 = vmatprep.mubr.f32.mxu0 0.0
      %v3307 = vand.u32 %v481, 4294901760
      %3308 = vmatmul.mubr.f32.gmra.mrb[0].mxu0 %v3307
      %v3309 = vpop.f32.mrb[0].mxu0
      %v3310 = vadd.f32 %v2899, %v3309
      %v3311 = vpop.f32.mrb[0].mxu0
      %3312 = vmatprep.mubr.f32.mxu0 0.0
      %v3313 = vand.u32 %v484, 4294901760
      %3314 = vmatmul.mubr.f32.gmra.mrb[0].mxu0 %v3313
      %v3315 = vpop.f32.mrb[0].mxu0
      %v3316 = vadd.f32 %v2905, %v3315
      %v3317 = vpop.f32.mrb[0].mxu0
      %3318 = vmatprep.mubr.f32.mxu0 0.0
      %v3319 = vand.u32 %v487, 4294901760
      %3320 = vmatmul.mubr.f32.gmra.mrb[0].mxu0 %v3319
      %v3321 = vpop.f32.mrb[0].mxu0
      %v3322 = vadd.f32 %v2911, %v3321
      %v3323 = vpop.f32.mrb[0].mxu0
      %3324 = vmatprep.mubr.f32.mxu0 0.0
      %v3325 = vand.u32 %v490, 4294901760
      %3326 = vmatmul.mubr.f32.gmra.mrb[0].mxu0 %v3325
      %v3327 = vpop.f32.mrb[0].mxu0
      %v3328 = vadd.f32 %v2917, %v3327
      %v3329 = vpop.f32.mrb[0].mxu0
      %3330 = vmatprep.mubr.f32.mxu0 0.0
      %v3331 = vand.u32 %v493, 4294901760
      %3332 = vmatmul.mubr.f32.gmra.mrb[0].mxu0 %v3331
      %v3333 = vpop.f32.mrb[0].mxu0
      %v3334 = vadd.f32 %v2923, %v3333
      %v3335 = vpop.f32.mrb[0].mxu0
      %3336 = vmatprep.mubr.f32.mxu0 0.0
      %v3337 = vand.u32 %v496, 4294901760
      %3338 = vmatmul.mubr.f32.gmra.mrb[0].mxu0 %v3337
      %v3339 = vpop.f32.mrb[0].mxu0
      %v3340 = vadd.f32 %v2929, %v3339
      %v3341 = vpop.f32.mrb[0].mxu0
      %3342 = vmatprep.mubr.f32.mxu0 0.0
      %v3343 = vand.u32 %v499, 4294901760
      %3344 = vmatmul.mubr.f32.gmra.mrb[0].mxu0 %v3343
      %v3345 = vpop.f32.mrb[0].mxu0
      %v3346 = vadd.f32 %v2935, %v3345
      %v3347 = vpop.f32.mrb[0].mxu0
      %3348 = vmatprep.mubr.f32.mxu0 0.0
      %v3349 = vand.u32 %v502, 4294901760
      %3350 = vmatmul.mubr.f32.gmra.mrb[0].mxu0 %v3349
      %v3351 = vpop.f32.mrb[0].mxu0
      %v3352 = vadd.f32 %v2941, %v3351
      %v3353 = vpop.f32.mrb[0].mxu0
      %3354 = vmatprep.mubr.f32.mxu0 0.0
      %v3355 = vand.u32 %v505, 4294901760
      %3356 = vmatmul.mubr.f32.gmra.mrb[0].mxu0 %v3355
      %v3357 = vpop.f32.mrb[0].mxu0
      %v3358 = vadd.f32 %v2947, %v3357
      %v3359 = vpop.f32.mrb[0].mxu0
      %3360 = vmatprep.mubr.f32.mxu0 0.0
      %v3361 = vand.u32 %v508, 4294901760
      %3362 = vmatmul.mubr.f32.gmra.mrb[0].mxu0 %v3361
      %v3363 = vpop.f32.mrb[0].mxu0
      %v3364 = vadd.f32 %v2953, %v3363
      %v3365 = vpop.f32.mrb[0].mxu0
      %3366 = vmatprep.mubr.f32.mxu0 0.0
      %v3367 = vand.u32 %v511, 4294901760
      %3368 = vmatmul.mubr.f32.gmra.mrb[0].mxu0 %v3367
      %v3369 = vpop.f32.mrb[0].mxu0
      %v3370 = vadd.f32 %v2959, %v3369
      %v3371 = vpop.f32.mrb[0].mxu0
      %3372 = vmatprep.mubr.f32.mxu0 0.0
      %v3373 = vand.u32 %v514, 4294901760
      %3374 = vmatmul.mubr.f32.gmra.mrb[0].mxu0 %v3373
      %v3375 = vpop.f32.mrb[0].mxu0
      %v3376 = vadd.f32 %v2965, %v3375
      %v3377 = vpop.f32.mrb[0].mxu0
      %3378 = vmatprep.mubr.f32.mxu0 0.0
      %v3379 = vand.u32 %v517, 4294901760
      %3380 = vmatmul.mubr.f32.gmra.mrb[0].mxu0 %v3379
      %v3381 = vpop.f32.mrb[0].mxu0
      %v3382 = vadd.f32 %v2971, %v3381
      %v3383 = vpop.f32.mrb[0].mxu0
      %3384 = vmatprep.mubr.f32.mxu0 0.0
      %v3385 = vand.u32 %v520, 4294901760
      %3386 = vmatmul.mubr.f32.gmra.mrb[0].mxu0 %v3385
      %v3387 = vpop.f32.mrb[0].mxu0
      %v3388 = vadd.f32 %v2977, %v3387
      %v3389 = vpop.f32.mrb[0].mxu0
      %3390 = vmatprep.mubr.f32.mxu0 0.0
      %v3391 = vand.u32 %v523, 4294901760
      %3392 = vmatmul.mubr.f32.gmra.mrb[0].mxu0 %v3391
      %v3393 = vpop.f32.mrb[0].mxu0
      %v3394 = vadd.f32 %v2983, %v3393
      %v3395 = vpop.f32.mrb[0].mxu0
      %3396 = vmatprep.mubr.f32.mxu0 0.0
      %v3397 = vand.u32 %v526, 4294901760
      %3398 = vmatmul.mubr.f32.gmra.mrb[0].mxu0 %v3397
      %v3399 = vpop.f32.mrb[0].mxu0
      %v3400 = vadd.f32 %v2989, %v3399
      %v3401 = vpop.f32.mrb[0].mxu0
      %3402 = vmatprep.mubr.f32.mxu0 0.0
      %v3403 = vand.u32 %v529, 4294901760
      %3404 = vmatmul.mubr.f32.gmra.mrb[0].mxu0 %v3403
      %v3405 = vpop.f32.mrb[0].mxu0
      %v3406 = vadd.f32 %v2995, %v3405
      %v3407 = vpop.f32.mrb[0].mxu0
      %3408 = vmatprep.mubr.f32.mxu0 0.0
      %v3409 = vand.u32 %v532, 4294901760
      %3410 = vmatmul.mubr.f32.gmra.mrb[0].mxu0 %v3409
      %v3411 = vpop.f32.mrb[0].mxu0
      %v3412 = vadd.f32 %v3001, %v3411
      %v3413 = vpop.f32.mrb[0].mxu0
      %3414 = vmatprep.mubr.f32.mxu0 0.0
      %v3415 = vand.u32 %v535, 4294901760
      %3416 = vmatmul.mubr.f32.gmra.mrb[0].mxu0 %v3415
      %v3417 = vpop.f32.mrb[0].mxu0
      %v3418 = vadd.f32 %v3007, %v3417
      %v3419 = vpop.f32.mrb[0].mxu0
      %3420 = vmatprep.mubr.f32.mxu0 0.0
      %v3421 = vand.u32 %v538, 4294901760
      %3422 = vmatmul.mubr.f32.gmra.mrb[0].mxu0 %v3421
      %v3423 = vpop.f32.mrb[0].mxu0
      %v3424 = vadd.f32 %v3013, %v3423
      %v3425 = vpop.f32.mrb[0].mxu0
      %3426 = vmatprep.mubr.f32.mxu0 0.0
      %v3427 = vand.u32 %v541, 4294901760
      %3428 = vmatmul.mubr.f32.gmra.mrb[0].mxu0 %v3427
      %v3429 = vpop.f32.mrb[0].mxu0
      %v3430 = vadd.f32 %v3019, %v3429
      %v3431 = vpop.f32.mrb[0].mxu0
      %3432 = vmatprep.mubr.f32.mxu0 0.0
      %v3433 = vand.u32 %v544, 4294901760
      %3434 = vmatmul.mubr.f32.gmra.mrb[0].mxu0 %v3433
      %v3435 = vpop.f32.mrb[0].mxu0
      %v3436 = vadd.f32 %v3025, %v3435
      %v3437 = vpop.f32.mrb[0].mxu0
      %3438 = vdwg.mxu0
      %v3439 = vmax.f32 %v3100, 0.0
      %v3440 = vmax.f32 %v3106, 0.0
      %v3441 = vmax.f32 %v3112, 0.0
      %v3442 = vmax.f32 %v3118, 0.0
      %v3443 = vmax.f32 %v3124, 0.0
      %v3444 = vmax.f32 %v3130, 0.0
      %v3445 = vmax.f32 %v3136, 0.0
      %v3446 = vmax.f32 %v3142, 0.0
      %v3447 = vmax.f32 %v3148, 0.0
      %v3448 = vmax.f32 %v3154, 0.0
      %v3449 = vmax.f32 %v3160, 0.0
      %v3450 = vmax.f32 %v3166, 0.0
      %v3451 = vmax.f32 %v3172, 0.0
      %v3452 = vmax.f32 %v3178, 0.0
      %v3453 = vmax.f32 %v3184, 0.0
      %v3454 = vmax.f32 %v3190, 0.0
      %v3455 = vmax.f32 %v3196, 0.0
      %v3456 = vmax.f32 %v3202, 0.0
      %v3457 = vmax.f32 %v3208, 0.0
      %v3458 = vmax.f32 %v3214, 0.0
      %v3459 = vmax.f32 %v3220, 0.0
      %v3460 = vmax.f32 %v3226, 0.0
      %v3461 = vmax.f32 %v3232, 0.0
      %v3462 = vmax.f32 %v3238, 0.0
      %v3463 = vmax.f32 %v3244, 0.0
      %v3464 = vmax.f32 %v3250, 0.0
      %v3465 = vmax.f32 %v3256, 0.0
      %v3466 = vmax.f32 %v3262, 0.0
      %v3467 = vmax.f32 %v3268, 0.0
      %v3468 = vmax.f32 %v3274, 0.0
      %v3469 = vmax.f32 %v3280, 0.0
      %v3470 = vmax.f32 %v3286, 0.0
      %v3471 = vmax.f32 %v3292, 0.0
      %v3472 = vmax.f32 %v3298, 0.0
      %v3473 = vmax.f32 %v3304, 0.0
      %v3474 = vmax.f32 %v3310, 0.0
      %v3475 = vmax.f32 %v3316, 0.0
      %v3476 = vmax.f32 %v3322, 0.0
      %v3477 = vmax.f32 %v3328, 0.0
      %v3478 = vmax.f32 %v3334, 0.0
      %v3479 = vmax.f32 %v3340, 0.0
      %v3480 = vmax.f32 %v3346, 0.0
      %v3481 = vmax.f32 %v3352, 0.0
      %v3482 = vmax.f32 %v3358, 0.0
      %v3483 = vmax.f32 %v3364, 0.0
      %v3484 = vmax.f32 %v3370, 0.0
      %v3485 = vmax.f32 %v3376, 0.0
      %v3486 = vmax.f32 %v3382, 0.0
      %v3487 = vmax.f32 %v3388, 0.0
      %v3488 = vmax.f32 %v3394, 0.0
      %v3489 = vmax.f32 %v3400, 0.0
      %v3490 = vmax.f32 %v3406, 0.0
      %v3491 = vmax.f32 %v3412, 0.0
      %v3492 = vmax.f32 %v3418, 0.0
      %v3493 = vmax.f32 %v3424, 0.0
      %v3494 = vmax.f32 %v3430, 0.0
      %v3495 = vmax.f32 %v3436, 0.0
      %v3496 = vld [vmem:[%s1] sm:$0xff]
      %v3497 = vld [vmem:[%s1 + $0x8] sm:$0xff]
      %v3498 = vld [vmem:[%s1 + $0x10] sm:$0xff]
      %v3499 = vld [vmem:[%s1 + $0x18] sm:$0xff]
      %v3500 = vld [vmem:[%s1 + $0x20] sm:$0xff]
      %v3501 = vld [vmem:[%s1 + $0x28] sm:$0xff]
      %v3502 = vld [vmem:[%s1 + $0x30] sm:$0xff]
      %v3503 = vld [vmem:[%s1 + $0x38] sm:$0xff]
      %v3504 = vld [vmem:[%s1 + $0x40] sm:$0xff]
      %v3505 = vld [vmem:[%s1 + $0x48] sm:$0xff]
      %v3506 = vld [vmem:[%s1 + $0x50] sm:$0xff]
      %v3507 = vld [vmem:[%s1 + $0x58] sm:$0xff]
      %v3508 = vld [vmem:[%s1 + $0x60] sm:$0xff]
      %v3509 = vld [vmem:[%s1 + $0x68] sm:$0xff]
      %v3510 = vld [vmem:[%s1 + $0x70] sm:$0xff]
      %v3511 = vld [vmem:[%s1 + $0x78] sm:$0xff]
      %v3512 = vld [vmem:[%s1 + $0x80] sm:$0xff]
      %v3513 = vld [vmem:[%s1 + $0x88] sm:$0xff]
      %v3514 = vld [vmem:[%s1 + $0x90] sm:$0xff]
      %v3515 = vld [vmem:[%s1 + $0x98] sm:$0xff]
      %v3516 = vld [vmem:[%s1 + $0xa0] sm:$0xff]
      %v3517 = vld [vmem:[%s1 + $0xa8] sm:$0xff]
      %v3518 = vld [vmem:[%s1 + $0xb0] sm:$0xff]
      %v3519 = vld [vmem:[%s1 + $0xb8] sm:$0xff]
      %v3520 = vld [vmem:[%s1 + $0xc0] sm:$0xff]
      %v3521 = vld [vmem:[%s1 + $0xc8] sm:$0xff]
      %v3522 = vld [vmem:[%s1 + $0xd0] sm:$0xff]
      %v3523 = vld [vmem:[%s1 + $0xd8] sm:$0xff]
      %v3524 = vld [vmem:[%s1 + $0xe0] sm:$0xff]
      %v3525 = vld [vmem:[%s1 + $0xe8] sm:$0xff]
      %v3526 = vld [vmem:[%s1 + $0xf0] sm:$0xff]
      %v3527 = vld [vmem:[%s1 + $0xf8] sm:$0xff]
      %v3528 = vld [vmem:[%s1 + $0x100] sm:$0xff]
      %v3529 = vld [vmem:[%s1 + $0x108] sm:$0xff]
      %v3530 = vld [vmem:[%s1 + $0x110] sm:$0xff]
      %v3531 = vld [vmem:[%s1 + $0x118] sm:$0xff]
      %v3532 = vld [vmem:[%s1 + $0x120] sm:$0xff]
      %v3533 = vld [vmem:[%s1 + $0x128] sm:$0xff]
      %v3534 = vld [vmem:[%s1 + $0x130] sm:$0xff]
      %v3535 = vld [vmem:[%s1 + $0x138] sm:$0xff]
      %v3536 = vld [vmem:[%s1 + $0x140] sm:$0xff]
      %v3537 = vld [vmem:[%s1 + $0x148] sm:$0xff]
      %v3538 = vld [vmem:[%s1 + $0x150] sm:$0xff]
      %v3539 = vld [vmem:[%s1 + $0x158] sm:$0xff]
      %v3540 = vld [vmem:[%s1 + $0x160] sm:$0xff]
      %v3541 = vld [vmem:[%s1 + $0x168] sm:$0xff]
      %v3542 = vld [vmem:[%s1 + $0x170] sm:$0xff]
      %v3543 = vld [vmem:[%s1 + $0x178] sm:$0xff]
      %v3544 = vld [vmem:[%s1 + $0x180] sm:$0xff]
      %v3545 = vld [vmem:[%s1 + $0x188] sm:$0xff]
      %v3546 = vld [vmem:[%s1 + $0x190] sm:$0xff]
      %v3547 = vld [vmem:[%s1 + $0x198] sm:$0xff]
      %v3548 = vld [vmem:[%s1 + $0x1a0] sm:$0xff]
      %v3549 = vld [vmem:[%s1 + $0x1a8] sm:$0xff]
      %v3550 = vld [vmem:[%s1 + $0x1b0] sm:$0xff]
      %v3551 = vld [vmem:[%s1 + $0x1b8] sm:$0xff]
      %v3552 = vld [vmem:[%s1 + $0x1c0] sm:$0xff]
      %3554 = vset.pattern.permute.xlu0 0
      %3555 = vperm.xlu0 %3554, %v3496
      %v3556 = vpop.permute.xlu0 %3555
      %3559 = vset.pattern.permute.xlu0 0
      %3560 = vperm.xlu0 %3559, %v3497
      %v3561 = vpop.permute.xlu0 %3560
      %3564 = vset.pattern.permute.xlu0 0
      %3565 = vperm.xlu0 %3564, %v3498
      %v3566 = vpop.permute.xlu0 %3565
      %3569 = vset.pattern.permute.xlu0 0
      %3570 = vperm.xlu0 %3569, %v3499
      %v3571 = vpop.permute.xlu0 %3570
      %3574 = vset.pattern.permute.xlu0 0
      %3575 = vperm.xlu0 %3574, %v3500
      %v3576 = vpop.permute.xlu0 %3575
      %3579 = vset.pattern.permute.xlu0 0
      %3580 = vperm.xlu0 %3579, %v3501
      %v3581 = vpop.permute.xlu0 %3580
      %3584 = vset.pattern.permute.xlu0 0
      %3585 = vperm.xlu0 %3584, %v3502
      %v3586 = vpop.permute.xlu0 %3585
      %3589 = vset.pattern.permute.xlu0 0
      %3590 = vperm.xlu0 %3589, %v3503
      %v3591 = vpop.permute.xlu0 %3590
      %3594 = vset.pattern.permute.xlu0 0
      %3595 = vperm.xlu0 %3594, %v3504
      %v3596 = vpop.permute.xlu0 %3595
      %3599 = vset.pattern.permute.xlu0 0
      %3600 = vperm.xlu0 %3599, %v3505
      %v3601 = vpop.permute.xlu0 %3600
      %3604 = vset.pattern.permute.xlu0 0
      %3605 = vperm.xlu0 %3604, %v3506
      %v3606 = vpop.permute.xlu0 %3605
      %3609 = vset.pattern.permute.xlu0 0
      %3610 = vperm.xlu0 %3609, %v3507
      %v3611 = vpop.permute.xlu0 %3610
      %3614 = vset.pattern.permute.xlu0 0
      %3615 = vperm.xlu0 %3614, %v3508
      %v3616 = vpop.permute.xlu0 %3615
      %3619 = vset.pattern.permute.xlu0 0
      %3620 = vperm.xlu0 %3619, %v3509
      %v3621 = vpop.permute.xlu0 %3620
      %3624 = vset.pattern.permute.xlu0 0
      %3625 = vperm.xlu0 %3624, %v3510
      %v3626 = vpop.permute.xlu0 %3625
      %3629 = vset.pattern.permute.xlu0 0
      %3630 = vperm.xlu0 %3629, %v3511
      %v3631 = vpop.permute.xlu0 %3630
      %3634 = vset.pattern.permute.xlu0 0
      %3635 = vperm.xlu0 %3634, %v3512
      %v3636 = vpop.permute.xlu0 %3635
      %3639 = vset.pattern.permute.xlu0 0
      %3640 = vperm.xlu0 %3639, %v3513
      %v3641 = vpop.permute.xlu0 %3640
      %3644 = vset.pattern.permute.xlu0 0
      %3645 = vperm.xlu0 %3644, %v3514
      %v3646 = vpop.permute.xlu0 %3645
      %3649 = vset.pattern.permute.xlu0 0
      %3650 = vperm.xlu0 %3649, %v3515
      %v3651 = vpop.permute.xlu0 %3650
      %3654 = vset.pattern.permute.xlu0 0
      %3655 = vperm.xlu0 %3654, %v3516
      %v3656 = vpop.permute.xlu0 %3655
      %3659 = vset.pattern.permute.xlu0 0
      %3660 = vperm.xlu0 %3659, %v3517
      %v3661 = vpop.permute.xlu0 %3660
      %3664 = vset.pattern.permute.xlu0 0
      %3665 = vperm.xlu0 %3664, %v3518
      %v3666 = vpop.permute.xlu0 %3665
      %3669 = vset.pattern.permute.xlu0 0
      %3670 = vperm.xlu0 %3669, %v3519
      %v3671 = vpop.permute.xlu0 %3670
      %3674 = vset.pattern.permute.xlu0 0
      %3675 = vperm.xlu0 %3674, %v3520
      %v3676 = vpop.permute.xlu0 %3675
      %3679 = vset.pattern.permute.xlu0 0
      %3680 = vperm.xlu0 %3679, %v3521
      %v3681 = vpop.permute.xlu0 %3680
      %3684 = vset.pattern.permute.xlu0 0
      %3685 = vperm.xlu0 %3684, %v3522
      %v3686 = vpop.permute.xlu0 %3685
      %3689 = vset.pattern.permute.xlu0 0
      %3690 = vperm.xlu0 %3689, %v3523
      %v3691 = vpop.permute.xlu0 %3690
      %3694 = vset.pattern.permute.xlu0 0
      %3695 = vperm.xlu0 %3694, %v3524
      %v3696 = vpop.permute.xlu0 %3695
      %3699 = vset.pattern.permute.xlu0 0
      %3700 = vperm.xlu0 %3699, %v3525
      %v3701 = vpop.permute.xlu0 %3700
      %3704 = vset.pattern.permute.xlu0 0
      %3705 = vperm.xlu0 %3704, %v3526
      %v3706 = vpop.permute.xlu0 %3705
      %3709 = vset.pattern.permute.xlu0 0
      %3710 = vperm.xlu0 %3709, %v3527
      %v3711 = vpop.permute.xlu0 %3710
      %3714 = vset.pattern.permute.xlu0 0
      %3715 = vperm.xlu0 %3714, %v3528
      %v3716 = vpop.permute.xlu0 %3715
      %3719 = vset.pattern.permute.xlu0 0
      %3720 = vperm.xlu0 %3719, %v3529
      %v3721 = vpop.permute.xlu0 %3720
      %3724 = vset.pattern.permute.xlu0 0
      %3725 = vperm.xlu0 %3724, %v3530
      %v3726 = vpop.permute.xlu0 %3725
      %3729 = vset.pattern.permute.xlu0 0
      %3730 = vperm.xlu0 %3729, %v3531
      %v3731 = vpop.permute.xlu0 %3730
      %3734 = vset.pattern.permute.xlu0 0
      %3735 = vperm.xlu0 %3734, %v3532
      %v3736 = vpop.permute.xlu0 %3735
      %3739 = vset.pattern.permute.xlu0 0
      %3740 = vperm.xlu0 %3739, %v3533
      %v3741 = vpop.permute.xlu0 %3740
      %3744 = vset.pattern.permute.xlu0 0
      %3745 = vperm.xlu0 %3744, %v3534
      %v3746 = vpop.permute.xlu0 %3745
      %3749 = vset.pattern.permute.xlu0 0
      %3750 = vperm.xlu0 %3749, %v3535
      %v3751 = vpop.permute.xlu0 %3750
      %3754 = vset.pattern.permute.xlu0 0
      %3755 = vperm.xlu0 %3754, %v3536
      %v3756 = vpop.permute.xlu0 %3755
      %3759 = vset.pattern.permute.xlu0 0
      %3760 = vperm.xlu0 %3759, %v3537
      %v3761 = vpop.permute.xlu0 %3760
      %3764 = vset.pattern.permute.xlu0 0
      %3765 = vperm.xlu0 %3764, %v3538
      %v3766 = vpop.permute.xlu0 %3765
      %3769 = vset.pattern.permute.xlu0 0
      %3770 = vperm.xlu0 %3769, %v3539
      %v3771 = vpop.permute.xlu0 %3770
      %3774 = vset.pattern.permute.xlu0 0
      %3775 = vperm.xlu0 %3774, %v3540
      %v3776 = vpop.permute.xlu0 %3775
      %3779 = vset.pattern.permute.xlu0 0
      %3780 = vperm.xlu0 %3779, %v3541
      %v3781 = vpop.permute.xlu0 %3780
      %3784 = vset.pattern.permute.xlu0 0
      %3785 = vperm.xlu0 %3784, %v3542
      %v3786 = vpop.permute.xlu0 %3785
      %3789 = vset.pattern.permute.xlu0 0
      %3790 = vperm.xlu0 %3789, %v3543
      %v3791 = vpop.permute.xlu0 %3790
      %3794 = vset.pattern.permute.xlu0 0
      %3795 = vperm.xlu0 %3794, %v3544
      %v3796 = vpop.permute.xlu0 %3795
      %3799 = vset.pattern.permute.xlu0 0
      %3800 = vperm.xlu0 %3799, %v3545
      %v3801 = vpop.permute.xlu0 %3800
      %3804 = vset.pattern.permute.xlu0 0
      %3805 = vperm.xlu0 %3804, %v3546
      %v3806 = vpop.permute.xlu0 %3805
      %3809 = vset.pattern.permute.xlu0 0
      %3810 = vperm.xlu0 %3809, %v3547
      %v3811 = vpop.permute.xlu0 %3810
      %3814 = vset.pattern.permute.xlu0 0
      %3815 = vperm.xlu0 %3814, %v3548
      %v3816 = vpop.permute.xlu0 %3815
      %3819 = vset.pattern.permute.xlu0 0
      %3820 = vperm.xlu0 %3819, %v3549
      %v3821 = vpop.permute.xlu0 %3820
      %3824 = vset.pattern.permute.xlu0 0
      %3825 = vperm.xlu0 %3824, %v3550
      %v3826 = vpop.permute.xlu0 %3825
      %3829 = vset.pattern.permute.xlu0 0
      %3830 = vperm.xlu0 %3829, %v3551
      %v3831 = vpop.permute.xlu0 %3830
      %3834 = vset.pattern.permute.xlu0 0
      %3835 = vperm.xlu0 %3834, %v3552
      %v3836 = vpop.permute.xlu0 %3835
      %v3838 = vmul.f32 %v3439, %v3556
      %v3839 = vmul.f32 %v3440, %v3561
      %v3840 = vmul.f32 %v3441, %v3566
      %v3841 = vmul.f32 %v3442, %v3571
      %v3842 = vmul.f32 %v3443, %v3576
      %v3843 = vmul.f32 %v3444, %v3581
      %v3844 = vmul.f32 %v3445, %v3586
      %v3845 = vmul.f32 %v3446, %v3591
      %v3846 = vmul.f32 %v3447, %v3596
      %v3847 = vmul.f32 %v3448, %v3601
      %v3848 = vmul.f32 %v3449, %v3606
      %v3849 = vmul.f32 %v3450, %v3611
      %v3850 = vmul.f32 %v3451, %v3616
      %v3851 = vmul.f32 %v3452, %v3621
      %v3852 = vmul.f32 %v3453, %v3626
      %v3853 = vmul.f32 %v3454, %v3631
      %v3854 = vmul.f32 %v3455, %v3636
      %v3855 = vmul.f32 %v3456, %v3641
      %v3856 = vmul.f32 %v3457, %v3646
      %v3857 = vmul.f32 %v3458, %v3651
      %v3858 = vmul.f32 %v3459, %v3656
      %v3859 = vmul.f32 %v3460, %v3661
      %v3860 = vmul.f32 %v3461, %v3666
      %v3861 = vmul.f32 %v3462, %v3671
      %v3862 = vmul.f32 %v3463, %v3676
      %v3863 = vmul.f32 %v3464, %v3681
      %v3864 = vmul.f32 %v3465, %v3686
      %v3865 = vmul.f32 %v3466, %v3691
      %v3866 = vmul.f32 %v3467, %v3696
      %v3867 = vmul.f32 %v3468, %v3701
      %v3868 = vmul.f32 %v3469, %v3706
      %v3869 = vmul.f32 %v3470, %v3711
      %v3870 = vmul.f32 %v3471, %v3716
      %v3871 = vmul.f32 %v3472, %v3721
      %v3872 = vmul.f32 %v3473, %v3726
      %v3873 = vmul.f32 %v3474, %v3731
      %v3874 = vmul.f32 %v3475, %v3736
      %v3875 = vmul.f32 %v3476, %v3741
      %v3876 = vmul.f32 %v3477, %v3746
      %v3877 = vmul.f32 %v3478, %v3751
      %v3878 = vmul.f32 %v3479, %v3756
      %v3879 = vmul.f32 %v3480, %v3761
      %v3880 = vmul.f32 %v3481, %v3766
      %v3881 = vmul.f32 %v3482, %v3771
      %v3882 = vmul.f32 %v3483, %v3776
      %v3883 = vmul.f32 %v3484, %v3781
      %v3884 = vmul.f32 %v3485, %v3786
      %v3885 = vmul.f32 %v3486, %v3791
      %v3886 = vmul.f32 %v3487, %v3796
      %v3887 = vmul.f32 %v3488, %v3801
      %v3888 = vmul.f32 %v3489, %v3806
      %v3889 = vmul.f32 %v3490, %v3811
      %v3890 = vmul.f32 %v3491, %v3816
      %v3891 = vmul.f32 %v3492, %v3821
      %v3892 = vmul.f32 %v3493, %v3826
      %v3893 = vmul.f32 %v3494, %v3831
      %v3894 = vmul.f32 %v3495, %v3836
      %vm3895 = vcmask 64512
      %3896 = vst.msk [vmem:[#allocation2] sm:$0xff] %vm3895, %v3838
      %3897 = vst.msk [vmem:[#allocation2 + $0x8] sm:$0xff] %vm3895, %v3839
      %3898 = vst.msk [vmem:[#allocation2 + $0x10] sm:$0xff] %vm3895, %v3840
      %3899 = vst.msk [vmem:[#allocation2 + $0x18] sm:$0xff] %vm3895, %v3841
      %3900 = vst.msk [vmem:[#allocation2 + $0x20] sm:$0xff] %vm3895, %v3842
      %3901 = vst.msk [vmem:[#allocation2 + $0x28] sm:$0xff] %vm3895, %v3843
      %3902 = vst.msk [vmem:[#allocation2 + $0x30] sm:$0xff] %vm3895, %v3844
      %3903 = vst.msk [vmem:[#allocation2 + $0x38] sm:$0xff] %vm3895, %v3845
      %3904 = vst.msk [vmem:[#allocation2 + $0x40] sm:$0xff] %vm3895, %v3846
      %3905 = vst.msk [vmem:[#allocation2 + $0x48] sm:$0xff] %vm3895, %v3847
      %3906 = vst.msk [vmem:[#allocation2 + $0x50] sm:$0xff] %vm3895, %v3848
      %3907 = vst.msk [vmem:[#allocation2 + $0x58] sm:$0xff] %vm3895, %v3849
      %3908 = vst.msk [vmem:[#allocation2 + $0x60] sm:$0xff] %vm3895, %v3850
      %3909 = vst.msk [vmem:[#allocation2 + $0x68] sm:$0xff] %vm3895, %v3851
      %3910 = vst.msk [vmem:[#allocation2 + $0x70] sm:$0xff] %vm3895, %v3852
      %3911 = vst.msk [vmem:[#allocation2 + $0x78] sm:$0xff] %vm3895, %v3853
      %3912 = vst.msk [vmem:[#allocation2 + $0x80] sm:$0xff] %vm3895, %v3854
      %3913 = vst.msk [vmem:[#allocation2 + $0x88] sm:$0xff] %vm3895, %v3855
      %3914 = vst.msk [vmem:[#allocation2 + $0x90] sm:$0xff] %vm3895, %v3856
      %3915 = vst.msk [vmem:[#allocation2 + $0x98] sm:$0xff] %vm3895, %v3857
      %3916 = vst.msk [vmem:[#allocation2 + $0xa0] sm:$0xff] %vm3895, %v3858
      %3917 = vst.msk [vmem:[#allocation2 + $0xa8] sm:$0xff] %vm3895, %v3859
      %3918 = vst.msk [vmem:[#allocation2 + $0xb0] sm:$0xff] %vm3895, %v3860
      %3919 = vst.msk [vmem:[#allocation2 + $0xb8] sm:$0xff] %vm3895, %v3861
      %3920 = vst.msk [vmem:[#allocation2 + $0xc0] sm:$0xff] %vm3895, %v3862
      %3921 = vst.msk [vmem:[#allocation2 + $0xc8] sm:$0xff] %vm3895, %v3863
      %3922 = vst.msk [vmem:[#allocation2 + $0xd0] sm:$0xff] %vm3895, %v3864
      %3923 = vst.msk [vmem:[#allocation2 + $0xd8] sm:$0xff] %vm3895, %v3865
      %3924 = vst.msk [vmem:[#allocation2 + $0xe0] sm:$0xff] %vm3895, %v3866
      %3925 = vst.msk [vmem:[#allocation2 + $0xe8] sm:$0xff] %vm3895, %v3867
      %3926 = vst.msk [vmem:[#allocation2 + $0xf0] sm:$0xff] %vm3895, %v3868
      %3927 = vst.msk [vmem:[#allocation2 + $0xf8] sm:$0xff] %vm3895, %v3869
      %3928 = vst.msk [vmem:[#allocation2 + $0x100] sm:$0xff] %vm3895, %v3870
      %3929 = vst.msk [vmem:[#allocation2 + $0x108] sm:$0xff] %vm3895, %v3871
      %3930 = vst.msk [vmem:[#allocation2 + $0x110] sm:$0xff] %vm3895, %v3872
      %3931 = vst.msk [vmem:[#allocation2 + $0x118] sm:$0xff] %vm3895, %v3873
      %3932 = vst.msk [vmem:[#allocation2 + $0x120] sm:$0xff] %vm3895, %v3874
      %3933 = vst.msk [vmem:[#allocation2 + $0x128] sm:$0xff] %vm3895, %v3875
      %3934 = vst.msk [vmem:[#allocation2 + $0x130] sm:$0xff] %vm3895, %v3876
      %3935 = vst.msk [vmem:[#allocation2 + $0x138] sm:$0xff] %vm3895, %v3877
      %3936 = vst.msk [vmem:[#allocation2 + $0x140] sm:$0xff] %vm3895, %v3878
      %3937 = vst.msk [vmem:[#allocation2 + $0x148] sm:$0xff] %vm3895, %v3879
      %3938 = vst.msk [vmem:[#allocation2 + $0x150] sm:$0xff] %vm3895, %v3880
      %3939 = vst.msk [vmem:[#allocation2 + $0x158] sm:$0xff] %vm3895, %v3881
      %3940 = vst.msk [vmem:[#allocation2 + $0x160] sm:$0xff] %vm3895, %v3882
      %3941 = vst.msk [vmem:[#allocation2 + $0x168] sm:$0xff] %vm3895, %v3883
      %3942 = vst.msk [vmem:[#allocation2 + $0x170] sm:$0xff] %vm3895, %v3884
      %3943 = vst.msk [vmem:[#allocation2 + $0x178] sm:$0xff] %vm3895, %v3885
      %3944 = vst.msk [vmem:[#allocation2 + $0x180] sm:$0xff] %vm3895, %v3886
      %3945 = vst.msk [vmem:[#allocation2 + $0x188] sm:$0xff] %vm3895, %v3887
      %3946 = vst.msk [vmem:[#allocation2 + $0x190] sm:$0xff] %vm3895, %v3888
      %3947 = vst.msk [vmem:[#allocation2 + $0x198] sm:$0xff] %vm3895, %v3889
      %3948 = vst.msk [vmem:[#allocation2 + $0x1a0] sm:$0xff] %vm3895, %v3890
      %3949 = vst.msk [vmem:[#allocation2 + $0x1a8] sm:$0xff] %vm3895, %v3891
      %3950 = vst.msk [vmem:[#allocation2 + $0x1b0] sm:$0xff] %vm3895, %v3892
      %3951 = vst.msk [vmem:[#allocation2 + $0x1b8] sm:$0xff] %vm3895, %v3893
      %3952 = vst.msk [vmem:[#allocation2 + $0x1c0] sm:$0xff] %vm3895, %v3894
      %v3953 = vld [vmem:[#allocation2] sm:$0xff]
      %v3954 = vld [vmem:[#allocation2 + $0x8] sm:$0xff]
      %v3955 = vld [vmem:[#allocation2 + $0x10] sm:$0xff]
      %v3956 = vld [vmem:[#allocation2 + $0x18] sm:$0xff]
      %v3957 = vld [vmem:[#allocation2 + $0x20] sm:$0xff]
      %v3958 = vld [vmem:[#allocation2 + $0x28] sm:$0xff]
      %v3959 = vld [vmem:[#allocation2 + $0x30] sm:$0xff]
      %v3960 = vld [vmem:[#allocation2 + $0x38] sm:$0xff]
      %v3961 = vld [vmem:[#allocation2 + $0x40] sm:$0xff]
      %v3962 = vld [vmem:[#allocation2 + $0x48] sm:$0xff]
      %v3963 = vld [vmem:[#allocation2 + $0x50] sm:$0xff]
      %v3964 = vld [vmem:[#allocation2 + $0x58] sm:$0xff]
      %v3965 = vld [vmem:[#allocation2 + $0x60] sm:$0xff]
      %v3966 = vld [vmem:[#allocation2 + $0x68] sm:$0xff]
      %v3967 = vld [vmem:[#allocation2 + $0x70] sm:$0xff]
      %v3968 = vld [vmem:[#allocation2 + $0x78] sm:$0xff]
      %v3969 = vld [vmem:[#allocation2 + $0x80] sm:$0xff]
      %v3970 = vld [vmem:[#allocation2 + $0x88] sm:$0xff]
      %v3971 = vld [vmem:[#allocation2 + $0x90] sm:$0xff]
      %v3972 = vld [vmem:[#allocation2 + $0x98] sm:$0xff]
      %v3973 = vld [vmem:[#allocation2 + $0xa0] sm:$0xff]
      %v3974 = vld [vmem:[#allocation2 + $0xa8] sm:$0xff]
      %v3975 = vld [vmem:[#allocation2 + $0xb0] sm:$0xff]
      %v3976 = vld [vmem:[#allocation2 + $0xb8] sm:$0xff]
      %v3977 = vld [vmem:[#allocation2 + $0xc0] sm:$0xff]
      %v3978 = vld [vmem:[#allocation2 + $0xc8] sm:$0xff]
      %v3979 = vld [vmem:[#allocation2 + $0xd0] sm:$0xff]
      %v3980 = vld [vmem:[#allocation2 + $0xd8] sm:$0xff]
      %v3981 = vld [vmem:[#allocation2 + $0xe0] sm:$0xff]
      %v3982 = vld [vmem:[#allocation2 + $0xe8] sm:$0xff]
      %v3983 = vld [vmem:[#allocation2 + $0xf0] sm:$0xff]
      %v3984 = vld [vmem:[#allocation2 + $0xf8] sm:$0xff]
      %v3985 = vld [vmem:[#allocation2 + $0x100] sm:$0xff]
      %v3986 = vld [vmem:[#allocation2 + $0x108] sm:$0xff]
      %v3987 = vld [vmem:[#allocation2 + $0x110] sm:$0xff]
      %v3988 = vld [vmem:[#allocation2 + $0x118] sm:$0xff]
      %v3989 = vld [vmem:[#allocation2 + $0x120] sm:$0xff]
      %v3990 = vld [vmem:[#allocation2 + $0x128] sm:$0xff]
      %v3991 = vld [vmem:[#allocation2 + $0x130] sm:$0xff]
      %v3992 = vld [vmem:[#allocation2 + $0x138] sm:$0xff]
      %v3993 = vld [vmem:[#allocation2 + $0x140] sm:$0xff]
      %v3994 = vld [vmem:[#allocation2 + $0x148] sm:$0xff]
      %v3995 = vld [vmem:[#allocation2 + $0x150] sm:$0xff]
      %v3996 = vld [vmem:[#allocation2 + $0x158] sm:$0xff]
      %v3997 = vld [vmem:[#allocation2 + $0x160] sm:$0xff]
      %v3998 = vld [vmem:[#allocation2 + $0x168] sm:$0xff]
      %v3999 = vld [vmem:[#allocation2 + $0x170] sm:$0xff]
      %v4000 = vld [vmem:[#allocation2 + $0x178] sm:$0xff]
      %v4001 = vld [vmem:[#allocation2 + $0x1] sm:$0xff]
      %v4002 = vld [vmem:[#allocation2 + $0x9] sm:$0xff]
      %v4003 = vld [vmem:[#allocation2 + $0x11] sm:$0xff]
      %v4004 = vld [vmem:[#allocation2 + $0x19] sm:$0xff]
      %v4005 = vld [vmem:[#allocation2 + $0x21] sm:$0xff]
      %v4006 = vld [vmem:[#allocation2 + $0x29] sm:$0xff]
      %v4007 = vld [vmem:[#allocation2 + $0x31] sm:$0xff]
      %v4008 = vld [vmem:[#allocation2 + $0x39] sm:$0xff]
      %v4009 = vld [vmem:[#allocation2 + $0x41] sm:$0xff]
      %v4010 = vld [vmem:[#allocation2 + $0x49] sm:$0xff]
      %v4011 = vld [vmem:[#allocation2 + $0x51] sm:$0xff]
      %v4012 = vld [vmem:[#allocation2 + $0x59] sm:$0xff]
      %v4013 = vld [vmem:[#allocation2 + $0x61] sm:$0xff]
      %v4014 = vld [vmem:[#allocation2 + $0x69] sm:$0xff]
      %v4015 = vld [vmem:[#allocation2 + $0x71] sm:$0xff]
      %v4016 = vld [vmem:[#allocation2 + $0x79] sm:$0xff]
      %v4017 = vld [vmem:[#allocation2 + $0x81] sm:$0xff]
      %v4018 = vld [vmem:[#allocation2 + $0x89] sm:$0xff]
      %v4019 = vld [vmem:[#allocation2 + $0x91] sm:$0xff]
      %v4020 = vld [vmem:[#allocation2 + $0x99] sm:$0xff]
      %v4021 = vld [vmem:[#allocation2 + $0xa1] sm:$0xff]
      %v4022 = vld [vmem:[#allocation2 + $0xa9] sm:$0xff]
      %v4023 = vld [vmem:[#allocation2 + $0xb1] sm:$0xff]
      %v4024 = vld [vmem:[#allocation2 + $0xb9] sm:$0xff]
      %v4025 = vld [vmem:[#allocation2 + $0xc1] sm:$0xff]
      %v4026 = vld [vmem:[#allocation2 + $0xc9] sm:$0xff]
      %v4027 = vld [vmem:[#allocation2 + $0xd1] sm:$0xff]
      %v4028 = vld [vmem:[#allocation2 + $0xd9] sm:$0xff]
      %v4029 = vld [vmem:[#allocation2 + $0xe1] sm:$0xff]
      %v4030 = vld [vmem:[#allocation2 + $0xe9] sm:$0xff]
      %v4031 = vld [vmem:[#allocation2 + $0xf1] sm:$0xff]
      %v4032 = vld [vmem:[#allocation2 + $0xf9] sm:$0xff]
      %v4033 = vld [vmem:[#allocation2 + $0x101] sm:$0xff]
      %v4034 = vld [vmem:[#allocation2 + $0x109] sm:$0xff]
      %v4035 = vld [vmem:[#allocation2 + $0x111] sm:$0xff]
      %v4036 = vld [vmem:[#allocation2 + $0x119] sm:$0xff]
      %v4037 = vld [vmem:[#allocation2 + $0x121] sm:$0xff]
      %v4038 = vld [vmem:[#allocation2 + $0x129] sm:$0xff]
      %v4039 = vld [vmem:[#allocation2 + $0x131] sm:$0xff]
      %v4040 = vld [vmem:[#allocation2 + $0x139] sm:$0xff]
      %v4041 = vld [vmem:[#allocation2 + $0x141] sm:$0xff]
      %v4042 = vld [vmem:[#allocation2 + $0x149] sm:$0xff]
      %v4043 = vld [vmem:[#allocation2 + $0x151] sm:$0xff]
      %v4044 = vld [vmem:[#allocation2 + $0x159] sm:$0xff]
      %v4045 = vld [vmem:[#allocation2 + $0x161] sm:$0xff]
      %v4046 = vld [vmem:[#allocation2 + $0x169] sm:$0xff]
      %v4047 = vld [vmem:[#allocation2 + $0x171] sm:$0xff]
      %v4048 = vld [vmem:[#allocation2 + $0x179] sm:$0xff]
      %v4049 = vld [vmem:[#allocation2 + $0x2] sm:$0xff]
      %v4050 = vld [vmem:[#allocation2 + $0xa] sm:$0xff]
      %v4051 = vld [vmem:[#allocation2 + $0x12] sm:$0xff]
      %v4052 = vld [vmem:[#allocation2 + $0x1a] sm:$0xff]
      %v4053 = vld [vmem:[#allocation2 + $0x22] sm:$0xff]
      %v4054 = vld [vmem:[#allocation2 + $0x2a] sm:$0xff]
      %v4055 = vld [vmem:[#allocation2 + $0x32] sm:$0xff]
      %v4056 = vld [vmem:[#allocation2 + $0x3a] sm:$0xff]
      %v4057 = vld [vmem:[#allocation2 + $0x42] sm:$0xff]
      %v4058 = vld [vmem:[#allocation2 + $0x4a] sm:$0xff]
      %v4059 = vld [vmem:[#allocation2 + $0x52] sm:$0xff]
      %v4060 = vld [vmem:[#allocation2 + $0x5a] sm:$0xff]
      %v4061 = vld [vmem:[#allocation2 + $0x62] sm:$0xff]
      %v4062 = vld [vmem:[#allocation2 + $0x6a] sm:$0xff]
      %v4063 = vld [vmem:[#allocation2 + $0x72] sm:$0xff]
      %v4064 = vld [vmem:[#allocation2 + $0x7a] sm:$0xff]
      %v4065 = vld [vmem:[#allocation2 + $0x82] sm:$0xff]
      %v4066 = vld [vmem:[#allocation2 + $0x8a] sm:$0xff]
      %v4067 = vld [vmem:[#allocation2 + $0x92] sm:$0xff]
      %v4068 = vld [vmem:[#allocation2 + $0x9a] sm:$0xff]
      %v4069 = vld [vmem:[#allocation2 + $0xa2] sm:$0xff]
      %v4070 = vld [vmem:[#allocation2 + $0xaa] sm:$0xff]
      %v4071 = vld [vmem:[#allocation2 + $0xb2] sm:$0xff]
      %v4072 = vld [vmem:[#allocation2 + $0xba] sm:$0xff]
      %v4073 = vld [vmem:[#allocation2 + $0xc2] sm:$0xff]
      %v4074 = vld [vmem:[#allocation2 + $0xca] sm:$0xff]
      %v4075 = vld [vmem:[#allocation2 + $0xd2] sm:$0xff]
      %v4076 = vld [vmem:[#allocation2 + $0xda] sm:$0xff]
      %v4077 = vld [vmem:[#allocation2 + $0xe2] sm:$0xff]
      %v4078 = vld [vmem:[#allocation2 + $0xea] sm:$0xff]
      %v4079 = vld [vmem:[#allocation2 + $0xf2] sm:$0xff]
      %v4080 = vld [vmem:[#allocation2 + $0xfa] sm:$0xff]
      %v4081 = vld [vmem:[#allocation2 + $0x102] sm:$0xff]
      %v4082 = vld [vmem:[#allocation2 + $0x10a] sm:$0xff]
      %v4083 = vld [vmem:[#allocation2 + $0x112] sm:$0xff]
      %v4084 = vld [vmem:[#allocation2 + $0x11a] sm:$0xff]
      %v4085 = vld [vmem:[#allocation2 + $0x122] sm:$0xff]
      %v4086 = vld [vmem:[#allocation2 + $0x12a] sm:$0xff]
      %v4087 = vld [vmem:[#allocation2 + $0x132] sm:$0xff]
      %v4088 = vld [vmem:[#allocation2 + $0x13a] sm:$0xff]
      %v4089 = vld [vmem:[#allocation2 + $0x142] sm:$0xff]
      %v4090 = vld [vmem:[#allocation2 + $0x14a] sm:$0xff]
      %v4091 = vld [vmem:[#allocation2 + $0x152] sm:$0xff]
      %v4092 = vld [vmem:[#allocation2 + $0x15a] sm:$0xff]
      %v4093 = vld [vmem:[#allocation2 + $0x162] sm:$0xff]
      %v4094 = vld [vmem:[#allocation2 + $0x16a] sm:$0xff]
      %v4095 = vld [vmem:[#allocation2 + $0x172] sm:$0xff]
      %v4096 = vld [vmem:[#allocation2 + $0x17a] sm:$0xff]
      %v4097 = vld [vmem:[#allocation2 + $0x180] sm:$0xff]
      %v4098 = vld [vmem:[#allocation2 + $0x188] sm:$0xff]
      %v4099 = vld [vmem:[#allocation2 + $0x190] sm:$0xff]
      %v4100 = vld [vmem:[#allocation2 + $0x181] sm:$0xff]
      %v4101 = vld [vmem:[#allocation2 + $0x189] sm:$0xff]
      %v4102 = vld [vmem:[#allocation2 + $0x191] sm:$0xff]
      %v4103 = vld [vmem:[#allocation2 + $0x182] sm:$0xff]
      %v4104 = vld [vmem:[#allocation2 + $0x18a] sm:$0xff]
      %v4105 = vld [vmem:[#allocation2 + $0x192] sm:$0xff]
      %v4106 = vld [vmem:[#allocation2 + $0x198] sm:$0xff]
      %v4107 = vld [vmem:[#allocation2 + $0x1a0] sm:$0xff]
      %v4108 = vld [vmem:[#allocation2 + $0x1a8] sm:$0xff]
      %v4109 = vld [vmem:[#allocation2 + $0x199] sm:$0xff]
      %v4110 = vld [vmem:[#allocation2 + $0x1a1] sm:$0xff]
      %v4111 = vld [vmem:[#allocation2 + $0x1a9] sm:$0xff]
      %v4112 = vld [vmem:[#allocation2 + $0x19a] sm:$0xff]
      %v4113 = vld [vmem:[#allocation2 + $0x1a2] sm:$0xff]
      %v4114 = vld [vmem:[#allocation2 + $0x1aa] sm:$0xff]
      %4163 = vrot.lane.b32.xlu0 %v4001, 8
      %v4164 = vpop.permute.xlu0 %4163
      %4165 = vrot.lane.b32.xlu0 %v4002, 8
      %v4166 = vpop.permute.xlu0 %4165
      %4167 = vrot.lane.b32.xlu0 %v4003, 8
      %v4168 = vpop.permute.xlu0 %4167
      %4169 = vrot.lane.b32.xlu0 %v4004, 8
      %v4170 = vpop.permute.xlu0 %4169
      %4171 = vrot.lane.b32.xlu0 %v4005, 8
      %v4172 = vpop.permute.xlu0 %4171
      %4173 = vrot.lane.b32.xlu0 %v4006, 8
      %v4174 = vpop.permute.xlu0 %4173
      %4175 = vrot.lane.b32.xlu0 %v4007, 8
      %v4176 = vpop.permute.xlu0 %4175
      %4177 = vrot.lane.b32.xlu0 %v4008, 8
      %v4178 = vpop.permute.xlu0 %4177
      %4179 = vrot.lane.b32.xlu0 %v4009, 8
      %v4180 = vpop.permute.xlu0 %4179
      %4181 = vrot.lane.b32.xlu0 %v4010, 8
      %v4182 = vpop.permute.xlu0 %4181
      %4183 = vrot.lane.b32.xlu0 %v4011, 8
      %v4184 = vpop.permute.xlu0 %4183
      %4185 = vrot.lane.b32.xlu0 %v4012, 8
      %v4186 = vpop.permute.xlu0 %4185
      %4187 = vrot.lane.b32.xlu0 %v4013, 8
      %v4188 = vpop.permute.xlu0 %4187
      %4189 = vrot.lane.b32.xlu0 %v4014, 8
      %v4190 = vpop.permute.xlu0 %4189
      %4191 = vrot.lane.b32.xlu0 %v4015, 8
      %v4192 = vpop.permute.xlu0 %4191
      %4193 = vrot.lane.b32.xlu0 %v4016, 8
      %v4194 = vpop.permute.xlu0 %4193
      %4195 = vrot.lane.b32.xlu0 %v4017, 8
      %v4196 = vpop.permute.xlu0 %4195
      %4197 = vrot.lane.b32.xlu0 %v4018, 8
      %v4198 = vpop.permute.xlu0 %4197
      %4199 = vrot.lane.b32.xlu0 %v4019, 8
      %v4200 = vpop.permute.xlu0 %4199
      %4201 = vrot.lane.b32.xlu0 %v4020, 8
      %v4202 = vpop.permute.xlu0 %4201
      %4203 = vrot.lane.b32.xlu0 %v4021, 8
      %v4204 = vpop.permute.xlu0 %4203
      %4205 = vrot.lane.b32.xlu0 %v4022, 8
      %v4206 = vpop.permute.xlu0 %4205
      %4207 = vrot.lane.b32.xlu0 %v4023, 8
      %v4208 = vpop.permute.xlu0 %4207
      %4209 = vrot.lane.b32.xlu0 %v4024, 8
      %v4210 = vpop.permute.xlu0 %4209
      %4211 = vrot.lane.b32.xlu0 %v4025, 8
      %v4212 = vpop.permute.xlu0 %4211
      %4213 = vrot.lane.b32.xlu0 %v4026, 8
      %v4214 = vpop.permute.xlu0 %4213
      %4215 = vrot.lane.b32.xlu0 %v4027, 8
      %v4216 = vpop.permute.xlu0 %4215
      %4217 = vrot.lane.b32.xlu0 %v4028, 8
      %v4218 = vpop.permute.xlu0 %4217
      %4219 = vrot.lane.b32.xlu0 %v4029, 8
      %v4220 = vpop.permute.xlu0 %4219
      %4221 = vrot.lane.b32.xlu0 %v4030, 8
      %v4222 = vpop.permute.xlu0 %4221
      %4223 = vrot.lane.b32.xlu0 %v4031, 8
      %v4224 = vpop.permute.xlu0 %4223
      %4225 = vrot.lane.b32.xlu0 %v4032, 8
      %v4226 = vpop.permute.xlu0 %4225
      %4227 = vrot.lane.b32.xlu0 %v4033, 8
      %v4228 = vpop.permute.xlu0 %4227
      %4229 = vrot.lane.b32.xlu0 %v4034, 8
      %v4230 = vpop.permute.xlu0 %4229
      %4231 = vrot.lane.b32.xlu0 %v4035, 8
      %v4232 = vpop.permute.xlu0 %4231
      %4233 = vrot.lane.b32.xlu0 %v4036, 8
      %v4234 = vpop.permute.xlu0 %4233
      %4235 = vrot.lane.b32.xlu0 %v4037, 8
      %v4236 = vpop.permute.xlu0 %4235
      %4237 = vrot.lane.b32.xlu0 %v4038, 8
      %v4238 = vpop.permute.xlu0 %4237
      %4239 = vrot.lane.b32.xlu0 %v4039, 8
      %v4240 = vpop.permute.xlu0 %4239
      %4241 = vrot.lane.b32.xlu0 %v4040, 8
      %v4242 = vpop.permute.xlu0 %4241
      %4243 = vrot.lane.b32.xlu0 %v4041, 8
      %v4244 = vpop.permute.xlu0 %4243
      %4245 = vrot.lane.b32.xlu0 %v4042, 8
      %v4246 = vpop.permute.xlu0 %4245
      %4247 = vrot.lane.b32.xlu0 %v4043, 8
      %v4248 = vpop.permute.xlu0 %4247
      %4249 = vrot.lane.b32.xlu0 %v4044, 8
      %v4250 = vpop.permute.xlu0 %4249
      %4251 = vrot.lane.b32.xlu0 %v4045, 8
      %v4252 = vpop.permute.xlu0 %4251
      %4253 = vrot.lane.b32.xlu0 %v4046, 8
      %v4254 = vpop.permute.xlu0 %4253
      %4255 = vrot.lane.b32.xlu0 %v4047, 8
      %v4256 = vpop.permute.xlu0 %4255
      %4257 = vrot.lane.b32.xlu0 %v4048, 8
      %v4258 = vpop.permute.xlu0 %4257
      %4355 = vrot.lane.b32.xlu0 %v4049, 16
      %v4356 = vpop.permute.xlu0 %4355
      %4357 = vrot.lane.b32.xlu0 %v4050, 16
      %v4358 = vpop.permute.xlu0 %4357
      %4359 = vrot.lane.b32.xlu0 %v4051, 16
      %v4360 = vpop.permute.xlu0 %4359
      %4361 = vrot.lane.b32.xlu0 %v4052, 16
      %v4362 = vpop.permute.xlu0 %4361
      %4363 = vrot.lane.b32.xlu0 %v4053, 16
      %v4364 = vpop.permute.xlu0 %4363
      %4365 = vrot.lane.b32.xlu0 %v4054, 16
      %v4366 = vpop.permute.xlu0 %4365
      %4367 = vrot.lane.b32.xlu0 %v4055, 16
      %v4368 = vpop.permute.xlu0 %4367
      %4369 = vrot.lane.b32.xlu0 %v4056, 16
      %v4370 = vpop.permute.xlu0 %4369
      %4371 = vrot.lane.b32.xlu0 %v4057, 16
      %v4372 = vpop.permute.xlu0 %4371
      %4373 = vrot.lane.b32.xlu0 %v4058, 16
      %v4374 = vpop.permute.xlu0 %4373
      %4375 = vrot.lane.b32.xlu0 %v4059, 16
      %v4376 = vpop.permute.xlu0 %4375
      %4377 = vrot.lane.b32.xlu0 %v4060, 16
      %v4378 = vpop.permute.xlu0 %4377
      %4379 = vrot.lane.b32.xlu0 %v4061, 16
      %v4380 = vpop.permute.xlu0 %4379
      %4381 = vrot.lane.b32.xlu0 %v4062, 16
      %v4382 = vpop.permute.xlu0 %4381
      %4383 = vrot.lane.b32.xlu0 %v4063, 16
      %v4384 = vpop.permute.xlu0 %4383
      %4385 = vrot.lane.b32.xlu0 %v4064, 16
      %v4386 = vpop.permute.xlu0 %4385
      %4387 = vrot.lane.b32.xlu0 %v4065, 16
      %v4388 = vpop.permute.xlu0 %4387
      %4389 = vrot.lane.b32.xlu0 %v4066, 16
      %v4390 = vpop.permute.xlu0 %4389
      %4391 = vrot.lane.b32.xlu0 %v4067, 16
      %v4392 = vpop.permute.xlu0 %4391
      %4393 = vrot.lane.b32.xlu0 %v4068, 16
      %v4394 = vpop.permute.xlu0 %4393
      %4395 = vrot.lane.b32.xlu0 %v4069, 16
      %v4396 = vpop.permute.xlu0 %4395
      %4397 = vrot.lane.b32.xlu0 %v4070, 16
      %v4398 = vpop.permute.xlu0 %4397
      %4399 = vrot.lane.b32.xlu0 %v4071, 16
      %v4400 = vpop.permute.xlu0 %4399
      %4401 = vrot.lane.b32.xlu0 %v4072, 16
      %v4402 = vpop.permute.xlu0 %4401
      %4403 = vrot.lane.b32.xlu0 %v4073, 16
      %v4404 = vpop.permute.xlu0 %4403
      %4405 = vrot.lane.b32.xlu0 %v4074, 16
      %v4406 = vpop.permute.xlu0 %4405
      %4407 = vrot.lane.b32.xlu0 %v4075, 16
      %v4408 = vpop.permute.xlu0 %4407
      %4409 = vrot.lane.b32.xlu0 %v4076, 16
      %v4410 = vpop.permute.xlu0 %4409
      %4411 = vrot.lane.b32.xlu0 %v4077, 16
      %v4412 = vpop.permute.xlu0 %4411
      %4413 = vrot.lane.b32.xlu0 %v4078, 16
      %v4414 = vpop.permute.xlu0 %4413
      %4415 = vrot.lane.b32.xlu0 %v4079, 16
      %v4416 = vpop.permute.xlu0 %4415
      %4417 = vrot.lane.b32.xlu0 %v4080, 16
      %v4418 = vpop.permute.xlu0 %4417
      %4419 = vrot.lane.b32.xlu0 %v4081, 16
      %v4420 = vpop.permute.xlu0 %4419
      %4421 = vrot.lane.b32.xlu0 %v4082, 16
      %v4422 = vpop.permute.xlu0 %4421
      %4423 = vrot.lane.b32.xlu0 %v4083, 16
      %v4424 = vpop.permute.xlu0 %4423
      %4425 = vrot.lane.b32.xlu0 %v4084, 16
      %v4426 = vpop.permute.xlu0 %4425
      %4427 = vrot.lane.b32.xlu0 %v4085, 16
      %v4428 = vpop.permute.xlu0 %4427
      %4429 = vrot.lane.b32.xlu0 %v4086, 16
      %v4430 = vpop.permute.xlu0 %4429
      %4431 = vrot.lane.b32.xlu0 %v4087, 16
      %v4432 = vpop.permute.xlu0 %4431
      %4433 = vrot.lane.b32.xlu0 %v4088, 16
      %v4434 = vpop.permute.xlu0 %4433
      %4435 = vrot.lane.b32.xlu0 %v4089, 16
      %v4436 = vpop.permute.xlu0 %4435
      %4437 = vrot.lane.b32.xlu0 %v4090, 16
      %v4438 = vpop.permute.xlu0 %4437
      %4439 = vrot.lane.b32.xlu0 %v4091, 16
      %v4440 = vpop.permute.xlu0 %4439
      %4441 = vrot.lane.b32.xlu0 %v4092, 16
      %v4442 = vpop.permute.xlu0 %4441
      %4443 = vrot.lane.b32.xlu0 %v4093, 16
      %v4444 = vpop.permute.xlu0 %4443
      %4445 = vrot.lane.b32.xlu0 %v4094, 16
      %v4446 = vpop.permute.xlu0 %4445
      %4447 = vrot.lane.b32.xlu0 %v4095, 16
      %v4448 = vpop.permute.xlu0 %4447
      %4449 = vrot.lane.b32.xlu0 %v4096, 16
      %v4450 = vpop.permute.xlu0 %4449
      %4547 = vrot.lane.b32.xlu0 %v3956, 24
      %v4548 = vpop.permute.xlu0 %4547
      %4549 = vrot.lane.b32.xlu0 %v3957, 24
      %v4550 = vpop.permute.xlu0 %4549
      %4551 = vrot.lane.b32.xlu0 %v3958, 24
      %v4552 = vpop.permute.xlu0 %4551
      %4553 = vrot.lane.b32.xlu0 %v3959, 24
      %v4554 = vpop.permute.xlu0 %4553
      %4555 = vrot.lane.b32.xlu0 %v3960, 24
      %v4556 = vpop.permute.xlu0 %4555
      %4557 = vrot.lane.b32.xlu0 %v3961, 24
      %v4558 = vpop.permute.xlu0 %4557
      %4559 = vrot.lane.b32.xlu0 %v3962, 24
      %v4560 = vpop.permute.xlu0 %4559
      %4561 = vrot.lane.b32.xlu0 %v3963, 24
      %v4562 = vpop.permute.xlu0 %4561
      %4563 = vrot.lane.b32.xlu0 %v3964, 24
      %v4564 = vpop.permute.xlu0 %4563
      %4565 = vrot.lane.b32.xlu0 %v3965, 24
      %v4566 = vpop.permute.xlu0 %4565
      %4567 = vrot.lane.b32.xlu0 %v3966, 24
      %v4568 = vpop.permute.xlu0 %4567
      %4569 = vrot.lane.b32.xlu0 %v3967, 24
      %v4570 = vpop.permute.xlu0 %4569
      %4571 = vrot.lane.b32.xlu0 %v3968, 24
      %v4572 = vpop.permute.xlu0 %4571
      %4573 = vrot.lane.b32.xlu0 %v3969, 24
      %v4574 = vpop.permute.xlu0 %4573
      %4575 = vrot.lane.b32.xlu0 %v3970, 24
      %v4576 = vpop.permute.xlu0 %4575
      %4577 = vrot.lane.b32.xlu0 %v3971, 24
      %v4578 = vpop.permute.xlu0 %4577
      %4579 = vrot.lane.b32.xlu0 %v3972, 24
      %v4580 = vpop.permute.xlu0 %4579
      %4581 = vrot.lane.b32.xlu0 %v3973, 24
      %v4582 = vpop.permute.xlu0 %4581
      %4583 = vrot.lane.b32.xlu0 %v3974, 24
      %v4584 = vpop.permute.xlu0 %4583
      %4585 = vrot.lane.b32.xlu0 %v3975, 24
      %v4586 = vpop.permute.xlu0 %4585
      %4587 = vrot.lane.b32.xlu0 %v3976, 24
      %v4588 = vpop.permute.xlu0 %4587
      %4589 = vrot.lane.b32.xlu0 %v3977, 24
      %v4590 = vpop.permute.xlu0 %4589
      %4591 = vrot.lane.b32.xlu0 %v3978, 24
      %v4592 = vpop.permute.xlu0 %4591
      %4593 = vrot.lane.b32.xlu0 %v3979, 24
      %v4594 = vpop.permute.xlu0 %4593
      %4595 = vrot.lane.b32.xlu0 %v3980, 24
      %v4596 = vpop.permute.xlu0 %4595
      %4597 = vrot.lane.b32.xlu0 %v3981, 24
      %v4598 = vpop.permute.xlu0 %4597
      %4599 = vrot.lane.b32.xlu0 %v3982, 24
      %v4600 = vpop.permute.xlu0 %4599
      %4601 = vrot.lane.b32.xlu0 %v3983, 24
      %v4602 = vpop.permute.xlu0 %4601
      %4603 = vrot.lane.b32.xlu0 %v3984, 24
      %v4604 = vpop.permute.xlu0 %4603
      %4605 = vrot.lane.b32.xlu0 %v3985, 24
      %v4606 = vpop.permute.xlu0 %4605
      %4607 = vrot.lane.b32.xlu0 %v3986, 24
      %v4608 = vpop.permute.xlu0 %4607
      %4609 = vrot.lane.b32.xlu0 %v3987, 24
      %v4610 = vpop.permute.xlu0 %4609
      %4611 = vrot.lane.b32.xlu0 %v3988, 24
      %v4612 = vpop.permute.xlu0 %4611
      %4613 = vrot.lane.b32.xlu0 %v3989, 24
      %v4614 = vpop.permute.xlu0 %4613
      %4615 = vrot.lane.b32.xlu0 %v3990, 24
      %v4616 = vpop.permute.xlu0 %4615
      %4617 = vrot.lane.b32.xlu0 %v3991, 24
      %v4618 = vpop.permute.xlu0 %4617
      %4619 = vrot.lane.b32.xlu0 %v3992, 24
      %v4620 = vpop.permute.xlu0 %4619
      %4621 = vrot.lane.b32.xlu0 %v3993, 24
      %v4622 = vpop.permute.xlu0 %4621
      %4623 = vrot.lane.b32.xlu0 %v3994, 24
      %v4624 = vpop.permute.xlu0 %4623
      %4625 = vrot.lane.b32.xlu0 %v3995, 24
      %v4626 = vpop.permute.xlu0 %4625
      %4627 = vrot.lane.b32.xlu0 %v3996, 24
      %v4628 = vpop.permute.xlu0 %4627
      %4629 = vrot.lane.b32.xlu0 %v3997, 24
      %v4630 = vpop.permute.xlu0 %4629
      %4631 = vrot.lane.b32.xlu0 %v3998, 24
      %v4632 = vpop.permute.xlu0 %4631
      %4633 = vrot.lane.b32.xlu0 %v3999, 24
      %v4634 = vpop.permute.xlu0 %4633
      %4635 = vrot.lane.b32.xlu0 %v4000, 24
      %v4636 = vpop.permute.xlu0 %4635
      %4637 = vrot.lane.b32.xlu0 %v4097, 24
      %v4638 = vpop.permute.xlu0 %4637
      %4639 = vrot.lane.b32.xlu0 %v4098, 24
      %v4640 = vpop.permute.xlu0 %4639
      %4641 = vrot.lane.b32.xlu0 %v4099, 24
      %v4642 = vpop.permute.xlu0 %4641
      %4694 = vrot.lane.b32.xlu0 %v4004, 32
      %v4695 = vpop.permute.xlu0 %4694
      %4696 = vrot.lane.b32.xlu0 %v4005, 32
      %v4697 = vpop.permute.xlu0 %4696
      %4698 = vrot.lane.b32.xlu0 %v4006, 32
      %v4699 = vpop.permute.xlu0 %4698
      %4700 = vrot.lane.b32.xlu0 %v4007, 32
      %v4701 = vpop.permute.xlu0 %4700
      %4702 = vrot.lane.b32.xlu0 %v4008, 32
      %v4703 = vpop.permute.xlu0 %4702
      %4704 = vrot.lane.b32.xlu0 %v4009, 32
      %v4705 = vpop.permute.xlu0 %4704
      %4706 = vrot.lane.b32.xlu0 %v4010, 32
      %v4707 = vpop.permute.xlu0 %4706
      %4708 = vrot.lane.b32.xlu0 %v4011, 32
      %v4709 = vpop.permute.xlu0 %4708
      %4710 = vrot.lane.b32.xlu0 %v4012, 32
      %v4711 = vpop.permute.xlu0 %4710
      %4712 = vrot.lane.b32.xlu0 %v4013, 32
      %v4713 = vpop.permute.xlu0 %4712
      %4714 = vrot.lane.b32.xlu0 %v4014, 32
      %v4715 = vpop.permute.xlu0 %4714
      %4716 = vrot.lane.b32.xlu0 %v4015, 32
      %v4717 = vpop.permute.xlu0 %4716
      %4718 = vrot.lane.b32.xlu0 %v4016, 32
      %v4719 = vpop.permute.xlu0 %4718
      %4720 = vrot.lane.b32.xlu0 %v4017, 32
      %v4721 = vpop.permute.xlu0 %4720
      %4722 = vrot.lane.b32.xlu0 %v4018, 32
      %v4723 = vpop.permute.xlu0 %4722
      %4724 = vrot.lane.b32.xlu0 %v4019, 32
      %v4725 = vpop.permute.xlu0 %4724
      %4726 = vrot.lane.b32.xlu0 %v4020, 32
      %v4727 = vpop.permute.xlu0 %4726
      %4728 = vrot.lane.b32.xlu0 %v4021, 32
      %v4729 = vpop.permute.xlu0 %4728
      %4730 = vrot.lane.b32.xlu0 %v4022, 32
      %v4731 = vpop.permute.xlu0 %4730
      %4732 = vrot.lane.b32.xlu0 %v4023, 32
      %v4733 = vpop.permute.xlu0 %4732
      %4734 = vrot.lane.b32.xlu0 %v4024, 32
      %v4735 = vpop.permute.xlu0 %4734
      %4736 = vrot.lane.b32.xlu0 %v4025, 32
      %v4737 = vpop.permute.xlu0 %4736
      %4738 = vrot.lane.b32.xlu0 %v4026, 32
      %v4739 = vpop.permute.xlu0 %4738
      %4740 = vrot.lane.b32.xlu0 %v4027, 32
      %v4741 = vpop.permute.xlu0 %4740
      %4742 = vrot.lane.b32.xlu0 %v4028, 32
      %v4743 = vpop.permute.xlu0 %4742
      %4744 = vrot.lane.b32.xlu0 %v4029, 32
      %v4745 = vpop.permute.xlu0 %4744
      %4746 = vrot.lane.b32.xlu0 %v4030, 32
      %v4747 = vpop.permute.xlu0 %4746
      %4748 = vrot.lane.b32.xlu0 %v4031, 32
      %v4749 = vpop.permute.xlu0 %4748
      %4750 = vrot.lane.b32.xlu0 %v4032, 32
      %v4751 = vpop.permute.xlu0 %4750
      %4752 = vrot.lane.b32.xlu0 %v4033, 32
      %v4753 = vpop.permute.xlu0 %4752
      %4754 = vrot.lane.b32.xlu0 %v4034, 32
      %v4755 = vpop.permute.xlu0 %4754
      %4756 = vrot.lane.b32.xlu0 %v4035, 32
      %v4757 = vpop.permute.xlu0 %4756
      %4758 = vrot.lane.b32.xlu0 %v4036, 32
      %v4759 = vpop.permute.xlu0 %4758
      %4760 = vrot.lane.b32.xlu0 %v4037, 32
      %v4761 = vpop.permute.xlu0 %4760
      %4762 = vrot.lane.b32.xlu0 %v4038, 32
      %v4763 = vpop.permute.xlu0 %4762
      %4764 = vrot.lane.b32.xlu0 %v4039, 32
      %v4765 = vpop.permute.xlu0 %4764
      %4766 = vrot.lane.b32.xlu0 %v4040, 32
      %v4767 = vpop.permute.xlu0 %4766
      %4768 = vrot.lane.b32.xlu0 %v4041, 32
      %v4769 = vpop.permute.xlu0 %4768
      %4770 = vrot.lane.b32.xlu0 %v4042, 32
      %v4771 = vpop.permute.xlu0 %4770
      %4772 = vrot.lane.b32.xlu0 %v4043, 32
      %v4773 = vpop.permute.xlu0 %4772
      %4774 = vrot.lane.b32.xlu0 %v4044, 32
      %v4775 = vpop.permute.xlu0 %4774
      %4776 = vrot.lane.b32.xlu0 %v4045, 32
      %v4777 = vpop.permute.xlu0 %4776
      %4778 = vrot.lane.b32.xlu0 %v4046, 32
      %v4779 = vpop.permute.xlu0 %4778
      %4780 = vrot.lane.b32.xlu0 %v4047, 32
      %v4781 = vpop.permute.xlu0 %4780
      %4782 = vrot.lane.b32.xlu0 %v4048, 32
      %v4783 = vpop.permute.xlu0 %4782
      %4784 = vrot.lane.b32.xlu0 %v4100, 32
      %v4785 = vpop.permute.xlu0 %4784
      %4786 = vrot.lane.b32.xlu0 %v4101, 32
      %v4787 = vpop.permute.xlu0 %4786
      %4788 = vrot.lane.b32.xlu0 %v4102, 32
      %v4789 = vpop.permute.xlu0 %4788
      %4841 = vrot.lane.b32.xlu0 %v4052, 40
      %v4842 = vpop.permute.xlu0 %4841
      %4843 = vrot.lane.b32.xlu0 %v4053, 40
      %v4844 = vpop.permute.xlu0 %4843
      %4845 = vrot.lane.b32.xlu0 %v4054, 40
      %v4846 = vpop.permute.xlu0 %4845
      %4847 = vrot.lane.b32.xlu0 %v4055, 40
      %v4848 = vpop.permute.xlu0 %4847
      %4849 = vrot.lane.b32.xlu0 %v4056, 40
      %v4850 = vpop.permute.xlu0 %4849
      %4851 = vrot.lane.b32.xlu0 %v4057, 40
      %v4852 = vpop.permute.xlu0 %4851
      %4853 = vrot.lane.b32.xlu0 %v4058, 40
      %v4854 = vpop.permute.xlu0 %4853
      %4855 = vrot.lane.b32.xlu0 %v4059, 40
      %v4856 = vpop.permute.xlu0 %4855
      %4857 = vrot.lane.b32.xlu0 %v4060, 40
      %v4858 = vpop.permute.xlu0 %4857
      %4859 = vrot.lane.b32.xlu0 %v4061, 40
      %v4860 = vpop.permute.xlu0 %4859
      %4861 = vrot.lane.b32.xlu0 %v4062, 40
      %v4862 = vpop.permute.xlu0 %4861
      %4863 = vrot.lane.b32.xlu0 %v4063, 40
      %v4864 = vpop.permute.xlu0 %4863
      %4865 = vrot.lane.b32.xlu0 %v4064, 40
      %v4866 = vpop.permute.xlu0 %4865
      %4867 = vrot.lane.b32.xlu0 %v4065, 40
      %v4868 = vpop.permute.xlu0 %4867
      %4869 = vrot.lane.b32.xlu0 %v4066, 40
      %v4870 = vpop.permute.xlu0 %4869
      %4871 = vrot.lane.b32.xlu0 %v4067, 40
      %v4872 = vpop.permute.xlu0 %4871
      %4873 = vrot.lane.b32.xlu0 %v4068, 40
      %v4874 = vpop.permute.xlu0 %4873
      %4875 = vrot.lane.b32.xlu0 %v4069, 40
      %v4876 = vpop.permute.xlu0 %4875
      %4877 = vrot.lane.b32.xlu0 %v4070, 40
      %v4878 = vpop.permute.xlu0 %4877
      %4879 = vrot.lane.b32.xlu0 %v4071, 40
      %v4880 = vpop.permute.xlu0 %4879
      %4881 = vrot.lane.b32.xlu0 %v4072, 40
      %v4882 = vpop.permute.xlu0 %4881
      %4883 = vrot.lane.b32.xlu0 %v4073, 40
      %v4884 = vpop.permute.xlu0 %4883
      %4885 = vrot.lane.b32.xlu0 %v4074, 40
      %v4886 = vpop.permute.xlu0 %4885
      %4887 = vrot.lane.b32.xlu0 %v4075, 40
      %v4888 = vpop.permute.xlu0 %4887
      %4889 = vrot.lane.b32.xlu0 %v4076, 40
      %v4890 = vpop.permute.xlu0 %4889
      %4891 = vrot.lane.b32.xlu0 %v4077, 40
      %v4892 = vpop.permute.xlu0 %4891
      %4893 = vrot.lane.b32.xlu0 %v4078, 40
      %v4894 = vpop.permute.xlu0 %4893
      %4895 = vrot.lane.b32.xlu0 %v4079, 40
      %v4896 = vpop.permute.xlu0 %4895
      %4897 = vrot.lane.b32.xlu0 %v4080, 40
      %v4898 = vpop.permute.xlu0 %4897
      %4899 = vrot.lane.b32.xlu0 %v4081, 40
      %v4900 = vpop.permute.xlu0 %4899
      %4901 = vrot.lane.b32.xlu0 %v4082, 40
      %v4902 = vpop.permute.xlu0 %4901
      %4903 = vrot.lane.b32.xlu0 %v4083, 40
      %v4904 = vpop.permute.xlu0 %4903
      %4905 = vrot.lane.b32.xlu0 %v4084, 40
      %v4906 = vpop.permute.xlu0 %4905
      %4907 = vrot.lane.b32.xlu0 %v4085, 40
      %v4908 = vpop.permute.xlu0 %4907
      %4909 = vrot.lane.b32.xlu0 %v4086, 40
      %v4910 = vpop.permute.xlu0 %4909
      %4911 = vrot.lane.b32.xlu0 %v4087, 40
      %v4912 = vpop.permute.xlu0 %4911
      %4913 = vrot.lane.b32.xlu0 %v4088, 40
      %v4914 = vpop.permute.xlu0 %4913
      %4915 = vrot.lane.b32.xlu0 %v4089, 40
      %v4916 = vpop.permute.xlu0 %4915
      %4917 = vrot.lane.b32.xlu0 %v4090, 40
      %v4918 = vpop.permute.xlu0 %4917
      %4919 = vrot.lane.b32.xlu0 %v4091, 40
      %v4920 = vpop.permute.xlu0 %4919
      %4921 = vrot.lane.b32.xlu0 %v4092, 40
      %v4922 = vpop.permute.xlu0 %4921
      %4923 = vrot.lane.b32.xlu0 %v4093, 40
      %v4924 = vpop.permute.xlu0 %4923
      %4925 = vrot.lane.b32.xlu0 %v4094, 40
      %v4926 = vpop.permute.xlu0 %4925
      %4927 = vrot.lane.b32.xlu0 %v4095, 40
      %v4928 = vpop.permute.xlu0 %4927
      %4929 = vrot.lane.b32.xlu0 %v4096, 40
      %v4930 = vpop.permute.xlu0 %4929
      %4931 = vrot.lane.b32.xlu0 %v4103, 40
      %v4932 = vpop.permute.xlu0 %4931
      %4933 = vrot.lane.b32.xlu0 %v4104, 40
      %v4934 = vpop.permute.xlu0 %4933
      %4935 = vrot.lane.b32.xlu0 %v4105, 40
      %v4936 = vpop.permute.xlu0 %4935
      %4988 = vrot.lane.b32.xlu0 %v3959, 48
      %v4989 = vpop.permute.xlu0 %4988
      %4990 = vrot.lane.b32.xlu0 %v3960, 48
      %v4991 = vpop.permute.xlu0 %4990
      %4992 = vrot.lane.b32.xlu0 %v3961, 48
      %v4993 = vpop.permute.xlu0 %4992
      %4994 = vrot.lane.b32.xlu0 %v3962, 48
      %v4995 = vpop.permute.xlu0 %4994
      %4996 = vrot.lane.b32.xlu0 %v3963, 48
      %v4997 = vpop.permute.xlu0 %4996
      %4998 = vrot.lane.b32.xlu0 %v3964, 48
      %v4999 = vpop.permute.xlu0 %4998
      %5000 = vrot.lane.b32.xlu0 %v3965, 48
      %v5001 = vpop.permute.xlu0 %5000
      %5002 = vrot.lane.b32.xlu0 %v3966, 48
      %v5003 = vpop.permute.xlu0 %5002
      %5004 = vrot.lane.b32.xlu0 %v3967, 48
      %v5005 = vpop.permute.xlu0 %5004
      %5006 = vrot.lane.b32.xlu0 %v3968, 48
      %v5007 = vpop.permute.xlu0 %5006
      %5008 = vrot.lane.b32.xlu0 %v3969, 48
      %v5009 = vpop.permute.xlu0 %5008
      %5010 = vrot.lane.b32.xlu0 %v3970, 48
      %v5011 = vpop.permute.xlu0 %5010
      %5012 = vrot.lane.b32.xlu0 %v3971, 48
      %v5013 = vpop.permute.xlu0 %5012
      %5014 = vrot.lane.b32.xlu0 %v3972, 48
      %v5015 = vpop.permute.xlu0 %5014
      %5016 = vrot.lane.b32.xlu0 %v3973, 48
      %v5017 = vpop.permute.xlu0 %5016
      %5018 = vrot.lane.b32.xlu0 %v3974, 48
      %v5019 = vpop.permute.xlu0 %5018
      %5020 = vrot.lane.b32.xlu0 %v3975, 48
      %v5021 = vpop.permute.xlu0 %5020
      %5022 = vrot.lane.b32.xlu0 %v3976, 48
      %v5023 = vpop.permute.xlu0 %5022
      %5024 = vrot.lane.b32.xlu0 %v3977, 48
      %v5025 = vpop.permute.xlu0 %5024
      %5026 = vrot.lane.b32.xlu0 %v3978, 48
      %v5027 = vpop.permute.xlu0 %5026
      %5028 = vrot.lane.b32.xlu0 %v3979, 48
      %v5029 = vpop.permute.xlu0 %5028
      %5030 = vrot.lane.b32.xlu0 %v3980, 48
      %v5031 = vpop.permute.xlu0 %5030
      %5032 = vrot.lane.b32.xlu0 %v3981, 48
      %v5033 = vpop.permute.xlu0 %5032
      %5034 = vrot.lane.b32.xlu0 %v3982, 48
      %v5035 = vpop.permute.xlu0 %5034
      %5036 = vrot.lane.b32.xlu0 %v3983, 48
      %v5037 = vpop.permute.xlu0 %5036
      %5038 = vrot.lane.b32.xlu0 %v3984, 48
      %v5039 = vpop.permute.xlu0 %5038
      %5040 = vrot.lane.b32.xlu0 %v3985, 48
      %v5041 = vpop.permute.xlu0 %5040
      %5042 = vrot.lane.b32.xlu0 %v3986, 48
      %v5043 = vpop.permute.xlu0 %5042
      %5044 = vrot.lane.b32.xlu0 %v3987, 48
      %v5045 = vpop.permute.xlu0 %5044
      %5046 = vrot.lane.b32.xlu0 %v3988, 48
      %v5047 = vpop.permute.xlu0 %5046
      %5048 = vrot.lane.b32.xlu0 %v3989, 48
      %v5049 = vpop.permute.xlu0 %5048
      %5050 = vrot.lane.b32.xlu0 %v3990, 48
      %v5051 = vpop.permute.xlu0 %5050
      %5052 = vrot.lane.b32.xlu0 %v3991, 48
      %v5053 = vpop.permute.xlu0 %5052
      %5054 = vrot.lane.b32.xlu0 %v3992, 48
      %v5055 = vpop.permute.xlu0 %5054
      %5056 = vrot.lane.b32.xlu0 %v3993, 48
      %v5057 = vpop.permute.xlu0 %5056
      %5058 = vrot.lane.b32.xlu0 %v3994, 48
      %v5059 = vpop.permute.xlu0 %5058
      %5060 = vrot.lane.b32.xlu0 %v3995, 48
      %v5061 = vpop.permute.xlu0 %5060
      %5062 = vrot.lane.b32.xlu0 %v3996, 48
      %v5063 = vpop.permute.xlu0 %5062
      %5064 = vrot.lane.b32.xlu0 %v3997, 48
      %v5065 = vpop.permute.xlu0 %5064
      %5066 = vrot.lane.b32.xlu0 %v3998, 48
      %v5067 = vpop.permute.xlu0 %5066
      %5068 = vrot.lane.b32.xlu0 %v3999, 48
      %v5069 = vpop.permute.xlu0 %5068
      %5070 = vrot.lane.b32.xlu0 %v4000, 48
      %v5071 = vpop.permute.xlu0 %5070
      %5072 = vrot.lane.b32.xlu0 %v4097, 48
      %v5073 = vpop.permute.xlu0 %5072
      %5074 = vrot.lane.b32.xlu0 %v4098, 48
      %v5075 = vpop.permute.xlu0 %5074
      %5076 = vrot.lane.b32.xlu0 %v4099, 48
      %v5077 = vpop.permute.xlu0 %5076
      %5078 = vrot.lane.b32.xlu0 %v4106, 48
      %v5079 = vpop.permute.xlu0 %5078
      %5080 = vrot.lane.b32.xlu0 %v4107, 48
      %v5081 = vpop.permute.xlu0 %5080
      %5082 = vrot.lane.b32.xlu0 %v4108, 48
      %v5083 = vpop.permute.xlu0 %5082
      %5135 = vrot.lane.b32.xlu0 %v4007, 56
      %v5136 = vpop.permute.xlu0 %5135
      %5137 = vrot.lane.b32.xlu0 %v4008, 56
      %v5138 = vpop.permute.xlu0 %5137
      %5139 = vrot.lane.b32.xlu0 %v4009, 56
      %v5140 = vpop.permute.xlu0 %5139
      %5141 = vrot.lane.b32.xlu0 %v4010, 56
      %v5142 = vpop.permute.xlu0 %5141
      %5143 = vrot.lane.b32.xlu0 %v4011, 56
      %v5144 = vpop.permute.xlu0 %5143
      %5145 = vrot.lane.b32.xlu0 %v4012, 56
      %v5146 = vpop.permute.xlu0 %5145
      %5147 = vrot.lane.b32.xlu0 %v4013, 56
      %v5148 = vpop.permute.xlu0 %5147
      %5149 = vrot.lane.b32.xlu0 %v4014, 56
      %v5150 = vpop.permute.xlu0 %5149
      %5151 = vrot.lane.b32.xlu0 %v4015, 56
      %v5152 = vpop.permute.xlu0 %5151
      %5153 = vrot.lane.b32.xlu0 %v4016, 56
      %v5154 = vpop.permute.xlu0 %5153
      %5155 = vrot.lane.b32.xlu0 %v4017, 56
      %v5156 = vpop.permute.xlu0 %5155
      %5157 = vrot.lane.b32.xlu0 %v4018, 56
      %v5158 = vpop.permute.xlu0 %5157
      %5159 = vrot.lane.b32.xlu0 %v4019, 56
      %v5160 = vpop.permute.xlu0 %5159
      %5161 = vrot.lane.b32.xlu0 %v4020, 56
      %v5162 = vpop.permute.xlu0 %5161
      %5163 = vrot.lane.b32.xlu0 %v4021, 56
      %v5164 = vpop.permute.xlu0 %5163
      %5165 = vrot.lane.b32.xlu0 %v4022, 56
      %v5166 = vpop.permute.xlu0 %5165
      %5167 = vrot.lane.b32.xlu0 %v4023, 56
      %v5168 = vpop.permute.xlu0 %5167
      %5169 = vrot.lane.b32.xlu0 %v4024, 56
      %v5170 = vpop.permute.xlu0 %5169
      %5171 = vrot.lane.b32.xlu0 %v4025, 56
      %v5172 = vpop.permute.xlu0 %5171
      %5173 = vrot.lane.b32.xlu0 %v4026, 56
      %v5174 = vpop.permute.xlu0 %5173
      %5175 = vrot.lane.b32.xlu0 %v4027, 56
      %v5176 = vpop.permute.xlu0 %5175
      %5177 = vrot.lane.b32.xlu0 %v4028, 56
      %v5178 = vpop.permute.xlu0 %5177
      %5179 = vrot.lane.b32.xlu0 %v4029, 56
      %v5180 = vpop.permute.xlu0 %5179
      %5181 = vrot.lane.b32.xlu0 %v4030, 56
      %v5182 = vpop.permute.xlu0 %5181
      %5183 = vrot.lane.b32.xlu0 %v4031, 56
      %v5184 = vpop.permute.xlu0 %5183
      %5185 = vrot.lane.b32.xlu0 %v4032, 56
      %v5186 = vpop.permute.xlu0 %5185
      %5187 = vrot.lane.b32.xlu0 %v4033, 56
      %v5188 = vpop.permute.xlu0 %5187
      %5189 = vrot.lane.b32.xlu0 %v4034, 56
      %v5190 = vpop.permute.xlu0 %5189
      %5191 = vrot.lane.b32.xlu0 %v4035, 56
      %v5192 = vpop.permute.xlu0 %5191
      %5193 = vrot.lane.b32.xlu0 %v4036, 56
      %v5194 = vpop.permute.xlu0 %5193
      %5195 = vrot.lane.b32.xlu0 %v4037, 56
      %v5196 = vpop.permute.xlu0 %5195
      %5197 = vrot.lane.b32.xlu0 %v4038, 56
      %v5198 = vpop.permute.xlu0 %5197
      %5199 = vrot.lane.b32.xlu0 %v4039, 56
      %v5200 = vpop.permute.xlu0 %5199
      %5201 = vrot.lane.b32.xlu0 %v4040, 56
      %v5202 = vpop.permute.xlu0 %5201
      %5203 = vrot.lane.b32.xlu0 %v4041, 56
      %v5204 = vpop.permute.xlu0 %5203
      %5205 = vrot.lane.b32.xlu0 %v4042, 56
      %v5206 = vpop.permute.xlu0 %5205
      %5207 = vrot.lane.b32.xlu0 %v4043, 56
      %v5208 = vpop.permute.xlu0 %5207
      %5209 = vrot.lane.b32.xlu0 %v4044, 56
      %v5210 = vpop.permute.xlu0 %5209
      %5211 = vrot.lane.b32.xlu0 %v4045, 56
      %v5212 = vpop.permute.xlu0 %5211
      %5213 = vrot.lane.b32.xlu0 %v4046, 56
      %v5214 = vpop.permute.xlu0 %5213
      %5215 = vrot.lane.b32.xlu0 %v4047, 56
      %v5216 = vpop.permute.xlu0 %5215
      %5217 = vrot.lane.b32.xlu0 %v4048, 56
      %v5218 = vpop.permute.xlu0 %5217
      %5219 = vrot.lane.b32.xlu0 %v4100, 56
      %v5220 = vpop.permute.xlu0 %5219
      %5221 = vrot.lane.b32.xlu0 %v4101, 56
      %v5222 = vpop.permute.xlu0 %5221
      %5223 = vrot.lane.b32.xlu0 %v4102, 56
      %v5224 = vpop.permute.xlu0 %5223
      %5225 = vrot.lane.b32.xlu0 %v4109, 56
      %v5226 = vpop.permute.xlu0 %5225
      %5227 = vrot.lane.b32.xlu0 %v4110, 56
      %v5228 = vpop.permute.xlu0 %5227
      %5229 = vrot.lane.b32.xlu0 %v4111, 56
      %v5230 = vpop.permute.xlu0 %5229
      %5282 = vrot.lane.b32.xlu0 %v4055, 64
      %v5283 = vpop.permute.xlu0 %5282
      %5284 = vrot.lane.b32.xlu0 %v4056, 64
      %v5285 = vpop.permute.xlu0 %5284
      %5286 = vrot.lane.b32.xlu0 %v4057, 64
      %v5287 = vpop.permute.xlu0 %5286
      %5288 = vrot.lane.b32.xlu0 %v4058, 64
      %v5289 = vpop.permute.xlu0 %5288
      %5290 = vrot.lane.b32.xlu0 %v4059, 64
      %v5291 = vpop.permute.xlu0 %5290
      %5292 = vrot.lane.b32.xlu0 %v4060, 64
      %v5293 = vpop.permute.xlu0 %5292
      %5294 = vrot.lane.b32.xlu0 %v4061, 64
      %v5295 = vpop.permute.xlu0 %5294
      %5296 = vrot.lane.b32.xlu0 %v4062, 64
      %v5297 = vpop.permute.xlu0 %5296
      %5298 = vrot.lane.b32.xlu0 %v4063, 64
      %v5299 = vpop.permute.xlu0 %5298
      %5300 = vrot.lane.b32.xlu0 %v4064, 64
      %v5301 = vpop.permute.xlu0 %5300
      %5302 = vrot.lane.b32.xlu0 %v4065, 64
      %v5303 = vpop.permute.xlu0 %5302
      %5304 = vrot.lane.b32.xlu0 %v4066, 64
      %v5305 = vpop.permute.xlu0 %5304
      %5306 = vrot.lane.b32.xlu0 %v4067, 64
      %v5307 = vpop.permute.xlu0 %5306
      %5308 = vrot.lane.b32.xlu0 %v4068, 64
      %v5309 = vpop.permute.xlu0 %5308
      %5310 = vrot.lane.b32.xlu0 %v4069, 64
      %v5311 = vpop.permute.xlu0 %5310
      %5312 = vrot.lane.b32.xlu0 %v4070, 64
      %v5313 = vpop.permute.xlu0 %5312
      %5314 = vrot.lane.b32.xlu0 %v4071, 64
      %v5315 = vpop.permute.xlu0 %5314
      %5316 = vrot.lane.b32.xlu0 %v4072, 64
      %v5317 = vpop.permute.xlu0 %5316
      %5318 = vrot.lane.b32.xlu0 %v4073, 64
      %v5319 = vpop.permute.xlu0 %5318
      %5320 = vrot.lane.b32.xlu0 %v4074, 64
      %v5321 = vpop.permute.xlu0 %5320
      %5322 = vrot.lane.b32.xlu0 %v4075, 64
      %v5323 = vpop.permute.xlu0 %5322
      %5324 = vrot.lane.b32.xlu0 %v4076, 64
      %v5325 = vpop.permute.xlu0 %5324
      %5326 = vrot.lane.b32.xlu0 %v4077, 64
      %v5327 = vpop.permute.xlu0 %5326
      %5328 = vrot.lane.b32.xlu0 %v4078, 64
      %v5329 = vpop.permute.xlu0 %5328
      %5330 = vrot.lane.b32.xlu0 %v4079, 64
      %v5331 = vpop.permute.xlu0 %5330
      %5332 = vrot.lane.b32.xlu0 %v4080, 64
      %v5333 = vpop.permute.xlu0 %5332
      %5334 = vrot.lane.b32.xlu0 %v4081, 64
      %v5335 = vpop.permute.xlu0 %5334
      %5336 = vrot.lane.b32.xlu0 %v4082, 64
      %v5337 = vpop.permute.xlu0 %5336
      %5338 = vrot.lane.b32.xlu0 %v4083, 64
      %v5339 = vpop.permute.xlu0 %5338
      %5340 = vrot.lane.b32.xlu0 %v4084, 64
      %v5341 = vpop.permute.xlu0 %5340
      %5342 = vrot.lane.b32.xlu0 %v4085, 64
      %v5343 = vpop.permute.xlu0 %5342
      %5344 = vrot.lane.b32.xlu0 %v4086, 64
      %v5345 = vpop.permute.xlu0 %5344
      %5346 = vrot.lane.b32.xlu0 %v4087, 64
      %v5347 = vpop.permute.xlu0 %5346
      %5348 = vrot.lane.b32.xlu0 %v4088, 64
      %v5349 = vpop.permute.xlu0 %5348
      %5350 = vrot.lane.b32.xlu0 %v4089, 64
      %v5351 = vpop.permute.xlu0 %5350
      %5352 = vrot.lane.b32.xlu0 %v4090, 64
      %v5353 = vpop.permute.xlu0 %5352
      %5354 = vrot.lane.b32.xlu0 %v4091, 64
      %v5355 = vpop.permute.xlu0 %5354
      %5356 = vrot.lane.b32.xlu0 %v4092, 64
      %v5357 = vpop.permute.xlu0 %5356
      %5358 = vrot.lane.b32.xlu0 %v4093, 64
      %v5359 = vpop.permute.xlu0 %5358
      %5360 = vrot.lane.b32.xlu0 %v4094, 64
      %v5361 = vpop.permute.xlu0 %5360
      %5362 = vrot.lane.b32.xlu0 %v4095, 64
      %v5363 = vpop.permute.xlu0 %5362
      %5364 = vrot.lane.b32.xlu0 %v4096, 64
      %v5365 = vpop.permute.xlu0 %5364
      %5366 = vrot.lane.b32.xlu0 %v4103, 64
      %v5367 = vpop.permute.xlu0 %5366
      %5368 = vrot.lane.b32.xlu0 %v4104, 64
      %v5369 = vpop.permute.xlu0 %5368
      %5370 = vrot.lane.b32.xlu0 %v4105, 64
      %v5371 = vpop.permute.xlu0 %5370
      %5372 = vrot.lane.b32.xlu0 %v4112, 64
      %v5373 = vpop.permute.xlu0 %5372
      %5374 = vrot.lane.b32.xlu0 %v4113, 64
      %v5375 = vpop.permute.xlu0 %5374
      %5376 = vrot.lane.b32.xlu0 %v4114, 64
      %v5377 = vpop.permute.xlu0 %5376
      %v5426 = vsel %vm3895, %v3953, %v4164
      %v5427 = vsel %vm3895, %v3954, %v4166
      %v5428 = vsel %vm3895, %v3955, %v4168
      %v5429 = vsel %vm3895, %v3956, %v4170
      %v5430 = vsel %vm3895, %v3957, %v4172
      %v5431 = vsel %vm3895, %v3958, %v4174
      %v5432 = vsel %vm3895, %v3959, %v4176
      %v5433 = vsel %vm3895, %v3960, %v4178
      %v5434 = vsel %vm3895, %v3961, %v4180
      %v5435 = vsel %vm3895, %v3962, %v4182
      %v5436 = vsel %vm3895, %v3963, %v4184
      %v5437 = vsel %vm3895, %v3964, %v4186
      %v5438 = vsel %vm3895, %v3965, %v4188
      %v5439 = vsel %vm3895, %v3966, %v4190
      %v5440 = vsel %vm3895, %v3967, %v4192
      %v5441 = vsel %vm3895, %v3968, %v4194
      %v5442 = vsel %vm3895, %v3969, %v4196
      %v5443 = vsel %vm3895, %v3970, %v4198
      %v5444 = vsel %vm3895, %v3971, %v4200
      %v5445 = vsel %vm3895, %v3972, %v4202
      %v5446 = vsel %vm3895, %v3973, %v4204
      %v5447 = vsel %vm3895, %v3974, %v4206
      %v5448 = vsel %vm3895, %v3975, %v4208
      %v5449 = vsel %vm3895, %v3976, %v4210
      %v5450 = vsel %vm3895, %v3977, %v4212
      %v5451 = vsel %vm3895, %v3978, %v4214
      %v5452 = vsel %vm3895, %v3979, %v4216
      %v5453 = vsel %vm3895, %v3980, %v4218
      %v5454 = vsel %vm3895, %v3981, %v4220
      %v5455 = vsel %vm3895, %v3982, %v4222
      %v5456 = vsel %vm3895, %v3983, %v4224
      %v5457 = vsel %vm3895, %v3984, %v4226
      %v5458 = vsel %vm3895, %v3985, %v4228
      %v5459 = vsel %vm3895, %v3986, %v4230
      %v5460 = vsel %vm3895, %v3987, %v4232
      %v5461 = vsel %vm3895, %v3988, %v4234
      %v5462 = vsel %vm3895, %v3989, %v4236
      %v5463 = vsel %vm3895, %v3990, %v4238
      %v5464 = vsel %vm3895, %v3991, %v4240
      %v5465 = vsel %vm3895, %v3992, %v4242
      %v5466 = vsel %vm3895, %v3993, %v4244
      %v5467 = vsel %vm3895, %v3994, %v4246
      %v5468 = vsel %vm3895, %v3995, %v4248
      %v5469 = vsel %vm3895, %v3996, %v4250
      %v5470 = vsel %vm3895, %v3997, %v4252
      %v5471 = vsel %vm3895, %v3998, %v4254
      %v5472 = vsel %vm3895, %v3999, %v4256
      %v5473 = vsel %vm3895, %v4000, %v4258
      %vm5474 = vcmask 130048
      %v5475 = vsel %vm5474, %v5426, %v4356
      %v5476 = vsel %vm5474, %v5427, %v4358
      %v5477 = vsel %vm5474, %v5428, %v4360
      %v5478 = vsel %vm5474, %v5429, %v4362
      %v5479 = vsel %vm5474, %v5430, %v4364
      %v5480 = vsel %vm5474, %v5431, %v4366
      %v5481 = vsel %vm5474, %v5432, %v4368
      %v5482 = vsel %vm5474, %v5433, %v4370
      %v5483 = vsel %vm5474, %v5434, %v4372
      %v5484 = vsel %vm5474, %v5435, %v4374
      %v5485 = vsel %vm5474, %v5436, %v4376
      %v5486 = vsel %vm5474, %v5437, %v4378
      %v5487 = vsel %vm5474, %v5438, %v4380
      %v5488 = vsel %vm5474, %v5439, %v4382
      %v5489 = vsel %vm5474, %v5440, %v4384
      %v5490 = vsel %vm5474, %v5441, %v4386
      %v5491 = vsel %vm5474, %v5442, %v4388
      %v5492 = vsel %vm5474, %v5443, %v4390
      %v5493 = vsel %vm5474, %v5444, %v4392
      %v5494 = vsel %vm5474, %v5445, %v4394
      %v5495 = vsel %vm5474, %v5446, %v4396
      %v5496 = vsel %vm5474, %v5447, %v4398
      %v5497 = vsel %vm5474, %v5448, %v4400
      %v5498 = vsel %vm5474, %v5449, %v4402
      %v5499 = vsel %vm5474, %v5450, %v4404
      %v5500 = vsel %vm5474, %v5451, %v4406
      %v5501 = vsel %vm5474, %v5452, %v4408
      %v5502 = vsel %vm5474, %v5453, %v4410
      %v5503 = vsel %vm5474, %v5454, %v4412
      %v5504 = vsel %vm5474, %v5455, %v4414
      %v5505 = vsel %vm5474, %v5456, %v4416
      %v5506 = vsel %vm5474, %v5457, %v4418
      %v5507 = vsel %vm5474, %v5458, %v4420
      %v5508 = vsel %vm5474, %v5459, %v4422
      %v5509 = vsel %vm5474, %v5460, %v4424
      %v5510 = vsel %vm5474, %v5461, %v4426
      %v5511 = vsel %vm5474, %v5462, %v4428
      %v5512 = vsel %vm5474, %v5463, %v4430
      %v5513 = vsel %vm5474, %v5464, %v4432
      %v5514 = vsel %vm5474, %v5465, %v4434
      %v5515 = vsel %vm5474, %v5466, %v4436
      %v5516 = vsel %vm5474, %v5467, %v4438
      %v5517 = vsel %vm5474, %v5468, %v4440
      %v5518 = vsel %vm5474, %v5469, %v4442
      %v5519 = vsel %vm5474, %v5470, %v4444
      %v5520 = vsel %vm5474, %v5471, %v4446
      %v5521 = vsel %vm5474, %v5472, %v4448
      %v5522 = vsel %vm5474, %v5473, %v4450
      %vm5523 = vcmask 195584
      %v5524 = vsel %vm5523, %v5475, %v4548
      %v5525 = vsel %vm5523, %v5476, %v4550
      %v5526 = vsel %vm5523, %v5477, %v4552
      %v5527 = vsel %vm5523, %v5478, %v4554
      %v5528 = vsel %vm5523, %v5479, %v4556
      %v5529 = vsel %vm5523, %v5480, %v4558
      %v5530 = vsel %vm5523, %v5481, %v4560
      %v5531 = vsel %vm5523, %v5482, %v4562
      %v5532 = vsel %vm5523, %v5483, %v4564
      %v5533 = vsel %vm5523, %v5484, %v4566
      %v5534 = vsel %vm5523, %v5485, %v4568
      %v5535 = vsel %vm5523, %v5486, %v4570
      %v5536 = vsel %vm5523, %v5487, %v4572
      %v5537 = vsel %vm5523, %v5488, %v4574
      %v5538 = vsel %vm5523, %v5489, %v4576
      %v5539 = vsel %vm5523, %v5490, %v4578
      %v5540 = vsel %vm5523, %v5491, %v4580
      %v5541 = vsel %vm5523, %v5492, %v4582
      %v5542 = vsel %vm5523, %v5493, %v4584
      %v5543 = vsel %vm5523, %v5494, %v4586
      %v5544 = vsel %vm5523, %v5495, %v4588
      %v5545 = vsel %vm5523, %v5496, %v4590
      %v5546 = vsel %vm5523, %v5497, %v4592
      %v5547 = vsel %vm5523, %v5498, %v4594
      %v5548 = vsel %vm5523, %v5499, %v4596
      %v5549 = vsel %vm5523, %v5500, %v4598
      %v5550 = vsel %vm5523, %v5501, %v4600
      %v5551 = vsel %vm5523, %v5502, %v4602
      %v5552 = vsel %vm5523, %v5503, %v4604
      %v5553 = vsel %vm5523, %v5504, %v4606
      %v5554 = vsel %vm5523, %v5505, %v4608
      %v5555 = vsel %vm5523, %v5506, %v4610
      %v5556 = vsel %vm5523, %v5507, %v4612
      %v5557 = vsel %vm5523, %v5508, %v4614
      %v5558 = vsel %vm5523, %v5509, %v4616
      %v5559 = vsel %vm5523, %v5510, %v4618
      %v5560 = vsel %vm5523, %v5511, %v4620
      %v5561 = vsel %vm5523, %v5512, %v4622
      %v5562 = vsel %vm5523, %v5513, %v4624
      %v5563 = vsel %vm5523, %v5514, %v4626
      %v5564 = vsel %vm5523, %v5515, %v4628
      %v5565 = vsel %vm5523, %v5516, %v4630
      %v5566 = vsel %vm5523, %v5517, %v4632
      %v5567 = vsel %vm5523, %v5518, %v4634
      %v5568 = vsel %vm5523, %v5519, %v4636
      %v5569 = vsel %vm5523, %v5520, %v4638
      %v5570 = vsel %vm5523, %v5521, %v4640
      %v5571 = vsel %vm5523, %v5522, %v4642
      %v5572 = vsel %vm374, %v5524, %v4695
      %v5573 = vsel %vm374, %v5525, %v4697
      %v5574 = vsel %vm374, %v5526, %v4699
      %v5575 = vsel %vm374, %v5527, %v4701
      %v5576 = vsel %vm374, %v5528, %v4703
      %v5577 = vsel %vm374, %v5529, %v4705
      %v5578 = vsel %vm374, %v5530, %v4707
      %v5579 = vsel %vm374, %v5531, %v4709
      %v5580 = vsel %vm374, %v5532, %v4711
      %v5581 = vsel %vm374, %v5533, %v4713
      %v5582 = vsel %vm374, %v5534, %v4715
      %v5583 = vsel %vm374, %v5535, %v4717
      %v5584 = vsel %vm374, %v5536, %v4719
      %v5585 = vsel %vm374, %v5537, %v4721
      %v5586 = vsel %vm374, %v5538, %v4723
      %v5587 = vsel %vm374, %v5539, %v4725
      %v5588 = vsel %vm374, %v5540, %v4727
      %v5589 = vsel %vm374, %v5541, %v4729
      %v5590 = vsel %vm374, %v5542, %v4731
      %v5591 = vsel %vm374, %v5543, %v4733
      %v5592 = vsel %vm374, %v5544, %v4735
      %v5593 = vsel %vm374, %v5545, %v4737
      %v5594 = vsel %vm374, %v5546, %v4739
      %v5595 = vsel %vm374, %v5547, %v4741
      %v5596 = vsel %vm374, %v5548, %v4743
      %v5597 = vsel %vm374, %v5549, %v4745
      %v5598 = vsel %vm374, %v5550, %v4747
      %v5599 = vsel %vm374, %v5551, %v4749
      %v5600 = vsel %vm374, %v5552, %v4751
      %v5601 = vsel %vm374, %v5553, %v4753
      %v5602 = vsel %vm374, %v5554, %v4755
      %v5603 = vsel %vm374, %v5555, %v4757
      %v5604 = vsel %vm374, %v5556, %v4759
      %v5605 = vsel %vm374, %v5557, %v4761
      %v5606 = vsel %vm374, %v5558, %v4763
      %v5607 = vsel %vm374, %v5559, %v4765
      %v5608 = vsel %vm374, %v5560, %v4767
      %v5609 = vsel %vm374, %v5561, %v4769
      %v5610 = vsel %vm374, %v5562, %v4771
      %v5611 = vsel %vm374, %v5563, %v4773
      %v5612 = vsel %vm374, %v5564, %v4775
      %v5613 = vsel %vm374, %v5565, %v4777
      %v5614 = vsel %vm374, %v5566, %v4779
      %v5615 = vsel %vm374, %v5567, %v4781
      %v5616 = vsel %vm374, %v5568, %v4783
      %v5617 = vsel %vm374, %v5569, %v4785
      %v5618 = vsel %vm374, %v5570, %v4787
      %v5619 = vsel %vm374, %v5571, %v4789
      %vm5620 = vcmask 326656
      %v5621 = vsel %vm5620, %v5572, %v4842
      %v5622 = vsel %vm5620, %v5573, %v4844
      %v5623 = vsel %vm5620, %v5574, %v4846
      %v5624 = vsel %vm5620, %v5575, %v4848
      %v5625 = vsel %vm5620, %v5576, %v4850
      %v5626 = vsel %vm5620, %v5577, %v4852
      %v5627 = vsel %vm5620, %v5578, %v4854
      %v5628 = vsel %vm5620, %v5579, %v4856
      %v5629 = vsel %vm5620, %v5580, %v4858
      %v5630 = vsel %vm5620, %v5581, %v4860
      %v5631 = vsel %vm5620, %v5582, %v4862
      %v5632 = vsel %vm5620, %v5583, %v4864
      %v5633 = vsel %vm5620, %v5584, %v4866
      %v5634 = vsel %vm5620, %v5585, %v4868
      %v5635 = vsel %vm5620, %v5586, %v4870
      %v5636 = vsel %vm5620, %v5587, %v4872
      %v5637 = vsel %vm5620, %v5588, %v4874
      %v5638 = vsel %vm5620, %v5589, %v4876
      %v5639 = vsel %vm5620, %v5590, %v4878
      %v5640 = vsel %vm5620, %v5591, %v4880
      %v5641 = vsel %vm5620, %v5592, %v4882
      %v5642 = vsel %vm5620, %v5593, %v4884
      %v5643 = vsel %vm5620, %v5594, %v4886
      %v5644 = vsel %vm5620, %v5595, %v4888
      %v5645 = vsel %vm5620, %v5596, %v4890
      %v5646 = vsel %vm5620, %v5597, %v4892
      %v5647 = vsel %vm5620, %v5598, %v4894
      %v5648 = vsel %vm5620, %v5599, %v4896
      %v5649 = vsel %vm5620, %v5600, %v4898
      %v5650 = vsel %vm5620, %v5601, %v4900
      %v5651 = vsel %vm5620, %v5602, %v4902
      %v5652 = vsel %vm5620, %v5603, %v4904
      %v5653 = vsel %vm5620, %v5604, %v4906
      %v5654 = vsel %vm5620, %v5605, %v4908
      %v5655 = vsel %vm5620, %v5606, %v4910
      %v5656 = vsel %vm5620, %v5607, %v4912
      %v5657 = vsel %vm5620, %v5608, %v4914
      %v5658 = vsel %vm5620, %v5609, %v4916
      %v5659 = vsel %vm5620, %v5610, %v4918
      %v5660 = vsel %vm5620, %v5611, %v4920
      %v5661 = vsel %vm5620, %v5612, %v4922
      %v5662 = vsel %vm5620, %v5613, %v4924
      %v5663 = vsel %vm5620, %v5614, %v4926
      %v5664 = vsel %vm5620, %v5615, %v4928
      %v5665 = vsel %vm5620, %v5616, %v4930
      %v5666 = vsel %vm5620, %v5617, %v4932
      %v5667 = vsel %vm5620, %v5618, %v4934
      %v5668 = vsel %vm5620, %v5619, %v4936
      %vm5669 = vcmask 392192
      %v5670 = vsel %vm5669, %v5621, %v4989
      %v5671 = vsel %vm5669, %v5622, %v4991
      %v5672 = vsel %vm5669, %v5623, %v4993
      %v5673 = vsel %vm5669, %v5624, %v4995
      %v5674 = vsel %vm5669, %v5625, %v4997
      %v5675 = vsel %vm5669, %v5626, %v4999
      %v5676 = vsel %vm5669, %v5627, %v5001
      %v5677 = vsel %vm5669, %v5628, %v5003
      %v5678 = vsel %vm5669, %v5629, %v5005
      %v5679 = vsel %vm5669, %v5630, %v5007
      %v5680 = vsel %vm5669, %v5631, %v5009
      %v5681 = vsel %vm5669, %v5632, %v5011
      %v5682 = vsel %vm5669, %v5633, %v5013
      %v5683 = vsel %vm5669, %v5634, %v5015
      %v5684 = vsel %vm5669, %v5635, %v5017
      %v5685 = vsel %vm5669, %v5636, %v5019
      %v5686 = vsel %vm5669, %v5637, %v5021
      %v5687 = vsel %vm5669, %v5638, %v5023
      %v5688 = vsel %vm5669, %v5639, %v5025
      %v5689 = vsel %vm5669, %v5640, %v5027
      %v5690 = vsel %vm5669, %v5641, %v5029
      %v5691 = vsel %vm5669, %v5642, %v5031
      %v5692 = vsel %vm5669, %v5643, %v5033
      %v5693 = vsel %vm5669, %v5644, %v5035
      %v5694 = vsel %vm5669, %v5645, %v5037
      %v5695 = vsel %vm5669, %v5646, %v5039
      %v5696 = vsel %vm5669, %v5647, %v5041
      %v5697 = vsel %vm5669, %v5648, %v5043
      %v5698 = vsel %vm5669, %v5649, %v5045
      %v5699 = vsel %vm5669, %v5650, %v5047
      %v5700 = vsel %vm5669, %v5651, %v5049
      %v5701 = vsel %vm5669, %v5652, %v5051
      %v5702 = vsel %vm5669, %v5653, %v5053
      %v5703 = vsel %vm5669, %v5654, %v5055
      %v5704 = vsel %vm5669, %v5655, %v5057
      %v5705 = vsel %vm5669, %v5656, %v5059
      %v5706 = vsel %vm5669, %v5657, %v5061
      %v5707 = vsel %vm5669, %v5658, %v5063
      %v5708 = vsel %vm5669, %v5659, %v5065
      %v5709 = vsel %vm5669, %v5660, %v5067
      %v5710 = vsel %vm5669, %v5661, %v5069
      %v5711 = vsel %vm5669, %v5662, %v5071
      %v5712 = vsel %vm5669, %v5663, %v5073
      %v5713 = vsel %vm5669, %v5664, %v5075
      %v5714 = vsel %vm5669, %v5665, %v5077
      %v5715 = vsel %vm5669, %v5666, %v5079
      %v5716 = vsel %vm5669, %v5667, %v5081
      %v5717 = vsel %vm5669, %v5668, %v5083
      %vm5718 = vcmask 457728
      %v5719 = vsel %vm5718, %v5670, %v5136
      %v5720 = vsel %vm5718, %v5671, %v5138
      %v5721 = vsel %vm5718, %v5672, %v5140
      %v5722 = vsel %vm5718, %v5673, %v5142
      %v5723 = vsel %vm5718, %v5674, %v5144
      %v5724 = vsel %vm5718, %v5675, %v5146
      %v5725 = vsel %vm5718, %v5676, %v5148
      %v5726 = vsel %vm5718, %v5677, %v5150
      %v5727 = vsel %vm5718, %v5678, %v5152
      %v5728 = vsel %vm5718, %v5679, %v5154
      %v5729 = vsel %vm5718, %v5680, %v5156
      %v5730 = vsel %vm5718, %v5681, %v5158
      %v5731 = vsel %vm5718, %v5682, %v5160
      %v5732 = vsel %vm5718, %v5683, %v5162
      %v5733 = vsel %vm5718, %v5684, %v5164
      %v5734 = vsel %vm5718, %v5685, %v5166
      %v5735 = vsel %vm5718, %v5686, %v5168
      %v5736 = vsel %vm5718, %v5687, %v5170
      %v5737 = vsel %vm5718, %v5688, %v5172
      %v5738 = vsel %vm5718, %v5689, %v5174
      %v5739 = vsel %vm5718, %v5690, %v5176
      %v5740 = vsel %vm5718, %v5691, %v5178
      %v5741 = vsel %vm5718, %v5692, %v5180
      %v5742 = vsel %vm5718, %v5693, %v5182
      %v5743 = vsel %vm5718, %v5694, %v5184
      %v5744 = vsel %vm5718, %v5695, %v5186
      %v5745 = vsel %vm5718, %v5696, %v5188
      %v5746 = vsel %vm5718, %v5697, %v5190
      %v5747 = vsel %vm5718, %v5698, %v5192
      %v5748 = vsel %vm5718, %v5699, %v5194
      %v5749 = vsel %vm5718, %v5700, %v5196
      %v5750 = vsel %vm5718, %v5701, %v5198
      %v5751 = vsel %vm5718, %v5702, %v5200
      %v5752 = vsel %vm5718, %v5703, %v5202
      %v5753 = vsel %vm5718, %v5704, %v5204
      %v5754 = vsel %vm5718, %v5705, %v5206
      %v5755 = vsel %vm5718, %v5706, %v5208
      %v5756 = vsel %vm5718, %v5707, %v5210
      %v5757 = vsel %vm5718, %v5708, %v5212
      %v5758 = vsel %vm5718, %v5709, %v5214
      %v5759 = vsel %vm5718, %v5710, %v5216
      %v5760 = vsel %vm5718, %v5711, %v5218
      %v5761 = vsel %vm5718, %v5712, %v5220
      %v5762 = vsel %vm5718, %v5713, %v5222
      %v5763 = vsel %vm5718, %v5714, %v5224
      %v5764 = vsel %vm5718, %v5715, %v5226
      %v5765 = vsel %vm5718, %v5716, %v5228
      %v5766 = vsel %vm5718, %v5717, %v5230
      %vm5767 = vcmask 523264
      %v5768 = vsel %vm5767, %v5719, %v5283
      %v5769 = vsel %vm5767, %v5720, %v5285
      %v5770 = vsel %vm5767, %v5721, %v5287
      %v5771 = vsel %vm5767, %v5722, %v5289
      %v5772 = vsel %vm5767, %v5723, %v5291
      %v5773 = vsel %vm5767, %v5724, %v5293
      %v5774 = vsel %vm5767, %v5725, %v5295
      %v5775 = vsel %vm5767, %v5726, %v5297
      %v5776 = vsel %vm5767, %v5727, %v5299
      %v5777 = vsel %vm5767, %v5728, %v5301
      %v5778 = vsel %vm5767, %v5729, %v5303
      %v5779 = vsel %vm5767, %v5730, %v5305
      %v5780 = vsel %vm5767, %v5731, %v5307
      %v5781 = vsel %vm5767, %v5732, %v5309
      %v5782 = vsel %vm5767, %v5733, %v5311
      %v5783 = vsel %vm5767, %v5734, %v5313
      %v5784 = vsel %vm5767, %v5735, %v5315
      %v5785 = vsel %vm5767, %v5736, %v5317
      %v5786 = vsel %vm5767, %v5737, %v5319
      %v5787 = vsel %vm5767, %v5738, %v5321
      %v5788 = vsel %vm5767, %v5739, %v5323
      %v5789 = vsel %vm5767, %v5740, %v5325
      %v5790 = vsel %vm5767, %v5741, %v5327
      %v5791 = vsel %vm5767, %v5742, %v5329
      %v5792 = vsel %vm5767, %v5743, %v5331
      %v5793 = vsel %vm5767, %v5744, %v5333
      %v5794 = vsel %vm5767, %v5745, %v5335
      %v5795 = vsel %vm5767, %v5746, %v5337
      %v5796 = vsel %vm5767, %v5747, %v5339
      %v5797 = vsel %vm5767, %v5748, %v5341
      %v5798 = vsel %vm5767, %v5749, %v5343
      %v5799 = vsel %vm5767, %v5750, %v5345
      %v5800 = vsel %vm5767, %v5751, %v5347
      %v5801 = vsel %vm5767, %v5752, %v5349
      %v5802 = vsel %vm5767, %v5753, %v5351
      %v5803 = vsel %vm5767, %v5754, %v5353
      %v5804 = vsel %vm5767, %v5755, %v5355
      %v5805 = vsel %vm5767, %v5756, %v5357
      %v5806 = vsel %vm5767, %v5757, %v5359
      %v5807 = vsel %vm5767, %v5758, %v5361
      %v5808 = vsel %vm5767, %v5759, %v5363
      %v5809 = vsel %vm5767, %v5760, %v5365
      %v5810 = vsel %vm5767, %v5761, %v5367
      %v5811 = vsel %vm5767, %v5762, %v5369
      %v5812 = vsel %vm5767, %v5763, %v5371
      %v5813 = vsel %vm5767, %v5764, %v5373
      %v5814 = vsel %vm5767, %v5765, %v5375
      %v5815 = vsel %vm5767, %v5766, %v5377
      %v5816 = vld [vmem:[%s4] sm:$0xff]
      %v5817 = vld [vmem:[%s4 + $0x8] sm:$0xff]
      %v5818 = vld [vmem:[%s4 + $0x10] sm:$0xff]
      %v5819 = vld [vmem:[%s4 + $0x18] sm:$0xff]
      %v5820 = vld [vmem:[%s4 + $0x20] sm:$0xff]
      %v5821 = vld [vmem:[%s4 + $0x28] sm:$0xff]
      %v5822 = vld [vmem:[%s4 + $0x30] sm:$0xff]
      %v5823 = vld [vmem:[%s4 + $0x38] sm:$0xff]
      %v5824 = vld [vmem:[%s4 + $0x40] sm:$0xff]
      %v5825 = vld [vmem:[%s5] sm:$0x1]
      %v5827 = vlaneseq
      %v5828 = vshrl.u32 %v5827, 7
      %v5829 = vsub.s32 0, %v5828
      %v5830 = vrot.slane %v5825, %v5829
      %vm5832 = vcmask 588800
      %v5834 = vsel %vm5832, %v5768, 0
      %v5837 = vsel %vm5832, %v5769, 0
      %v5840 = vsel %vm5832, %v5770, 0
      %v5843 = vsel %vm5832, %v5771, 0
      %v5846 = vsel %vm5832, %v5772, 0
      %v5849 = vsel %vm5832, %v5773, 0
      %v5852 = vsel %vm5832, %v5774, 0
      %v5855 = vsel %vm5832, %v5775, 0
      %v5858 = vsel %vm5832, %v5776, 0
      %v5861 = vsel %vm5832, %v5777, 0
      %v5864 = vsel %vm5832, %v5778, 0
      %v5867 = vsel %vm5832, %v5779, 0
      %v5870 = vsel %vm5832, %v5780, 0
      %v5873 = vsel %vm5832, %v5781, 0
      %v5876 = vsel %vm5832, %v5782, 0
      %v5879 = vsel %vm5832, %v5783, 0
      %v5882 = vsel %vm5832, %v5784, 0
      %v5885 = vsel %vm5832, %v5785, 0
      %v5888 = vsel %vm5832, %v5786, 0
      %v5891 = vsel %vm5832, %v5787, 0
      %v5894 = vsel %vm5832, %v5788, 0
      %v5897 = vsel %vm5832, %v5789, 0
      %v5900 = vsel %vm5832, %v5790, 0
      %v5903 = vsel %vm5832, %v5791, 0
      %v5906 = vsel %vm5832, %v5792, 0
      %v5909 = vsel %vm5832, %v5793, 0
      %v5912 = vsel %vm5832, %v5794, 0
      %v5915 = vsel %vm5832, %v5795, 0
      %v5918 = vsel %vm5832, %v5796, 0
      %v5921 = vsel %vm5832, %v5797, 0
      %v5924 = vsel %vm5832, %v5798, 0
      %v5927 = vsel %vm5832, %v5799, 0
      %v5930 = vsel %vm5832, %v5800, 0
      %v5933 = vsel %vm5832, %v5801, 0
      %v5936 = vsel %vm5832, %v5802, 0
      %v5939 = vsel %vm5832, %v5803, 0
      %v5942 = vsel %vm5832, %v5804, 0
      %v5945 = vsel %vm5832, %v5805, 0
      %v5948 = vsel %vm5832, %v5806, 0
      %v5951 = vsel %vm5832, %v5807, 0
      %v5954 = vsel %vm5832, %v5808, 0
      %v5957 = vsel %vm5832, %v5809, 0
      %v5960 = vsel %vm5832, %v5810, 0
      %v5963 = vsel %vm5832, %v5811, 0
      %v5966 = vsel %vm5832, %v5812, 0
      %v5969 = vsel %vm5832, %v5813, 0
      %v5972 = vsel %vm5832, %v5814, 0
      %v5975 = vsel %vm5832, %v5815, 0
      %5977 = vmatprep.subr.mxu0 0.0
      %v5978 = vand.u32 %v5816, 4294901760
      %5979 = vmatpush1.msra.mxu0 %v5978
      %5980 = vmatprep.subr.mxu0 0.0
      %v5981 = vand.u32 %v5817, 4294901760
      %5982 = vmatpush1.msra.mxu0 %v5981
      %5983 = vmatprep.subr.mxu0 0.0
      %v5984 = vand.u32 %v5818, 4294901760
      %5985 = vmatpush1.msra.mxu0 %v5984
      %5986 = vmatprep.subr.mxu0 0.0
      %v5987 = vand.u32 %v5819, 4294901760
      %5988 = vmatpush1.msra.mxu0 %v5987
      %5989 = vmatprep.subr.mxu0 0.0
      %v5990 = vand.u32 %v5820, 4294901760
      %5991 = vmatpush1.msra.mxu0 %v5990
      %5992 = vmatprep.subr.mxu0 0.0
      %v5993 = vand.u32 %v5821, 4294901760
      %5994 = vmatpush1.msra.mxu0 %v5993
      %5995 = vmatprep.subr.mxu0 0.0
      %v5996 = vand.u32 %v5822, 4294901760
      %5997 = vmatpush1.msra.mxu0 %v5996
      %5998 = vmatprep.subr.mxu0 0.0
      %v5999 = vand.u32 %v5823, 4294901760
      %6000 = vmatpush1.msra.mxu0 %v5999
      %6001 = vmatprep.subr.mxu0 0.0
      %v6002 = vand.u32 %v5824, 4294901760
      %6003 = vmatpush1.msra.mxu0 %v6002
      %6004 = vmatprep.subr.mxu0 0.0
      %6005 = vmatpush1.msra.mxu0 0.0
      %6006 = vmatprep.subr.mxu0 0.0
      %6007 = vmatpush1.msra.mxu0 0.0
      %6008 = vmatprep.subr.mxu0 0.0
      %6009 = vmatpush1.msra.mxu0 0.0
      %6010 = vmatprep.subr.mxu0 0.0
      %6011 = vmatpush1.msra.mxu0 0.0
      %6012 = vmatprep.subr.mxu0 0.0
      %6013 = vmatpush1.msra.mxu0 0.0
      %6014 = vmatprep.subr.mxu0 0.0
      %6015 = vmatpush1.msra.mxu0 0.0
      %6016 = vmatprep.subr.mxu0 0.0
      %6017 = vmatpush1.msra.mxu0 0.0
      %6018 = vmatprep.subr.mxu0 0.0
      %6019 = vmatpush1.msra.mxu0 0.0
      %6020 = vmatprep.subr.mxu0 0.0
      %6021 = vmatpush1.msra.mxu0 0.0
      %6022 = vmatprep.subr.mxu0 0.0
      %6023 = vmatpush1.msra.mxu0 0.0
      %6024 = vmatprep.subr.mxu0 0.0
      %6025 = vmatpush1.msra.mxu0 0.0
      %6026 = vmatprep.subr.mxu0 0.0
      %6027 = vmatpush1.msra.mxu0 0.0
      %6028 = vmatprep.subr.mxu0 0.0
      %6029 = vmatpush1.msra.mxu0 0.0
      %6030 = vmatprep.subr.mxu0 0.0
      %6031 = vmatpush1.msra.mxu0 0.0
      %6032 = vmatprep.subr.mxu0 0.0
      %6033 = vmatpush1.msra.mxu0 0.0
      %6034 = vmatprep.subr.mxu0 0.0
      %6035 = vmatpush1.msra.mxu0 0.0
      %6036 = vmatprep.subr.mxu0 0.0
      %6037 = vmatpush1.msra.mxu0 0.0
      %6038 = vmatprep.subr.mxu0 0.0
      %6039 = vmatpush1.msra.mxu0 0.0
      %6040 = vmatprep.subr.mxu0 0.0
      %6041 = vmatpush1.msra.mxu0 0.0
      %6042 = vmatprep.subr.mxu0 0.0
      %6043 = vmatpush1.msra.mxu0 0.0
      %6044 = vmatprep.subr.mxu0 0.0
      %6045 = vmatpush1.msra.mxu0 0.0
      %6046 = vmatprep.subr.mxu0 0.0
      %6047 = vmatpush1.msra.mxu0 0.0
      %6048 = vmatprep.subr.mxu0 0.0
      %6049 = vmatpush1.msra.mxu0 0.0
      %6050 = vmatprep.mubr.f32.mxu0 0.0
      %v6051 = vand.u32 %v5834, 4294901760
      %v6052 = vsub.f32 %v5834, %v6051
      %v6053 = vand.u32 %v6052, 4294901760
      %v6054 = vsub.f32 %v6052, %v6053
      %v6055 = vand.u32 %v6054, 4294901760
      %6056 = vmatmul.mubr.f32.gmra.mrb[0].mxu0 %v6055
      %v6057 = vpop.f32.mrb[0].mxu0
      %v6058 = vadd.f32 %v5830, %v6057
      %v6059 = vpop.f32.mrb[0].mxu0
      %6060 = vmatprep.mubr.f32.mxu0 0.0
      %v6061 = vand.u32 %v5837, 4294901760
      %v6062 = vsub.f32 %v5837, %v6061
      %v6063 = vand.u32 %v6062, 4294901760
      %v6064 = vsub.f32 %v6062, %v6063
      %v6065 = vand.u32 %v6064, 4294901760
      %6066 = vmatmul.mubr.f32.gmra.mrb[0].mxu0 %v6065
      %v6067 = vpop.f32.mrb[0].mxu0
      %v6068 = vadd.f32 %v5830, %v6067
      %v6069 = vpop.f32.mrb[0].mxu0
      %6070 = vmatprep.mubr.f32.mxu0 0.0
      %v6071 = vand.u32 %v5840, 4294901760
      %v6072 = vsub.f32 %v5840, %v6071
      %v6073 = vand.u32 %v6072, 4294901760
      %v6074 = vsub.f32 %v6072, %v6073
      %v6075 = vand.u32 %v6074, 4294901760
      %6076 = vmatmul.mubr.f32.gmra.mrb[0].mxu0 %v6075
      %v6077 = vpop.f32.mrb[0].mxu0
      %v6078 = vadd.f32 %v5830, %v6077
      %v6079 = vpop.f32.mrb[0].mxu0
      %6080 = vmatprep.mubr.f32.mxu0 0.0
      %v6081 = vand.u32 %v5843, 4294901760
      %v6082 = vsub.f32 %v5843, %v6081
      %v6083 = vand.u32 %v6082, 4294901760
      %v6084 = vsub.f32 %v6082, %v6083
      %v6085 = vand.u32 %v6084, 4294901760
      %6086 = vmatmul.mubr.f32.gmra.mrb[0].mxu0 %v6085
      %v6087 = vpop.f32.mrb[0].mxu0
      %v6088 = vadd.f32 %v5830, %v6087
      %v6089 = vpop.f32.mrb[0].mxu0
      %6090 = vmatprep.mubr.f32.mxu0 0.0
      %v6091 = vand.u32 %v5846, 4294901760
      %v6092 = vsub.f32 %v5846, %v6091
      %v6093 = vand.u32 %v6092, 4294901760
      %v6094 = vsub.f32 %v6092, %v6093
      %v6095 = vand.u32 %v6094, 4294901760
      %6096 = vmatmul.mubr.f32.gmra.mrb[0].mxu0 %v6095
      %v6097 = vpop.f32.mrb[0].mxu0
      %v6098 = vadd.f32 %v5830, %v6097
      %v6099 = vpop.f32.mrb[0].mxu0
      %6100 = vmatprep.mubr.f32.mxu0 0.0
      %v6101 = vand.u32 %v5849, 4294901760
      %v6102 = vsub.f32 %v5849, %v6101
      %v6103 = vand.u32 %v6102, 4294901760
      %v6104 = vsub.f32 %v6102, %v6103
      %v6105 = vand.u32 %v6104, 4294901760
      %6106 = vmatmul.mubr.f32.gmra.mrb[0].mxu0 %v6105
      %v6107 = vpop.f32.mrb[0].mxu0
      %v6108 = vadd.f32 %v5830, %v6107
      %v6109 = vpop.f32.mrb[0].mxu0
      %6110 = vmatprep.mubr.f32.mxu0 0.0
      %v6111 = vand.u32 %v5852, 4294901760
      %v6112 = vsub.f32 %v5852, %v6111
      %v6113 = vand.u32 %v6112, 4294901760
      %v6114 = vsub.f32 %v6112, %v6113
      %v6115 = vand.u32 %v6114, 4294901760
      %6116 = vmatmul.mubr.f32.gmra.mrb[0].mxu0 %v6115
      %v6117 = vpop.f32.mrb[0].mxu0
      %v6118 = vadd.f32 %v5830, %v6117
      %v6119 = vpop.f32.mrb[0].mxu0
      %6120 = vmatprep.mubr.f32.mxu0 0.0
      %v6121 = vand.u32 %v5855, 4294901760
      %v6122 = vsub.f32 %v5855, %v6121
      %v6123 = vand.u32 %v6122, 4294901760
      %v6124 = vsub.f32 %v6122, %v6123
      %v6125 = vand.u32 %v6124, 4294901760
      %6126 = vmatmul.mubr.f32.gmra.mrb[0].mxu0 %v6125
      %v6127 = vpop.f32.mrb[0].mxu0
      %v6128 = vadd.f32 %v5830, %v6127
      %v6129 = vpop.f32.mrb[0].mxu0
      %6130 = vmatprep.mubr.f32.mxu0 0.0
      %v6131 = vand.u32 %v5858, 4294901760
      %v6132 = vsub.f32 %v5858, %v6131
      %v6133 = vand.u32 %v6132, 4294901760
      %v6134 = vsub.f32 %v6132, %v6133
      %v6135 = vand.u32 %v6134, 4294901760
      %6136 = vmatmul.mubr.f32.gmra.mrb[0].mxu0 %v6135
      %v6137 = vpop.f32.mrb[0].mxu0
      %v6138 = vadd.f32 %v5830, %v6137
      %v6139 = vpop.f32.mrb[0].mxu0
      %6140 = vmatprep.mubr.f32.mxu0 0.0
      %v6141 = vand.u32 %v5861, 4294901760
      %v6142 = vsub.f32 %v5861, %v6141
      %v6143 = vand.u32 %v6142, 4294901760
      %v6144 = vsub.f32 %v6142, %v6143
      %v6145 = vand.u32 %v6144, 4294901760
      %6146 = vmatmul.mubr.f32.gmra.mrb[0].mxu0 %v6145
      %v6147 = vpop.f32.mrb[0].mxu0
      %v6148 = vadd.f32 %v5830, %v6147
      %v6149 = vpop.f32.mrb[0].mxu0
      %6150 = vmatprep.mubr.f32.mxu0 0.0
      %v6151 = vand.u32 %v5864, 4294901760
      %v6152 = vsub.f32 %v5864, %v6151
      %v6153 = vand.u32 %v6152, 4294901760
      %v6154 = vsub.f32 %v6152, %v6153
      %v6155 = vand.u32 %v6154, 4294901760
      %6156 = vmatmul.mubr.f32.gmra.mrb[0].mxu0 %v6155
      %v6157 = vpop.f32.mrb[0].mxu0
      %v6158 = vadd.f32 %v5830, %v6157
      %v6159 = vpop.f32.mrb[0].mxu0
      %6160 = vmatprep.mubr.f32.mxu0 0.0
      %v6161 = vand.u32 %v5867, 4294901760
      %v6162 = vsub.f32 %v5867, %v6161
      %v6163 = vand.u32 %v6162, 4294901760
      %v6164 = vsub.f32 %v6162, %v6163
      %v6165 = vand.u32 %v6164, 4294901760
      %6166 = vmatmul.mubr.f32.gmra.mrb[0].mxu0 %v6165
      %v6167 = vpop.f32.mrb[0].mxu0
      %v6168 = vadd.f32 %v5830, %v6167
      %v6169 = vpop.f32.mrb[0].mxu0
      %6170 = vmatprep.mubr.f32.mxu0 0.0
      %v6171 = vand.u32 %v5870, 4294901760
      %v6172 = vsub.f32 %v5870, %v6171
      %v6173 = vand.u32 %v6172, 4294901760
      %v6174 = vsub.f32 %v6172, %v6173
      %v6175 = vand.u32 %v6174, 4294901760
      %6176 = vmatmul.mubr.f32.gmra.mrb[0].mxu0 %v6175
      %v6177 = vpop.f32.mrb[0].mxu0
      %v6178 = vadd.f32 %v5830, %v6177
      %v6179 = vpop.f32.mrb[0].mxu0
      %6180 = vmatprep.mubr.f32.mxu0 0.0
      %v6181 = vand.u32 %v5873, 4294901760
      %v6182 = vsub.f32 %v5873, %v6181
      %v6183 = vand.u32 %v6182, 4294901760
      %v6184 = vsub.f32 %v6182, %v6183
      %v6185 = vand.u32 %v6184, 4294901760
      %6186 = vmatmul.mubr.f32.gmra.mrb[0].mxu0 %v6185
      %v6187 = vpop.f32.mrb[0].mxu0
      %v6188 = vadd.f32 %v5830, %v6187
      %v6189 = vpop.f32.mrb[0].mxu0
      %6190 = vmatprep.mubr.f32.mxu0 0.0
      %v6191 = vand.u32 %v5876, 4294901760
      %v6192 = vsub.f32 %v5876, %v6191
      %v6193 = vand.u32 %v6192, 4294901760
      %v6194 = vsub.f32 %v6192, %v6193
      %v6195 = vand.u32 %v6194, 4294901760
      %6196 = vmatmul.mubr.f32.gmra.mrb[0].mxu0 %v6195
      %v6197 = vpop.f32.mrb[0].mxu0
      %v6198 = vadd.f32 %v5830, %v6197
      %v6199 = vpop.f32.mrb[0].mxu0
      %6200 = vmatprep.mubr.f32.mxu0 0.0
      %v6201 = vand.u32 %v5879, 4294901760
      %v6202 = vsub.f32 %v5879, %v6201
      %v6203 = vand.u32 %v6202, 4294901760
      %v6204 = vsub.f32 %v6202, %v6203
      %v6205 = vand.u32 %v6204, 4294901760
      %6206 = vmatmul.mubr.f32.gmra.mrb[0].mxu0 %v6205
      %v6207 = vpop.f32.mrb[0].mxu0
      %v6208 = vadd.f32 %v5830, %v6207
      %v6209 = vpop.f32.mrb[0].mxu0
      %6210 = vmatprep.mubr.f32.mxu0 0.0
      %v6211 = vand.u32 %v5882, 4294901760
      %v6212 = vsub.f32 %v5882, %v6211
      %v6213 = vand.u32 %v6212, 4294901760
      %v6214 = vsub.f32 %v6212, %v6213
      %v6215 = vand.u32 %v6214, 4294901760
      %6216 = vmatmul.mubr.f32.gmra.mrb[0].mxu0 %v6215
      %v6217 = vpop.f32.mrb[0].mxu0
      %v6218 = vadd.f32 %v5830, %v6217
      %v6219 = vpop.f32.mrb[0].mxu0
      %6220 = vmatprep.mubr.f32.mxu0 0.0
      %v6221 = vand.u32 %v5885, 4294901760
      %v6222 = vsub.f32 %v5885, %v6221
      %v6223 = vand.u32 %v6222, 4294901760
      %v6224 = vsub.f32 %v6222, %v6223
      %v6225 = vand.u32 %v6224, 4294901760
      %6226 = vmatmul.mubr.f32.gmra.mrb[0].mxu0 %v6225
      %v6227 = vpop.f32.mrb[0].mxu0
      %v6228 = vadd.f32 %v5830, %v6227
      %v6229 = vpop.f32.mrb[0].mxu0
      %6230 = vmatprep.mubr.f32.mxu0 0.0
      %v6231 = vand.u32 %v5888, 4294901760
      %v6232 = vsub.f32 %v5888, %v6231
      %v6233 = vand.u32 %v6232, 4294901760
      %v6234 = vsub.f32 %v6232, %v6233
      %v6235 = vand.u32 %v6234, 4294901760
      %6236 = vmatmul.mubr.f32.gmra.mrb[0].mxu0 %v6235
      %v6237 = vpop.f32.mrb[0].mxu0
      %v6238 = vadd.f32 %v5830, %v6237
      %v6239 = vpop.f32.mrb[0].mxu0
      %6240 = vmatprep.mubr.f32.mxu0 0.0
      %v6241 = vand.u32 %v5891, 4294901760
      %v6242 = vsub.f32 %v5891, %v6241
      %v6243 = vand.u32 %v6242, 4294901760
      %v6244 = vsub.f32 %v6242, %v6243
      %v6245 = vand.u32 %v6244, 4294901760
      %6246 = vmatmul.mubr.f32.gmra.mrb[0].mxu0 %v6245
      %v6247 = vpop.f32.mrb[0].mxu0
      %v6248 = vadd.f32 %v5830, %v6247
      %v6249 = vpop.f32.mrb[0].mxu0
      %6250 = vmatprep.mubr.f32.mxu0 0.0
      %v6251 = vand.u32 %v5894, 4294901760
      %v6252 = vsub.f32 %v5894, %v6251
      %v6253 = vand.u32 %v6252, 4294901760
      %v6254 = vsub.f32 %v6252, %v6253
      %v6255 = vand.u32 %v6254, 4294901760
      %6256 = vmatmul.mubr.f32.gmra.mrb[0].mxu0 %v6255
      %v6257 = vpop.f32.mrb[0].mxu0
      %v6258 = vadd.f32 %v5830, %v6257
      %v6259 = vpop.f32.mrb[0].mxu0
      %6260 = vmatprep.mubr.f32.mxu0 0.0
      %v6261 = vand.u32 %v5897, 4294901760
      %v6262 = vsub.f32 %v5897, %v6261
      %v6263 = vand.u32 %v6262, 4294901760
      %v6264 = vsub.f32 %v6262, %v6263
      %v6265 = vand.u32 %v6264, 4294901760
      %6266 = vmatmul.mubr.f32.gmra.mrb[0].mxu0 %v6265
      %v6267 = vpop.f32.mrb[0].mxu0
      %v6268 = vadd.f32 %v5830, %v6267
      %v6269 = vpop.f32.mrb[0].mxu0
      %6270 = vmatprep.mubr.f32.mxu0 0.0
      %v6271 = vand.u32 %v5900, 4294901760
      %v6272 = vsub.f32 %v5900, %v6271
      %v6273 = vand.u32 %v6272, 4294901760
      %v6274 = vsub.f32 %v6272, %v6273
      %v6275 = vand.u32 %v6274, 4294901760
      %6276 = vmatmul.mubr.f32.gmra.mrb[0].mxu0 %v6275
      %v6277 = vpop.f32.mrb[0].mxu0
      %v6278 = vadd.f32 %v5830, %v6277
      %v6279 = vpop.f32.mrb[0].mxu0
      %6280 = vmatprep.mubr.f32.mxu0 0.0
      %v6281 = vand.u32 %v5903, 4294901760
      %v6282 = vsub.f32 %v5903, %v6281
      %v6283 = vand.u32 %v6282, 4294901760
      %v6284 = vsub.f32 %v6282, %v6283
      %v6285 = vand.u32 %v6284, 4294901760
      %6286 = vmatmul.mubr.f32.gmra.mrb[0].mxu0 %v6285
      %v6287 = vpop.f32.mrb[0].mxu0
      %v6288 = vadd.f32 %v5830, %v6287
      %v6289 = vpop.f32.mrb[0].mxu0
      %6290 = vmatprep.mubr.f32.mxu0 0.0
      %v6291 = vand.u32 %v5906, 4294901760
      %v6292 = vsub.f32 %v5906, %v6291
      %v6293 = vand.u32 %v6292, 4294901760
      %v6294 = vsub.f32 %v6292, %v6293
      %v6295 = vand.u32 %v6294, 4294901760
      %6296 = vmatmul.mubr.f32.gmra.mrb[0].mxu0 %v6295
      %v6297 = vpop.f32.mrb[0].mxu0
      %v6298 = vadd.f32 %v5830, %v6297
      %v6299 = vpop.f32.mrb[0].mxu0
      %6300 = vmatprep.mubr.f32.mxu0 0.0
      %v6301 = vand.u32 %v5909, 4294901760
      %v6302 = vsub.f32 %v5909, %v6301
      %v6303 = vand.u32 %v6302, 4294901760
      %v6304 = vsub.f32 %v6302, %v6303
      %v6305 = vand.u32 %v6304, 4294901760
      %6306 = vmatmul.mubr.f32.gmra.mrb[0].mxu0 %v6305
      %v6307 = vpop.f32.mrb[0].mxu0
      %v6308 = vadd.f32 %v5830, %v6307
      %v6309 = vpop.f32.mrb[0].mxu0
      %6310 = vmatprep.mubr.f32.mxu0 0.0
      %v6311 = vand.u32 %v5912, 4294901760
      %v6312 = vsub.f32 %v5912, %v6311
      %v6313 = vand.u32 %v6312, 4294901760
      %v6314 = vsub.f32 %v6312, %v6313
      %v6315 = vand.u32 %v6314, 4294901760
      %6316 = vmatmul.mubr.f32.gmra.mrb[0].mxu0 %v6315
      %v6317 = vpop.f32.mrb[0].mxu0
      %v6318 = vadd.f32 %v5830, %v6317
      %v6319 = vpop.f32.mrb[0].mxu0
      %6320 = vmatprep.mubr.f32.mxu0 0.0
      %v6321 = vand.u32 %v5915, 4294901760
      %v6322 = vsub.f32 %v5915, %v6321
      %v6323 = vand.u32 %v6322, 4294901760
      %v6324 = vsub.f32 %v6322, %v6323
      %v6325 = vand.u32 %v6324, 4294901760
      %6326 = vmatmul.mubr.f32.gmra.mrb[0].mxu0 %v6325
      %v6327 = vpop.f32.mrb[0].mxu0
      %v6328 = vadd.f32 %v5830, %v6327
      %v6329 = vpop.f32.mrb[0].mxu0
      %6330 = vmatprep.mubr.f32.mxu0 0.0
      %v6331 = vand.u32 %v5918, 4294901760
      %v6332 = vsub.f32 %v5918, %v6331
      %v6333 = vand.u32 %v6332, 4294901760
      %v6334 = vsub.f32 %v6332, %v6333
      %v6335 = vand.u32 %v6334, 4294901760
      %6336 = vmatmul.mubr.f32.gmra.mrb[0].mxu0 %v6335
      %v6337 = vpop.f32.mrb[0].mxu0
      %v6338 = vadd.f32 %v5830, %v6337
      %v6339 = vpop.f32.mrb[0].mxu0
      %6340 = vmatprep.mubr.f32.mxu0 0.0
      %v6341 = vand.u32 %v5921, 4294901760
      %v6342 = vsub.f32 %v5921, %v6341
      %v6343 = vand.u32 %v6342, 4294901760
      %v6344 = vsub.f32 %v6342, %v6343
      %v6345 = vand.u32 %v6344, 4294901760
      %6346 = vmatmul.mubr.f32.gmra.mrb[0].mxu0 %v6345
      %v6347 = vpop.f32.mrb[0].mxu0
      %v6348 = vadd.f32 %v5830, %v6347
      %v6349 = vpop.f32.mrb[0].mxu0
      %6350 = vmatprep.mubr.f32.mxu0 0.0
      %v6351 = vand.u32 %v5924, 4294901760
      %v6352 = vsub.f32 %v5924, %v6351
      %v6353 = vand.u32 %v6352, 4294901760
      %v6354 = vsub.f32 %v6352, %v6353
      %v6355 = vand.u32 %v6354, 4294901760
      %6356 = vmatmul.mubr.f32.gmra.mrb[0].mxu0 %v6355
      %v6357 = vpop.f32.mrb[0].mxu0
      %v6358 = vadd.f32 %v5830, %v6357
      %v6359 = vpop.f32.mrb[0].mxu0
      %6360 = vmatprep.mubr.f32.mxu0 0.0
      %v6361 = vand.u32 %v5927, 4294901760
      %v6362 = vsub.f32 %v5927, %v6361
      %v6363 = vand.u32 %v6362, 4294901760
      %v6364 = vsub.f32 %v6362, %v6363
      %v6365 = vand.u32 %v6364, 4294901760
      %6366 = vmatmul.mubr.f32.gmra.mrb[0].mxu0 %v6365
      %v6367 = vpop.f32.mrb[0].mxu0
      %v6368 = vadd.f32 %v5830, %v6367
      %v6369 = vpop.f32.mrb[0].mxu0
      %6370 = vmatprep.mubr.f32.mxu0 0.0
      %v6371 = vand.u32 %v5930, 4294901760
      %v6372 = vsub.f32 %v5930, %v6371
      %v6373 = vand.u32 %v6372, 4294901760
      %v6374 = vsub.f32 %v6372, %v6373
      %v6375 = vand.u32 %v6374, 4294901760
      %6376 = vmatmul.mubr.f32.gmra.mrb[0].mxu0 %v6375
      %v6377 = vpop.f32.mrb[0].mxu0
      %v6378 = vadd.f32 %v5830, %v6377
      %v6379 = vpop.f32.mrb[0].mxu0
      %6380 = vmatprep.mubr.f32.mxu0 0.0
      %v6381 = vand.u32 %v5933, 4294901760
      %v6382 = vsub.f32 %v5933, %v6381
      %v6383 = vand.u32 %v6382, 4294901760
      %v6384 = vsub.f32 %v6382, %v6383
      %v6385 = vand.u32 %v6384, 4294901760
      %6386 = vmatmul.mubr.f32.gmra.mrb[0].mxu0 %v6385
      %v6387 = vpop.f32.mrb[0].mxu0
      %v6388 = vadd.f32 %v5830, %v6387
      %v6389 = vpop.f32.mrb[0].mxu0
      %6390 = vmatprep.mubr.f32.mxu0 0.0
      %v6391 = vand.u32 %v5936, 4294901760
      %v6392 = vsub.f32 %v5936, %v6391
      %v6393 = vand.u32 %v6392, 4294901760
      %v6394 = vsub.f32 %v6392, %v6393
      %v6395 = vand.u32 %v6394, 4294901760
      %6396 = vmatmul.mubr.f32.gmra.mrb[0].mxu0 %v6395
      %v6397 = vpop.f32.mrb[0].mxu0
      %v6398 = vadd.f32 %v5830, %v6397
      %v6399 = vpop.f32.mrb[0].mxu0
      %6400 = vmatprep.mubr.f32.mxu0 0.0
      %v6401 = vand.u32 %v5939, 4294901760
      %v6402 = vsub.f32 %v5939, %v6401
      %v6403 = vand.u32 %v6402, 4294901760
      %v6404 = vsub.f32 %v6402, %v6403
      %v6405 = vand.u32 %v6404, 4294901760
      %6406 = vmatmul.mubr.f32.gmra.mrb[0].mxu0 %v6405
      %v6407 = vpop.f32.mrb[0].mxu0
      %v6408 = vadd.f32 %v5830, %v6407
      %v6409 = vpop.f32.mrb[0].mxu0
      %6410 = vmatprep.mubr.f32.mxu0 0.0
      %v6411 = vand.u32 %v5942, 4294901760
      %v6412 = vsub.f32 %v5942, %v6411
      %v6413 = vand.u32 %v6412, 4294901760
      %v6414 = vsub.f32 %v6412, %v6413
      %v6415 = vand.u32 %v6414, 4294901760
      %6416 = vmatmul.mubr.f32.gmra.mrb[0].mxu0 %v6415
      %v6417 = vpop.f32.mrb[0].mxu0
      %v6418 = vadd.f32 %v5830, %v6417
      %v6419 = vpop.f32.mrb[0].mxu0
      %6420 = vmatprep.mubr.f32.mxu0 0.0
      %v6421 = vand.u32 %v5945, 4294901760
      %v6422 = vsub.f32 %v5945, %v6421
      %v6423 = vand.u32 %v6422, 4294901760
      %v6424 = vsub.f32 %v6422, %v6423
      %v6425 = vand.u32 %v6424, 4294901760
      %6426 = vmatmul.mubr.f32.gmra.mrb[0].mxu0 %v6425
      %v6427 = vpop.f32.mrb[0].mxu0
      %v6428 = vadd.f32 %v5830, %v6427
      %v6429 = vpop.f32.mrb[0].mxu0
      %6430 = vmatprep.mubr.f32.mxu0 0.0
      %v6431 = vand.u32 %v5948, 4294901760
      %v6432 = vsub.f32 %v5948, %v6431
      %v6433 = vand.u32 %v6432, 4294901760
      %v6434 = vsub.f32 %v6432, %v6433
      %v6435 = vand.u32 %v6434, 4294901760
      %6436 = vmatmul.mubr.f32.gmra.mrb[0].mxu0 %v6435
      %v6437 = vpop.f32.mrb[0].mxu0
      %v6438 = vadd.f32 %v5830, %v6437
      %v6439 = vpop.f32.mrb[0].mxu0
      %6440 = vmatprep.mubr.f32.mxu0 0.0
      %v6441 = vand.u32 %v5951, 4294901760
      %v6442 = vsub.f32 %v5951, %v6441
      %v6443 = vand.u32 %v6442, 4294901760
      %v6444 = vsub.f32 %v6442, %v6443
      %v6445 = vand.u32 %v6444, 4294901760
      %6446 = vmatmul.mubr.f32.gmra.mrb[0].mxu0 %v6445
      %v6447 = vpop.f32.mrb[0].mxu0
      %v6448 = vadd.f32 %v5830, %v6447
      %v6449 = vpop.f32.mrb[0].mxu0
      %6450 = vmatprep.mubr.f32.mxu0 0.0
      %v6451 = vand.u32 %v5954, 4294901760
      %v6452 = vsub.f32 %v5954, %v6451
      %v6453 = vand.u32 %v6452, 4294901760
      %v6454 = vsub.f32 %v6452, %v6453
      %v6455 = vand.u32 %v6454, 4294901760
      %6456 = vmatmul.mubr.f32.gmra.mrb[0].mxu0 %v6455
      %v6457 = vpop.f32.mrb[0].mxu0
      %v6458 = vadd.f32 %v5830, %v6457
      %v6459 = vpop.f32.mrb[0].mxu0
      %6460 = vmatprep.mubr.f32.mxu0 0.0
      %v6461 = vand.u32 %v5957, 4294901760
      %v6462 = vsub.f32 %v5957, %v6461
      %v6463 = vand.u32 %v6462, 4294901760
      %v6464 = vsub.f32 %v6462, %v6463
      %v6465 = vand.u32 %v6464, 4294901760
      %6466 = vmatmul.mubr.f32.gmra.mrb[0].mxu0 %v6465
      %v6467 = vpop.f32.mrb[0].mxu0
      %v6468 = vadd.f32 %v5830, %v6467
      %v6469 = vpop.f32.mrb[0].mxu0
      %6470 = vmatprep.mubr.f32.mxu0 0.0
      %v6471 = vand.u32 %v5960, 4294901760
      %v6472 = vsub.f32 %v5960, %v6471
      %v6473 = vand.u32 %v6472, 4294901760
      %v6474 = vsub.f32 %v6472, %v6473
      %v6475 = vand.u32 %v6474, 4294901760
      %6476 = vmatmul.mubr.f32.gmra.mrb[0].mxu0 %v6475
      %v6477 = vpop.f32.mrb[0].mxu0
      %v6478 = vadd.f32 %v5830, %v6477
      %v6479 = vpop.f32.mrb[0].mxu0
      %6480 = vmatprep.mubr.f32.mxu0 0.0
      %v6481 = vand.u32 %v5963, 4294901760
      %v6482 = vsub.f32 %v5963, %v6481
      %v6483 = vand.u32 %v6482, 4294901760
      %v6484 = vsub.f32 %v6482, %v6483
      %v6485 = vand.u32 %v6484, 4294901760
      %6486 = vmatmul.mubr.f32.gmra.mrb[0].mxu0 %v6485
      %v6487 = vpop.f32.mrb[0].mxu0
      %v6488 = vadd.f32 %v5830, %v6487
      %v6489 = vpop.f32.mrb[0].mxu0
      %6490 = vmatprep.mubr.f32.mxu0 0.0
      %v6491 = vand.u32 %v5966, 4294901760
      %v6492 = vsub.f32 %v5966, %v6491
      %v6493 = vand.u32 %v6492, 4294901760
      %v6494 = vsub.f32 %v6492, %v6493
      %v6495 = vand.u32 %v6494, 4294901760
      %6496 = vmatmul.mubr.f32.gmra.mrb[0].mxu0 %v6495
      %v6497 = vpop.f32.mrb[0].mxu0
      %v6498 = vadd.f32 %v5830, %v6497
      %v6499 = vpop.f32.mrb[0].mxu0
      %6500 = vmatprep.mubr.f32.mxu0 0.0
      %v6501 = vand.u32 %v5969, 4294901760
      %v6502 = vsub.f32 %v5969, %v6501
      %v6503 = vand.u32 %v6502, 4294901760
      %v6504 = vsub.f32 %v6502, %v6503
      %v6505 = vand.u32 %v6504, 4294901760
      %6506 = vmatmul.mubr.f32.gmra.mrb[0].mxu0 %v6505
      %v6507 = vpop.f32.mrb[0].mxu0
      %v6508 = vadd.f32 %v5830, %v6507
      %v6509 = vpop.f32.mrb[0].mxu0
      %6510 = vmatprep.mubr.f32.mxu0 0.0
      %v6511 = vand.u32 %v5972, 4294901760
      %v6512 = vsub.f32 %v5972, %v6511
      %v6513 = vand.u32 %v6512, 4294901760
      %v6514 = vsub.f32 %v6512, %v6513
      %v6515 = vand.u32 %v6514, 4294901760
      %6516 = vmatmul.mubr.f32.gmra.mrb[0].mxu0 %v6515
      %v6517 = vpop.f32.mrb[0].mxu0
      %v6518 = vadd.f32 %v5830, %v6517
      %v6519 = vpop.f32.mrb[0].mxu0
      %6520 = vmatprep.mubr.f32.mxu0 0.0
      %v6521 = vand.u32 %v5975, 4294901760
      %v6522 = vsub.f32 %v5975, %v6521
      %v6523 = vand.u32 %v6522, 4294901760
      %v6524 = vsub.f32 %v6522, %v6523
      %v6525 = vand.u32 %v6524, 4294901760
      %6526 = vmatmul.mubr.f32.gmra.mrb[0].mxu0 %v6525
      %v6527 = vpop.f32.mrb[0].mxu0
      %v6528 = vadd.f32 %v5830, %v6527
      %v6529 = vpop.f32.mrb[0].mxu0
      %6530 = vdwg.mxu0
      %6531 = vmatprep.subr.mxu0 0.0
      %v6532 = vand.u32 %v5816, 4294901760
      %v6533 = vsub.f32 %v5816, %v6532
      %v6534 = vand.u32 %v6533, 4294901760
      %v6535 = vsub.f32 %v6533, %v6534
      %v6536 = vand.u32 %v6535, 4294901760
      %6537 = vmatpush1.msra.mxu0 %v6536
      %6538 = vmatprep.subr.mxu0 0.0
      %v6539 = vand.u32 %v5817, 4294901760
      %v6540 = vsub.f32 %v5817, %v6539
      %v6541 = vand.u32 %v6540, 4294901760
      %v6542 = vsub.f32 %v6540, %v6541
      %v6543 = vand.u32 %v6542, 4294901760
      %6544 = vmatpush1.msra.mxu0 %v6543
      %6545 = vmatprep.subr.mxu0 0.0
      %v6546 = vand.u32 %v5818, 4294901760
      %v6547 = vsub.f32 %v5818, %v6546
      %v6548 = vand.u32 %v6547, 4294901760
      %v6549 = vsub.f32 %v6547, %v6548
      %v6550 = vand.u32 %v6549, 4294901760
      %6551 = vmatpush1.msra.mxu0 %v6550
      %6552 = vmatprep.subr.mxu0 0.0
      %v6553 = vand.u32 %v5819, 4294901760
      %v6554 = vsub.f32 %v5819, %v6553
      %v6555 = vand.u32 %v6554, 4294901760
      %v6556 = vsub.f32 %v6554, %v6555
      %v6557 = vand.u32 %v6556, 4294901760
      %6558 = vmatpush1.msra.mxu0 %v6557
      %6559 = vmatprep.subr.mxu0 0.0
      %v6560 = vand.u32 %v5820, 4294901760
      %v6561 = vsub.f32 %v5820, %v6560
      %v6562 = vand.u32 %v6561, 4294901760
      %v6563 = vsub.f32 %v6561, %v6562
      %v6564 = vand.u32 %v6563, 4294901760
      %6565 = vmatpush1.msra.mxu0 %v6564
      %6566 = vmatprep.subr.mxu0 0.0
      %v6567 = vand.u32 %v5821, 4294901760
      %v6568 = vsub.f32 %v5821, %v6567
      %v6569 = vand.u32 %v6568, 4294901760
      %v6570 = vsub.f32 %v6568, %v6569
      %v6571 = vand.u32 %v6570, 4294901760
      %6572 = vmatpush1.msra.mxu0 %v6571
      %6573 = vmatprep.subr.mxu0 0.0
      %v6574 = vand.u32 %v5822, 4294901760
      %v6575 = vsub.f32 %v5822, %v6574
      %v6576 = vand.u32 %v6575, 4294901760
      %v6577 = vsub.f32 %v6575, %v6576
      %v6578 = vand.u32 %v6577, 4294901760
      %6579 = vmatpush1.msra.mxu0 %v6578
      %6580 = vmatprep.subr.mxu0 0.0
      %v6581 = vand.u32 %v5823, 4294901760
      %v6582 = vsub.f32 %v5823, %v6581
      %v6583 = vand.u32 %v6582, 4294901760
      %v6584 = vsub.f32 %v6582, %v6583
      %v6585 = vand.u32 %v6584, 4294901760
      %6586 = vmatpush1.msra.mxu0 %v6585
      %6587 = vmatprep.subr.mxu0 0.0
      %v6588 = vand.u32 %v5824, 4294901760
      %v6589 = vsub.f32 %v5824, %v6588
      %v6590 = vand.u32 %v6589, 4294901760
      %v6591 = vsub.f32 %v6589, %v6590
      %v6592 = vand.u32 %v6591, 4294901760
      %6593 = vmatpush1.msra.mxu0 %v6592
      %6594 = vmatprep.subr.mxu0 0.0
      %6595 = vmatpush1.msra.mxu0 0.0
      %6596 = vmatprep.subr.mxu0 0.0
      %6597 = vmatpush1.msra.mxu0 0.0
      %6598 = vmatprep.subr.mxu0 0.0
      %6599 = vmatpush1.msra.mxu0 0.0
      %6600 = vmatprep.subr.mxu0 0.0
      %6601 = vmatpush1.msra.mxu0 0.0
      %6602 = vmatprep.subr.mxu0 0.0
      %6603 = vmatpush1.msra.mxu0 0.0
      %6604 = vmatprep.subr.mxu0 0.0
      %6605 = vmatpush1.msra.mxu0 0.0
      %6606 = vmatprep.subr.mxu0 0.0
      %6607 = vmatpush1.msra.mxu0 0.0
      %6608 = vmatprep.subr.mxu0 0.0
      %6609 = vmatpush1.msra.mxu0 0.0
      %6610 = vmatprep.subr.mxu0 0.0
      %6611 = vmatpush1.msra.mxu0 0.0
      %6612 = vmatprep.subr.mxu0 0.0
      %6613 = vmatpush1.msra.mxu0 0.0
      %6614 = vmatprep.subr.mxu0 0.0
      %6615 = vmatpush1.msra.mxu0 0.0
      %6616 = vmatprep.subr.mxu0 0.0
      %6617 = vmatpush1.msra.mxu0 0.0
      %6618 = vmatprep.subr.mxu0 0.0
      %6619 = vmatpush1.msra.mxu0 0.0
      %6620 = vmatprep.subr.mxu0 0.0
      %6621 = vmatpush1.msra.mxu0 0.0
      %6622 = vmatprep.subr.mxu0 0.0
      %6623 = vmatpush1.msra.mxu0 0.0
      %6624 = vmatprep.subr.mxu0 0.0
      %6625 = vmatpush1.msra.mxu0 0.0
      %6626 = vmatprep.subr.mxu0 0.0
      %6627 = vmatpush1.msra.mxu0 0.0
      %6628 = vmatprep.subr.mxu0 0.0
      %6629 = vmatpush1.msra.mxu0 0.0
      %6630 = vmatprep.subr.mxu0 0.0
      %6631 = vmatpush1.msra.mxu0 0.0
      %6632 = vmatprep.subr.mxu0 0.0
      %6633 = vmatpush1.msra.mxu0 0.0
      %6634 = vmatprep.subr.mxu0 0.0
      %6635 = vmatpush1.msra.mxu0 0.0
      %6636 = vmatprep.subr.mxu0 0.0
      %6637 = vmatpush1.msra.mxu0 0.0
      %6638 = vmatprep.subr.mxu0 0.0
      %6639 = vmatpush1.msra.mxu0 0.0
      %6640 = vmatprep.mubr.f32.mxu0 0.0
      %v6641 = vand.u32 %v5834, 4294901760
      %6642 = vmatmul.mubr.f32.gmra.mrb[0].mxu0 %v6641
      %v6643 = vpop.f32.mrb[0].mxu0
      %v6644 = vadd.f32 %v6058, %v6643
      %v6645 = vpop.f32.mrb[0].mxu0
      %6646 = vmatprep.mubr.f32.mxu0 0.0
      %v6647 = vand.u32 %v5837, 4294901760
      %6648 = vmatmul.mubr.f32.gmra.mrb[0].mxu0 %v6647
      %v6649 = vpop.f32.mrb[0].mxu0
      %v6650 = vadd.f32 %v6068, %v6649
      %v6651 = vpop.f32.mrb[0].mxu0
      %6652 = vmatprep.mubr.f32.mxu0 0.0
      %v6653 = vand.u32 %v5840, 4294901760
      %6654 = vmatmul.mubr.f32.gmra.mrb[0].mxu0 %v6653
      %v6655 = vpop.f32.mrb[0].mxu0
      %v6656 = vadd.f32 %v6078, %v6655
      %v6657 = vpop.f32.mrb[0].mxu0
      %6658 = vmatprep.mubr.f32.mxu0 0.0
      %v6659 = vand.u32 %v5843, 4294901760
      %6660 = vmatmul.mubr.f32.gmra.mrb[0].mxu0 %v6659
      %v6661 = vpop.f32.mrb[0].mxu0
      %v6662 = vadd.f32 %v6088, %v6661
      %v6663 = vpop.f32.mrb[0].mxu0
      %6664 = vmatprep.mubr.f32.mxu0 0.0
      %v6665 = vand.u32 %v5846, 4294901760
      %6666 = vmatmul.mubr.f32.gmra.mrb[0].mxu0 %v6665
      %v6667 = vpop.f32.mrb[0].mxu0
      %v6668 = vadd.f32 %v6098, %v6667
      %v6669 = vpop.f32.mrb[0].mxu0
      %6670 = vmatprep.mubr.f32.mxu0 0.0
      %v6671 = vand.u32 %v5849, 4294901760
      %6672 = vmatmul.mubr.f32.gmra.mrb[0].mxu0 %v6671
      %v6673 = vpop.f32.mrb[0].mxu0
      %v6674 = vadd.f32 %v6108, %v6673
      %v6675 = vpop.f32.mrb[0].mxu0
      %6676 = vmatprep.mubr.f32.mxu0 0.0
      %v6677 = vand.u32 %v5852, 4294901760
      %6678 = vmatmul.mubr.f32.gmra.mrb[0].mxu0 %v6677
      %v6679 = vpop.f32.mrb[0].mxu0
      %v6680 = vadd.f32 %v6118, %v6679
      %v6681 = vpop.f32.mrb[0].mxu0
      %6682 = vmatprep.mubr.f32.mxu0 0.0
      %v6683 = vand.u32 %v5855, 4294901760
      %6684 = vmatmul.mubr.f32.gmra.mrb[0].mxu0 %v6683
      %v6685 = vpop.f32.mrb[0].mxu0
      %v6686 = vadd.f32 %v6128, %v6685
      %v6687 = vpop.f32.mrb[0].mxu0
      %6688 = vmatprep.mubr.f32.mxu0 0.0
      %v6689 = vand.u32 %v5858, 4294901760
      %6690 = vmatmul.mubr.f32.gmra.mrb[0].mxu0 %v6689
      %v6691 = vpop.f32.mrb[0].mxu0
      %v6692 = vadd.f32 %v6138, %v6691
      %v6693 = vpop.f32.mrb[0].mxu0
      %6694 = vmatprep.mubr.f32.mxu0 0.0
      %v6695 = vand.u32 %v5861, 4294901760
      %6696 = vmatmul.mubr.f32.gmra.mrb[0].mxu0 %v6695
      %v6697 = vpop.f32.mrb[0].mxu0
      %v6698 = vadd.f32 %v6148, %v6697
      %v6699 = vpop.f32.mrb[0].mxu0
      %6700 = vmatprep.mubr.f32.mxu0 0.0
      %v6701 = vand.u32 %v5864, 4294901760
      %6702 = vmatmul.mubr.f32.gmra.mrb[0].mxu0 %v6701
      %v6703 = vpop.f32.mrb[0].mxu0
      %v6704 = vadd.f32 %v6158, %v6703
      %v6705 = vpop.f32.mrb[0].mxu0
      %6706 = vmatprep.mubr.f32.mxu0 0.0
      %v6707 = vand.u32 %v5867, 4294901760
      %6708 = vmatmul.mubr.f32.gmra.mrb[0].mxu0 %v6707
      %v6709 = vpop.f32.mrb[0].mxu0
      %v6710 = vadd.f32 %v6168, %v6709
      %v6711 = vpop.f32.mrb[0].mxu0
      %6712 = vmatprep.mubr.f32.mxu0 0.0
      %v6713 = vand.u32 %v5870, 4294901760
      %6714 = vmatmul.mubr.f32.gmra.mrb[0].mxu0 %v6713
      %v6715 = vpop.f32.mrb[0].mxu0
      %v6716 = vadd.f32 %v6178, %v6715
      %v6717 = vpop.f32.mrb[0].mxu0
      %6718 = vmatprep.mubr.f32.mxu0 0.0
      %v6719 = vand.u32 %v5873, 4294901760
      %6720 = vmatmul.mubr.f32.gmra.mrb[0].mxu0 %v6719
      %v6721 = vpop.f32.mrb[0].mxu0
      %v6722 = vadd.f32 %v6188, %v6721
      %v6723 = vpop.f32.mrb[0].mxu0
      %6724 = vmatprep.mubr.f32.mxu0 0.0
      %v6725 = vand.u32 %v5876, 4294901760
      %6726 = vmatmul.mubr.f32.gmra.mrb[0].mxu0 %v6725
      %v6727 = vpop.f32.mrb[0].mxu0
      %v6728 = vadd.f32 %v6198, %v6727
      %v6729 = vpop.f32.mrb[0].mxu0
      %6730 = vmatprep.mubr.f32.mxu0 0.0
      %v6731 = vand.u32 %v5879, 4294901760
      %6732 = vmatmul.mubr.f32.gmra.mrb[0].mxu0 %v6731
      %v6733 = vpop.f32.mrb[0].mxu0
      %v6734 = vadd.f32 %v6208, %v6733
      %v6735 = vpop.f32.mrb[0].mxu0
      %6736 = vmatprep.mubr.f32.mxu0 0.0
      %v6737 = vand.u32 %v5882, 4294901760
      %6738 = vmatmul.mubr.f32.gmra.mrb[0].mxu0 %v6737
      %v6739 = vpop.f32.mrb[0].mxu0
      %v6740 = vadd.f32 %v6218, %v6739
      %v6741 = vpop.f32.mrb[0].mxu0
      %6742 = vmatprep.mubr.f32.mxu0 0.0
      %v6743 = vand.u32 %v5885, 4294901760
      %6744 = vmatmul.mubr.f32.gmra.mrb[0].mxu0 %v6743
      %v6745 = vpop.f32.mrb[0].mxu0
      %v6746 = vadd.f32 %v6228, %v6745
      %v6747 = vpop.f32.mrb[0].mxu0
      %6748 = vmatprep.mubr.f32.mxu0 0.0
      %v6749 = vand.u32 %v5888, 4294901760
      %6750 = vmatmul.mubr.f32.gmra.mrb[0].mxu0 %v6749
      %v6751 = vpop.f32.mrb[0].mxu0
      %v6752 = vadd.f32 %v6238, %v6751
      %v6753 = vpop.f32.mrb[0].mxu0
      %6754 = vmatprep.mubr.f32.mxu0 0.0
      %v6755 = vand.u32 %v5891, 4294901760
      %6756 = vmatmul.mubr.f32.gmra.mrb[0].mxu0 %v6755
      %v6757 = vpop.f32.mrb[0].mxu0
      %v6758 = vadd.f32 %v6248, %v6757
      %v6759 = vpop.f32.mrb[0].mxu0
      %6760 = vmatprep.mubr.f32.mxu0 0.0
      %v6761 = vand.u32 %v5894, 4294901760
      %6762 = vmatmul.mubr.f32.gmra.mrb[0].mxu0 %v6761
      %v6763 = vpop.f32.mrb[0].mxu0
      %v6764 = vadd.f32 %v6258, %v6763
      %v6765 = vpop.f32.mrb[0].mxu0
      %6766 = vmatprep.mubr.f32.mxu0 0.0
      %v6767 = vand.u32 %v5897, 4294901760
      %6768 = vmatmul.mubr.f32.gmra.mrb[0].mxu0 %v6767
      %v6769 = vpop.f32.mrb[0].mxu0
      %v6770 = vadd.f32 %v6268, %v6769
      %v6771 = vpop.f32.mrb[0].mxu0
      %6772 = vmatprep.mubr.f32.mxu0 0.0
      %v6773 = vand.u32 %v5900, 4294901760
      %6774 = vmatmul.mubr.f32.gmra.mrb[0].mxu0 %v6773
      %v6775 = vpop.f32.mrb[0].mxu0
      %v6776 = vadd.f32 %v6278, %v6775
      %v6777 = vpop.f32.mrb[0].mxu0
      %6778 = vmatprep.mubr.f32.mxu0 0.0
      %v6779 = vand.u32 %v5903, 4294901760
      %6780 = vmatmul.mubr.f32.gmra.mrb[0].mxu0 %v6779
      %v6781 = vpop.f32.mrb[0].mxu0
      %v6782 = vadd.f32 %v6288, %v6781
      %v6783 = vpop.f32.mrb[0].mxu0
      %6784 = vmatprep.mubr.f32.mxu0 0.0
      %v6785 = vand.u32 %v5906, 4294901760
      %6786 = vmatmul.mubr.f32.gmra.mrb[0].mxu0 %v6785
      %v6787 = vpop.f32.mrb[0].mxu0
      %v6788 = vadd.f32 %v6298, %v6787
      %v6789 = vpop.f32.mrb[0].mxu0
      %6790 = vmatprep.mubr.f32.mxu0 0.0
      %v6791 = vand.u32 %v5909, 4294901760
      %6792 = vmatmul.mubr.f32.gmra.mrb[0].mxu0 %v6791
      %v6793 = vpop.f32.mrb[0].mxu0
      %v6794 = vadd.f32 %v6308, %v6793
      %v6795 = vpop.f32.mrb[0].mxu0
      %6796 = vmatprep.mubr.f32.mxu0 0.0
      %v6797 = vand.u32 %v5912, 4294901760
      %6798 = vmatmul.mubr.f32.gmra.mrb[0].mxu0 %v6797
      %v6799 = vpop.f32.mrb[0].mxu0
      %v6800 = vadd.f32 %v6318, %v6799
      %v6801 = vpop.f32.mrb[0].mxu0
      %6802 = vmatprep.mubr.f32.mxu0 0.0
      %v6803 = vand.u32 %v5915, 4294901760
      %6804 = vmatmul.mubr.f32.gmra.mrb[0].mxu0 %v6803
      %v6805 = vpop.f32.mrb[0].mxu0
      %v6806 = vadd.f32 %v6328, %v6805
      %v6807 = vpop.f32.mrb[0].mxu0
      %6808 = vmatprep.mubr.f32.mxu0 0.0
      %v6809 = vand.u32 %v5918, 4294901760
      %6810 = vmatmul.mubr.f32.gmra.mrb[0].mxu0 %v6809
      %v6811 = vpop.f32.mrb[0].mxu0
      %v6812 = vadd.f32 %v6338, %v6811
      %v6813 = vpop.f32.mrb[0].mxu0
      %6814 = vmatprep.mubr.f32.mxu0 0.0
      %v6815 = vand.u32 %v5921, 4294901760
      %6816 = vmatmul.mubr.f32.gmra.mrb[0].mxu0 %v6815
      %v6817 = vpop.f32.mrb[0].mxu0
      %v6818 = vadd.f32 %v6348, %v6817
      %v6819 = vpop.f32.mrb[0].mxu0
      %6820 = vmatprep.mubr.f32.mxu0 0.0
      %v6821 = vand.u32 %v5924, 4294901760
      %6822 = vmatmul.mubr.f32.gmra.mrb[0].mxu0 %v6821
      %v6823 = vpop.f32.mrb[0].mxu0
      %v6824 = vadd.f32 %v6358, %v6823
      %v6825 = vpop.f32.mrb[0].mxu0
      %6826 = vmatprep.mubr.f32.mxu0 0.0
      %v6827 = vand.u32 %v5927, 4294901760
      %6828 = vmatmul.mubr.f32.gmra.mrb[0].mxu0 %v6827
      %v6829 = vpop.f32.mrb[0].mxu0
      %v6830 = vadd.f32 %v6368, %v6829
      %v6831 = vpop.f32.mrb[0].mxu0
      %6832 = vmatprep.mubr.f32.mxu0 0.0
      %v6833 = vand.u32 %v5930, 4294901760
      %6834 = vmatmul.mubr.f32.gmra.mrb[0].mxu0 %v6833
      %v6835 = vpop.f32.mrb[0].mxu0
      %v6836 = vadd.f32 %v6378, %v6835
      %v6837 = vpop.f32.mrb[0].mxu0
      %6838 = vmatprep.mubr.f32.mxu0 0.0
      %v6839 = vand.u32 %v5933, 4294901760
      %6840 = vmatmul.mubr.f32.gmra.mrb[0].mxu0 %v6839
      %v6841 = vpop.f32.mrb[0].mxu0
      %v6842 = vadd.f32 %v6388, %v6841
      %v6843 = vpop.f32.mrb[0].mxu0
      %6844 = vmatprep.mubr.f32.mxu0 0.0
      %v6845 = vand.u32 %v5936, 4294901760
      %6846 = vmatmul.mubr.f32.gmra.mrb[0].mxu0 %v6845
      %v6847 = vpop.f32.mrb[0].mxu0
      %v6848 = vadd.f32 %v6398, %v6847
      %v6849 = vpop.f32.mrb[0].mxu0
      %6850 = vmatprep.mubr.f32.mxu0 0.0
      %v6851 = vand.u32 %v5939, 4294901760
      %6852 = vmatmul.mubr.f32.gmra.mrb[0].mxu0 %v6851
      %v6853 = vpop.f32.mrb[0].mxu0
      %v6854 = vadd.f32 %v6408, %v6853
      %v6855 = vpop.f32.mrb[0].mxu0
      %6856 = vmatprep.mubr.f32.mxu0 0.0
      %v6857 = vand.u32 %v5942, 4294901760
      %6858 = vmatmul.mubr.f32.gmra.mrb[0].mxu0 %v6857
      %v6859 = vpop.f32.mrb[0].mxu0
      %v6860 = vadd.f32 %v6418, %v6859
      %v6861 = vpop.f32.mrb[0].mxu0
      %6862 = vmatprep.mubr.f32.mxu0 0.0
      %v6863 = vand.u32 %v5945, 4294901760
      %6864 = vmatmul.mubr.f32.gmra.mrb[0].mxu0 %v6863
      %v6865 = vpop.f32.mrb[0].mxu0
      %v6866 = vadd.f32 %v6428, %v6865
      %v6867 = vpop.f32.mrb[0].mxu0
      %6868 = vmatprep.mubr.f32.mxu0 0.0
      %v6869 = vand.u32 %v5948, 4294901760
      %6870 = vmatmul.mubr.f32.gmra.mrb[0].mxu0 %v6869
      %v6871 = vpop.f32.mrb[0].mxu0
      %v6872 = vadd.f32 %v6438, %v6871
      %v6873 = vpop.f32.mrb[0].mxu0
      %6874 = vmatprep.mubr.f32.mxu0 0.0
      %v6875 = vand.u32 %v5951, 4294901760
      %6876 = vmatmul.mubr.f32.gmra.mrb[0].mxu0 %v6875
      %v6877 = vpop.f32.mrb[0].mxu0
      %v6878 = vadd.f32 %v6448, %v6877
      %v6879 = vpop.f32.mrb[0].mxu0
      %6880 = vmatprep.mubr.f32.mxu0 0.0
      %v6881 = vand.u32 %v5954, 4294901760
      %6882 = vmatmul.mubr.f32.gmra.mrb[0].mxu0 %v6881
      %v6883 = vpop.f32.mrb[0].mxu0
      %v6884 = vadd.f32 %v6458, %v6883
      %v6885 = vpop.f32.mrb[0].mxu0
      %6886 = vmatprep.mubr.f32.mxu0 0.0
      %v6887 = vand.u32 %v5957, 4294901760
      %6888 = vmatmul.mubr.f32.gmra.mrb[0].mxu0 %v6887
      %v6889 = vpop.f32.mrb[0].mxu0
      %v6890 = vadd.f32 %v6468, %v6889
      %v6891 = vpop.f32.mrb[0].mxu0
      %6892 = vmatprep.mubr.f32.mxu0 0.0
      %v6893 = vand.u32 %v5960, 4294901760
      %6894 = vmatmul.mubr.f32.gmra.mrb[0].mxu0 %v6893
      %v6895 = vpop.f32.mrb[0].mxu0
      %v6896 = vadd.f32 %v6478, %v6895
      %v6897 = vpop.f32.mrb[0].mxu0
      %6898 = vmatprep.mubr.f32.mxu0 0.0
      %v6899 = vand.u32 %v5963, 4294901760
      %6900 = vmatmul.mubr.f32.gmra.mrb[0].mxu0 %v6899
      %v6901 = vpop.f32.mrb[0].mxu0
      %v6902 = vadd.f32 %v6488, %v6901
      %v6903 = vpop.f32.mrb[0].mxu0
      %6904 = vmatprep.mubr.f32.mxu0 0.0
      %v6905 = vand.u32 %v5966, 4294901760
      %6906 = vmatmul.mubr.f32.gmra.mrb[0].mxu0 %v6905
      %v6907 = vpop.f32.mrb[0].mxu0
      %v6908 = vadd.f32 %v6498, %v6907
      %v6909 = vpop.f32.mrb[0].mxu0
      %6910 = vmatprep.mubr.f32.mxu0 0.0
      %v6911 = vand.u32 %v5969, 4294901760
      %6912 = vmatmul.mubr.f32.gmra.mrb[0].mxu0 %v6911
      %v6913 = vpop.f32.mrb[0].mxu0
      %v6914 = vadd.f32 %v6508, %v6913
      %v6915 = vpop.f32.mrb[0].mxu0
      %6916 = vmatprep.mubr.f32.mxu0 0.0
      %v6917 = vand.u32 %v5972, 4294901760
      %6918 = vmatmul.mubr.f32.gmra.mrb[0].mxu0 %v6917
      %v6919 = vpop.f32.mrb[0].mxu0
      %v6920 = vadd.f32 %v6518, %v6919
      %v6921 = vpop.f32.mrb[0].mxu0
      %6922 = vmatprep.mubr.f32.mxu0 0.0
      %v6923 = vand.u32 %v5975, 4294901760
      %6924 = vmatmul.mubr.f32.gmra.mrb[0].mxu0 %v6923
      %v6925 = vpop.f32.mrb[0].mxu0
      %v6926 = vadd.f32 %v6528, %v6925
      %v6927 = vpop.f32.mrb[0].mxu0
      %6928 = vdwg.mxu0
      %6929 = vmatprep.subr.mxu0 0.0
      %v6930 = vand.u32 %v5816, 4294901760
      %v6931 = vsub.f32 %v5816, %v6930
      %6932 = vmatpush1.msra.mxu0 %v6931
      %6933 = vmatprep.subr.mxu0 0.0
      %v6934 = vand.u32 %v5817, 4294901760
      %v6935 = vsub.f32 %v5817, %v6934
      %6936 = vmatpush1.msra.mxu0 %v6935
      %6937 = vmatprep.subr.mxu0 0.0
      %v6938 = vand.u32 %v5818, 4294901760
      %v6939 = vsub.f32 %v5818, %v6938
      %6940 = vmatpush1.msra.mxu0 %v6939
      %6941 = vmatprep.subr.mxu0 0.0
      %v6942 = vand.u32 %v5819, 4294901760
      %v6943 = vsub.f32 %v5819, %v6942
      %6944 = vmatpush1.msra.mxu0 %v6943
      %6945 = vmatprep.subr.mxu0 0.0
      %v6946 = vand.u32 %v5820, 4294901760
      %v6947 = vsub.f32 %v5820, %v6946
      %6948 = vmatpush1.msra.mxu0 %v6947
      %6949 = vmatprep.subr.mxu0 0.0
      %v6950 = vand.u32 %v5821, 4294901760
      %v6951 = vsub.f32 %v5821, %v6950
      %6952 = vmatpush1.msra.mxu0 %v6951
      %6953 = vmatprep.subr.mxu0 0.0
      %v6954 = vand.u32 %v5822, 4294901760
      %v6955 = vsub.f32 %v5822, %v6954
      %6956 = vmatpush1.msra.mxu0 %v6955
      %6957 = vmatprep.subr.mxu0 0.0
      %v6958 = vand.u32 %v5823, 4294901760
      %v6959 = vsub.f32 %v5823, %v6958
      %6960 = vmatpush1.msra.mxu0 %v6959
      %6961 = vmatprep.subr.mxu0 0.0
      %v6962 = vand.u32 %v5824, 4294901760
      %v6963 = vsub.f32 %v5824, %v6962
      %6964 = vmatpush1.msra.mxu0 %v6963
      %6965 = vmatprep.subr.mxu0 0.0
      %6966 = vmatpush1.msra.mxu0 0.0
      %6967 = vmatprep.subr.mxu0 0.0
      %6968 = vmatpush1.msra.mxu0 0.0
      %6969 = vmatprep.subr.mxu0 0.0
      %6970 = vmatpush1.msra.mxu0 0.0
      %6971 = vmatprep.subr.mxu0 0.0
      %6972 = vmatpush1.msra.mxu0 0.0
      %6973 = vmatprep.subr.mxu0 0.0
      %6974 = vmatpush1.msra.mxu0 0.0
      %6975 = vmatprep.subr.mxu0 0.0
      %6976 = vmatpush1.msra.mxu0 0.0
      %6977 = vmatprep.subr.mxu0 0.0
      %6978 = vmatpush1.msra.mxu0 0.0
      %6979 = vmatprep.subr.mxu0 0.0
      %6980 = vmatpush1.msra.mxu0 0.0
      %6981 = vmatprep.subr.mxu0 0.0
      %6982 = vmatpush1.msra.mxu0 0.0
      %6983 = vmatprep.subr.mxu0 0.0
      %6984 = vmatpush1.msra.mxu0 0.0
      %6985 = vmatprep.subr.mxu0 0.0
      %6986 = vmatpush1.msra.mxu0 0.0
      %6987 = vmatprep.subr.mxu0 0.0
      %6988 = vmatpush1.msra.mxu0 0.0
      %6989 = vmatprep.subr.mxu0 0.0
      %6990 = vmatpush1.msra.mxu0 0.0
      %6991 = vmatprep.subr.mxu0 0.0
      %6992 = vmatpush1.msra.mxu0 0.0
      %6993 = vmatprep.subr.mxu0 0.0
      %6994 = vmatpush1.msra.mxu0 0.0
      %6995 = vmatprep.subr.mxu0 0.0
      %6996 = vmatpush1.msra.mxu0 0.0
      %6997 = vmatprep.subr.mxu0 0.0
      %6998 = vmatpush1.msra.mxu0 0.0
      %6999 = vmatprep.subr.mxu0 0.0
      %7000 = vmatpush1.msra.mxu0 0.0
      %7001 = vmatprep.subr.mxu0 0.0
      %7002 = vmatpush1.msra.mxu0 0.0
      %7003 = vmatprep.subr.mxu0 0.0
      %7004 = vmatpush1.msra.mxu0 0.0
      %7005 = vmatprep.subr.mxu0 0.0
      %7006 = vmatpush1.msra.mxu0 0.0
      %7007 = vmatprep.subr.mxu0 0.0
      %7008 = vmatpush1.msra.mxu0 0.0
      %7009 = vmatprep.subr.mxu0 0.0
      %7010 = vmatpush1.msra.mxu0 0.0
      %7011 = vmatprep.mubr.f32.mxu0 0.0
      %v7012 = vand.u32 %v5834, 4294901760
      %v7013 = vsub.f32 %v5834, %v7012
      %7014 = vmatmul.mubr.f32.gmra.mrb[0].mxu0 %v7013
      %v7015 = vpop.f32.mrb[0].mxu0
      %v7016 = vadd.f32 %v6644, %v7015
      %v7017 = vpop.f32.mrb[0].mxu0
      %7018 = vmatprep.mubr.f32.mxu0 0.0
      %v7019 = vand.u32 %v5837, 4294901760
      %v7020 = vsub.f32 %v5837, %v7019
      %7021 = vmatmul.mubr.f32.gmra.mrb[0].mxu0 %v7020
      %v7022 = vpop.f32.mrb[0].mxu0
      %v7023 = vadd.f32 %v6650, %v7022
      %v7024 = vpop.f32.mrb[0].mxu0
      %7025 = vmatprep.mubr.f32.mxu0 0.0
      %v7026 = vand.u32 %v5840, 4294901760
      %v7027 = vsub.f32 %v5840, %v7026
      %7028 = vmatmul.mubr.f32.gmra.mrb[0].mxu0 %v7027
      %v7029 = vpop.f32.mrb[0].mxu0
      %v7030 = vadd.f32 %v6656, %v7029
      %v7031 = vpop.f32.mrb[0].mxu0
      %7032 = vmatprep.mubr.f32.mxu0 0.0
      %v7033 = vand.u32 %v5843, 4294901760
      %v7034 = vsub.f32 %v5843, %v7033
      %7035 = vmatmul.mubr.f32.gmra.mrb[0].mxu0 %v7034
      %v7036 = vpop.f32.mrb[0].mxu0
      %v7037 = vadd.f32 %v6662, %v7036
      %v7038 = vpop.f32.mrb[0].mxu0
      %7039 = vmatprep.mubr.f32.mxu0 0.0
      %v7040 = vand.u32 %v5846, 4294901760
      %v7041 = vsub.f32 %v5846, %v7040
      %7042 = vmatmul.mubr.f32.gmra.mrb[0].mxu0 %v7041
      %v7043 = vpop.f32.mrb[0].mxu0
      %v7044 = vadd.f32 %v6668, %v7043
      %v7045 = vpop.f32.mrb[0].mxu0
      %7046 = vmatprep.mubr.f32.mxu0 0.0
      %v7047 = vand.u32 %v5849, 4294901760
      %v7048 = vsub.f32 %v5849, %v7047
      %7049 = vmatmul.mubr.f32.gmra.mrb[0].mxu0 %v7048
      %v7050 = vpop.f32.mrb[0].mxu0
      %v7051 = vadd.f32 %v6674, %v7050
      %v7052 = vpop.f32.mrb[0].mxu0
      %7053 = vmatprep.mubr.f32.mxu0 0.0
      %v7054 = vand.u32 %v5852, 4294901760
      %v7055 = vsub.f32 %v5852, %v7054
      %7056 = vmatmul.mubr.f32.gmra.mrb[0].mxu0 %v7055
      %v7057 = vpop.f32.mrb[0].mxu0
      %v7058 = vadd.f32 %v6680, %v7057
      %v7059 = vpop.f32.mrb[0].mxu0
      %7060 = vmatprep.mubr.f32.mxu0 0.0
      %v7061 = vand.u32 %v5855, 4294901760
      %v7062 = vsub.f32 %v5855, %v7061
      %7063 = vmatmul.mubr.f32.gmra.mrb[0].mxu0 %v7062
      %v7064 = vpop.f32.mrb[0].mxu0
      %v7065 = vadd.f32 %v6686, %v7064
      %v7066 = vpop.f32.mrb[0].mxu0
      %7067 = vmatprep.mubr.f32.mxu0 0.0
      %v7068 = vand.u32 %v5858, 4294901760
      %v7069 = vsub.f32 %v5858, %v7068
      %7070 = vmatmul.mubr.f32.gmra.mrb[0].mxu0 %v7069
      %v7071 = vpop.f32.mrb[0].mxu0
      %v7072 = vadd.f32 %v6692, %v7071
      %v7073 = vpop.f32.mrb[0].mxu0
      %7074 = vmatprep.mubr.f32.mxu0 0.0
      %v7075 = vand.u32 %v5861, 4294901760
      %v7076 = vsub.f32 %v5861, %v7075
      %7077 = vmatmul.mubr.f32.gmra.mrb[0].mxu0 %v7076
      %v7078 = vpop.f32.mrb[0].mxu0
      %v7079 = vadd.f32 %v6698, %v7078
      %v7080 = vpop.f32.mrb[0].mxu0
      %7081 = vmatprep.mubr.f32.mxu0 0.0
      %v7082 = vand.u32 %v5864, 4294901760
      %v7083 = vsub.f32 %v5864, %v7082
      %7084 = vmatmul.mubr.f32.gmra.mrb[0].mxu0 %v7083
      %v7085 = vpop.f32.mrb[0].mxu0
      %v7086 = vadd.f32 %v6704, %v7085
      %v7087 = vpop.f32.mrb[0].mxu0
      %7088 = vmatprep.mubr.f32.mxu0 0.0
      %v7089 = vand.u32 %v5867, 4294901760
      %v7090 = vsub.f32 %v5867, %v7089
      %7091 = vmatmul.mubr.f32.gmra.mrb[0].mxu0 %v7090
      %v7092 = vpop.f32.mrb[0].mxu0
      %v7093 = vadd.f32 %v6710, %v7092
      %v7094 = vpop.f32.mrb[0].mxu0
      %7095 = vmatprep.mubr.f32.mxu0 0.0
      %v7096 = vand.u32 %v5870, 4294901760
      %v7097 = vsub.f32 %v5870, %v7096
      %7098 = vmatmul.mubr.f32.gmra.mrb[0].mxu0 %v7097
      %v7099 = vpop.f32.mrb[0].mxu0
      %v7100 = vadd.f32 %v6716, %v7099
      %v7101 = vpop.f32.mrb[0].mxu0
      %7102 = vmatprep.mubr.f32.mxu0 0.0
      %v7103 = vand.u32 %v5873, 4294901760
      %v7104 = vsub.f32 %v5873, %v7103
      %7105 = vmatmul.mubr.f32.gmra.mrb[0].mxu0 %v7104
      %v7106 = vpop.f32.mrb[0].mxu0
      %v7107 = vadd.f32 %v6722, %v7106
      %v7108 = vpop.f32.mrb[0].mxu0
      %7109 = vmatprep.mubr.f32.mxu0 0.0
      %v7110 = vand.u32 %v5876, 4294901760
      %v7111 = vsub.f32 %v5876, %v7110
      %7112 = vmatmul.mubr.f32.gmra.mrb[0].mxu0 %v7111
      %v7113 = vpop.f32.mrb[0].mxu0
      %v7114 = vadd.f32 %v6728, %v7113
      %v7115 = vpop.f32.mrb[0].mxu0
      %7116 = vmatprep.mubr.f32.mxu0 0.0
      %v7117 = vand.u32 %v5879, 4294901760
      %v7118 = vsub.f32 %v5879, %v7117
      %7119 = vmatmul.mubr.f32.gmra.mrb[0].mxu0 %v7118
      %v7120 = vpop.f32.mrb[0].mxu0
      %v7121 = vadd.f32 %v6734, %v7120
      %v7122 = vpop.f32.mrb[0].mxu0
      %7123 = vmatprep.mubr.f32.mxu0 0.0
      %v7124 = vand.u32 %v5882, 4294901760
      %v7125 = vsub.f32 %v5882, %v7124
      %7126 = vmatmul.mubr.f32.gmra.mrb[0].mxu0 %v7125
      %v7127 = vpop.f32.mrb[0].mxu0
      %v7128 = vadd.f32 %v6740, %v7127
      %v7129 = vpop.f32.mrb[0].mxu0
      %7130 = vmatprep.mubr.f32.mxu0 0.0
      %v7131 = vand.u32 %v5885, 4294901760
      %v7132 = vsub.f32 %v5885, %v7131
      %7133 = vmatmul.mubr.f32.gmra.mrb[0].mxu0 %v7132
      %v7134 = vpop.f32.mrb[0].mxu0
      %v7135 = vadd.f32 %v6746, %v7134
      %v7136 = vpop.f32.mrb[0].mxu0
      %7137 = vmatprep.mubr.f32.mxu0 0.0
      %v7138 = vand.u32 %v5888, 4294901760
      %v7139 = vsub.f32 %v5888, %v7138
      %7140 = vmatmul.mubr.f32.gmra.mrb[0].mxu0 %v7139
      %v7141 = vpop.f32.mrb[0].mxu0
      %v7142 = vadd.f32 %v6752, %v7141
      %v7143 = vpop.f32.mrb[0].mxu0
      %7144 = vmatprep.mubr.f32.mxu0 0.0
      %v7145 = vand.u32 %v5891, 4294901760
      %v7146 = vsub.f32 %v5891, %v7145
      %7147 = vmatmul.mubr.f32.gmra.mrb[0].mxu0 %v7146
      %v7148 = vpop.f32.mrb[0].mxu0
      %v7149 = vadd.f32 %v6758, %v7148
      %v7150 = vpop.f32.mrb[0].mxu0
      %7151 = vmatprep.mubr.f32.mxu0 0.0
      %v7152 = vand.u32 %v5894, 4294901760
      %v7153 = vsub.f32 %v5894, %v7152
      %7154 = vmatmul.mubr.f32.gmra.mrb[0].mxu0 %v7153
      %v7155 = vpop.f32.mrb[0].mxu0
      %v7156 = vadd.f32 %v6764, %v7155
      %v7157 = vpop.f32.mrb[0].mxu0
      %7158 = vmatprep.mubr.f32.mxu0 0.0
      %v7159 = vand.u32 %v5897, 4294901760
      %v7160 = vsub.f32 %v5897, %v7159
      %7161 = vmatmul.mubr.f32.gmra.mrb[0].mxu0 %v7160
      %v7162 = vpop.f32.mrb[0].mxu0
      %v7163 = vadd.f32 %v6770, %v7162
      %v7164 = vpop.f32.mrb[0].mxu0
      %7165 = vmatprep.mubr.f32.mxu0 0.0
      %v7166 = vand.u32 %v5900, 4294901760
      %v7167 = vsub.f32 %v5900, %v7166
      %7168 = vmatmul.mubr.f32.gmra.mrb[0].mxu0 %v7167
      %v7169 = vpop.f32.mrb[0].mxu0
      %v7170 = vadd.f32 %v6776, %v7169
      %v7171 = vpop.f32.mrb[0].mxu0
      %7172 = vmatprep.mubr.f32.mxu0 0.0
      %v7173 = vand.u32 %v5903, 4294901760
      %v7174 = vsub.f32 %v5903, %v7173
      %7175 = vmatmul.mubr.f32.gmra.mrb[0].mxu0 %v7174
      %v7176 = vpop.f32.mrb[0].mxu0
      %v7177 = vadd.f32 %v6782, %v7176
      %v7178 = vpop.f32.mrb[0].mxu0
      %7179 = vmatprep.mubr.f32.mxu0 0.0
      %v7180 = vand.u32 %v5906, 4294901760
      %v7181 = vsub.f32 %v5906, %v7180
      %7182 = vmatmul.mubr.f32.gmra.mrb[0].mxu0 %v7181
      %v7183 = vpop.f32.mrb[0].mxu0
      %v7184 = vadd.f32 %v6788, %v7183
      %v7185 = vpop.f32.mrb[0].mxu0
      %7186 = vmatprep.mubr.f32.mxu0 0.0
      %v7187 = vand.u32 %v5909, 4294901760
      %v7188 = vsub.f32 %v5909, %v7187
      %7189 = vmatmul.mubr.f32.gmra.mrb[0].mxu0 %v7188
      %v7190 = vpop.f32.mrb[0].mxu0
      %v7191 = vadd.f32 %v6794, %v7190
      %v7192 = vpop.f32.mrb[0].mxu0
      %7193 = vmatprep.mubr.f32.mxu0 0.0
      %v7194 = vand.u32 %v5912, 4294901760
      %v7195 = vsub.f32 %v5912, %v7194
      %7196 = vmatmul.mubr.f32.gmra.mrb[0].mxu0 %v7195
      %v7197 = vpop.f32.mrb[0].mxu0
      %v7198 = vadd.f32 %v6800, %v7197
      %v7199 = vpop.f32.mrb[0].mxu0
      %7200 = vmatprep.mubr.f32.mxu0 0.0
      %v7201 = vand.u32 %v5915, 4294901760
      %v7202 = vsub.f32 %v5915, %v7201
      %7203 = vmatmul.mubr.f32.gmra.mrb[0].mxu0 %v7202
      %v7204 = vpop.f32.mrb[0].mxu0
      %v7205 = vadd.f32 %v6806, %v7204
      %v7206 = vpop.f32.mrb[0].mxu0
      %7207 = vmatprep.mubr.f32.mxu0 0.0
      %v7208 = vand.u32 %v5918, 4294901760
      %v7209 = vsub.f32 %v5918, %v7208
      %7210 = vmatmul.mubr.f32.gmra.mrb[0].mxu0 %v7209
      %v7211 = vpop.f32.mrb[0].mxu0
      %v7212 = vadd.f32 %v6812, %v7211
      %v7213 = vpop.f32.mrb[0].mxu0
      %7214 = vmatprep.mubr.f32.mxu0 0.0
      %v7215 = vand.u32 %v5921, 4294901760
      %v7216 = vsub.f32 %v5921, %v7215
      %7217 = vmatmul.mubr.f32.gmra.mrb[0].mxu0 %v7216
      %v7218 = vpop.f32.mrb[0].mxu0
      %v7219 = vadd.f32 %v6818, %v7218
      %v7220 = vpop.f32.mrb[0].mxu0
      %7221 = vmatprep.mubr.f32.mxu0 0.0
      %v7222 = vand.u32 %v5924, 4294901760
      %v7223 = vsub.f32 %v5924, %v7222
      %7224 = vmatmul.mubr.f32.gmra.mrb[0].mxu0 %v7223
      %v7225 = vpop.f32.mrb[0].mxu0
      %v7226 = vadd.f32 %v6824, %v7225
      %v7227 = vpop.f32.mrb[0].mxu0
      %7228 = vmatprep.mubr.f32.mxu0 0.0
      %v7229 = vand.u32 %v5927, 4294901760
      %v7230 = vsub.f32 %v5927, %v7229
      %7231 = vmatmul.mubr.f32.gmra.mrb[0].mxu0 %v7230
      %v7232 = vpop.f32.mrb[0].mxu0
      %v7233 = vadd.f32 %v6830, %v7232
      %v7234 = vpop.f32.mrb[0].mxu0
      %7235 = vmatprep.mubr.f32.mxu0 0.0
      %v7236 = vand.u32 %v5930, 4294901760
      %v7237 = vsub.f32 %v5930, %v7236
      %7238 = vmatmul.mubr.f32.gmra.mrb[0].mxu0 %v7237
      %v7239 = vpop.f32.mrb[0].mxu0
      %v7240 = vadd.f32 %v6836, %v7239
      %v7241 = vpop.f32.mrb[0].mxu0
      %7242 = vmatprep.mubr.f32.mxu0 0.0
      %v7243 = vand.u32 %v5933, 4294901760
      %v7244 = vsub.f32 %v5933, %v7243
      %7245 = vmatmul.mubr.f32.gmra.mrb[0].mxu0 %v7244
      %v7246 = vpop.f32.mrb[0].mxu0
      %v7247 = vadd.f32 %v6842, %v7246
      %v7248 = vpop.f32.mrb[0].mxu0
      %7249 = vmatprep.mubr.f32.mxu0 0.0
      %v7250 = vand.u32 %v5936, 4294901760
      %v7251 = vsub.f32 %v5936, %v7250
      %7252 = vmatmul.mubr.f32.gmra.mrb[0].mxu0 %v7251
      %v7253 = vpop.f32.mrb[0].mxu0
      %v7254 = vadd.f32 %v6848, %v7253
      %v7255 = vpop.f32.mrb[0].mxu0
      %7256 = vmatprep.mubr.f32.mxu0 0.0
      %v7257 = vand.u32 %v5939, 4294901760
      %v7258 = vsub.f32 %v5939, %v7257
      %7259 = vmatmul.mubr.f32.gmra.mrb[0].mxu0 %v7258
      %v7260 = vpop.f32.mrb[0].mxu0
      %v7261 = vadd.f32 %v6854, %v7260
      %v7262 = vpop.f32.mrb[0].mxu0
      %7263 = vmatprep.mubr.f32.mxu0 0.0
      %v7264 = vand.u32 %v5942, 4294901760
      %v7265 = vsub.f32 %v5942, %v7264
      %7266 = vmatmul.mubr.f32.gmra.mrb[0].mxu0 %v7265
      %v7267 = vpop.f32.mrb[0].mxu0
      %v7268 = vadd.f32 %v6860, %v7267
      %v7269 = vpop.f32.mrb[0].mxu0
      %7270 = vmatprep.mubr.f32.mxu0 0.0
      %v7271 = vand.u32 %v5945, 4294901760
      %v7272 = vsub.f32 %v5945, %v7271
      %7273 = vmatmul.mubr.f32.gmra.mrb[0].mxu0 %v7272
      %v7274 = vpop.f32.mrb[0].mxu0
      %v7275 = vadd.f32 %v6866, %v7274
      %v7276 = vpop.f32.mrb[0].mxu0
      %7277 = vmatprep.mubr.f32.mxu0 0.0
      %v7278 = vand.u32 %v5948, 4294901760
      %v7279 = vsub.f32 %v5948, %v7278
      %7280 = vmatmul.mubr.f32.gmra.mrb[0].mxu0 %v7279
      %v7281 = vpop.f32.mrb[0].mxu0
      %v7282 = vadd.f32 %v6872, %v7281
      %v7283 = vpop.f32.mrb[0].mxu0
      %7284 = vmatprep.mubr.f32.mxu0 0.0
      %v7285 = vand.u32 %v5951, 4294901760
      %v7286 = vsub.f32 %v5951, %v7285
      %7287 = vmatmul.mubr.f32.gmra.mrb[0].mxu0 %v7286
      %v7288 = vpop.f32.mrb[0].mxu0
      %v7289 = vadd.f32 %v6878, %v7288
      %v7290 = vpop.f32.mrb[0].mxu0
      %7291 = vmatprep.mubr.f32.mxu0 0.0
      %v7292 = vand.u32 %v5954, 4294901760
      %v7293 = vsub.f32 %v5954, %v7292
      %7294 = vmatmul.mubr.f32.gmra.mrb[0].mxu0 %v7293
      %v7295 = vpop.f32.mrb[0].mxu0
      %v7296 = vadd.f32 %v6884, %v7295
      %v7297 = vpop.f32.mrb[0].mxu0
      %7298 = vmatprep.mubr.f32.mxu0 0.0
      %v7299 = vand.u32 %v5957, 4294901760
      %v7300 = vsub.f32 %v5957, %v7299
      %7301 = vmatmul.mubr.f32.gmra.mrb[0].mxu0 %v7300
      %v7302 = vpop.f32.mrb[0].mxu0
      %v7303 = vadd.f32 %v6890, %v7302
      %v7304 = vpop.f32.mrb[0].mxu0
      %7305 = vmatprep.mubr.f32.mxu0 0.0
      %v7306 = vand.u32 %v5960, 4294901760
      %v7307 = vsub.f32 %v5960, %v7306
      %7308 = vmatmul.mubr.f32.gmra.mrb[0].mxu0 %v7307
      %v7309 = vpop.f32.mrb[0].mxu0
      %v7310 = vadd.f32 %v6896, %v7309
      %v7311 = vpop.f32.mrb[0].mxu0
      %7312 = vmatprep.mubr.f32.mxu0 0.0
      %v7313 = vand.u32 %v5963, 4294901760
      %v7314 = vsub.f32 %v5963, %v7313
      %7315 = vmatmul.mubr.f32.gmra.mrb[0].mxu0 %v7314
      %v7316 = vpop.f32.mrb[0].mxu0
      %v7317 = vadd.f32 %v6902, %v7316
      %v7318 = vpop.f32.mrb[0].mxu0
      %7319 = vmatprep.mubr.f32.mxu0 0.0
      %v7320 = vand.u32 %v5966, 4294901760
      %v7321 = vsub.f32 %v5966, %v7320
      %7322 = vmatmul.mubr.f32.gmra.mrb[0].mxu0 %v7321
      %v7323 = vpop.f32.mrb[0].mxu0
      %v7324 = vadd.f32 %v6908, %v7323
      %v7325 = vpop.f32.mrb[0].mxu0
      %7326 = vmatprep.mubr.f32.mxu0 0.0
      %v7327 = vand.u32 %v5969, 4294901760
      %v7328 = vsub.f32 %v5969, %v7327
      %7329 = vmatmul.mubr.f32.gmra.mrb[0].mxu0 %v7328
      %v7330 = vpop.f32.mrb[0].mxu0
      %v7331 = vadd.f32 %v6914, %v7330
      %v7332 = vpop.f32.mrb[0].mxu0
      %7333 = vmatprep.mubr.f32.mxu0 0.0
      %v7334 = vand.u32 %v5972, 4294901760
      %v7335 = vsub.f32 %v5972, %v7334
      %7336 = vmatmul.mubr.f32.gmra.mrb[0].mxu0 %v7335
      %v7337 = vpop.f32.mrb[0].mxu0
      %v7338 = vadd.f32 %v6920, %v7337
      %v7339 = vpop.f32.mrb[0].mxu0
      %7340 = vmatprep.mubr.f32.mxu0 0.0
      %v7341 = vand.u32 %v5975, 4294901760
      %v7342 = vsub.f32 %v5975, %v7341
      %7343 = vmatmul.mubr.f32.gmra.mrb[0].mxu0 %v7342
      %v7344 = vpop.f32.mrb[0].mxu0
      %v7345 = vadd.f32 %v6926, %v7344
      %v7346 = vpop.f32.mrb[0].mxu0
      %7347 = vdwg.mxu0
      %7348 = vmatprep.subr.mxu0 0.0
      %v7349 = vand.u32 %v5816, 4294901760
      %7350 = vmatpush1.msra.mxu0 %v7349
      %7351 = vmatprep.subr.mxu0 0.0
      %v7352 = vand.u32 %v5817, 4294901760
      %7353 = vmatpush1.msra.mxu0 %v7352
      %7354 = vmatprep.subr.mxu0 0.0
      %v7355 = vand.u32 %v5818, 4294901760
      %7356 = vmatpush1.msra.mxu0 %v7355
      %7357 = vmatprep.subr.mxu0 0.0
      %v7358 = vand.u32 %v5819, 4294901760
      %7359 = vmatpush1.msra.mxu0 %v7358
      %7360 = vmatprep.subr.mxu0 0.0
      %v7361 = vand.u32 %v5820, 4294901760
      %7362 = vmatpush1.msra.mxu0 %v7361
      %7363 = vmatprep.subr.mxu0 0.0
      %v7364 = vand.u32 %v5821, 4294901760
      %7365 = vmatpush1.msra.mxu0 %v7364
      %7366 = vmatprep.subr.mxu0 0.0
      %v7367 = vand.u32 %v5822, 4294901760
      %7368 = vmatpush1.msra.mxu0 %v7367
      %7369 = vmatprep.subr.mxu0 0.0
      %v7370 = vand.u32 %v5823, 4294901760
      %7371 = vmatpush1.msra.mxu0 %v7370
      %7372 = vmatprep.subr.mxu0 0.0
      %v7373 = vand.u32 %v5824, 4294901760
      %7374 = vmatpush1.msra.mxu0 %v7373
      %7375 = vmatprep.subr.mxu0 0.0
      %7376 = vmatpush1.msra.mxu0 0.0
      %7377 = vmatprep.subr.mxu0 0.0
      %7378 = vmatpush1.msra.mxu0 0.0
      %7379 = vmatprep.subr.mxu0 0.0
      %7380 = vmatpush1.msra.mxu0 0.0
      %7381 = vmatprep.subr.mxu0 0.0
      %7382 = vmatpush1.msra.mxu0 0.0
      %7383 = vmatprep.subr.mxu0 0.0
      %7384 = vmatpush1.msra.mxu0 0.0
      %7385 = vmatprep.subr.mxu0 0.0
      %7386 = vmatpush1.msra.mxu0 0.0
      %7387 = vmatprep.subr.mxu0 0.0
      %7388 = vmatpush1.msra.mxu0 0.0
      %7389 = vmatprep.subr.mxu0 0.0
      %7390 = vmatpush1.msra.mxu0 0.0
      %7391 = vmatprep.subr.mxu0 0.0
      %7392 = vmatpush1.msra.mxu0 0.0
      %7393 = vmatprep.subr.mxu0 0.0
      %7394 = vmatpush1.msra.mxu0 0.0
      %7395 = vmatprep.subr.mxu0 0.0
      %7396 = vmatpush1.msra.mxu0 0.0
      %7397 = vmatprep.subr.mxu0 0.0
      %7398 = vmatpush1.msra.mxu0 0.0
      %7399 = vmatprep.subr.mxu0 0.0
      %7400 = vmatpush1.msra.mxu0 0.0
      %7401 = vmatprep.subr.mxu0 0.0
      %7402 = vmatpush1.msra.mxu0 0.0
      %7403 = vmatprep.subr.mxu0 0.0
      %7404 = vmatpush1.msra.mxu0 0.0
      %7405 = vmatprep.subr.mxu0 0.0
      %7406 = vmatpush1.msra.mxu0 0.0
      %7407 = vmatprep.subr.mxu0 0.0
      %7408 = vmatpush1.msra.mxu0 0.0
      %7409 = vmatprep.subr.mxu0 0.0
      %7410 = vmatpush1.msra.mxu0 0.0
      %7411 = vmatprep.subr.mxu0 0.0
      %7412 = vmatpush1.msra.mxu0 0.0
      %7413 = vmatprep.subr.mxu0 0.0
      %7414 = vmatpush1.msra.mxu0 0.0
      %7415 = vmatprep.subr.mxu0 0.0
      %7416 = vmatpush1.msra.mxu0 0.0
      %7417 = vmatprep.subr.mxu0 0.0
      %7418 = vmatpush1.msra.mxu0 0.0
      %7419 = vmatprep.subr.mxu0 0.0
      %7420 = vmatpush1.msra.mxu0 0.0
      %7421 = vmatprep.mubr.f32.mxu0 0.0
      %v7422 = vand.u32 %v5834, 4294901760
      %v7423 = vsub.f32 %v5834, %v7422
      %v7424 = vand.u32 %v7423, 4294901760
      %7425 = vmatmul.mubr.f32.gmra.mrb[0].mxu0 %v7424
      %v7426 = vpop.f32.mrb[0].mxu0
      %v7427 = vadd.f32 %v7016, %v7426
      %v7428 = vpop.f32.mrb[0].mxu0
      %7429 = vmatprep.mubr.f32.mxu0 0.0
      %v7430 = vand.u32 %v5837, 4294901760
      %v7431 = vsub.f32 %v5837, %v7430
      %v7432 = vand.u32 %v7431, 4294901760
      %7433 = vmatmul.mubr.f32.gmra.mrb[0].mxu0 %v7432
      %v7434 = vpop.f32.mrb[0].mxu0
      %v7435 = vadd.f32 %v7023, %v7434
      %v7436 = vpop.f32.mrb[0].mxu0
      %7437 = vmatprep.mubr.f32.mxu0 0.0
      %v7438 = vand.u32 %v5840, 4294901760
      %v7439 = vsub.f32 %v5840, %v7438
      %v7440 = vand.u32 %v7439, 4294901760
      %7441 = vmatmul.mubr.f32.gmra.mrb[0].mxu0 %v7440
      %v7442 = vpop.f32.mrb[0].mxu0
      %v7443 = vadd.f32 %v7030, %v7442
      %v7444 = vpop.f32.mrb[0].mxu0
      %7445 = vmatprep.mubr.f32.mxu0 0.0
      %v7446 = vand.u32 %v5843, 4294901760
      %v7447 = vsub.f32 %v5843, %v7446
      %v7448 = vand.u32 %v7447, 4294901760
      %7449 = vmatmul.mubr.f32.gmra.mrb[0].mxu0 %v7448
      %v7450 = vpop.f32.mrb[0].mxu0
      %v7451 = vadd.f32 %v7037, %v7450
      %v7452 = vpop.f32.mrb[0].mxu0
      %7453 = vmatprep.mubr.f32.mxu0 0.0
      %v7454 = vand.u32 %v5846, 4294901760
      %v7455 = vsub.f32 %v5846, %v7454
      %v7456 = vand.u32 %v7455, 4294901760
      %7457 = vmatmul.mubr.f32.gmra.mrb[0].mxu0 %v7456
      %v7458 = vpop.f32.mrb[0].mxu0
      %v7459 = vadd.f32 %v7044, %v7458
      %v7460 = vpop.f32.mrb[0].mxu0
      %7461 = vmatprep.mubr.f32.mxu0 0.0
      %v7462 = vand.u32 %v5849, 4294901760
      %v7463 = vsub.f32 %v5849, %v7462
      %v7464 = vand.u32 %v7463, 4294901760
      %7465 = vmatmul.mubr.f32.gmra.mrb[0].mxu0 %v7464
      %v7466 = vpop.f32.mrb[0].mxu0
      %v7467 = vadd.f32 %v7051, %v7466
      %v7468 = vpop.f32.mrb[0].mxu0
      %7469 = vmatprep.mubr.f32.mxu0 0.0
      %v7470 = vand.u32 %v5852, 4294901760
      %v7471 = vsub.f32 %v5852, %v7470
      %v7472 = vand.u32 %v7471, 4294901760
      %7473 = vmatmul.mubr.f32.gmra.mrb[0].mxu0 %v7472
      %v7474 = vpop.f32.mrb[0].mxu0
      %v7475 = vadd.f32 %v7058, %v7474
      %v7476 = vpop.f32.mrb[0].mxu0
      %7477 = vmatprep.mubr.f32.mxu0 0.0
      %v7478 = vand.u32 %v5855, 4294901760
      %v7479 = vsub.f32 %v5855, %v7478
      %v7480 = vand.u32 %v7479, 4294901760
      %7481 = vmatmul.mubr.f32.gmra.mrb[0].mxu0 %v7480
      %v7482 = vpop.f32.mrb[0].mxu0
      %v7483 = vadd.f32 %v7065, %v7482
      %v7484 = vpop.f32.mrb[0].mxu0
      %7485 = vmatprep.mubr.f32.mxu0 0.0
      %v7486 = vand.u32 %v5858, 4294901760
      %v7487 = vsub.f32 %v5858, %v7486
      %v7488 = vand.u32 %v7487, 4294901760
      %7489 = vmatmul.mubr.f32.gmra.mrb[0].mxu0 %v7488
      %v7490 = vpop.f32.mrb[0].mxu0
      %v7491 = vadd.f32 %v7072, %v7490
      %v7492 = vpop.f32.mrb[0].mxu0
      %7493 = vmatprep.mubr.f32.mxu0 0.0
      %v7494 = vand.u32 %v5861, 4294901760
      %v7495 = vsub.f32 %v5861, %v7494
      %v7496 = vand.u32 %v7495, 4294901760
      %7497 = vmatmul.mubr.f32.gmra.mrb[0].mxu0 %v7496
      %v7498 = vpop.f32.mrb[0].mxu0
      %v7499 = vadd.f32 %v7079, %v7498
      %v7500 = vpop.f32.mrb[0].mxu0
      %7501 = vmatprep.mubr.f32.mxu0 0.0
      %v7502 = vand.u32 %v5864, 4294901760
      %v7503 = vsub.f32 %v5864, %v7502
      %v7504 = vand.u32 %v7503, 4294901760
      %7505 = vmatmul.mubr.f32.gmra.mrb[0].mxu0 %v7504
      %v7506 = vpop.f32.mrb[0].mxu0
      %v7507 = vadd.f32 %v7086, %v7506
      %v7508 = vpop.f32.mrb[0].mxu0
      %7509 = vmatprep.mubr.f32.mxu0 0.0
      %v7510 = vand.u32 %v5867, 4294901760
      %v7511 = vsub.f32 %v5867, %v7510
      %v7512 = vand.u32 %v7511, 4294901760
      %7513 = vmatmul.mubr.f32.gmra.mrb[0].mxu0 %v7512
      %v7514 = vpop.f32.mrb[0].mxu0
      %v7515 = vadd.f32 %v7093, %v7514
      %v7516 = vpop.f32.mrb[0].mxu0
      %7517 = vmatprep.mubr.f32.mxu0 0.0
      %v7518 = vand.u32 %v5870, 4294901760
      %v7519 = vsub.f32 %v5870, %v7518
      %v7520 = vand.u32 %v7519, 4294901760
      %7521 = vmatmul.mubr.f32.gmra.mrb[0].mxu0 %v7520
      %v7522 = vpop.f32.mrb[0].mxu0
      %v7523 = vadd.f32 %v7100, %v7522
      %v7524 = vpop.f32.mrb[0].mxu0
      %7525 = vmatprep.mubr.f32.mxu0 0.0
      %v7526 = vand.u32 %v5873, 4294901760
      %v7527 = vsub.f32 %v5873, %v7526
      %v7528 = vand.u32 %v7527, 4294901760
      %7529 = vmatmul.mubr.f32.gmra.mrb[0].mxu0 %v7528
      %v7530 = vpop.f32.mrb[0].mxu0
      %v7531 = vadd.f32 %v7107, %v7530
      %v7532 = vpop.f32.mrb[0].mxu0
      %7533 = vmatprep.mubr.f32.mxu0 0.0
      %v7534 = vand.u32 %v5876, 4294901760
      %v7535 = vsub.f32 %v5876, %v7534
      %v7536 = vand.u32 %v7535, 4294901760
      %7537 = vmatmul.mubr.f32.gmra.mrb[0].mxu0 %v7536
      %v7538 = vpop.f32.mrb[0].mxu0
      %v7539 = vadd.f32 %v7114, %v7538
      %v7540 = vpop.f32.mrb[0].mxu0
      %7541 = vmatprep.mubr.f32.mxu0 0.0
      %v7542 = vand.u32 %v5879, 4294901760
      %v7543 = vsub.f32 %v5879, %v7542
      %v7544 = vand.u32 %v7543, 4294901760
      %7545 = vmatmul.mubr.f32.gmra.mrb[0].mxu0 %v7544
      %v7546 = vpop.f32.mrb[0].mxu0
      %v7547 = vadd.f32 %v7121, %v7546
      %v7548 = vpop.f32.mrb[0].mxu0
      %7549 = vmatprep.mubr.f32.mxu0 0.0
      %v7550 = vand.u32 %v5882, 4294901760
      %v7551 = vsub.f32 %v5882, %v7550
      %v7552 = vand.u32 %v7551, 4294901760
      %7553 = vmatmul.mubr.f32.gmra.mrb[0].mxu0 %v7552
      %v7554 = vpop.f32.mrb[0].mxu0
      %v7555 = vadd.f32 %v7128, %v7554
      %v7556 = vpop.f32.mrb[0].mxu0
      %7557 = vmatprep.mubr.f32.mxu0 0.0
      %v7558 = vand.u32 %v5885, 4294901760
      %v7559 = vsub.f32 %v5885, %v7558
      %v7560 = vand.u32 %v7559, 4294901760
      %7561 = vmatmul.mubr.f32.gmra.mrb[0].mxu0 %v7560
      %v7562 = vpop.f32.mrb[0].mxu0
      %v7563 = vadd.f32 %v7135, %v7562
      %v7564 = vpop.f32.mrb[0].mxu0
      %7565 = vmatprep.mubr.f32.mxu0 0.0
      %v7566 = vand.u32 %v5888, 4294901760
      %v7567 = vsub.f32 %v5888, %v7566
      %v7568 = vand.u32 %v7567, 4294901760
      %7569 = vmatmul.mubr.f32.gmra.mrb[0].mxu0 %v7568
      %v7570 = vpop.f32.mrb[0].mxu0
      %v7571 = vadd.f32 %v7142, %v7570
      %v7572 = vpop.f32.mrb[0].mxu0
      %7573 = vmatprep.mubr.f32.mxu0 0.0
      %v7574 = vand.u32 %v5891, 4294901760
      %v7575 = vsub.f32 %v5891, %v7574
      %v7576 = vand.u32 %v7575, 4294901760
      %7577 = vmatmul.mubr.f32.gmra.mrb[0].mxu0 %v7576
      %v7578 = vpop.f32.mrb[0].mxu0
      %v7579 = vadd.f32 %v7149, %v7578
      %v7580 = vpop.f32.mrb[0].mxu0
      %7581 = vmatprep.mubr.f32.mxu0 0.0
      %v7582 = vand.u32 %v5894, 4294901760
      %v7583 = vsub.f32 %v5894, %v7582
      %v7584 = vand.u32 %v7583, 4294901760
      %7585 = vmatmul.mubr.f32.gmra.mrb[0].mxu0 %v7584
      %v7586 = vpop.f32.mrb[0].mxu0
      %v7587 = vadd.f32 %v7156, %v7586
      %v7588 = vpop.f32.mrb[0].mxu0
      %7589 = vmatprep.mubr.f32.mxu0 0.0
      %v7590 = vand.u32 %v5897, 4294901760
      %v7591 = vsub.f32 %v5897, %v7590
      %v7592 = vand.u32 %v7591, 4294901760
      %7593 = vmatmul.mubr.f32.gmra.mrb[0].mxu0 %v7592
      %v7594 = vpop.f32.mrb[0].mxu0
      %v7595 = vadd.f32 %v7163, %v7594
      %v7596 = vpop.f32.mrb[0].mxu0
      %7597 = vmatprep.mubr.f32.mxu0 0.0
      %v7598 = vand.u32 %v5900, 4294901760
      %v7599 = vsub.f32 %v5900, %v7598
      %v7600 = vand.u32 %v7599, 4294901760
      %7601 = vmatmul.mubr.f32.gmra.mrb[0].mxu0 %v7600
      %v7602 = vpop.f32.mrb[0].mxu0
      %v7603 = vadd.f32 %v7170, %v7602
      %v7604 = vpop.f32.mrb[0].mxu0
      %7605 = vmatprep.mubr.f32.mxu0 0.0
      %v7606 = vand.u32 %v5903, 4294901760
      %v7607 = vsub.f32 %v5903, %v7606
      %v7608 = vand.u32 %v7607, 4294901760
      %7609 = vmatmul.mubr.f32.gmra.mrb[0].mxu0 %v7608
      %v7610 = vpop.f32.mrb[0].mxu0
      %v7611 = vadd.f32 %v7177, %v7610
      %v7612 = vpop.f32.mrb[0].mxu0
      %7613 = vmatprep.mubr.f32.mxu0 0.0
      %v7614 = vand.u32 %v5906, 4294901760
      %v7615 = vsub.f32 %v5906, %v7614
      %v7616 = vand.u32 %v7615, 4294901760
      %7617 = vmatmul.mubr.f32.gmra.mrb[0].mxu0 %v7616
      %v7618 = vpop.f32.mrb[0].mxu0
      %v7619 = vadd.f32 %v7184, %v7618
      %v7620 = vpop.f32.mrb[0].mxu0
      %7621 = vmatprep.mubr.f32.mxu0 0.0
      %v7622 = vand.u32 %v5909, 4294901760
      %v7623 = vsub.f32 %v5909, %v7622
      %v7624 = vand.u32 %v7623, 4294901760
      %7625 = vmatmul.mubr.f32.gmra.mrb[0].mxu0 %v7624
      %v7626 = vpop.f32.mrb[0].mxu0
      %v7627 = vadd.f32 %v7191, %v7626
      %v7628 = vpop.f32.mrb[0].mxu0
      %7629 = vmatprep.mubr.f32.mxu0 0.0
      %v7630 = vand.u32 %v5912, 4294901760
      %v7631 = vsub.f32 %v5912, %v7630
      %v7632 = vand.u32 %v7631, 4294901760
      %7633 = vmatmul.mubr.f32.gmra.mrb[0].mxu0 %v7632
      %v7634 = vpop.f32.mrb[0].mxu0
      %v7635 = vadd.f32 %v7198, %v7634
      %v7636 = vpop.f32.mrb[0].mxu0
      %7637 = vmatprep.mubr.f32.mxu0 0.0
      %v7638 = vand.u32 %v5915, 4294901760
      %v7639 = vsub.f32 %v5915, %v7638
      %v7640 = vand.u32 %v7639, 4294901760
      %7641 = vmatmul.mubr.f32.gmra.mrb[0].mxu0 %v7640
      %v7642 = vpop.f32.mrb[0].mxu0
      %v7643 = vadd.f32 %v7205, %v7642
      %v7644 = vpop.f32.mrb[0].mxu0
      %7645 = vmatprep.mubr.f32.mxu0 0.0
      %v7646 = vand.u32 %v5918, 4294901760
      %v7647 = vsub.f32 %v5918, %v7646
      %v7648 = vand.u32 %v7647, 4294901760
      %7649 = vmatmul.mubr.f32.gmra.mrb[0].mxu0 %v7648
      %v7650 = vpop.f32.mrb[0].mxu0
      %v7651 = vadd.f32 %v7212, %v7650
      %v7652 = vpop.f32.mrb[0].mxu0
      %7653 = vmatprep.mubr.f32.mxu0 0.0
      %v7654 = vand.u32 %v5921, 4294901760
      %v7655 = vsub.f32 %v5921, %v7654
      %v7656 = vand.u32 %v7655, 4294901760
      %7657 = vmatmul.mubr.f32.gmra.mrb[0].mxu0 %v7656
      %v7658 = vpop.f32.mrb[0].mxu0
      %v7659 = vadd.f32 %v7219, %v7658
      %v7660 = vpop.f32.mrb[0].mxu0
      %7661 = vmatprep.mubr.f32.mxu0 0.0
      %v7662 = vand.u32 %v5924, 4294901760
      %v7663 = vsub.f32 %v5924, %v7662
      %v7664 = vand.u32 %v7663, 4294901760
      %7665 = vmatmul.mubr.f32.gmra.mrb[0].mxu0 %v7664
      %v7666 = vpop.f32.mrb[0].mxu0
      %v7667 = vadd.f32 %v7226, %v7666
      %v7668 = vpop.f32.mrb[0].mxu0
      %7669 = vmatprep.mubr.f32.mxu0 0.0
      %v7670 = vand.u32 %v5927, 4294901760
      %v7671 = vsub.f32 %v5927, %v7670
      %v7672 = vand.u32 %v7671, 4294901760
      %7673 = vmatmul.mubr.f32.gmra.mrb[0].mxu0 %v7672
      %v7674 = vpop.f32.mrb[0].mxu0
      %v7675 = vadd.f32 %v7233, %v7674
      %v7676 = vpop.f32.mrb[0].mxu0
      %7677 = vmatprep.mubr.f32.mxu0 0.0
      %v7678 = vand.u32 %v5930, 4294901760
      %v7679 = vsub.f32 %v5930, %v7678
      %v7680 = vand.u32 %v7679, 4294901760
      %7681 = vmatmul.mubr.f32.gmra.mrb[0].mxu0 %v7680
      %v7682 = vpop.f32.mrb[0].mxu0
      %v7683 = vadd.f32 %v7240, %v7682
      %v7684 = vpop.f32.mrb[0].mxu0
      %7685 = vmatprep.mubr.f32.mxu0 0.0
      %v7686 = vand.u32 %v5933, 4294901760
      %v7687 = vsub.f32 %v5933, %v7686
      %v7688 = vand.u32 %v7687, 4294901760
      %7689 = vmatmul.mubr.f32.gmra.mrb[0].mxu0 %v7688
      %v7690 = vpop.f32.mrb[0].mxu0
      %v7691 = vadd.f32 %v7247, %v7690
      %v7692 = vpop.f32.mrb[0].mxu0
      %7693 = vmatprep.mubr.f32.mxu0 0.0
      %v7694 = vand.u32 %v5936, 4294901760
      %v7695 = vsub.f32 %v5936, %v7694
      %v7696 = vand.u32 %v7695, 4294901760
      %7697 = vmatmul.mubr.f32.gmra.mrb[0].mxu0 %v7696
      %v7698 = vpop.f32.mrb[0].mxu0
      %v7699 = vadd.f32 %v7254, %v7698
      %v7700 = vpop.f32.mrb[0].mxu0
      %7701 = vmatprep.mubr.f32.mxu0 0.0
      %v7702 = vand.u32 %v5939, 4294901760
      %v7703 = vsub.f32 %v5939, %v7702
      %v7704 = vand.u32 %v7703, 4294901760
      %7705 = vmatmul.mubr.f32.gmra.mrb[0].mxu0 %v7704
      %v7706 = vpop.f32.mrb[0].mxu0
      %v7707 = vadd.f32 %v7261, %v7706
      %v7708 = vpop.f32.mrb[0].mxu0
      %7709 = vmatprep.mubr.f32.mxu0 0.0
      %v7710 = vand.u32 %v5942, 4294901760
      %v7711 = vsub.f32 %v5942, %v7710
      %v7712 = vand.u32 %v7711, 4294901760
      %7713 = vmatmul.mubr.f32.gmra.mrb[0].mxu0 %v7712
      %v7714 = vpop.f32.mrb[0].mxu0
      %v7715 = vadd.f32 %v7268, %v7714
      %v7716 = vpop.f32.mrb[0].mxu0
      %7717 = vmatprep.mubr.f32.mxu0 0.0
      %v7718 = vand.u32 %v5945, 4294901760
      %v7719 = vsub.f32 %v5945, %v7718
      %v7720 = vand.u32 %v7719, 4294901760
      %7721 = vmatmul.mubr.f32.gmra.mrb[0].mxu0 %v7720
      %v7722 = vpop.f32.mrb[0].mxu0
      %v7723 = vadd.f32 %v7275, %v7722
      %v7724 = vpop.f32.mrb[0].mxu0
      %7725 = vmatprep.mubr.f32.mxu0 0.0
      %v7726 = vand.u32 %v5948, 4294901760
      %v7727 = vsub.f32 %v5948, %v7726
      %v7728 = vand.u32 %v7727, 4294901760
      %7729 = vmatmul.mubr.f32.gmra.mrb[0].mxu0 %v7728
      %v7730 = vpop.f32.mrb[0].mxu0
      %v7731 = vadd.f32 %v7282, %v7730
      %v7732 = vpop.f32.mrb[0].mxu0
      %7733 = vmatprep.mubr.f32.mxu0 0.0
      %v7734 = vand.u32 %v5951, 4294901760
      %v7735 = vsub.f32 %v5951, %v7734
      %v7736 = vand.u32 %v7735, 4294901760
      %7737 = vmatmul.mubr.f32.gmra.mrb[0].mxu0 %v7736
      %v7738 = vpop.f32.mrb[0].mxu0
      %v7739 = vadd.f32 %v7289, %v7738
      %v7740 = vpop.f32.mrb[0].mxu0
      %7741 = vmatprep.mubr.f32.mxu0 0.0
      %v7742 = vand.u32 %v5954, 4294901760
      %v7743 = vsub.f32 %v5954, %v7742
      %v7744 = vand.u32 %v7743, 4294901760
      %7745 = vmatmul.mubr.f32.gmra.mrb[0].mxu0 %v7744
      %v7746 = vpop.f32.mrb[0].mxu0
      %v7747 = vadd.f32 %v7296, %v7746
      %v7748 = vpop.f32.mrb[0].mxu0
      %7749 = vmatprep.mubr.f32.mxu0 0.0
      %v7750 = vand.u32 %v5957, 4294901760
      %v7751 = vsub.f32 %v5957, %v7750
      %v7752 = vand.u32 %v7751, 4294901760
      %7753 = vmatmul.mubr.f32.gmra.mrb[0].mxu0 %v7752
      %v7754 = vpop.f32.mrb[0].mxu0
      %v7755 = vadd.f32 %v7303, %v7754
      %v7756 = vpop.f32.mrb[0].mxu0
      %7757 = vmatprep.mubr.f32.mxu0 0.0
      %v7758 = vand.u32 %v5960, 4294901760
      %v7759 = vsub.f32 %v5960, %v7758
      %v7760 = vand.u32 %v7759, 4294901760
      %7761 = vmatmul.mubr.f32.gmra.mrb[0].mxu0 %v7760
      %v7762 = vpop.f32.mrb[0].mxu0
      %v7763 = vadd.f32 %v7310, %v7762
      %v7764 = vpop.f32.mrb[0].mxu0
      %7765 = vmatprep.mubr.f32.mxu0 0.0
      %v7766 = vand.u32 %v5963, 4294901760
      %v7767 = vsub.f32 %v5963, %v7766
      %v7768 = vand.u32 %v7767, 4294901760
      %7769 = vmatmul.mubr.f32.gmra.mrb[0].mxu0 %v7768
      %v7770 = vpop.f32.mrb[0].mxu0
      %v7771 = vadd.f32 %v7317, %v7770
      %v7772 = vpop.f32.mrb[0].mxu0
      %7773 = vmatprep.mubr.f32.mxu0 0.0
      %v7774 = vand.u32 %v5966, 4294901760
      %v7775 = vsub.f32 %v5966, %v7774
      %v7776 = vand.u32 %v7775, 4294901760
      %7777 = vmatmul.mubr.f32.gmra.mrb[0].mxu0 %v7776
      %v7778 = vpop.f32.mrb[0].mxu0
      %v7779 = vadd.f32 %v7324, %v7778
      %v7780 = vpop.f32.mrb[0].mxu0
      %7781 = vmatprep.mubr.f32.mxu0 0.0
      %v7782 = vand.u32 %v5969, 4294901760
      %v7783 = vsub.f32 %v5969, %v7782
      %v7784 = vand.u32 %v7783, 4294901760
      %7785 = vmatmul.mubr.f32.gmra.mrb[0].mxu0 %v7784
      %v7786 = vpop.f32.mrb[0].mxu0
      %v7787 = vadd.f32 %v7331, %v7786
      %v7788 = vpop.f32.mrb[0].mxu0
      %7789 = vmatprep.mubr.f32.mxu0 0.0
      %v7790 = vand.u32 %v5972, 4294901760
      %v7791 = vsub.f32 %v5972, %v7790
      %v7792 = vand.u32 %v7791, 4294901760
      %7793 = vmatmul.mubr.f32.gmra.mrb[0].mxu0 %v7792
      %v7794 = vpop.f32.mrb[0].mxu0
      %v7795 = vadd.f32 %v7338, %v7794
      %v7796 = vpop.f32.mrb[0].mxu0
      %7797 = vmatprep.mubr.f32.mxu0 0.0
      %v7798 = vand.u32 %v5975, 4294901760
      %v7799 = vsub.f32 %v5975, %v7798
      %v7800 = vand.u32 %v7799, 4294901760
      %7801 = vmatmul.mubr.f32.gmra.mrb[0].mxu0 %v7800
      %v7802 = vpop.f32.mrb[0].mxu0
      %v7803 = vadd.f32 %v7345, %v7802
      %v7804 = vpop.f32.mrb[0].mxu0
      %7805 = vdwg.mxu0
      %7806 = vmatprep.subr.mxu0 0.0
      %v7807 = vand.u32 %v5816, 4294901760
      %v7808 = vsub.f32 %v5816, %v7807
      %v7809 = vand.u32 %v7808, 4294901760
      %7810 = vmatpush1.msra.mxu0 %v7809
      %7811 = vmatprep.subr.mxu0 0.0
      %v7812 = vand.u32 %v5817, 4294901760
      %v7813 = vsub.f32 %v5817, %v7812
      %v7814 = vand.u32 %v7813, 4294901760
      %7815 = vmatpush1.msra.mxu0 %v7814
      %7816 = vmatprep.subr.mxu0 0.0
      %v7817 = vand.u32 %v5818, 4294901760
      %v7818 = vsub.f32 %v5818, %v7817
      %v7819 = vand.u32 %v7818, 4294901760
      %7820 = vmatpush1.msra.mxu0 %v7819
      %7821 = vmatprep.subr.mxu0 0.0
      %v7822 = vand.u32 %v5819, 4294901760
      %v7823 = vsub.f32 %v5819, %v7822
      %v7824 = vand.u32 %v7823, 4294901760
      %7825 = vmatpush1.msra.mxu0 %v7824
      %7826 = vmatprep.subr.mxu0 0.0
      %v7827 = vand.u32 %v5820, 4294901760
      %v7828 = vsub.f32 %v5820, %v7827
      %v7829 = vand.u32 %v7828, 4294901760
      %7830 = vmatpush1.msra.mxu0 %v7829
      %7831 = vmatprep.subr.mxu0 0.0
      %v7832 = vand.u32 %v5821, 4294901760
      %v7833 = vsub.f32 %v5821, %v7832
      %v7834 = vand.u32 %v7833, 4294901760
      %7835 = vmatpush1.msra.mxu0 %v7834
      %7836 = vmatprep.subr.mxu0 0.0
      %v7837 = vand.u32 %v5822, 4294901760
      %v7838 = vsub.f32 %v5822, %v7837
      %v7839 = vand.u32 %v7838, 4294901760
      %7840 = vmatpush1.msra.mxu0 %v7839
      %7841 = vmatprep.subr.mxu0 0.0
      %v7842 = vand.u32 %v5823, 4294901760
      %v7843 = vsub.f32 %v5823, %v7842
      %v7844 = vand.u32 %v7843, 4294901760
      %7845 = vmatpush1.msra.mxu0 %v7844
      %7846 = vmatprep.subr.mxu0 0.0
      %v7847 = vand.u32 %v5824, 4294901760
      %v7848 = vsub.f32 %v5824, %v7847
      %v7849 = vand.u32 %v7848, 4294901760
      %7850 = vmatpush1.msra.mxu0 %v7849
      %7851 = vmatprep.subr.mxu0 0.0
      %7852 = vmatpush1.msra.mxu0 0.0
      %7853 = vmatprep.subr.mxu0 0.0
      %7854 = vmatpush1.msra.mxu0 0.0
      %7855 = vmatprep.subr.mxu0 0.0
      %7856 = vmatpush1.msra.mxu0 0.0
      %7857 = vmatprep.subr.mxu0 0.0
      %7858 = vmatpush1.msra.mxu0 0.0
      %7859 = vmatprep.subr.mxu0 0.0
      %7860 = vmatpush1.msra.mxu0 0.0
      %7861 = vmatprep.subr.mxu0 0.0
      %7862 = vmatpush1.msra.mxu0 0.0
      %7863 = vmatprep.subr.mxu0 0.0
      %7864 = vmatpush1.msra.mxu0 0.0
      %7865 = vmatprep.subr.mxu0 0.0
      %7866 = vmatpush1.msra.mxu0 0.0
      %7867 = vmatprep.subr.mxu0 0.0
      %7868 = vmatpush1.msra.mxu0 0.0
      %7869 = vmatprep.subr.mxu0 0.0
      %7870 = vmatpush1.msra.mxu0 0.0
      %7871 = vmatprep.subr.mxu0 0.0
      %7872 = vmatpush1.msra.mxu0 0.0
      %7873 = vmatprep.subr.mxu0 0.0
      %7874 = vmatpush1.msra.mxu0 0.0
      %7875 = vmatprep.subr.mxu0 0.0
      %7876 = vmatpush1.msra.mxu0 0.0
      %7877 = vmatprep.subr.mxu0 0.0
      %7878 = vmatpush1.msra.mxu0 0.0
      %7879 = vmatprep.subr.mxu0 0.0
      %7880 = vmatpush1.msra.mxu0 0.0
      %7881 = vmatprep.subr.mxu0 0.0
      %7882 = vmatpush1.msra.mxu0 0.0
      %7883 = vmatprep.subr.mxu0 0.0
      %7884 = vmatpush1.msra.mxu0 0.0
      %7885 = vmatprep.subr.mxu0 0.0
      %7886 = vmatpush1.msra.mxu0 0.0
      %7887 = vmatprep.subr.mxu0 0.0
      %7888 = vmatpush1.msra.mxu0 0.0
      %7889 = vmatprep.subr.mxu0 0.0
      %7890 = vmatpush1.msra.mxu0 0.0
      %7891 = vmatprep.subr.mxu0 0.0
      %7892 = vmatpush1.msra.mxu0 0.0
      %7893 = vmatprep.subr.mxu0 0.0
      %7894 = vmatpush1.msra.mxu0 0.0
      %7895 = vmatprep.subr.mxu0 0.0
      %7896 = vmatpush1.msra.mxu0 0.0
      %7897 = vmatprep.mubr.f32.mxu0 0.0
      %v7898 = vand.u32 %v5834, 4294901760
      %7899 = vmatmul.mubr.f32.gmra.mrb[0].mxu0 %v7898
      %v7900 = vpop.f32.mrb[0].mxu0
      %v7901 = vadd.f32 %v7427, %v7900
      %v7902 = vpop.f32.mrb[0].mxu0
      %7903 = vmatprep.mubr.f32.mxu0 0.0
      %v7904 = vand.u32 %v5837, 4294901760
      %7905 = vmatmul.mubr.f32.gmra.mrb[0].mxu0 %v7904
      %v7906 = vpop.f32.mrb[0].mxu0
      %v7907 = vadd.f32 %v7435, %v7906
      %v7908 = vpop.f32.mrb[0].mxu0
      %7909 = vmatprep.mubr.f32.mxu0 0.0
      %v7910 = vand.u32 %v5840, 4294901760
      %7911 = vmatmul.mubr.f32.gmra.mrb[0].mxu0 %v7910
      %v7912 = vpop.f32.mrb[0].mxu0
      %v7913 = vadd.f32 %v7443, %v7912
      %v7914 = vpop.f32.mrb[0].mxu0
      %7915 = vmatprep.mubr.f32.mxu0 0.0
      %v7916 = vand.u32 %v5843, 4294901760
      %7917 = vmatmul.mubr.f32.gmra.mrb[0].mxu0 %v7916
      %v7918 = vpop.f32.mrb[0].mxu0
      %v7919 = vadd.f32 %v7451, %v7918
      %v7920 = vpop.f32.mrb[0].mxu0
      %7921 = vmatprep.mubr.f32.mxu0 0.0
      %v7922 = vand.u32 %v5846, 4294901760
      %7923 = vmatmul.mubr.f32.gmra.mrb[0].mxu0 %v7922
      %v7924 = vpop.f32.mrb[0].mxu0
      %v7925 = vadd.f32 %v7459, %v7924
      %v7926 = vpop.f32.mrb[0].mxu0
      %7927 = vmatprep.mubr.f32.mxu0 0.0
      %v7928 = vand.u32 %v5849, 4294901760
      %7929 = vmatmul.mubr.f32.gmra.mrb[0].mxu0 %v7928
      %v7930 = vpop.f32.mrb[0].mxu0
      %v7931 = vadd.f32 %v7467, %v7930
      %v7932 = vpop.f32.mrb[0].mxu0
      %7933 = vmatprep.mubr.f32.mxu0 0.0
      %v7934 = vand.u32 %v5852, 4294901760
      %7935 = vmatmul.mubr.f32.gmra.mrb[0].mxu0 %v7934
      %v7936 = vpop.f32.mrb[0].mxu0
      %v7937 = vadd.f32 %v7475, %v7936
      %v7938 = vpop.f32.mrb[0].mxu0
      %7939 = vmatprep.mubr.f32.mxu0 0.0
      %v7940 = vand.u32 %v5855, 4294901760
      %7941 = vmatmul.mubr.f32.gmra.mrb[0].mxu0 %v7940
      %v7942 = vpop.f32.mrb[0].mxu0
      %v7943 = vadd.f32 %v7483, %v7942
      %v7944 = vpop.f32.mrb[0].mxu0
      %7945 = vmatprep.mubr.f32.mxu0 0.0
      %v7946 = vand.u32 %v5858, 4294901760
      %7947 = vmatmul.mubr.f32.gmra.mrb[0].mxu0 %v7946
      %v7948 = vpop.f32.mrb[0].mxu0
      %v7949 = vadd.f32 %v7491, %v7948
      %v7950 = vpop.f32.mrb[0].mxu0
      %7951 = vmatprep.mubr.f32.mxu0 0.0
      %v7952 = vand.u32 %v5861, 4294901760
      %7953 = vmatmul.mubr.f32.gmra.mrb[0].mxu0 %v7952
      %v7954 = vpop.f32.mrb[0].mxu0
      %v7955 = vadd.f32 %v7499, %v7954
      %v7956 = vpop.f32.mrb[0].mxu0
      %7957 = vmatprep.mubr.f32.mxu0 0.0
      %v7958 = vand.u32 %v5864, 4294901760
      %7959 = vmatmul.mubr.f32.gmra.mrb[0].mxu0 %v7958
      %v7960 = vpop.f32.mrb[0].mxu0
      %v7961 = vadd.f32 %v7507, %v7960
      %v7962 = vpop.f32.mrb[0].mxu0
      %7963 = vmatprep.mubr.f32.mxu0 0.0
      %v7964 = vand.u32 %v5867, 4294901760
      %7965 = vmatmul.mubr.f32.gmra.mrb[0].mxu0 %v7964
      %v7966 = vpop.f32.mrb[0].mxu0
      %v7967 = vadd.f32 %v7515, %v7966
      %v7968 = vpop.f32.mrb[0].mxu0
      %7969 = vmatprep.mubr.f32.mxu0 0.0
      %v7970 = vand.u32 %v5870, 4294901760
      %7971 = vmatmul.mubr.f32.gmra.mrb[0].mxu0 %v7970
      %v7972 = vpop.f32.mrb[0].mxu0
      %v7973 = vadd.f32 %v7523, %v7972
      %v7974 = vpop.f32.mrb[0].mxu0
      %7975 = vmatprep.mubr.f32.mxu0 0.0
      %v7976 = vand.u32 %v5873, 4294901760
      %7977 = vmatmul.mubr.f32.gmra.mrb[0].mxu0 %v7976
      %v7978 = vpop.f32.mrb[0].mxu0
      %v7979 = vadd.f32 %v7531, %v7978
      %v7980 = vpop.f32.mrb[0].mxu0
      %7981 = vmatprep.mubr.f32.mxu0 0.0
      %v7982 = vand.u32 %v5876, 4294901760
      %7983 = vmatmul.mubr.f32.gmra.mrb[0].mxu0 %v7982
      %v7984 = vpop.f32.mrb[0].mxu0
      %v7985 = vadd.f32 %v7539, %v7984
      %v7986 = vpop.f32.mrb[0].mxu0
      %7987 = vmatprep.mubr.f32.mxu0 0.0
      %v7988 = vand.u32 %v5879, 4294901760
      %7989 = vmatmul.mubr.f32.gmra.mrb[0].mxu0 %v7988
      %v7990 = vpop.f32.mrb[0].mxu0
      %v7991 = vadd.f32 %v7547, %v7990
      %v7992 = vpop.f32.mrb[0].mxu0
      %7993 = vmatprep.mubr.f32.mxu0 0.0
      %v7994 = vand.u32 %v5882, 4294901760
      %7995 = vmatmul.mubr.f32.gmra.mrb[0].mxu0 %v7994
      %v7996 = vpop.f32.mrb[0].mxu0
      %v7997 = vadd.f32 %v7555, %v7996
      %v7998 = vpop.f32.mrb[0].mxu0
      %7999 = vmatprep.mubr.f32.mxu0 0.0
      %v8000 = vand.u32 %v5885, 4294901760
      %8001 = vmatmul.mubr.f32.gmra.mrb[0].mxu0 %v8000
      %v8002 = vpop.f32.mrb[0].mxu0
      %v8003 = vadd.f32 %v7563, %v8002
      %v8004 = vpop.f32.mrb[0].mxu0
      %8005 = vmatprep.mubr.f32.mxu0 0.0
      %v8006 = vand.u32 %v5888, 4294901760
      %8007 = vmatmul.mubr.f32.gmra.mrb[0].mxu0 %v8006
      %v8008 = vpop.f32.mrb[0].mxu0
      %v8009 = vadd.f32 %v7571, %v8008
      %v8010 = vpop.f32.mrb[0].mxu0
      %8011 = vmatprep.mubr.f32.mxu0 0.0
      %v8012 = vand.u32 %v5891, 4294901760
      %8013 = vmatmul.mubr.f32.gmra.mrb[0].mxu0 %v8012
      %v8014 = vpop.f32.mrb[0].mxu0
      %v8015 = vadd.f32 %v7579, %v8014
      %v8016 = vpop.f32.mrb[0].mxu0
      %8017 = vmatprep.mubr.f32.mxu0 0.0
      %v8018 = vand.u32 %v5894, 4294901760
      %8019 = vmatmul.mubr.f32.gmra.mrb[0].mxu0 %v8018
      %v8020 = vpop.f32.mrb[0].mxu0
      %v8021 = vadd.f32 %v7587, %v8020
      %v8022 = vpop.f32.mrb[0].mxu0
      %8023 = vmatprep.mubr.f32.mxu0 0.0
      %v8024 = vand.u32 %v5897, 4294901760
      %8025 = vmatmul.mubr.f32.gmra.mrb[0].mxu0 %v8024
      %v8026 = vpop.f32.mrb[0].mxu0
      %v8027 = vadd.f32 %v7595, %v8026
      %v8028 = vpop.f32.mrb[0].mxu0
      %8029 = vmatprep.mubr.f32.mxu0 0.0
      %v8030 = vand.u32 %v5900, 4294901760
      %8031 = vmatmul.mubr.f32.gmra.mrb[0].mxu0 %v8030
      %v8032 = vpop.f32.mrb[0].mxu0
      %v8033 = vadd.f32 %v7603, %v8032
      %v8034 = vpop.f32.mrb[0].mxu0
      %8035 = vmatprep.mubr.f32.mxu0 0.0
      %v8036 = vand.u32 %v5903, 4294901760
      %8037 = vmatmul.mubr.f32.gmra.mrb[0].mxu0 %v8036
      %v8038 = vpop.f32.mrb[0].mxu0
      %v8039 = vadd.f32 %v7611, %v8038
      %v8040 = vpop.f32.mrb[0].mxu0
      %8041 = vmatprep.mubr.f32.mxu0 0.0
      %v8042 = vand.u32 %v5906, 4294901760
      %8043 = vmatmul.mubr.f32.gmra.mrb[0].mxu0 %v8042
      %v8044 = vpop.f32.mrb[0].mxu0
      %v8045 = vadd.f32 %v7619, %v8044
      %v8046 = vpop.f32.mrb[0].mxu0
      %8047 = vmatprep.mubr.f32.mxu0 0.0
      %v8048 = vand.u32 %v5909, 4294901760
      %8049 = vmatmul.mubr.f32.gmra.mrb[0].mxu0 %v8048
      %v8050 = vpop.f32.mrb[0].mxu0
      %v8051 = vadd.f32 %v7627, %v8050
      %v8052 = vpop.f32.mrb[0].mxu0
      %8053 = vmatprep.mubr.f32.mxu0 0.0
      %v8054 = vand.u32 %v5912, 4294901760
      %8055 = vmatmul.mubr.f32.gmra.mrb[0].mxu0 %v8054
      %v8056 = vpop.f32.mrb[0].mxu0
      %v8057 = vadd.f32 %v7635, %v8056
      %v8058 = vpop.f32.mrb[0].mxu0
      %8059 = vmatprep.mubr.f32.mxu0 0.0
      %v8060 = vand.u32 %v5915, 4294901760
      %8061 = vmatmul.mubr.f32.gmra.mrb[0].mxu0 %v8060
      %v8062 = vpop.f32.mrb[0].mxu0
      %v8063 = vadd.f32 %v7643, %v8062
      %v8064 = vpop.f32.mrb[0].mxu0
      %8065 = vmatprep.mubr.f32.mxu0 0.0
      %v8066 = vand.u32 %v5918, 4294901760
      %8067 = vmatmul.mubr.f32.gmra.mrb[0].mxu0 %v8066
      %v8068 = vpop.f32.mrb[0].mxu0
      %v8069 = vadd.f32 %v7651, %v8068
      %v8070 = vpop.f32.mrb[0].mxu0
      %8071 = vmatprep.mubr.f32.mxu0 0.0
      %v8072 = vand.u32 %v5921, 4294901760
      %8073 = vmatmul.mubr.f32.gmra.mrb[0].mxu0 %v8072
      %v8074 = vpop.f32.mrb[0].mxu0
      %v8075 = vadd.f32 %v7659, %v8074
      %v8076 = vpop.f32.mrb[0].mxu0
      %8077 = vmatprep.mubr.f32.mxu0 0.0
      %v8078 = vand.u32 %v5924, 4294901760
      %8079 = vmatmul.mubr.f32.gmra.mrb[0].mxu0 %v8078
      %v8080 = vpop.f32.mrb[0].mxu0
      %v8081 = vadd.f32 %v7667, %v8080
      %v8082 = vpop.f32.mrb[0].mxu0
      %8083 = vmatprep.mubr.f32.mxu0 0.0
      %v8084 = vand.u32 %v5927, 4294901760
      %8085 = vmatmul.mubr.f32.gmra.mrb[0].mxu0 %v8084
      %v8086 = vpop.f32.mrb[0].mxu0
      %v8087 = vadd.f32 %v7675, %v8086
      %v8088 = vpop.f32.mrb[0].mxu0
      %8089 = vmatprep.mubr.f32.mxu0 0.0
      %v8090 = vand.u32 %v5930, 4294901760
      %8091 = vmatmul.mubr.f32.gmra.mrb[0].mxu0 %v8090
      %v8092 = vpop.f32.mrb[0].mxu0
      %v8093 = vadd.f32 %v7683, %v8092
      %v8094 = vpop.f32.mrb[0].mxu0
      %8095 = vmatprep.mubr.f32.mxu0 0.0
      %v8096 = vand.u32 %v5933, 4294901760
      %8097 = vmatmul.mubr.f32.gmra.mrb[0].mxu0 %v8096
      %v8098 = vpop.f32.mrb[0].mxu0
      %v8099 = vadd.f32 %v7691, %v8098
      %v8100 = vpop.f32.mrb[0].mxu0
      %8101 = vmatprep.mubr.f32.mxu0 0.0
      %v8102 = vand.u32 %v5936, 4294901760
      %8103 = vmatmul.mubr.f32.gmra.mrb[0].mxu0 %v8102
      %v8104 = vpop.f32.mrb[0].mxu0
      %v8105 = vadd.f32 %v7699, %v8104
      %v8106 = vpop.f32.mrb[0].mxu0
      %8107 = vmatprep.mubr.f32.mxu0 0.0
      %v8108 = vand.u32 %v5939, 4294901760
      %8109 = vmatmul.mubr.f32.gmra.mrb[0].mxu0 %v8108
      %v8110 = vpop.f32.mrb[0].mxu0
      %v8111 = vadd.f32 %v7707, %v8110
      %v8112 = vpop.f32.mrb[0].mxu0
      %8113 = vmatprep.mubr.f32.mxu0 0.0
      %v8114 = vand.u32 %v5942, 4294901760
      %8115 = vmatmul.mubr.f32.gmra.mrb[0].mxu0 %v8114
      %v8116 = vpop.f32.mrb[0].mxu0
      %v8117 = vadd.f32 %v7715, %v8116
      %v8118 = vpop.f32.mrb[0].mxu0
      %8119 = vmatprep.mubr.f32.mxu0 0.0
      %v8120 = vand.u32 %v5945, 4294901760
      %8121 = vmatmul.mubr.f32.gmra.mrb[0].mxu0 %v8120
      %v8122 = vpop.f32.mrb[0].mxu0
      %v8123 = vadd.f32 %v7723, %v8122
      %v8124 = vpop.f32.mrb[0].mxu0
      %8125 = vmatprep.mubr.f32.mxu0 0.0
      %v8126 = vand.u32 %v5948, 4294901760
      %8127 = vmatmul.mubr.f32.gmra.mrb[0].mxu0 %v8126
      %v8128 = vpop.f32.mrb[0].mxu0
      %v8129 = vadd.f32 %v7731, %v8128
      %v8130 = vpop.f32.mrb[0].mxu0
      %8131 = vmatprep.mubr.f32.mxu0 0.0
      %v8132 = vand.u32 %v5951, 4294901760
      %8133 = vmatmul.mubr.f32.gmra.mrb[0].mxu0 %v8132
      %v8134 = vpop.f32.mrb[0].mxu0
      %v8135 = vadd.f32 %v7739, %v8134
      %v8136 = vpop.f32.mrb[0].mxu0
      %8137 = vmatprep.mubr.f32.mxu0 0.0
      %v8138 = vand.u32 %v5954, 4294901760
      %8139 = vmatmul.mubr.f32.gmra.mrb[0].mxu0 %v8138
      %v8140 = vpop.f32.mrb[0].mxu0
      %v8141 = vadd.f32 %v7747, %v8140
      %v8142 = vpop.f32.mrb[0].mxu0
      %8143 = vmatprep.mubr.f32.mxu0 0.0
      %v8144 = vand.u32 %v5957, 4294901760
      %8145 = vmatmul.mubr.f32.gmra.mrb[0].mxu0 %v8144
      %v8146 = vpop.f32.mrb[0].mxu0
      %v8147 = vadd.f32 %v7755, %v8146
      %v8148 = vpop.f32.mrb[0].mxu0
      %8149 = vmatprep.mubr.f32.mxu0 0.0
      %v8150 = vand.u32 %v5960, 4294901760
      %8151 = vmatmul.mubr.f32.gmra.mrb[0].mxu0 %v8150
      %v8152 = vpop.f32.mrb[0].mxu0
      %v8153 = vadd.f32 %v7763, %v8152
      %v8154 = vpop.f32.mrb[0].mxu0
      %8155 = vmatprep.mubr.f32.mxu0 0.0
      %v8156 = vand.u32 %v5963, 4294901760
      %8157 = vmatmul.mubr.f32.gmra.mrb[0].mxu0 %v8156
      %v8158 = vpop.f32.mrb[0].mxu0
      %v8159 = vadd.f32 %v7771, %v8158
      %v8160 = vpop.f32.mrb[0].mxu0
      %8161 = vmatprep.mubr.f32.mxu0 0.0
      %v8162 = vand.u32 %v5966, 4294901760
      %8163 = vmatmul.mubr.f32.gmra.mrb[0].mxu0 %v8162
      %v8164 = vpop.f32.mrb[0].mxu0
      %v8165 = vadd.f32 %v7779, %v8164
      %v8166 = vpop.f32.mrb[0].mxu0
      %8167 = vmatprep.mubr.f32.mxu0 0.0
      %v8168 = vand.u32 %v5969, 4294901760
      %8169 = vmatmul.mubr.f32.gmra.mrb[0].mxu0 %v8168
      %v8170 = vpop.f32.mrb[0].mxu0
      %v8171 = vadd.f32 %v7787, %v8170
      %v8172 = vpop.f32.mrb[0].mxu0
      %8173 = vmatprep.mubr.f32.mxu0 0.0
      %v8174 = vand.u32 %v5972, 4294901760
      %8175 = vmatmul.mubr.f32.gmra.mrb[0].mxu0 %v8174
      %v8176 = vpop.f32.mrb[0].mxu0
      %v8177 = vadd.f32 %v7795, %v8176
      %v8178 = vpop.f32.mrb[0].mxu0
      %8179 = vmatprep.mubr.f32.mxu0 0.0
      %v8180 = vand.u32 %v5975, 4294901760
      %8181 = vmatmul.mubr.f32.gmra.mrb[0].mxu0 %v8180
      %v8182 = vpop.f32.mrb[0].mxu0
      %v8183 = vadd.f32 %v7803, %v8182
      %v8184 = vpop.f32.mrb[0].mxu0
      %8185 = vdwg.mxu0
      %8186 = vmatprep.subr.mxu0 0.0
      %v8187 = vand.u32 %v5816, 4294901760
      %8188 = vmatpush1.msra.mxu0 %v8187
      %8189 = vmatprep.subr.mxu0 0.0
      %v8190 = vand.u32 %v5817, 4294901760
      %8191 = vmatpush1.msra.mxu0 %v8190
      %8192 = vmatprep.subr.mxu0 0.0
      %v8193 = vand.u32 %v5818, 4294901760
      %8194 = vmatpush1.msra.mxu0 %v8193
      %8195 = vmatprep.subr.mxu0 0.0
      %v8196 = vand.u32 %v5819, 4294901760
      %8197 = vmatpush1.msra.mxu0 %v8196
      %8198 = vmatprep.subr.mxu0 0.0
      %v8199 = vand.u32 %v5820, 4294901760
      %8200 = vmatpush1.msra.mxu0 %v8199
      %8201 = vmatprep.subr.mxu0 0.0
      %v8202 = vand.u32 %v5821, 4294901760
      %8203 = vmatpush1.msra.mxu0 %v8202
      %8204 = vmatprep.subr.mxu0 0.0
      %v8205 = vand.u32 %v5822, 4294901760
      %8206 = vmatpush1.msra.mxu0 %v8205
      %8207 = vmatprep.subr.mxu0 0.0
      %v8208 = vand.u32 %v5823, 4294901760
      %8209 = vmatpush1.msra.mxu0 %v8208
      %8210 = vmatprep.subr.mxu0 0.0
      %v8211 = vand.u32 %v5824, 4294901760
      %8212 = vmatpush1.msra.mxu0 %v8211
      %8213 = vmatprep.subr.mxu0 0.0
      %8214 = vmatpush1.msra.mxu0 0.0
      %8215 = vmatprep.subr.mxu0 0.0
      %8216 = vmatpush1.msra.mxu0 0.0
      %8217 = vmatprep.subr.mxu0 0.0
      %8218 = vmatpush1.msra.mxu0 0.0
      %8219 = vmatprep.subr.mxu0 0.0
      %8220 = vmatpush1.msra.mxu0 0.0
      %8221 = vmatprep.subr.mxu0 0.0
      %8222 = vmatpush1.msra.mxu0 0.0
      %8223 = vmatprep.subr.mxu0 0.0
      %8224 = vmatpush1.msra.mxu0 0.0
      %8225 = vmatprep.subr.mxu0 0.0
      %8226 = vmatpush1.msra.mxu0 0.0
      %8227 = vmatprep.subr.mxu0 0.0
      %8228 = vmatpush1.msra.mxu0 0.0
      %8229 = vmatprep.subr.mxu0 0.0
      %8230 = vmatpush1.msra.mxu0 0.0
      %8231 = vmatprep.subr.mxu0 0.0
      %8232 = vmatpush1.msra.mxu0 0.0
      %8233 = vmatprep.subr.mxu0 0.0
      %8234 = vmatpush1.msra.mxu0 0.0
      %8235 = vmatprep.subr.mxu0 0.0
      %8236 = vmatpush1.msra.mxu0 0.0
      %8237 = vmatprep.subr.mxu0 0.0
      %8238 = vmatpush1.msra.mxu0 0.0
      %8239 = vmatprep.subr.mxu0 0.0
      %8240 = vmatpush1.msra.mxu0 0.0
      %8241 = vmatprep.subr.mxu0 0.0
      %8242 = vmatpush1.msra.mxu0 0.0
      %8243 = vmatprep.subr.mxu0 0.0
      %8244 = vmatpush1.msra.mxu0 0.0
      %8245 = vmatprep.subr.mxu0 0.0
      %8246 = vmatpush1.msra.mxu0 0.0
      %8247 = vmatprep.subr.mxu0 0.0
      %8248 = vmatpush1.msra.mxu0 0.0
      %8249 = vmatprep.subr.mxu0 0.0
      %8250 = vmatpush1.msra.mxu0 0.0
      %8251 = vmatprep.subr.mxu0 0.0
      %8252 = vmatpush1.msra.mxu0 0.0
      %8253 = vmatprep.subr.mxu0 0.0
      %8254 = vmatpush1.msra.mxu0 0.0
      %8255 = vmatprep.subr.mxu0 0.0
      %8256 = vmatpush1.msra.mxu0 0.0
      %8257 = vmatprep.subr.mxu0 0.0
      %8258 = vmatpush1.msra.mxu0 0.0
      %8259 = vmatprep.mubr.f32.mxu0 0.0
      %v8260 = vand.u32 %v5834, 4294901760
      %8261 = vmatmul.mubr.f32.gmra.mrb[0].mxu0 %v8260
      %v8262 = vpop.f32.mrb[0].mxu0
      %v8263 = vadd.f32 %v7901, %v8262
      %v8264 = vpop.f32.mrb[0].mxu0
      %8265 = vmatprep.mubr.f32.mxu0 0.0
      %v8266 = vand.u32 %v5837, 4294901760
      %8267 = vmatmul.mubr.f32.gmra.mrb[0].mxu0 %v8266
      %v8268 = vpop.f32.mrb[0].mxu0
      %v8269 = vadd.f32 %v7907, %v8268
      %v8270 = vpop.f32.mrb[0].mxu0
      %8271 = vmatprep.mubr.f32.mxu0 0.0
      %v8272 = vand.u32 %v5840, 4294901760
      %8273 = vmatmul.mubr.f32.gmra.mrb[0].mxu0 %v8272
      %v8274 = vpop.f32.mrb[0].mxu0
      %v8275 = vadd.f32 %v7913, %v8274
      %v8276 = vpop.f32.mrb[0].mxu0
      %8277 = vmatprep.mubr.f32.mxu0 0.0
      %v8278 = vand.u32 %v5843, 4294901760
      %8279 = vmatmul.mubr.f32.gmra.mrb[0].mxu0 %v8278
      %v8280 = vpop.f32.mrb[0].mxu0
      %v8281 = vadd.f32 %v7919, %v8280
      %v8282 = vpop.f32.mrb[0].mxu0
      %8283 = vmatprep.mubr.f32.mxu0 0.0
      %v8284 = vand.u32 %v5846, 4294901760
      %8285 = vmatmul.mubr.f32.gmra.mrb[0].mxu0 %v8284
      %v8286 = vpop.f32.mrb[0].mxu0
      %v8287 = vadd.f32 %v7925, %v8286
      %v8288 = vpop.f32.mrb[0].mxu0
      %8289 = vmatprep.mubr.f32.mxu0 0.0
      %v8290 = vand.u32 %v5849, 4294901760
      %8291 = vmatmul.mubr.f32.gmra.mrb[0].mxu0 %v8290
      %v8292 = vpop.f32.mrb[0].mxu0
      %v8293 = vadd.f32 %v7931, %v8292
      %v8294 = vpop.f32.mrb[0].mxu0
      %8295 = vmatprep.mubr.f32.mxu0 0.0
      %v8296 = vand.u32 %v5852, 4294901760
      %8297 = vmatmul.mubr.f32.gmra.mrb[0].mxu0 %v8296
      %v8298 = vpop.f32.mrb[0].mxu0
      %v8299 = vadd.f32 %v7937, %v8298
      %v8300 = vpop.f32.mrb[0].mxu0
      %8301 = vmatprep.mubr.f32.mxu0 0.0
      %v8302 = vand.u32 %v5855, 4294901760
      %8303 = vmatmul.mubr.f32.gmra.mrb[0].mxu0 %v8302
      %v8304 = vpop.f32.mrb[0].mxu0
      %v8305 = vadd.f32 %v7943, %v8304
      %v8306 = vpop.f32.mrb[0].mxu0
      %8307 = vmatprep.mubr.f32.mxu0 0.0
      %v8308 = vand.u32 %v5858, 4294901760
      %8309 = vmatmul.mubr.f32.gmra.mrb[0].mxu0 %v8308
      %v8310 = vpop.f32.mrb[0].mxu0
      %v8311 = vadd.f32 %v7949, %v8310
      %v8312 = vpop.f32.mrb[0].mxu0
      %8313 = vmatprep.mubr.f32.mxu0 0.0
      %v8314 = vand.u32 %v5861, 4294901760
      %8315 = vmatmul.mubr.f32.gmra.mrb[0].mxu0 %v8314
      %v8316 = vpop.f32.mrb[0].mxu0
      %v8317 = vadd.f32 %v7955, %v8316
      %v8318 = vpop.f32.mrb[0].mxu0
      %8319 = vmatprep.mubr.f32.mxu0 0.0
      %v8320 = vand.u32 %v5864, 4294901760
      %8321 = vmatmul.mubr.f32.gmra.mrb[0].mxu0 %v8320
      %v8322 = vpop.f32.mrb[0].mxu0
      %v8323 = vadd.f32 %v7961, %v8322
      %v8324 = vpop.f32.mrb[0].mxu0
      %8325 = vmatprep.mubr.f32.mxu0 0.0
      %v8326 = vand.u32 %v5867, 4294901760
      %8327 = vmatmul.mubr.f32.gmra.mrb[0].mxu0 %v8326
      %v8328 = vpop.f32.mrb[0].mxu0
      %v8329 = vadd.f32 %v7967, %v8328
      %v8330 = vpop.f32.mrb[0].mxu0
      %8331 = vmatprep.mubr.f32.mxu0 0.0
      %v8332 = vand.u32 %v5870, 4294901760
      %8333 = vmatmul.mubr.f32.gmra.mrb[0].mxu0 %v8332
      %v8334 = vpop.f32.mrb[0].mxu0
      %v8335 = vadd.f32 %v7973, %v8334
      %v8336 = vpop.f32.mrb[0].mxu0
      %8337 = vmatprep.mubr.f32.mxu0 0.0
      %v8338 = vand.u32 %v5873, 4294901760
      %8339 = vmatmul.mubr.f32.gmra.mrb[0].mxu0 %v8338
      %v8340 = vpop.f32.mrb[0].mxu0
      %v8341 = vadd.f32 %v7979, %v8340
      %v8342 = vpop.f32.mrb[0].mxu0
      %8343 = vmatprep.mubr.f32.mxu0 0.0
      %v8344 = vand.u32 %v5876, 4294901760
      %8345 = vmatmul.mubr.f32.gmra.mrb[0].mxu0 %v8344
      %v8346 = vpop.f32.mrb[0].mxu0
      %v8347 = vadd.f32 %v7985, %v8346
      %v8348 = vpop.f32.mrb[0].mxu0
      %8349 = vmatprep.mubr.f32.mxu0 0.0
      %v8350 = vand.u32 %v5879, 4294901760
      %8351 = vmatmul.mubr.f32.gmra.mrb[0].mxu0 %v8350
      %v8352 = vpop.f32.mrb[0].mxu0
      %v8353 = vadd.f32 %v7991, %v8352
      %v8354 = vpop.f32.mrb[0].mxu0
      %8355 = vmatprep.mubr.f32.mxu0 0.0
      %v8356 = vand.u32 %v5882, 4294901760
      %8357 = vmatmul.mubr.f32.gmra.mrb[0].mxu0 %v8356
      %v8358 = vpop.f32.mrb[0].mxu0
      %v8359 = vadd.f32 %v7997, %v8358
      %v8360 = vpop.f32.mrb[0].mxu0
      %8361 = vmatprep.mubr.f32.mxu0 0.0
      %v8362 = vand.u32 %v5885, 4294901760
      %8363 = vmatmul.mubr.f32.gmra.mrb[0].mxu0 %v8362
      %v8364 = vpop.f32.mrb[0].mxu0
      %v8365 = vadd.f32 %v8003, %v8364
      %v8366 = vpop.f32.mrb[0].mxu0
      %8367 = vmatprep.mubr.f32.mxu0 0.0
      %v8368 = vand.u32 %v5888, 4294901760
      %8369 = vmatmul.mubr.f32.gmra.mrb[0].mxu0 %v8368
      %v8370 = vpop.f32.mrb[0].mxu0
      %v8371 = vadd.f32 %v8009, %v8370
      %v8372 = vpop.f32.mrb[0].mxu0
      %8373 = vmatprep.mubr.f32.mxu0 0.0
      %v8374 = vand.u32 %v5891, 4294901760
      %8375 = vmatmul.mubr.f32.gmra.mrb[0].mxu0 %v8374
      %v8376 = vpop.f32.mrb[0].mxu0
      %v8377 = vadd.f32 %v8015, %v8376
      %v8378 = vpop.f32.mrb[0].mxu0
      %8379 = vmatprep.mubr.f32.mxu0 0.0
      %v8380 = vand.u32 %v5894, 4294901760
      %8381 = vmatmul.mubr.f32.gmra.mrb[0].mxu0 %v8380
      %v8382 = vpop.f32.mrb[0].mxu0
      %v8383 = vadd.f32 %v8021, %v8382
      %v8384 = vpop.f32.mrb[0].mxu0
      %8385 = vmatprep.mubr.f32.mxu0 0.0
      %v8386 = vand.u32 %v5897, 4294901760
      %8387 = vmatmul.mubr.f32.gmra.mrb[0].mxu0 %v8386
      %v8388 = vpop.f32.mrb[0].mxu0
      %v8389 = vadd.f32 %v8027, %v8388
      %v8390 = vpop.f32.mrb[0].mxu0
      %8391 = vmatprep.mubr.f32.mxu0 0.0
      %v8392 = vand.u32 %v5900, 4294901760
      %8393 = vmatmul.mubr.f32.gmra.mrb[0].mxu0 %v8392
      %v8394 = vpop.f32.mrb[0].mxu0
      %v8395 = vadd.f32 %v8033, %v8394
      %v8396 = vpop.f32.mrb[0].mxu0
      %8397 = vmatprep.mubr.f32.mxu0 0.0
      %v8398 = vand.u32 %v5903, 4294901760
      %8399 = vmatmul.mubr.f32.gmra.mrb[0].mxu0 %v8398
      %v8400 = vpop.f32.mrb[0].mxu0
      %v8401 = vadd.f32 %v8039, %v8400
      %v8402 = vpop.f32.mrb[0].mxu0
      %8403 = vmatprep.mubr.f32.mxu0 0.0
      %v8404 = vand.u32 %v5906, 4294901760
      %8405 = vmatmul.mubr.f32.gmra.mrb[0].mxu0 %v8404
      %v8406 = vpop.f32.mrb[0].mxu0
      %v8407 = vadd.f32 %v8045, %v8406
      %v8408 = vpop.f32.mrb[0].mxu0
      %8409 = vmatprep.mubr.f32.mxu0 0.0
      %v8410 = vand.u32 %v5909, 4294901760
      %8411 = vmatmul.mubr.f32.gmra.mrb[0].mxu0 %v8410
      %v8412 = vpop.f32.mrb[0].mxu0
      %v8413 = vadd.f32 %v8051, %v8412
      %v8414 = vpop.f32.mrb[0].mxu0
      %8415 = vmatprep.mubr.f32.mxu0 0.0
      %v8416 = vand.u32 %v5912, 4294901760
      %8417 = vmatmul.mubr.f32.gmra.mrb[0].mxu0 %v8416
      %v8418 = vpop.f32.mrb[0].mxu0
      %v8419 = vadd.f32 %v8057, %v8418
      %v8420 = vpop.f32.mrb[0].mxu0
      %8421 = vmatprep.mubr.f32.mxu0 0.0
      %v8422 = vand.u32 %v5915, 4294901760
      %8423 = vmatmul.mubr.f32.gmra.mrb[0].mxu0 %v8422
      %v8424 = vpop.f32.mrb[0].mxu0
      %v8425 = vadd.f32 %v8063, %v8424
      %v8426 = vpop.f32.mrb[0].mxu0
      %8427 = vmatprep.mubr.f32.mxu0 0.0
      %v8428 = vand.u32 %v5918, 4294901760
      %8429 = vmatmul.mubr.f32.gmra.mrb[0].mxu0 %v8428
      %v8430 = vpop.f32.mrb[0].mxu0
      %v8431 = vadd.f32 %v8069, %v8430
      %v8432 = vpop.f32.mrb[0].mxu0
      %8433 = vmatprep.mubr.f32.mxu0 0.0
      %v8434 = vand.u32 %v5921, 4294901760
      %8435 = vmatmul.mubr.f32.gmra.mrb[0].mxu0 %v8434
      %v8436 = vpop.f32.mrb[0].mxu0
      %v8437 = vadd.f32 %v8075, %v8436
      %v8438 = vpop.f32.mrb[0].mxu0
      %8439 = vmatprep.mubr.f32.mxu0 0.0
      %v8440 = vand.u32 %v5924, 4294901760
      %8441 = vmatmul.mubr.f32.gmra.mrb[0].mxu0 %v8440
      %v8442 = vpop.f32.mrb[0].mxu0
      %v8443 = vadd.f32 %v8081, %v8442
      %v8444 = vpop.f32.mrb[0].mxu0
      %8445 = vmatprep.mubr.f32.mxu0 0.0
      %v8446 = vand.u32 %v5927, 4294901760
      %8447 = vmatmul.mubr.f32.gmra.mrb[0].mxu0 %v8446
      %v8448 = vpop.f32.mrb[0].mxu0
      %v8449 = vadd.f32 %v8087, %v8448
      %v8450 = vpop.f32.mrb[0].mxu0
      %8451 = vmatprep.mubr.f32.mxu0 0.0
      %v8452 = vand.u32 %v5930, 4294901760
      %8453 = vmatmul.mubr.f32.gmra.mrb[0].mxu0 %v8452
      %v8454 = vpop.f32.mrb[0].mxu0
      %v8455 = vadd.f32 %v8093, %v8454
      %v8456 = vpop.f32.mrb[0].mxu0
      %8457 = vmatprep.mubr.f32.mxu0 0.0
      %v8458 = vand.u32 %v5933, 4294901760
      %8459 = vmatmul.mubr.f32.gmra.mrb[0].mxu0 %v8458
      %v8460 = vpop.f32.mrb[0].mxu0
      %v8461 = vadd.f32 %v8099, %v8460
      %v8462 = vpop.f32.mrb[0].mxu0
      %8463 = vmatprep.mubr.f32.mxu0 0.0
      %v8464 = vand.u32 %v5936, 4294901760
      %8465 = vmatmul.mubr.f32.gmra.mrb[0].mxu0 %v8464
      %v8466 = vpop.f32.mrb[0].mxu0
      %v8467 = vadd.f32 %v8105, %v8466
      %v8468 = vpop.f32.mrb[0].mxu0
      %8469 = vmatprep.mubr.f32.mxu0 0.0
      %v8470 = vand.u32 %v5939, 4294901760
      %8471 = vmatmul.mubr.f32.gmra.mrb[0].mxu0 %v8470
      %v8472 = vpop.f32.mrb[0].mxu0
      %v8473 = vadd.f32 %v8111, %v8472
      %v8474 = vpop.f32.mrb[0].mxu0
      %8475 = vmatprep.mubr.f32.mxu0 0.0
      %v8476 = vand.u32 %v5942, 4294901760
      %8477 = vmatmul.mubr.f32.gmra.mrb[0].mxu0 %v8476
      %v8478 = vpop.f32.mrb[0].mxu0
      %v8479 = vadd.f32 %v8117, %v8478
      %v8480 = vpop.f32.mrb[0].mxu0
      %8481 = vmatprep.mubr.f32.mxu0 0.0
      %v8482 = vand.u32 %v5945, 4294901760
      %8483 = vmatmul.mubr.f32.gmra.mrb[0].mxu0 %v8482
      %v8484 = vpop.f32.mrb[0].mxu0
      %v8485 = vadd.f32 %v8123, %v8484
      %v8486 = vpop.f32.mrb[0].mxu0
      %8487 = vmatprep.mubr.f32.mxu0 0.0
      %v8488 = vand.u32 %v5948, 4294901760
      %8489 = vmatmul.mubr.f32.gmra.mrb[0].mxu0 %v8488
      %v8490 = vpop.f32.mrb[0].mxu0
      %v8491 = vadd.f32 %v8129, %v8490
      %v8492 = vpop.f32.mrb[0].mxu0
      %8493 = vmatprep.mubr.f32.mxu0 0.0
      %v8494 = vand.u32 %v5951, 4294901760
      %8495 = vmatmul.mubr.f32.gmra.mrb[0].mxu0 %v8494
      %v8496 = vpop.f32.mrb[0].mxu0
      %v8497 = vadd.f32 %v8135, %v8496
      %v8498 = vpop.f32.mrb[0].mxu0
      %8499 = vmatprep.mubr.f32.mxu0 0.0
      %v8500 = vand.u32 %v5954, 4294901760
      %8501 = vmatmul.mubr.f32.gmra.mrb[0].mxu0 %v8500
      %v8502 = vpop.f32.mrb[0].mxu0
      %v8503 = vadd.f32 %v8141, %v8502
      %v8504 = vpop.f32.mrb[0].mxu0
      %8505 = vmatprep.mubr.f32.mxu0 0.0
      %v8506 = vand.u32 %v5957, 4294901760
      %8507 = vmatmul.mubr.f32.gmra.mrb[0].mxu0 %v8506
      %v8508 = vpop.f32.mrb[0].mxu0
      %v8509 = vadd.f32 %v8147, %v8508
      %v8510 = vpop.f32.mrb[0].mxu0
      %8511 = vmatprep.mubr.f32.mxu0 0.0
      %v8512 = vand.u32 %v5960, 4294901760
      %8513 = vmatmul.mubr.f32.gmra.mrb[0].mxu0 %v8512
      %v8514 = vpop.f32.mrb[0].mxu0
      %v8515 = vadd.f32 %v8153, %v8514
      %v8516 = vpop.f32.mrb[0].mxu0
      %8517 = vmatprep.mubr.f32.mxu0 0.0
      %v8518 = vand.u32 %v5963, 4294901760
      %8519 = vmatmul.mubr.f32.gmra.mrb[0].mxu0 %v8518
      %v8520 = vpop.f32.mrb[0].mxu0
      %v8521 = vadd.f32 %v8159, %v8520
      %v8522 = vpop.f32.mrb[0].mxu0
      %8523 = vmatprep.mubr.f32.mxu0 0.0
      %v8524 = vand.u32 %v5966, 4294901760
      %8525 = vmatmul.mubr.f32.gmra.mrb[0].mxu0 %v8524
      %v8526 = vpop.f32.mrb[0].mxu0
      %v8527 = vadd.f32 %v8165, %v8526
      %v8528 = vpop.f32.mrb[0].mxu0
      %8529 = vmatprep.mubr.f32.mxu0 0.0
      %v8530 = vand.u32 %v5969, 4294901760
      %8531 = vmatmul.mubr.f32.gmra.mrb[0].mxu0 %v8530
      %v8532 = vpop.f32.mrb[0].mxu0
      %v8533 = vadd.f32 %v8171, %v8532
      %v8534 = vpop.f32.mrb[0].mxu0
      %8535 = vmatprep.mubr.f32.mxu0 0.0
      %v8536 = vand.u32 %v5972, 4294901760
      %8537 = vmatmul.mubr.f32.gmra.mrb[0].mxu0 %v8536
      %v8538 = vpop.f32.mrb[0].mxu0
      %v8539 = vadd.f32 %v8177, %v8538
      %v8540 = vpop.f32.mrb[0].mxu0
      %8541 = vmatprep.mubr.f32.mxu0 0.0
      %v8542 = vand.u32 %v5975, 4294901760
      %8543 = vmatmul.mubr.f32.gmra.mrb[0].mxu0 %v8542
      %v8544 = vpop.f32.mrb[0].mxu0
      %v8545 = vadd.f32 %v8183, %v8544
      %v8546 = vpop.f32.mrb[0].mxu0
      %8547 = vdwg.mxu0
      %v8548 = vmax.f32 %v8263, 0.0
      %v8549 = vmax.f32 %v8269, 0.0
      %v8550 = vmax.f32 %v8275, 0.0
      %v8551 = vmax.f32 %v8281, 0.0
      %v8552 = vmax.f32 %v8287, 0.0
      %v8553 = vmax.f32 %v8293, 0.0
      %v8554 = vmax.f32 %v8299, 0.0
      %v8555 = vmax.f32 %v8305, 0.0
      %v8556 = vmax.f32 %v8311, 0.0
      %v8557 = vmax.f32 %v8317, 0.0
      %v8558 = vmax.f32 %v8323, 0.0
      %v8559 = vmax.f32 %v8329, 0.0
      %v8560 = vmax.f32 %v8335, 0.0
      %v8561 = vmax.f32 %v8341, 0.0
      %v8562 = vmax.f32 %v8347, 0.0
      %v8563 = vmax.f32 %v8353, 0.0
      %v8564 = vmax.f32 %v8359, 0.0
      %v8565 = vmax.f32 %v8365, 0.0
      %v8566 = vmax.f32 %v8371, 0.0
      %v8567 = vmax.f32 %v8377, 0.0
      %v8568 = vmax.f32 %v8383, 0.0
      %v8569 = vmax.f32 %v8389, 0.0
      %v8570 = vmax.f32 %v8395, 0.0
      %v8571 = vmax.f32 %v8401, 0.0
      %v8572 = vmax.f32 %v8407, 0.0
      %v8573 = vmax.f32 %v8413, 0.0
      %v8574 = vmax.f32 %v8419, 0.0
      %v8575 = vmax.f32 %v8425, 0.0
      %v8576 = vmax.f32 %v8431, 0.0
      %v8577 = vmax.f32 %v8437, 0.0
      %v8578 = vmax.f32 %v8443, 0.0
      %v8579 = vmax.f32 %v8449, 0.0
      %v8580 = vmax.f32 %v8455, 0.0
      %v8581 = vmax.f32 %v8461, 0.0
      %v8582 = vmax.f32 %v8467, 0.0
      %v8583 = vmax.f32 %v8473, 0.0
      %v8584 = vmax.f32 %v8479, 0.0
      %v8585 = vmax.f32 %v8485, 0.0
      %v8586 = vmax.f32 %v8491, 0.0
      %v8587 = vmax.f32 %v8497, 0.0
      %v8588 = vmax.f32 %v8503, 0.0
      %v8589 = vmax.f32 %v8509, 0.0
      %v8590 = vmax.f32 %v8515, 0.0
      %v8591 = vmax.f32 %v8521, 0.0
      %v8592 = vmax.f32 %v8527, 0.0
      %v8593 = vmax.f32 %v8533, 0.0
      %v8594 = vmax.f32 %v8539, 0.0
      %v8595 = vmax.f32 %v8545, 0.0
      %v8596 = vld [vmem:[%s6] sm:$0xff]
      %v8597 = vld [vmem:[%s300 + $0x19] sm:$0xff]
      %v8598 = vld [vmem:[%s300 + $0x21] sm:$0xff]
      %v8599 = vld [vmem:[%s300 + $0x29] sm:$0xff]
      %v8600 = vld [vmem:[%s300 + $0x31] sm:$0xff]
      %v8601 = vld [vmem:[%s300 + $0x39] sm:$0xff]
      %v8602 = vld [vmem:[%s300 + $0x41] sm:$0xff]
      %v8603 = vld [vmem:[%s300 + $0x49] sm:$0xff]
      %v8604 = vld [vmem:[%s300 + $0x51] sm:$0xff]
      %v8605 = vld [vmem:[%s300 + $0x59] sm:$0xff]
      %v8606 = vld [vmem:[%s300 + $0x61] sm:$0xff]
      %v8607 = vld [vmem:[%s300 + $0x69] sm:$0xff]
      %v8608 = vld [vmem:[%s300 + $0x71] sm:$0xff]
      %v8609 = vld [vmem:[%s300 + $0x79] sm:$0xff]
      %v8610 = vld [vmem:[%s300 + $0x81] sm:$0xff]
      %v8611 = vld [vmem:[%s300 + $0x89] sm:$0xff]
      %v8612 = vld [vmem:[%s300 + $0x91] sm:$0xff]
      %v8613 = vld [vmem:[%s300 + $0x99] sm:$0xff]
      %v8614 = vld [vmem:[%s300 + $0xa1] sm:$0xff]
      %v8615 = vld [vmem:[%s300 + $0xa9] sm:$0xff]
      %v8616 = vld [vmem:[%s300 + $0xb1] sm:$0xff]
      %v8617 = vld [vmem:[%s300 + $0xb9] sm:$0xff]
      %v8618 = vld [vmem:[%s300 + $0xc1] sm:$0xff]
      %v8619 = vld [vmem:[%s300 + $0xc9] sm:$0xff]
      %v8620 = vld [vmem:[%s300 + $0xd1] sm:$0xff]
      %v8621 = vld [vmem:[%s300 + $0xd9] sm:$0xff]
      %v8622 = vld [vmem:[%s300 + $0xe1] sm:$0xff]
      %v8623 = vld [vmem:[%s300 + $0xe9] sm:$0xff]
      %v8624 = vld [vmem:[%s300 + $0xf1] sm:$0xff]
      %v8625 = vld [vmem:[%s300 + $0xf9] sm:$0xff]
      %v8626 = vld [vmem:[%s300 + $0x101] sm:$0xff]
      %v8627 = vld [vmem:[%s300 + $0x109] sm:$0xff]
      %v8628 = vld [vmem:[%s300 + $0x111] sm:$0xff]
      %v8629 = vld [vmem:[%s300 + $0x119] sm:$0xff]
      %v8630 = vld [vmem:[%s300 + $0x121] sm:$0xff]
      %v8631 = vld [vmem:[%s300 + $0x129] sm:$0xff]
      %v8632 = vld [vmem:[%s300 + $0x131] sm:$0xff]
      %v8633 = vld [vmem:[%s300 + $0x139] sm:$0xff]
      %v8634 = vld [vmem:[%s300 + $0x141] sm:$0xff]
      %v8635 = vld [vmem:[%s300 + $0x149] sm:$0xff]
      %v8636 = vld [vmem:[%s300 + $0x151] sm:$0xff]
      %v8637 = vld [vmem:[%s300 + $0x159] sm:$0xff]
      %v8638 = vld [vmem:[%s300 + $0x161] sm:$0xff]
      %v8639 = vld [vmem:[%s300 + $0x169] sm:$0xff]
      %v8640 = vld [vmem:[%s300 + $0x171] sm:$0xff]
      %v8641 = vld [vmem:[%s300 + $0x179] sm:$0xff]
      %v8642 = vld [vmem:[%s300 + $0x181] sm:$0xff]
      %v8643 = vld [vmem:[%s300 + $0x189] sm:$0xff]
      %v8644 = vld [vmem:[%s300 + $0x191] sm:$0xff]
      %v8645 = vld [vmem:[%s7] sm:$0x1]
      %v8647 = vlaneseq
      %v8648 = vshrl.u32 %v8647, 7
      %v8649 = vsub.s32 0, %v8648
      %v8650 = vrot.slane %v8645, %v8649
      %v8653 = vsel %vm3895, %v8548, 0
      %v8656 = vsel %vm3895, %v8549, 0
      %v8659 = vsel %vm3895, %v8550, 0
      %v8662 = vsel %vm3895, %v8551, 0
      %v8665 = vsel %vm3895, %v8552, 0
      %v8668 = vsel %vm3895, %v8553, 0
      %v8671 = vsel %vm3895, %v8554, 0
      %v8674 = vsel %vm3895, %v8555, 0
      %v8677 = vsel %vm3895, %v8556, 0
      %v8680 = vsel %vm3895, %v8557, 0
      %v8683 = vsel %vm3895, %v8558, 0
      %v8686 = vsel %vm3895, %v8559, 0
      %v8689 = vsel %vm3895, %v8560, 0
      %v8692 = vsel %vm3895, %v8561, 0
      %v8695 = vsel %vm3895, %v8562, 0
      %v8698 = vsel %vm3895, %v8563, 0
      %v8701 = vsel %vm3895, %v8564, 0
      %v8704 = vsel %vm3895, %v8565, 0
      %v8707 = vsel %vm3895, %v8566, 0
      %v8710 = vsel %vm3895, %v8567, 0
      %v8713 = vsel %vm3895, %v8568, 0
      %v8716 = vsel %vm3895, %v8569, 0
      %v8719 = vsel %vm3895, %v8570, 0
      %v8722 = vsel %vm3895, %v8571, 0
      %v8725 = vsel %vm3895, %v8572, 0
      %v8728 = vsel %vm3895, %v8573, 0
      %v8731 = vsel %vm3895, %v8574, 0
      %v8734 = vsel %vm3895, %v8575, 0
      %v8737 = vsel %vm3895, %v8576, 0
      %v8740 = vsel %vm3895, %v8577, 0
      %v8743 = vsel %vm3895, %v8578, 0
      %v8746 = vsel %vm3895, %v8579, 0
      %v8749 = vsel %vm3895, %v8580, 0
      %v8752 = vsel %vm3895, %v8581, 0
      %v8755 = vsel %vm3895, %v8582, 0
      %v8758 = vsel %vm3895, %v8583, 0
      %v8761 = vsel %vm3895, %v8584, 0
      %v8764 = vsel %vm3895, %v8585, 0
      %v8767 = vsel %vm3895, %v8586, 0
      %v8770 = vsel %vm3895, %v8587, 0
      %v8773 = vsel %vm3895, %v8588, 0
      %v8776 = vsel %vm3895, %v8589, 0
      %v8779 = vsel %vm3895, %v8590, 0
      %v8782 = vsel %vm3895, %v8591, 0
      %v8785 = vsel %vm3895, %v8592, 0
      %v8788 = vsel %vm3895, %v8593, 0
      %v8791 = vsel %vm3895, %v8594, 0
      %v8794 = vsel %vm3895, %v8595, 0
      %8796 = vmatprep.subr.mxu0 0.0
      %v8797 = vand.u32 %v8596, 4294901760
      %8798 = vmatpush1.msra.mxu0 %v8797
      %8799 = vmatprep.subr.mxu0 0.0
      %8800 = vmatpush1.msra.mxu0 0.0
      %8801 = vmatprep.subr.mxu0 0.0
      %8802 = vmatpush1.msra.mxu0 0.0
      %8803 = vmatprep.subr.mxu0 0.0
      %8804 = vmatpush1.msra.mxu0 0.0
      %8805 = vmatprep.subr.mxu0 0.0
      %8806 = vmatpush1.msra.mxu0 0.0
      %8807 = vmatprep.subr.mxu0 0.0
      %8808 = vmatpush1.msra.mxu0 0.0
      %8809 = vmatprep.subr.mxu0 0.0
      %8810 = vmatpush1.msra.mxu0 0.0
      %8811 = vmatprep.subr.mxu0 0.0
      %8812 = vmatpush1.msra.mxu0 0.0
      %8813 = vmatprep.subr.mxu0 0.0
      %8814 = vmatpush1.msra.mxu0 0.0
      %8815 = vmatprep.subr.mxu0 0.0
      %8816 = vmatpush1.msra.mxu0 0.0
      %8817 = vmatprep.subr.mxu0 0.0
      %8818 = vmatpush1.msra.mxu0 0.0
      %8819 = vmatprep.subr.mxu0 0.0
      %8820 = vmatpush1.msra.mxu0 0.0
      %8821 = vmatprep.subr.mxu0 0.0
      %8822 = vmatpush1.msra.mxu0 0.0
      %8823 = vmatprep.subr.mxu0 0.0
      %8824 = vmatpush1.msra.mxu0 0.0
      %8825 = vmatprep.subr.mxu0 0.0
      %8826 = vmatpush1.msra.mxu0 0.0
      %8827 = vmatprep.subr.mxu0 0.0
      %8828 = vmatpush1.msra.mxu0 0.0
      %8829 = vmatprep.subr.mxu0 0.0
      %8830 = vmatpush1.msra.mxu0 0.0
      %8831 = vmatprep.subr.mxu0 0.0
      %8832 = vmatpush1.msra.mxu0 0.0
      %8833 = vmatprep.subr.mxu0 0.0
      %8834 = vmatpush1.msra.mxu0 0.0
      %8835 = vmatprep.subr.mxu0 0.0
      %8836 = vmatpush1.msra.mxu0 0.0
      %8837 = vmatprep.subr.mxu0 0.0
      %8838 = vmatpush1.msra.mxu0 0.0
      %8839 = vmatprep.subr.mxu0 0.0
      %8840 = vmatpush1.msra.mxu0 0.0
      %8841 = vmatprep.subr.mxu0 0.0
      %8842 = vmatpush1.msra.mxu0 0.0
      %8843 = vmatprep.subr.mxu0 0.0
      %8844 = vmatpush1.msra.mxu0 0.0
      %8845 = vmatprep.subr.mxu0 0.0
      %8846 = vmatpush1.msra.mxu0 0.0
      %8847 = vmatprep.subr.mxu0 0.0
      %8848 = vmatpush1.msra.mxu0 0.0
      %8849 = vmatprep.subr.mxu0 0.0
      %8850 = vmatpush1.msra.mxu0 0.0
      %8851 = vmatprep.subr.mxu0 0.0
      %8852 = vmatpush1.msra.mxu0 0.0
      %8853 = vmatprep.subr.mxu0 0.0
      %8854 = vmatpush1.msra.mxu0 0.0
      %8855 = vmatprep.subr.mxu0 0.0
      %8856 = vmatpush1.msra.mxu0 0.0
      %8857 = vmatprep.subr.mxu0 0.0
      %8858 = vmatpush1.msra.mxu0 0.0
      %8859 = vmatprep.subr.mxu0 0.0
      %8860 = vmatpush1.msra.mxu0 0.0
      %8861 = vmatprep.mubr.f32.mxu0 0.0
      %v8862 = vand.u32 %v8653, 4294901760
      %v8863 = vsub.f32 %v8653, %v8862
      %v8864 = vand.u32 %v8863, 4294901760
      %v8865 = vsub.f32 %v8863, %v8864
      %v8866 = vand.u32 %v8865, 4294901760
      %8867 = vmatmul.mubr.f32.gmra.mrb[0].mxu0 %v8866
      %v8868 = vpop.f32.mrb[0].mxu0
      %v8869 = vadd.f32 %v8650, %v8868
      %v8870 = vpop.f32.mrb[0].mxu0
      %8871 = vmatprep.mubr.f32.mxu0 0.0
      %v8872 = vand.u32 %v8656, 4294901760
      %v8873 = vsub.f32 %v8656, %v8872
      %v8874 = vand.u32 %v8873, 4294901760
      %v8875 = vsub.f32 %v8873, %v8874
      %v8876 = vand.u32 %v8875, 4294901760
      %8877 = vmatmul.mubr.f32.gmra.mrb[0].mxu0 %v8876
      %v8878 = vpop.f32.mrb[0].mxu0
      %v8879 = vadd.f32 %v8650, %v8878
      %v8880 = vpop.f32.mrb[0].mxu0
      %8881 = vmatprep.mubr.f32.mxu0 0.0
      %v8882 = vand.u32 %v8659, 4294901760
      %v8883 = vsub.f32 %v8659, %v8882
      %v8884 = vand.u32 %v8883, 4294901760
      %v8885 = vsub.f32 %v8883, %v8884
      %v8886 = vand.u32 %v8885, 4294901760
      %8887 = vmatmul.mubr.f32.gmra.mrb[0].mxu0 %v8886
      %v8888 = vpop.f32.mrb[0].mxu0
      %v8889 = vadd.f32 %v8650, %v8888
      %v8890 = vpop.f32.mrb[0].mxu0
      %8891 = vmatprep.mubr.f32.mxu0 0.0
      %v8892 = vand.u32 %v8662, 4294901760
      %v8893 = vsub.f32 %v8662, %v8892
      %v8894 = vand.u32 %v8893, 4294901760
      %v8895 = vsub.f32 %v8893, %v8894
      %v8896 = vand.u32 %v8895, 4294901760
      %8897 = vmatmul.mubr.f32.gmra.mrb[0].mxu0 %v8896
      %v8898 = vpop.f32.mrb[0].mxu0
      %v8899 = vadd.f32 %v8650, %v8898
      %v8900 = vpop.f32.mrb[0].mxu0
      %8901 = vmatprep.mubr.f32.mxu0 0.0
      %v8902 = vand.u32 %v8665, 4294901760
      %v8903 = vsub.f32 %v8665, %v8902
      %v8904 = vand.u32 %v8903, 4294901760
      %v8905 = vsub.f32 %v8903, %v8904
      %v8906 = vand.u32 %v8905, 4294901760
      %8907 = vmatmul.mubr.f32.gmra.mrb[0].mxu0 %v8906
      %v8908 = vpop.f32.mrb[0].mxu0
      %v8909 = vadd.f32 %v8650, %v8908
      %v8910 = vpop.f32.mrb[0].mxu0
      %8911 = vmatprep.mubr.f32.mxu0 0.0
      %v8912 = vand.u32 %v8668, 4294901760
      %v8913 = vsub.f32 %v8668, %v8912
      %v8914 = vand.u32 %v8913, 4294901760
      %v8915 = vsub.f32 %v8913, %v8914
      %v8916 = vand.u32 %v8915, 4294901760
      %8917 = vmatmul.mubr.f32.gmra.mrb[0].mxu0 %v8916
      %v8918 = vpop.f32.mrb[0].mxu0
      %v8919 = vadd.f32 %v8650, %v8918
      %v8920 = vpop.f32.mrb[0].mxu0
      %8921 = vmatprep.mubr.f32.mxu0 0.0
      %v8922 = vand.u32 %v8671, 4294901760
      %v8923 = vsub.f32 %v8671, %v8922
      %v8924 = vand.u32 %v8923, 4294901760
      %v8925 = vsub.f32 %v8923, %v8924
      %v8926 = vand.u32 %v8925, 4294901760
      %8927 = vmatmul.mubr.f32.gmra.mrb[0].mxu0 %v8926
      %v8928 = vpop.f32.mrb[0].mxu0
      %v8929 = vadd.f32 %v8650, %v8928
      %v8930 = vpop.f32.mrb[0].mxu0
      %8931 = vmatprep.mubr.f32.mxu0 0.0
      %v8932 = vand.u32 %v8674, 4294901760
      %v8933 = vsub.f32 %v8674, %v8932
      %v8934 = vand.u32 %v8933, 4294901760
      %v8935 = vsub.f32 %v8933, %v8934
      %v8936 = vand.u32 %v8935, 4294901760
      %8937 = vmatmul.mubr.f32.gmra.mrb[0].mxu0 %v8936
      %v8938 = vpop.f32.mrb[0].mxu0
      %v8939 = vadd.f32 %v8650, %v8938
      %v8940 = vpop.f32.mrb[0].mxu0
      %8941 = vmatprep.mubr.f32.mxu0 0.0
      %v8942 = vand.u32 %v8677, 4294901760
      %v8943 = vsub.f32 %v8677, %v8942
      %v8944 = vand.u32 %v8943, 4294901760
      %v8945 = vsub.f32 %v8943, %v8944
      %v8946 = vand.u32 %v8945, 4294901760
      %8947 = vmatmul.mubr.f32.gmra.mrb[0].mxu0 %v8946
      %v8948 = vpop.f32.mrb[0].mxu0
      %v8949 = vadd.f32 %v8650, %v8948
      %v8950 = vpop.f32.mrb[0].mxu0
      %8951 = vmatprep.mubr.f32.mxu0 0.0
      %v8952 = vand.u32 %v8680, 4294901760
      %v8953 = vsub.f32 %v8680, %v8952
      %v8954 = vand.u32 %v8953, 4294901760
      %v8955 = vsub.f32 %v8953, %v8954
      %v8956 = vand.u32 %v8955, 4294901760
      %8957 = vmatmul.mubr.f32.gmra.mrb[0].mxu0 %v8956
      %v8958 = vpop.f32.mrb[0].mxu0
      %v8959 = vadd.f32 %v8650, %v8958
      %v8960 = vpop.f32.mrb[0].mxu0
      %8961 = vmatprep.mubr.f32.mxu0 0.0
      %v8962 = vand.u32 %v8683, 4294901760
      %v8963 = vsub.f32 %v8683, %v8962
      %v8964 = vand.u32 %v8963, 4294901760
      %v8965 = vsub.f32 %v8963, %v8964
      %v8966 = vand.u32 %v8965, 4294901760
      %8967 = vmatmul.mubr.f32.gmra.mrb[0].mxu0 %v8966
      %v8968 = vpop.f32.mrb[0].mxu0
      %v8969 = vadd.f32 %v8650, %v8968
      %v8970 = vpop.f32.mrb[0].mxu0
      %8971 = vmatprep.mubr.f32.mxu0 0.0
      %v8972 = vand.u32 %v8686, 4294901760
      %v8973 = vsub.f32 %v8686, %v8972
      %v8974 = vand.u32 %v8973, 4294901760
      %v8975 = vsub.f32 %v8973, %v8974
      %v8976 = vand.u32 %v8975, 4294901760
      %8977 = vmatmul.mubr.f32.gmra.mrb[0].mxu0 %v8976
      %v8978 = vpop.f32.mrb[0].mxu0
      %v8979 = vadd.f32 %v8650, %v8978
      %v8980 = vpop.f32.mrb[0].mxu0
      %8981 = vmatprep.mubr.f32.mxu0 0.0
      %v8982 = vand.u32 %v8689, 4294901760
      %v8983 = vsub.f32 %v8689, %v8982
      %v8984 = vand.u32 %v8983, 4294901760
      %v8985 = vsub.f32 %v8983, %v8984
      %v8986 = vand.u32 %v8985, 4294901760
      %8987 = vmatmul.mubr.f32.gmra.mrb[0].mxu0 %v8986
      %v8988 = vpop.f32.mrb[0].mxu0
      %v8989 = vadd.f32 %v8650, %v8988
      %v8990 = vpop.f32.mrb[0].mxu0
      %8991 = vmatprep.mubr.f32.mxu0 0.0
      %v8992 = vand.u32 %v8692, 4294901760
      %v8993 = vsub.f32 %v8692, %v8992
      %v8994 = vand.u32 %v8993, 4294901760
      %v8995 = vsub.f32 %v8993, %v8994
      %v8996 = vand.u32 %v8995, 4294901760
      %8997 = vmatmul.mubr.f32.gmra.mrb[0].mxu0 %v8996
      %v8998 = vpop.f32.mrb[0].mxu0
      %v8999 = vadd.f32 %v8650, %v8998
      %v9000 = vpop.f32.mrb[0].mxu0
      %9001 = vmatprep.mubr.f32.mxu0 0.0
      %v9002 = vand.u32 %v8695, 4294901760
      %v9003 = vsub.f32 %v8695, %v9002
      %v9004 = vand.u32 %v9003, 4294901760
      %v9005 = vsub.f32 %v9003, %v9004
      %v9006 = vand.u32 %v9005, 4294901760
      %9007 = vmatmul.mubr.f32.gmra.mrb[0].mxu0 %v9006
      %v9008 = vpop.f32.mrb[0].mxu0
      %v9009 = vadd.f32 %v8650, %v9008
      %v9010 = vpop.f32.mrb[0].mxu0
      %9011 = vmatprep.mubr.f32.mxu0 0.0
      %v9012 = vand.u32 %v8698, 4294901760
      %v9013 = vsub.f32 %v8698, %v9012
      %v9014 = vand.u32 %v9013, 4294901760
      %v9015 = vsub.f32 %v9013, %v9014
      %v9016 = vand.u32 %v9015, 4294901760
      %9017 = vmatmul.mubr.f32.gmra.mrb[0].mxu0 %v9016
      %v9018 = vpop.f32.mrb[0].mxu0
      %v9019 = vadd.f32 %v8650, %v9018
      %v9020 = vpop.f32.mrb[0].mxu0
      %9021 = vmatprep.mubr.f32.mxu0 0.0
      %v9022 = vand.u32 %v8701, 4294901760
      %v9023 = vsub.f32 %v8701, %v9022
      %v9024 = vand.u32 %v9023, 4294901760
      %v9025 = vsub.f32 %v9023, %v9024
      %v9026 = vand.u32 %v9025, 4294901760
      %9027 = vmatmul.mubr.f32.gmra.mrb[0].mxu0 %v9026
      %v9028 = vpop.f32.mrb[0].mxu0
      %v9029 = vadd.f32 %v8650, %v9028
      %v9030 = vpop.f32.mrb[0].mxu0
      %9031 = vmatprep.mubr.f32.mxu0 0.0
      %v9032 = vand.u32 %v8704, 4294901760
      %v9033 = vsub.f32 %v8704, %v9032
      %v9034 = vand.u32 %v9033, 4294901760
      %v9035 = vsub.f32 %v9033, %v9034
      %v9036 = vand.u32 %v9035, 4294901760
      %9037 = vmatmul.mubr.f32.gmra.mrb[0].mxu0 %v9036
      %v9038 = vpop.f32.mrb[0].mxu0
      %v9039 = vadd.f32 %v8650, %v9038
      %v9040 = vpop.f32.mrb[0].mxu0
      %9041 = vmatprep.mubr.f32.mxu0 0.0
      %v9042 = vand.u32 %v8707, 4294901760
      %v9043 = vsub.f32 %v8707, %v9042
      %v9044 = vand.u32 %v9043, 4294901760
      %v9045 = vsub.f32 %v9043, %v9044
      %v9046 = vand.u32 %v9045, 4294901760
      %9047 = vmatmul.mubr.f32.gmra.mrb[0].mxu0 %v9046
      %v9048 = vpop.f32.mrb[0].mxu0
      %v9049 = vadd.f32 %v8650, %v9048
      %v9050 = vpop.f32.mrb[0].mxu0
      %9051 = vmatprep.mubr.f32.mxu0 0.0
      %v9052 = vand.u32 %v8710, 4294901760
      %v9053 = vsub.f32 %v8710, %v9052
      %v9054 = vand.u32 %v9053, 4294901760
      %v9055 = vsub.f32 %v9053, %v9054
      %v9056 = vand.u32 %v9055, 4294901760
      %9057 = vmatmul.mubr.f32.gmra.mrb[0].mxu0 %v9056
      %v9058 = vpop.f32.mrb[0].mxu0
      %v9059 = vadd.f32 %v8650, %v9058
      %v9060 = vpop.f32.mrb[0].mxu0
      %9061 = vmatprep.mubr.f32.mxu0 0.0
      %v9062 = vand.u32 %v8713, 4294901760
      %v9063 = vsub.f32 %v8713, %v9062
      %v9064 = vand.u32 %v9063, 4294901760
      %v9065 = vsub.f32 %v9063, %v9064
      %v9066 = vand.u32 %v9065, 4294901760
      %9067 = vmatmul.mubr.f32.gmra.mrb[0].mxu0 %v9066
      %v9068 = vpop.f32.mrb[0].mxu0
      %v9069 = vadd.f32 %v8650, %v9068
      %v9070 = vpop.f32.mrb[0].mxu0
      %9071 = vmatprep.mubr.f32.mxu0 0.0
      %v9072 = vand.u32 %v8716, 4294901760
      %v9073 = vsub.f32 %v8716, %v9072
      %v9074 = vand.u32 %v9073, 4294901760
      %v9075 = vsub.f32 %v9073, %v9074
      %v9076 = vand.u32 %v9075, 4294901760
      %9077 = vmatmul.mubr.f32.gmra.mrb[0].mxu0 %v9076
      %v9078 = vpop.f32.mrb[0].mxu0
      %v9079 = vadd.f32 %v8650, %v9078
      %v9080 = vpop.f32.mrb[0].mxu0
      %9081 = vmatprep.mubr.f32.mxu0 0.0
      %v9082 = vand.u32 %v8719, 4294901760
      %v9083 = vsub.f32 %v8719, %v9082
      %v9084 = vand.u32 %v9083, 4294901760
      %v9085 = vsub.f32 %v9083, %v9084
      %v9086 = vand.u32 %v9085, 4294901760
      %9087 = vmatmul.mubr.f32.gmra.mrb[0].mxu0 %v9086
      %v9088 = vpop.f32.mrb[0].mxu0
      %v9089 = vadd.f32 %v8650, %v9088
      %v9090 = vpop.f32.mrb[0].mxu0
      %9091 = vmatprep.mubr.f32.mxu0 0.0
      %v9092 = vand.u32 %v8722, 4294901760
      %v9093 = vsub.f32 %v8722, %v9092
      %v9094 = vand.u32 %v9093, 4294901760
      %v9095 = vsub.f32 %v9093, %v9094
      %v9096 = vand.u32 %v9095, 4294901760
      %9097 = vmatmul.mubr.f32.gmra.mrb[0].mxu0 %v9096
      %v9098 = vpop.f32.mrb[0].mxu0
      %v9099 = vadd.f32 %v8650, %v9098
      %v9100 = vpop.f32.mrb[0].mxu0
      %9101 = vmatprep.mubr.f32.mxu0 0.0
      %v9102 = vand.u32 %v8725, 4294901760
      %v9103 = vsub.f32 %v8725, %v9102
      %v9104 = vand.u32 %v9103, 4294901760
      %v9105 = vsub.f32 %v9103, %v9104
      %v9106 = vand.u32 %v9105, 4294901760
      %9107 = vmatmul.mubr.f32.gmra.mrb[0].mxu0 %v9106
      %v9108 = vpop.f32.mrb[0].mxu0
      %v9109 = vadd.f32 %v8650, %v9108
      %v9110 = vpop.f32.mrb[0].mxu0
      %9111 = vmatprep.mubr.f32.mxu0 0.0
      %v9112 = vand.u32 %v8728, 4294901760
      %v9113 = vsub.f32 %v8728, %v9112
      %v9114 = vand.u32 %v9113, 4294901760
      %v9115 = vsub.f32 %v9113, %v9114
      %v9116 = vand.u32 %v9115, 4294901760
      %9117 = vmatmul.mubr.f32.gmra.mrb[0].mxu0 %v9116
      %v9118 = vpop.f32.mrb[0].mxu0
      %v9119 = vadd.f32 %v8650, %v9118
      %v9120 = vpop.f32.mrb[0].mxu0
      %9121 = vmatprep.mubr.f32.mxu0 0.0
      %v9122 = vand.u32 %v8731, 4294901760
      %v9123 = vsub.f32 %v8731, %v9122
      %v9124 = vand.u32 %v9123, 4294901760
      %v9125 = vsub.f32 %v9123, %v9124
      %v9126 = vand.u32 %v9125, 4294901760
      %9127 = vmatmul.mubr.f32.gmra.mrb[0].mxu0 %v9126
      %v9128 = vpop.f32.mrb[0].mxu0
      %v9129 = vadd.f32 %v8650, %v9128
      %v9130 = vpop.f32.mrb[0].mxu0
      %9131 = vmatprep.mubr.f32.mxu0 0.0
      %v9132 = vand.u32 %v8734, 4294901760
      %v9133 = vsub.f32 %v8734, %v9132
      %v9134 = vand.u32 %v9133, 4294901760
      %v9135 = vsub.f32 %v9133, %v9134
      %v9136 = vand.u32 %v9135, 4294901760
      %9137 = vmatmul.mubr.f32.gmra.mrb[0].mxu0 %v9136
      %v9138 = vpop.f32.mrb[0].mxu0
      %v9139 = vadd.f32 %v8650, %v9138
      %v9140 = vpop.f32.mrb[0].mxu0
      %9141 = vmatprep.mubr.f32.mxu0 0.0
      %v9142 = vand.u32 %v8737, 4294901760
      %v9143 = vsub.f32 %v8737, %v9142
      %v9144 = vand.u32 %v9143, 4294901760
      %v9145 = vsub.f32 %v9143, %v9144
      %v9146 = vand.u32 %v9145, 4294901760
      %9147 = vmatmul.mubr.f32.gmra.mrb[0].mxu0 %v9146
      %v9148 = vpop.f32.mrb[0].mxu0
      %v9149 = vadd.f32 %v8650, %v9148
      %v9150 = vpop.f32.mrb[0].mxu0
      %9151 = vmatprep.mubr.f32.mxu0 0.0
      %v9152 = vand.u32 %v8740, 4294901760
      %v9153 = vsub.f32 %v8740, %v9152
      %v9154 = vand.u32 %v9153, 4294901760
      %v9155 = vsub.f32 %v9153, %v9154
      %v9156 = vand.u32 %v9155, 4294901760
      %9157 = vmatmul.mubr.f32.gmra.mrb[0].mxu0 %v9156
      %v9158 = vpop.f32.mrb[0].mxu0
      %v9159 = vadd.f32 %v8650, %v9158
      %v9160 = vpop.f32.mrb[0].mxu0
      %9161 = vmatprep.mubr.f32.mxu0 0.0
      %v9162 = vand.u32 %v8743, 4294901760
      %v9163 = vsub.f32 %v8743, %v9162
      %v9164 = vand.u32 %v9163, 4294901760
      %v9165 = vsub.f32 %v9163, %v9164
      %v9166 = vand.u32 %v9165, 4294901760
      %9167 = vmatmul.mubr.f32.gmra.mrb[0].mxu0 %v9166
      %v9168 = vpop.f32.mrb[0].mxu0
      %v9169 = vadd.f32 %v8650, %v9168
      %v9170 = vpop.f32.mrb[0].mxu0
      %9171 = vmatprep.mubr.f32.mxu0 0.0
      %v9172 = vand.u32 %v8746, 4294901760
      %v9173 = vsub.f32 %v8746, %v9172
      %v9174 = vand.u32 %v9173, 4294901760
      %v9175 = vsub.f32 %v9173, %v9174
      %v9176 = vand.u32 %v9175, 4294901760
      %9177 = vmatmul.mubr.f32.gmra.mrb[0].mxu0 %v9176
      %v9178 = vpop.f32.mrb[0].mxu0
      %v9179 = vadd.f32 %v8650, %v9178
      %v9180 = vpop.f32.mrb[0].mxu0
      %9181 = vmatprep.mubr.f32.mxu0 0.0
      %v9182 = vand.u32 %v8749, 4294901760
      %v9183 = vsub.f32 %v8749, %v9182
      %v9184 = vand.u32 %v9183, 4294901760
      %v9185 = vsub.f32 %v9183, %v9184
      %v9186 = vand.u32 %v9185, 4294901760
      %9187 = vmatmul.mubr.f32.gmra.mrb[0].mxu0 %v9186
      %v9188 = vpop.f32.mrb[0].mxu0
      %v9189 = vadd.f32 %v8650, %v9188
      %v9190 = vpop.f32.mrb[0].mxu0
      %9191 = vmatprep.mubr.f32.mxu0 0.0
      %v9192 = vand.u32 %v8752, 4294901760
      %v9193 = vsub.f32 %v8752, %v9192
      %v9194 = vand.u32 %v9193, 4294901760
      %v9195 = vsub.f32 %v9193, %v9194
      %v9196 = vand.u32 %v9195, 4294901760
      %9197 = vmatmul.mubr.f32.gmra.mrb[0].mxu0 %v9196
      %v9198 = vpop.f32.mrb[0].mxu0
      %v9199 = vadd.f32 %v8650, %v9198
      %v9200 = vpop.f32.mrb[0].mxu0
      %9201 = vmatprep.mubr.f32.mxu0 0.0
      %v9202 = vand.u32 %v8755, 4294901760
      %v9203 = vsub.f32 %v8755, %v9202
      %v9204 = vand.u32 %v9203, 4294901760
      %v9205 = vsub.f32 %v9203, %v9204
      %v9206 = vand.u32 %v9205, 4294901760
      %9207 = vmatmul.mubr.f32.gmra.mrb[0].mxu0 %v9206
      %v9208 = vpop.f32.mrb[0].mxu0
      %v9209 = vadd.f32 %v8650, %v9208
      %v9210 = vpop.f32.mrb[0].mxu0
      %9211 = vmatprep.mubr.f32.mxu0 0.0
      %v9212 = vand.u32 %v8758, 4294901760
      %v9213 = vsub.f32 %v8758, %v9212
      %v9214 = vand.u32 %v9213, 4294901760
      %v9215 = vsub.f32 %v9213, %v9214
      %v9216 = vand.u32 %v9215, 4294901760
      %9217 = vmatmul.mubr.f32.gmra.mrb[0].mxu0 %v9216
      %v9218 = vpop.f32.mrb[0].mxu0
      %v9219 = vadd.f32 %v8650, %v9218
      %v9220 = vpop.f32.mrb[0].mxu0
      %9221 = vmatprep.mubr.f32.mxu0 0.0
      %v9222 = vand.u32 %v8761, 4294901760
      %v9223 = vsub.f32 %v8761, %v9222
      %v9224 = vand.u32 %v9223, 4294901760
      %v9225 = vsub.f32 %v9223, %v9224
      %v9226 = vand.u32 %v9225, 4294901760
      %9227 = vmatmul.mubr.f32.gmra.mrb[0].mxu0 %v9226
      %v9228 = vpop.f32.mrb[0].mxu0
      %v9229 = vadd.f32 %v8650, %v9228
      %v9230 = vpop.f32.mrb[0].mxu0
      %9231 = vmatprep.mubr.f32.mxu0 0.0
      %v9232 = vand.u32 %v8764, 4294901760
      %v9233 = vsub.f32 %v8764, %v9232
      %v9234 = vand.u32 %v9233, 4294901760
      %v9235 = vsub.f32 %v9233, %v9234
      %v9236 = vand.u32 %v9235, 4294901760
      %9237 = vmatmul.mubr.f32.gmra.mrb[0].mxu0 %v9236
      %v9238 = vpop.f32.mrb[0].mxu0
      %v9239 = vadd.f32 %v8650, %v9238
      %v9240 = vpop.f32.mrb[0].mxu0
      %9241 = vmatprep.mubr.f32.mxu0 0.0
      %v9242 = vand.u32 %v8767, 4294901760
      %v9243 = vsub.f32 %v8767, %v9242
      %v9244 = vand.u32 %v9243, 4294901760
      %v9245 = vsub.f32 %v9243, %v9244
      %v9246 = vand.u32 %v9245, 4294901760
      %9247 = vmatmul.mubr.f32.gmra.mrb[0].mxu0 %v9246
      %v9248 = vpop.f32.mrb[0].mxu0
      %v9249 = vadd.f32 %v8650, %v9248
      %v9250 = vpop.f32.mrb[0].mxu0
      %9251 = vmatprep.mubr.f32.mxu0 0.0
      %v9252 = vand.u32 %v8770, 4294901760
      %v9253 = vsub.f32 %v8770, %v9252
      %v9254 = vand.u32 %v9253, 4294901760
      %v9255 = vsub.f32 %v9253, %v9254
      %v9256 = vand.u32 %v9255, 4294901760
      %9257 = vmatmul.mubr.f32.gmra.mrb[0].mxu0 %v9256
      %v9258 = vpop.f32.mrb[0].mxu0
      %v9259 = vadd.f32 %v8650, %v9258
      %v9260 = vpop.f32.mrb[0].mxu0
      %9261 = vmatprep.mubr.f32.mxu0 0.0
      %v9262 = vand.u32 %v8773, 4294901760
      %v9263 = vsub.f32 %v8773, %v9262
      %v9264 = vand.u32 %v9263, 4294901760
      %v9265 = vsub.f32 %v9263, %v9264
      %v9266 = vand.u32 %v9265, 4294901760
      %9267 = vmatmul.mubr.f32.gmra.mrb[0].mxu0 %v9266
      %v9268 = vpop.f32.mrb[0].mxu0
      %v9269 = vadd.f32 %v8650, %v9268
      %v9270 = vpop.f32.mrb[0].mxu0
      %9271 = vmatprep.mubr.f32.mxu0 0.0
      %v9272 = vand.u32 %v8776, 4294901760
      %v9273 = vsub.f32 %v8776, %v9272
      %v9274 = vand.u32 %v9273, 4294901760
      %v9275 = vsub.f32 %v9273, %v9274
      %v9276 = vand.u32 %v9275, 4294901760
      %9277 = vmatmul.mubr.f32.gmra.mrb[0].mxu0 %v9276
      %v9278 = vpop.f32.mrb[0].mxu0
      %v9279 = vadd.f32 %v8650, %v9278
      %v9280 = vpop.f32.mrb[0].mxu0
      %9281 = vmatprep.mubr.f32.mxu0 0.0
      %v9282 = vand.u32 %v8779, 4294901760
      %v9283 = vsub.f32 %v8779, %v9282
      %v9284 = vand.u32 %v9283, 4294901760
      %v9285 = vsub.f32 %v9283, %v9284
      %v9286 = vand.u32 %v9285, 4294901760
      %9287 = vmatmul.mubr.f32.gmra.mrb[0].mxu0 %v9286
      %v9288 = vpop.f32.mrb[0].mxu0
      %v9289 = vadd.f32 %v8650, %v9288
      %v9290 = vpop.f32.mrb[0].mxu0
      %9291 = vmatprep.mubr.f32.mxu0 0.0
      %v9292 = vand.u32 %v8782, 4294901760
      %v9293 = vsub.f32 %v8782, %v9292
      %v9294 = vand.u32 %v9293, 4294901760
      %v9295 = vsub.f32 %v9293, %v9294
      %v9296 = vand.u32 %v9295, 4294901760
      %9297 = vmatmul.mubr.f32.gmra.mrb[0].mxu0 %v9296
      %v9298 = vpop.f32.mrb[0].mxu0
      %v9299 = vadd.f32 %v8650, %v9298
      %v9300 = vpop.f32.mrb[0].mxu0
      %9301 = vmatprep.mubr.f32.mxu0 0.0
      %v9302 = vand.u32 %v8785, 4294901760
      %v9303 = vsub.f32 %v8785, %v9302
      %v9304 = vand.u32 %v9303, 4294901760
      %v9305 = vsub.f32 %v9303, %v9304
      %v9306 = vand.u32 %v9305, 4294901760
      %9307 = vmatmul.mubr.f32.gmra.mrb[0].mxu0 %v9306
      %v9308 = vpop.f32.mrb[0].mxu0
      %v9309 = vadd.f32 %v8650, %v9308
      %v9310 = vpop.f32.mrb[0].mxu0
      %9311 = vmatprep.mubr.f32.mxu0 0.0
      %v9312 = vand.u32 %v8788, 4294901760
      %v9313 = vsub.f32 %v8788, %v9312
      %v9314 = vand.u32 %v9313, 4294901760
      %v9315 = vsub.f32 %v9313, %v9314
      %v9316 = vand.u32 %v9315, 4294901760
      %9317 = vmatmul.mubr.f32.gmra.mrb[0].mxu0 %v9316
      %v9318 = vpop.f32.mrb[0].mxu0
      %v9319 = vadd.f32 %v8650, %v9318
      %v9320 = vpop.f32.mrb[0].mxu0
      %9321 = vmatprep.mubr.f32.mxu0 0.0
      %v9322 = vand.u32 %v8791, 4294901760
      %v9323 = vsub.f32 %v8791, %v9322
      %v9324 = vand.u32 %v9323, 4294901760
      %v9325 = vsub.f32 %v9323, %v9324
      %v9326 = vand.u32 %v9325, 4294901760
      %9327 = vmatmul.mubr.f32.gmra.mrb[0].mxu0 %v9326
      %v9328 = vpop.f32.mrb[0].mxu0
      %v9329 = vadd.f32 %v8650, %v9328
      %v9330 = vpop.f32.mrb[0].mxu0
      %9331 = vmatprep.mubr.f32.mxu0 0.0
      %v9332 = vand.u32 %v8794, 4294901760
      %v9333 = vsub.f32 %v8794, %v9332
      %v9334 = vand.u32 %v9333, 4294901760
      %v9335 = vsub.f32 %v9333, %v9334
      %v9336 = vand.u32 %v9335, 4294901760
      %9337 = vmatmul.mubr.f32.gmra.mrb[0].mxu0 %v9336
      %v9338 = vpop.f32.mrb[0].mxu0
      %v9339 = vadd.f32 %v8650, %v9338
      %v9340 = vpop.f32.mrb[0].mxu0
      %9341 = vdwg.mxu0
      %9342 = vmatprep.subr.mxu0 0.0
      %v9343 = vand.u32 %v8596, 4294901760
      %v9344 = vsub.f32 %v8596, %v9343
      %v9345 = vand.u32 %v9344, 4294901760
      %v9346 = vsub.f32 %v9344, %v9345
      %v9347 = vand.u32 %v9346, 4294901760
      %9348 = vmatpush1.msra.mxu0 %v9347
      %9349 = vmatprep.subr.mxu0 0.0
      %9350 = vmatpush1.msra.mxu0 0.0
      %9351 = vmatprep.subr.mxu0 0.0
      %9352 = vmatpush1.msra.mxu0 0.0
      %9353 = vmatprep.subr.mxu0 0.0
      %9354 = vmatpush1.msra.mxu0 0.0
      %9355 = vmatprep.subr.mxu0 0.0
      %9356 = vmatpush1.msra.mxu0 0.0
      %9357 = vmatprep.subr.mxu0 0.0
      %9358 = vmatpush1.msra.mxu0 0.0
      %9359 = vmatprep.subr.mxu0 0.0
      %9360 = vmatpush1.msra.mxu0 0.0
      %9361 = vmatprep.subr.mxu0 0.0
      %9362 = vmatpush1.msra.mxu0 0.0
      %9363 = vmatprep.subr.mxu0 0.0
      %9364 = vmatpush1.msra.mxu0 0.0
      %9365 = vmatprep.subr.mxu0 0.0
      %9366 = vmatpush1.msra.mxu0 0.0
      %9367 = vmatprep.subr.mxu0 0.0
      %9368 = vmatpush1.msra.mxu0 0.0
      %9369 = vmatprep.subr.mxu0 0.0
      %9370 = vmatpush1.msra.mxu0 0.0
      %9371 = vmatprep.subr.mxu0 0.0
      %9372 = vmatpush1.msra.mxu0 0.0
      %9373 = vmatprep.subr.mxu0 0.0
      %9374 = vmatpush1.msra.mxu0 0.0
      %9375 = vmatprep.subr.mxu0 0.0
      %9376 = vmatpush1.msra.mxu0 0.0
      %9377 = vmatprep.subr.mxu0 0.0
      %9378 = vmatpush1.msra.mxu0 0.0
      %9379 = vmatprep.subr.mxu0 0.0
      %9380 = vmatpush1.msra.mxu0 0.0
      %9381 = vmatprep.subr.mxu0 0.0
      %9382 = vmatpush1.msra.mxu0 0.0
      %9383 = vmatprep.subr.mxu0 0.0
      %9384 = vmatpush1.msra.mxu0 0.0
      %9385 = vmatprep.subr.mxu0 0.0
      %9386 = vmatpush1.msra.mxu0 0.0
      %9387 = vmatprep.subr.mxu0 0.0
      %9388 = vmatpush1.msra.mxu0 0.0
      %9389 = vmatprep.subr.mxu0 0.0
      %9390 = vmatpush1.msra.mxu0 0.0
      %9391 = vmatprep.subr.mxu0 0.0
      %9392 = vmatpush1.msra.mxu0 0.0
      %9393 = vmatprep.subr.mxu0 0.0
      %9394 = vmatpush1.msra.mxu0 0.0
      %9395 = vmatprep.subr.mxu0 0.0
      %9396 = vmatpush1.msra.mxu0 0.0
      %9397 = vmatprep.subr.mxu0 0.0
      %9398 = vmatpush1.msra.mxu0 0.0
      %9399 = vmatprep.subr.mxu0 0.0
      %9400 = vmatpush1.msra.mxu0 0.0
      %9401 = vmatprep.subr.mxu0 0.0
      %9402 = vmatpush1.msra.mxu0 0.0
      %9403 = vmatprep.subr.mxu0 0.0
      %9404 = vmatpush1.msra.mxu0 0.0
      %9405 = vmatprep.subr.mxu0 0.0
      %9406 = vmatpush1.msra.mxu0 0.0
      %9407 = vmatprep.subr.mxu0 0.0
      %9408 = vmatpush1.msra.mxu0 0.0
      %9409 = vmatprep.subr.mxu0 0.0
      %9410 = vmatpush1.msra.mxu0 0.0
      %9411 = vmatprep.mubr.f32.mxu0 0.0
      %v9412 = vand.u32 %v8653, 4294901760
      %9413 = vmatmul.mubr.f32.gmra.mrb[0].mxu0 %v9412
      %v9414 = vpop.f32.mrb[0].mxu0
      %v9415 = vadd.f32 %v8869, %v9414
      %v9416 = vpop.f32.mrb[0].mxu0
      %9417 = vmatprep.mubr.f32.mxu0 0.0
      %v9418 = vand.u32 %v8656, 4294901760
      %9419 = vmatmul.mubr.f32.gmra.mrb[0].mxu0 %v9418
      %v9420 = vpop.f32.mrb[0].mxu0
      %v9421 = vadd.f32 %v8879, %v9420
      %v9422 = vpop.f32.mrb[0].mxu0
      %9423 = vmatprep.mubr.f32.mxu0 0.0
      %v9424 = vand.u32 %v8659, 4294901760
      %9425 = vmatmul.mubr.f32.gmra.mrb[0].mxu0 %v9424
      %v9426 = vpop.f32.mrb[0].mxu0
      %v9427 = vadd.f32 %v8889, %v9426
      %v9428 = vpop.f32.mrb[0].mxu0
      %9429 = vmatprep.mubr.f32.mxu0 0.0
      %v9430 = vand.u32 %v8662, 4294901760
      %9431 = vmatmul.mubr.f32.gmra.mrb[0].mxu0 %v9430
      %v9432 = vpop.f32.mrb[0].mxu0
      %v9433 = vadd.f32 %v8899, %v9432
      %v9434 = vpop.f32.mrb[0].mxu0
      %9435 = vmatprep.mubr.f32.mxu0 0.0
      %v9436 = vand.u32 %v8665, 4294901760
      %9437 = vmatmul.mubr.f32.gmra.mrb[0].mxu0 %v9436
      %v9438 = vpop.f32.mrb[0].mxu0
      %v9439 = vadd.f32 %v8909, %v9438
      %v9440 = vpop.f32.mrb[0].mxu0
      %9441 = vmatprep.mubr.f32.mxu0 0.0
      %v9442 = vand.u32 %v8668, 4294901760
      %9443 = vmatmul.mubr.f32.gmra.mrb[0].mxu0 %v9442
      %v9444 = vpop.f32.mrb[0].mxu0
      %v9445 = vadd.f32 %v8919, %v9444
      %v9446 = vpop.f32.mrb[0].mxu0
      %9447 = vmatprep.mubr.f32.mxu0 0.0
      %v9448 = vand.u32 %v8671, 4294901760
      %9449 = vmatmul.mubr.f32.gmra.mrb[0].mxu0 %v9448
      %v9450 = vpop.f32.mrb[0].mxu0
      %v9451 = vadd.f32 %v8929, %v9450
      %v9452 = vpop.f32.mrb[0].mxu0
      %9453 = vmatprep.mubr.f32.mxu0 0.0
      %v9454 = vand.u32 %v8674, 4294901760
      %9455 = vmatmul.mubr.f32.gmra.mrb[0].mxu0 %v9454
      %v9456 = vpop.f32.mrb[0].mxu0
      %v9457 = vadd.f32 %v8939, %v9456
      %v9458 = vpop.f32.mrb[0].mxu0
      %9459 = vmatprep.mubr.f32.mxu0 0.0
      %v9460 = vand.u32 %v8677, 4294901760
      %9461 = vmatmul.mubr.f32.gmra.mrb[0].mxu0 %v9460
      %v9462 = vpop.f32.mrb[0].mxu0
      %v9463 = vadd.f32 %v8949, %v9462
      %v9464 = vpop.f32.mrb[0].mxu0
      %9465 = vmatprep.mubr.f32.mxu0 0.0
      %v9466 = vand.u32 %v8680, 4294901760
      %9467 = vmatmul.mubr.f32.gmra.mrb[0].mxu0 %v9466
      %v9468 = vpop.f32.mrb[0].mxu0
      %v9469 = vadd.f32 %v8959, %v9468
      %v9470 = vpop.f32.mrb[0].mxu0
      %9471 = vmatprep.mubr.f32.mxu0 0.0
      %v9472 = vand.u32 %v8683, 4294901760
      %9473 = vmatmul.mubr.f32.gmra.mrb[0].mxu0 %v9472
      %v9474 = vpop.f32.mrb[0].mxu0
      %v9475 = vadd.f32 %v8969, %v9474
      %v9476 = vpop.f32.mrb[0].mxu0
      %9477 = vmatprep.mubr.f32.mxu0 0.0
      %v9478 = vand.u32 %v8686, 4294901760
      %9479 = vmatmul.mubr.f32.gmra.mrb[0].mxu0 %v9478
      %v9480 = vpop.f32.mrb[0].mxu0
      %v9481 = vadd.f32 %v8979, %v9480
      %v9482 = vpop.f32.mrb[0].mxu0
      %9483 = vmatprep.mubr.f32.mxu0 0.0
      %v9484 = vand.u32 %v8689, 4294901760
      %9485 = vmatmul.mubr.f32.gmra.mrb[0].mxu0 %v9484
      %v9486 = vpop.f32.mrb[0].mxu0
      %v9487 = vadd.f32 %v8989, %v9486
      %v9488 = vpop.f32.mrb[0].mxu0
      %9489 = vmatprep.mubr.f32.mxu0 0.0
      %v9490 = vand.u32 %v8692, 4294901760
      %9491 = vmatmul.mubr.f32.gmra.mrb[0].mxu0 %v9490
      %v9492 = vpop.f32.mrb[0].mxu0
      %v9493 = vadd.f32 %v8999, %v9492
      %v9494 = vpop.f32.mrb[0].mxu0
      %9495 = vmatprep.mubr.f32.mxu0 0.0
      %v9496 = vand.u32 %v8695, 4294901760
      %9497 = vmatmul.mubr.f32.gmra.mrb[0].mxu0 %v9496
      %v9498 = vpop.f32.mrb[0].mxu0
      %v9499 = vadd.f32 %v9009, %v9498
      %v9500 = vpop.f32.mrb[0].mxu0
      %9501 = vmatprep.mubr.f32.mxu0 0.0
      %v9502 = vand.u32 %v8698, 4294901760
      %9503 = vmatmul.mubr.f32.gmra.mrb[0].mxu0 %v9502
      %v9504 = vpop.f32.mrb[0].mxu0
      %v9505 = vadd.f32 %v9019, %v9504
      %v9506 = vpop.f32.mrb[0].mxu0
      %9507 = vmatprep.mubr.f32.mxu0 0.0
      %v9508 = vand.u32 %v8701, 4294901760
      %9509 = vmatmul.mubr.f32.gmra.mrb[0].mxu0 %v9508
      %v9510 = vpop.f32.mrb[0].mxu0
      %v9511 = vadd.f32 %v9029, %v9510
      %v9512 = vpop.f32.mrb[0].mxu0
      %9513 = vmatprep.mubr.f32.mxu0 0.0
      %v9514 = vand.u32 %v8704, 4294901760
      %9515 = vmatmul.mubr.f32.gmra.mrb[0].mxu0 %v9514
      %v9516 = vpop.f32.mrb[0].mxu0
      %v9517 = vadd.f32 %v9039, %v9516
      %v9518 = vpop.f32.mrb[0].mxu0
      %9519 = vmatprep.mubr.f32.mxu0 0.0
      %v9520 = vand.u32 %v8707, 4294901760
      %9521 = vmatmul.mubr.f32.gmra.mrb[0].mxu0 %v9520
      %v9522 = vpop.f32.mrb[0].mxu0
      %v9523 = vadd.f32 %v9049, %v9522
      %v9524 = vpop.f32.mrb[0].mxu0
      %9525 = vmatprep.mubr.f32.mxu0 0.0
      %v9526 = vand.u32 %v8710, 4294901760
      %9527 = vmatmul.mubr.f32.gmra.mrb[0].mxu0 %v9526
      %v9528 = vpop.f32.mrb[0].mxu0
      %v9529 = vadd.f32 %v9059, %v9528
      %v9530 = vpop.f32.mrb[0].mxu0
      %9531 = vmatprep.mubr.f32.mxu0 0.0
      %v9532 = vand.u32 %v8713, 4294901760
      %9533 = vmatmul.mubr.f32.gmra.mrb[0].mxu0 %v9532
      %v9534 = vpop.f32.mrb[0].mxu0
      %v9535 = vadd.f32 %v9069, %v9534
      %v9536 = vpop.f32.mrb[0].mxu0
      %9537 = vmatprep.mubr.f32.mxu0 0.0
      %v9538 = vand.u32 %v8716, 4294901760
      %9539 = vmatmul.mubr.f32.gmra.mrb[0].mxu0 %v9538
      %v9540 = vpop.f32.mrb[0].mxu0
      %v9541 = vadd.f32 %v9079, %v9540
      %v9542 = vpop.f32.mrb[0].mxu0
      %9543 = vmatprep.mubr.f32.mxu0 0.0
      %v9544 = vand.u32 %v8719, 4294901760
      %9545 = vmatmul.mubr.f32.gmra.mrb[0].mxu0 %v9544
      %v9546 = vpop.f32.mrb[0].mxu0
      %v9547 = vadd.f32 %v9089, %v9546
      %v9548 = vpop.f32.mrb[0].mxu0
      %9549 = vmatprep.mubr.f32.mxu0 0.0
      %v9550 = vand.u32 %v8722, 4294901760
      %9551 = vmatmul.mubr.f32.gmra.mrb[0].mxu0 %v9550
      %v9552 = vpop.f32.mrb[0].mxu0
      %v9553 = vadd.f32 %v9099, %v9552
      %v9554 = vpop.f32.mrb[0].mxu0
      %9555 = vmatprep.mubr.f32.mxu0 0.0
      %v9556 = vand.u32 %v8725, 4294901760
      %9557 = vmatmul.mubr.f32.gmra.mrb[0].mxu0 %v9556
      %v9558 = vpop.f32.mrb[0].mxu0
      %v9559 = vadd.f32 %v9109, %v9558
      %v9560 = vpop.f32.mrb[0].mxu0
      %9561 = vmatprep.mubr.f32.mxu0 0.0
      %v9562 = vand.u32 %v8728, 4294901760
      %9563 = vmatmul.mubr.f32.gmra.mrb[0].mxu0 %v9562
      %v9564 = vpop.f32.mrb[0].mxu0
      %v9565 = vadd.f32 %v9119, %v9564
      %v9566 = vpop.f32.mrb[0].mxu0
      %9567 = vmatprep.mubr.f32.mxu0 0.0
      %v9568 = vand.u32 %v8731, 4294901760
      %9569 = vmatmul.mubr.f32.gmra.mrb[0].mxu0 %v9568
      %v9570 = vpop.f32.mrb[0].mxu0
      %v9571 = vadd.f32 %v9129, %v9570
      %v9572 = vpop.f32.mrb[0].mxu0
      %9573 = vmatprep.mubr.f32.mxu0 0.0
      %v9574 = vand.u32 %v8734, 4294901760
      %9575 = vmatmul.mubr.f32.gmra.mrb[0].mxu0 %v9574
      %v9576 = vpop.f32.mrb[0].mxu0
      %v9577 = vadd.f32 %v9139, %v9576
      %v9578 = vpop.f32.mrb[0].mxu0
      %9579 = vmatprep.mubr.f32.mxu0 0.0
      %v9580 = vand.u32 %v8737, 4294901760
      %9581 = vmatmul.mubr.f32.gmra.mrb[0].mxu0 %v9580
      %v9582 = vpop.f32.mrb[0].mxu0
      %v9583 = vadd.f32 %v9149, %v9582
      %v9584 = vpop.f32.mrb[0].mxu0
      %9585 = vmatprep.mubr.f32.mxu0 0.0
      %v9586 = vand.u32 %v8740, 4294901760
      %9587 = vmatmul.mubr.f32.gmra.mrb[0].mxu0 %v9586
      %v9588 = vpop.f32.mrb[0].mxu0
      %v9589 = vadd.f32 %v9159, %v9588
      %v9590 = vpop.f32.mrb[0].mxu0
      %9591 = vmatprep.mubr.f32.mxu0 0.0
      %v9592 = vand.u32 %v8743, 4294901760
      %9593 = vmatmul.mubr.f32.gmra.mrb[0].mxu0 %v9592
      %v9594 = vpop.f32.mrb[0].mxu0
      %v9595 = vadd.f32 %v9169, %v9594
      %v9596 = vpop.f32.mrb[0].mxu0
      %9597 = vmatprep.mubr.f32.mxu0 0.0
      %v9598 = vand.u32 %v8746, 4294901760
      %9599 = vmatmul.mubr.f32.gmra.mrb[0].mxu0 %v9598
      %v9600 = vpop.f32.mrb[0].mxu0
      %v9601 = vadd.f32 %v9179, %v9600
      %v9602 = vpop.f32.mrb[0].mxu0
      %9603 = vmatprep.mubr.f32.mxu0 0.0
      %v9604 = vand.u32 %v8749, 4294901760
      %9605 = vmatmul.mubr.f32.gmra.mrb[0].mxu0 %v9604
      %v9606 = vpop.f32.mrb[0].mxu0
      %v9607 = vadd.f32 %v9189, %v9606
      %v9608 = vpop.f32.mrb[0].mxu0
      %9609 = vmatprep.mubr.f32.mxu0 0.0
      %v9610 = vand.u32 %v8752, 4294901760
      %9611 = vmatmul.mubr.f32.gmra.mrb[0].mxu0 %v9610
      %v9612 = vpop.f32.mrb[0].mxu0
      %v9613 = vadd.f32 %v9199, %v9612
      %v9614 = vpop.f32.mrb[0].mxu0
      %9615 = vmatprep.mubr.f32.mxu0 0.0
      %v9616 = vand.u32 %v8755, 4294901760
      %9617 = vmatmul.mubr.f32.gmra.mrb[0].mxu0 %v9616
      %v9618 = vpop.f32.mrb[0].mxu0
      %v9619 = vadd.f32 %v9209, %v9618
      %v9620 = vpop.f32.mrb[0].mxu0
      %9621 = vmatprep.mubr.f32.mxu0 0.0
      %v9622 = vand.u32 %v8758, 4294901760
      %9623 = vmatmul.mubr.f32.gmra.mrb[0].mxu0 %v9622
      %v9624 = vpop.f32.mrb[0].mxu0
      %v9625 = vadd.f32 %v9219, %v9624
      %v9626 = vpop.f32.mrb[0].mxu0
      %9627 = vmatprep.mubr.f32.mxu0 0.0
      %v9628 = vand.u32 %v8761, 4294901760
      %9629 = vmatmul.mubr.f32.gmra.mrb[0].mxu0 %v9628
      %v9630 = vpop.f32.mrb[0].mxu0
      %v9631 = vadd.f32 %v9229, %v9630
      %v9632 = vpop.f32.mrb[0].mxu0
      %9633 = vmatprep.mubr.f32.mxu0 0.0
      %v9634 = vand.u32 %v8764, 4294901760
      %9635 = vmatmul.mubr.f32.gmra.mrb[0].mxu0 %v9634
      %v9636 = vpop.f32.mrb[0].mxu0
      %v9637 = vadd.f32 %v9239, %v9636
      %v9638 = vpop.f32.mrb[0].mxu0
      %9639 = vmatprep.mubr.f32.mxu0 0.0
      %v9640 = vand.u32 %v8767, 4294901760
      %9641 = vmatmul.mubr.f32.gmra.mrb[0].mxu0 %v9640
      %v9642 = vpop.f32.mrb[0].mxu0
      %v9643 = vadd.f32 %v9249, %v9642
      %v9644 = vpop.f32.mrb[0].mxu0
      %9645 = vmatprep.mubr.f32.mxu0 0.0
      %v9646 = vand.u32 %v8770, 4294901760
      %9647 = vmatmul.mubr.f32.gmra.mrb[0].mxu0 %v9646
      %v9648 = vpop.f32.mrb[0].mxu0
      %v9649 = vadd.f32 %v9259, %v9648
      %v9650 = vpop.f32.mrb[0].mxu0
      %9651 = vmatprep.mubr.f32.mxu0 0.0
      %v9652 = vand.u32 %v8773, 4294901760
      %9653 = vmatmul.mubr.f32.gmra.mrb[0].mxu0 %v9652
      %v9654 = vpop.f32.mrb[0].mxu0
      %v9655 = vadd.f32 %v9269, %v9654
      %v9656 = vpop.f32.mrb[0].mxu0
      %9657 = vmatprep.mubr.f32.mxu0 0.0
      %v9658 = vand.u32 %v8776, 4294901760
      %9659 = vmatmul.mubr.f32.gmra.mrb[0].mxu0 %v9658
      %v9660 = vpop.f32.mrb[0].mxu0
      %v9661 = vadd.f32 %v9279, %v9660
      %v9662 = vpop.f32.mrb[0].mxu0
      %9663 = vmatprep.mubr.f32.mxu0 0.0
      %v9664 = vand.u32 %v8779, 4294901760
      %9665 = vmatmul.mubr.f32.gmra.mrb[0].mxu0 %v9664
      %v9666 = vpop.f32.mrb[0].mxu0
      %v9667 = vadd.f32 %v9289, %v9666
      %v9668 = vpop.f32.mrb[0].mxu0
      %9669 = vmatprep.mubr.f32.mxu0 0.0
      %v9670 = vand.u32 %v8782, 4294901760
      %9671 = vmatmul.mubr.f32.gmra.mrb[0].mxu0 %v9670
      %v9672 = vpop.f32.mrb[0].mxu0
      %v9673 = vadd.f32 %v9299, %v9672
      %v9674 = vpop.f32.mrb[0].mxu0
      %9675 = vmatprep.mubr.f32.mxu0 0.0
      %v9676 = vand.u32 %v8785, 4294901760
      %9677 = vmatmul.mubr.f32.gmra.mrb[0].mxu0 %v9676
      %v9678 = vpop.f32.mrb[0].mxu0
      %v9679 = vadd.f32 %v9309, %v9678
      %v9680 = vpop.f32.mrb[0].mxu0
      %9681 = vmatprep.mubr.f32.mxu0 0.0
      %v9682 = vand.u32 %v8788, 4294901760
      %9683 = vmatmul.mubr.f32.gmra.mrb[0].mxu0 %v9682
      %v9684 = vpop.f32.mrb[0].mxu0
      %v9685 = vadd.f32 %v9319, %v9684
      %v9686 = vpop.f32.mrb[0].mxu0
      %9687 = vmatprep.mubr.f32.mxu0 0.0
      %v9688 = vand.u32 %v8791, 4294901760
      %9689 = vmatmul.mubr.f32.gmra.mrb[0].mxu0 %v9688
      %v9690 = vpop.f32.mrb[0].mxu0
      %v9691 = vadd.f32 %v9329, %v9690
      %v9692 = vpop.f32.mrb[0].mxu0
      %9693 = vmatprep.mubr.f32.mxu0 0.0
      %v9694 = vand.u32 %v8794, 4294901760
      %9695 = vmatmul.mubr.f32.gmra.mrb[0].mxu0 %v9694
      %v9696 = vpop.f32.mrb[0].mxu0
      %v9697 = vadd.f32 %v9339, %v9696
      %v9698 = vpop.f32.mrb[0].mxu0
      %9699 = vdwg.mxu0
      %9700 = vmatprep.subr.mxu0 0.0
      %v9701 = vand.u32 %v8596, 4294901760
      %v9702 = vsub.f32 %v8596, %v9701
      %9703 = vmatpush1.msra.mxu0 %v9702
      %9704 = vmatprep.subr.mxu0 0.0
      %9705 = vmatpush1.msra.mxu0 0.0
      %9706 = vmatprep.subr.mxu0 0.0
      %9707 = vmatpush1.msra.mxu0 0.0
      %9708 = vmatprep.subr.mxu0 0.0
      %9709 = vmatpush1.msra.mxu0 0.0
      %9710 = vmatprep.subr.mxu0 0.0
      %9711 = vmatpush1.msra.mxu0 0.0
      %9712 = vmatprep.subr.mxu0 0.0
      %9713 = vmatpush1.msra.mxu0 0.0
      %9714 = vmatprep.subr.mxu0 0.0
      %9715 = vmatpush1.msra.mxu0 0.0
      %9716 = vmatprep.subr.mxu0 0.0
      %9717 = vmatpush1.msra.mxu0 0.0
      %9718 = vmatprep.subr.mxu0 0.0
      %9719 = vmatpush1.msra.mxu0 0.0
      %9720 = vmatprep.subr.mxu0 0.0
      %9721 = vmatpush1.msra.mxu0 0.0
      %9722 = vmatprep.subr.mxu0 0.0
      %9723 = vmatpush1.msra.mxu0 0.0
      %9724 = vmatprep.subr.mxu0 0.0
      %9725 = vmatpush1.msra.mxu0 0.0
      %9726 = vmatprep.subr.mxu0 0.0
      %9727 = vmatpush1.msra.mxu0 0.0
      %9728 = vmatprep.subr.mxu0 0.0
      %9729 = vmatpush1.msra.mxu0 0.0
      %9730 = vmatprep.subr.mxu0 0.0
      %9731 = vmatpush1.msra.mxu0 0.0
      %9732 = vmatprep.subr.mxu0 0.0
      %9733 = vmatpush1.msra.mxu0 0.0
      %9734 = vmatprep.subr.mxu0 0.0
      %9735 = vmatpush1.msra.mxu0 0.0
      %9736 = vmatprep.subr.mxu0 0.0
      %9737 = vmatpush1.msra.mxu0 0.0
      %9738 = vmatprep.subr.mxu0 0.0
      %9739 = vmatpush1.msra.mxu0 0.0
      %9740 = vmatprep.subr.mxu0 0.0
      %9741 = vmatpush1.msra.mxu0 0.0
      %9742 = vmatprep.subr.mxu0 0.0
      %9743 = vmatpush1.msra.mxu0 0.0
      %9744 = vmatprep.subr.mxu0 0.0
      %9745 = vmatpush1.msra.mxu0 0.0
      %9746 = vmatprep.subr.mxu0 0.0
      %9747 = vmatpush1.msra.mxu0 0.0
      %9748 = vmatprep.subr.mxu0 0.0
      %9749 = vmatpush1.msra.mxu0 0.0
      %9750 = vmatprep.subr.mxu0 0.0
      %9751 = vmatpush1.msra.mxu0 0.0
      %9752 = vmatprep.subr.mxu0 0.0
      %9753 = vmatpush1.msra.mxu0 0.0
      %9754 = vmatprep.subr.mxu0 0.0
      %9755 = vmatpush1.msra.mxu0 0.0
      %9756 = vmatprep.subr.mxu0 0.0
      %9757 = vmatpush1.msra.mxu0 0.0
      %9758 = vmatprep.subr.mxu0 0.0
      %9759 = vmatpush1.msra.mxu0 0.0
      %9760 = vmatprep.subr.mxu0 0.0
      %9761 = vmatpush1.msra.mxu0 0.0
      %9762 = vmatprep.subr.mxu0 0.0
      %9763 = vmatpush1.msra.mxu0 0.0
      %9764 = vmatprep.subr.mxu0 0.0
      %9765 = vmatpush1.msra.mxu0 0.0
      %9766 = vmatprep.mubr.f32.mxu0 0.0
      %v9767 = vand.u32 %v8653, 4294901760
      %v9768 = vsub.f32 %v8653, %v9767
      %9769 = vmatmul.mubr.f32.gmra.mrb[0].mxu0 %v9768
      %v9770 = vpop.f32.mrb[0].mxu0
      %v9771 = vadd.f32 %v9415, %v9770
      %v9772 = vpop.f32.mrb[0].mxu0
      %9773 = vmatprep.mubr.f32.mxu0 0.0
      %v9774 = vand.u32 %v8656, 4294901760
      %v9775 = vsub.f32 %v8656, %v9774
      %9776 = vmatmul.mubr.f32.gmra.mrb[0].mxu0 %v9775
      %v9777 = vpop.f32.mrb[0].mxu0
      %v9778 = vadd.f32 %v9421, %v9777
      %v9779 = vpop.f32.mrb[0].mxu0
      %9780 = vmatprep.mubr.f32.mxu0 0.0
      %v9781 = vand.u32 %v8659, 4294901760
      %v9782 = vsub.f32 %v8659, %v9781
      %9783 = vmatmul.mubr.f32.gmra.mrb[0].mxu0 %v9782
      %v9784 = vpop.f32.mrb[0].mxu0
      %v9785 = vadd.f32 %v9427, %v9784
      %v9786 = vpop.f32.mrb[0].mxu0
      %9787 = vmatprep.mubr.f32.mxu0 0.0
      %v9788 = vand.u32 %v8662, 4294901760
      %v9789 = vsub.f32 %v8662, %v9788
      %9790 = vmatmul.mubr.f32.gmra.mrb[0].mxu0 %v9789
      %v9791 = vpop.f32.mrb[0].mxu0
      %v9792 = vadd.f32 %v9433, %v9791
      %v9793 = vpop.f32.mrb[0].mxu0
      %9794 = vmatprep.mubr.f32.mxu0 0.0
      %v9795 = vand.u32 %v8665, 4294901760
      %v9796 = vsub.f32 %v8665, %v9795
      %9797 = vmatmul.mubr.f32.gmra.mrb[0].mxu0 %v9796
      %v9798 = vpop.f32.mrb[0].mxu0
      %v9799 = vadd.f32 %v9439, %v9798
      %v9800 = vpop.f32.mrb[0].mxu0
      %9801 = vmatprep.mubr.f32.mxu0 0.0
      %v9802 = vand.u32 %v8668, 4294901760
      %v9803 = vsub.f32 %v8668, %v9802
      %9804 = vmatmul.mubr.f32.gmra.mrb[0].mxu0 %v9803
      %v9805 = vpop.f32.mrb[0].mxu0
      %v9806 = vadd.f32 %v9445, %v9805
      %v9807 = vpop.f32.mrb[0].mxu0
      %9808 = vmatprep.mubr.f32.mxu0 0.0
      %v9809 = vand.u32 %v8671, 4294901760
      %v9810 = vsub.f32 %v8671, %v9809
      %9811 = vmatmul.mubr.f32.gmra.mrb[0].mxu0 %v9810
      %v9812 = vpop.f32.mrb[0].mxu0
      %v9813 = vadd.f32 %v9451, %v9812
      %v9814 = vpop.f32.mrb[0].mxu0
      %9815 = vmatprep.mubr.f32.mxu0 0.0
      %v9816 = vand.u32 %v8674, 4294901760
      %v9817 = vsub.f32 %v8674, %v9816
      %9818 = vmatmul.mubr.f32.gmra.mrb[0].mxu0 %v9817
      %v9819 = vpop.f32.mrb[0].mxu0
      %v9820 = vadd.f32 %v9457, %v9819
      %v9821 = vpop.f32.mrb[0].mxu0
      %9822 = vmatprep.mubr.f32.mxu0 0.0
      %v9823 = vand.u32 %v8677, 4294901760
      %v9824 = vsub.f32 %v8677, %v9823
      %9825 = vmatmul.mubr.f32.gmra.mrb[0].mxu0 %v9824
      %v9826 = vpop.f32.mrb[0].mxu0
      %v9827 = vadd.f32 %v9463, %v9826
      %v9828 = vpop.f32.mrb[0].mxu0
      %9829 = vmatprep.mubr.f32.mxu0 0.0
      %v9830 = vand.u32 %v8680, 4294901760
      %v9831 = vsub.f32 %v8680, %v9830
      %9832 = vmatmul.mubr.f32.gmra.mrb[0].mxu0 %v9831
      %v9833 = vpop.f32.mrb[0].mxu0
      %v9834 = vadd.f32 %v9469, %v9833
      %v9835 = vpop.f32.mrb[0].mxu0
      %9836 = vmatprep.mubr.f32.mxu0 0.0
      %v9837 = vand.u32 %v8683, 4294901760
      %v9838 = vsub.f32 %v8683, %v9837
      %9839 = vmatmul.mubr.f32.gmra.mrb[0].mxu0 %v9838
      %v9840 = vpop.f32.mrb[0].mxu0
      %v9841 = vadd.f32 %v9475, %v9840
      %v9842 = vpop.f32.mrb[0].mxu0
      %9843 = vmatprep.mubr.f32.mxu0 0.0
      %v9844 = vand.u32 %v8686, 4294901760
      %v9845 = vsub.f32 %v8686, %v9844
      %9846 = vmatmul.mubr.f32.gmra.mrb[0].mxu0 %v9845
      %v9847 = vpop.f32.mrb[0].mxu0
      %v9848 = vadd.f32 %v9481, %v9847
      %v9849 = vpop.f32.mrb[0].mxu0
      %9850 = vmatprep.mubr.f32.mxu0 0.0
      %v9851 = vand.u32 %v8689, 4294901760
      %v9852 = vsub.f32 %v8689, %v9851
      %9853 = vmatmul.mubr.f32.gmra.mrb[0].mxu0 %v9852
      %v9854 = vpop.f32.mrb[0].mxu0
      %v9855 = vadd.f32 %v9487, %v9854
      %v9856 = vpop.f32.mrb[0].mxu0
      %9857 = vmatprep.mubr.f32.mxu0 0.0
      %v9858 = vand.u32 %v8692, 4294901760
      %v9859 = vsub.f32 %v8692, %v9858
      %9860 = vmatmul.mubr.f32.gmra.mrb[0].mxu0 %v9859
      %v9861 = vpop.f32.mrb[0].mxu0
      %v9862 = vadd.f32 %v9493, %v9861
      %v9863 = vpop.f32.mrb[0].mxu0
      %9864 = vmatprep.mubr.f32.mxu0 0.0
      %v9865 = vand.u32 %v8695, 4294901760
      %v9866 = vsub.f32 %v8695, %v9865
      %9867 = vmatmul.mubr.f32.gmra.mrb[0].mxu0 %v9866
      %v9868 = vpop.f32.mrb[0].mxu0
      %v9869 = vadd.f32 %v9499, %v9868
      %v9870 = vpop.f32.mrb[0].mxu0
      %9871 = vmatprep.mubr.f32.mxu0 0.0
      %v9872 = vand.u32 %v8698, 4294901760
      %v9873 = vsub.f32 %v8698, %v9872
      %9874 = vmatmul.mubr.f32.gmra.mrb[0].mxu0 %v9873
      %v9875 = vpop.f32.mrb[0].mxu0
      %v9876 = vadd.f32 %v9505, %v9875
      %v9877 = vpop.f32.mrb[0].mxu0
      %9878 = vmatprep.mubr.f32.mxu0 0.0
      %v9879 = vand.u32 %v8701, 4294901760
      %v9880 = vsub.f32 %v8701, %v9879
      %9881 = vmatmul.mubr.f32.gmra.mrb[0].mxu0 %v9880
      %v9882 = vpop.f32.mrb[0].mxu0
      %v9883 = vadd.f32 %v9511, %v9882
      %v9884 = vpop.f32.mrb[0].mxu0
      %9885 = vmatprep.mubr.f32.mxu0 0.0
      %v9886 = vand.u32 %v8704, 4294901760
      %v9887 = vsub.f32 %v8704, %v9886
      %9888 = vmatmul.mubr.f32.gmra.mrb[0].mxu0 %v9887
      %v9889 = vpop.f32.mrb[0].mxu0
      %v9890 = vadd.f32 %v9517, %v9889
      %v9891 = vpop.f32.mrb[0].mxu0
      %9892 = vmatprep.mubr.f32.mxu0 0.0
      %v9893 = vand.u32 %v8707, 4294901760
      %v9894 = vsub.f32 %v8707, %v9893
      %9895 = vmatmul.mubr.f32.gmra.mrb[0].mxu0 %v9894
      %v9896 = vpop.f32.mrb[0].mxu0
      %v9897 = vadd.f32 %v9523, %v9896
      %v9898 = vpop.f32.mrb[0].mxu0
      %9899 = vmatprep.mubr.f32.mxu0 0.0
      %v9900 = vand.u32 %v8710, 4294901760
      %v9901 = vsub.f32 %v8710, %v9900
      %9902 = vmatmul.mubr.f32.gmra.mrb[0].mxu0 %v9901
      %v9903 = vpop.f32.mrb[0].mxu0
      %v9904 = vadd.f32 %v9529, %v9903
      %v9905 = vpop.f32.mrb[0].mxu0
      %9906 = vmatprep.mubr.f32.mxu0 0.0
      %v9907 = vand.u32 %v8713, 4294901760
      %v9908 = vsub.f32 %v8713, %v9907
      %9909 = vmatmul.mubr.f32.gmra.mrb[0].mxu0 %v9908
      %v9910 = vpop.f32.mrb[0].mxu0
      %v9911 = vadd.f32 %v9535, %v9910
      %v9912 = vpop.f32.mrb[0].mxu0
      %9913 = vmatprep.mubr.f32.mxu0 0.0
      %v9914 = vand.u32 %v8716, 4294901760
      %v9915 = vsub.f32 %v8716, %v9914
      %9916 = vmatmul.mubr.f32.gmra.mrb[0].mxu0 %v9915
      %v9917 = vpop.f32.mrb[0].mxu0
      %v9918 = vadd.f32 %v9541, %v9917
      %v9919 = vpop.f32.mrb[0].mxu0
      %9920 = vmatprep.mubr.f32.mxu0 0.0
      %v9921 = vand.u32 %v8719, 4294901760
      %v9922 = vsub.f32 %v8719, %v9921
      %9923 = vmatmul.mubr.f32.gmra.mrb[0].mxu0 %v9922
      %v9924 = vpop.f32.mrb[0].mxu0
      %v9925 = vadd.f32 %v9547, %v9924
      %v9926 = vpop.f32.mrb[0].mxu0
      %9927 = vmatprep.mubr.f32.mxu0 0.0
      %v9928 = vand.u32 %v8722, 4294901760
      %v9929 = vsub.f32 %v8722, %v9928
      %9930 = vmatmul.mubr.f32.gmra.mrb[0].mxu0 %v9929
      %v9931 = vpop.f32.mrb[0].mxu0
      %v9932 = vadd.f32 %v9553, %v9931
      %v9933 = vpop.f32.mrb[0].mxu0
      %9934 = vmatprep.mubr.f32.mxu0 0.0
      %v9935 = vand.u32 %v8725, 4294901760
      %v9936 = vsub.f32 %v8725, %v9935
      %9937 = vmatmul.mubr.f32.gmra.mrb[0].mxu0 %v9936
      %v9938 = vpop.f32.mrb[0].mxu0
      %v9939 = vadd.f32 %v9559, %v9938
      %v9940 = vpop.f32.mrb[0].mxu0
      %9941 = vmatprep.mubr.f32.mxu0 0.0
      %v9942 = vand.u32 %v8728, 4294901760
      %v9943 = vsub.f32 %v8728, %v9942
      %9944 = vmatmul.mubr.f32.gmra.mrb[0].mxu0 %v9943
      %v9945 = vpop.f32.mrb[0].mxu0
      %v9946 = vadd.f32 %v9565, %v9945
      %v9947 = vpop.f32.mrb[0].mxu0
      %9948 = vmatprep.mubr.f32.mxu0 0.0
      %v9949 = vand.u32 %v8731, 4294901760
      %v9950 = vsub.f32 %v8731, %v9949
      %9951 = vmatmul.mubr.f32.gmra.mrb[0].mxu0 %v9950
      %v9952 = vpop.f32.mrb[0].mxu0
      %v9953 = vadd.f32 %v9571, %v9952
      %v9954 = vpop.f32.mrb[0].mxu0
      %9955 = vmatprep.mubr.f32.mxu0 0.0
      %v9956 = vand.u32 %v8734, 4294901760
      %v9957 = vsub.f32 %v8734, %v9956
      %9958 = vmatmul.mubr.f32.gmra.mrb[0].mxu0 %v9957
      %v9959 = vpop.f32.mrb[0].mxu0
      %v9960 = vadd.f32 %v9577, %v9959
      %v9961 = vpop.f32.mrb[0].mxu0
      %9962 = vmatprep.mubr.f32.mxu0 0.0
      %v9963 = vand.u32 %v8737, 4294901760
      %v9964 = vsub.f32 %v8737, %v9963
      %9965 = vmatmul.mubr.f32.gmra.mrb[0].mxu0 %v9964
      %v9966 = vpop.f32.mrb[0].mxu0
      %v9967 = vadd.f32 %v9583, %v9966
      %v9968 = vpop.f32.mrb[0].mxu0
      %9969 = vmatprep.mubr.f32.mxu0 0.0
      %v9970 = vand.u32 %v8740, 4294901760
      %v9971 = vsub.f32 %v8740, %v9970
      %9972 = vmatmul.mubr.f32.gmra.mrb[0].mxu0 %v9971
      %v9973 = vpop.f32.mrb[0].mxu0
      %v9974 = vadd.f32 %v9589, %v9973
      %v9975 = vpop.f32.mrb[0].mxu0
      %9976 = vmatprep.mubr.f32.mxu0 0.0
      %v9977 = vand.u32 %v8743, 4294901760
      %v9978 = vsub.f32 %v8743, %v9977
      %9979 = vmatmul.mubr.f32.gmra.mrb[0].mxu0 %v9978
      %v9980 = vpop.f32.mrb[0].mxu0
      %v9981 = vadd.f32 %v9595, %v9980
      %v9982 = vpop.f32.mrb[0].mxu0
      %9983 = vmatprep.mubr.f32.mxu0 0.0
      %v9984 = vand.u32 %v8746, 4294901760
      %v9985 = vsub.f32 %v8746, %v9984
      %9986 = vmatmul.mubr.f32.gmra.mrb[0].mxu0 %v9985
      %v9987 = vpop.f32.mrb[0].mxu0
      %v9988 = vadd.f32 %v9601, %v9987
      %v9989 = vpop.f32.mrb[0].mxu0
      %9990 = vmatprep.mubr.f32.mxu0 0.0
      %v9991 = vand.u32 %v8749, 4294901760
      %v9992 = vsub.f32 %v8749, %v9991
      %9993 = vmatmul.mubr.f32.gmra.mrb[0].mxu0 %v9992
      %v9994 = vpop.f32.mrb[0].mxu0
      %v9995 = vadd.f32 %v9607, %v9994
      %v9996 = vpop.f32.mrb[0].mxu0
      %9997 = vmatprep.mubr.f32.mxu0 0.0
      %v9998 = vand.u32 %v8752, 4294901760
      %v9999 = vsub.f32 %v8752, %v9998
      %10000 = vmatmul.mubr.f32.gmra.mrb[0].mxu0 %v9999
      %v10001 = vpop.f32.mrb[0].mxu0
      %v10002 = vadd.f32 %v9613, %v10001
      %v10003 = vpop.f32.mrb[0].mxu0
      %10004 = vmatprep.mubr.f32.mxu0 0.0
      %v10005 = vand.u32 %v8755, 4294901760
      %v10006 = vsub.f32 %v8755, %v10005
      %10007 = vmatmul.mubr.f32.gmra.mrb[0].mxu0 %v10006
      %v10008 = vpop.f32.mrb[0].mxu0
      %v10009 = vadd.f32 %v9619, %v10008
      %v10010 = vpop.f32.mrb[0].mxu0
      %10011 = vmatprep.mubr.f32.mxu0 0.0
      %v10012 = vand.u32 %v8758, 4294901760
      %v10013 = vsub.f32 %v8758, %v10012
      %10014 = vmatmul.mubr.f32.gmra.mrb[0].mxu0 %v10013
      %v10015 = vpop.f32.mrb[0].mxu0
      %v10016 = vadd.f32 %v9625, %v10015
      %v10017 = vpop.f32.mrb[0].mxu0
      %10018 = vmatprep.mubr.f32.mxu0 0.0
      %v10019 = vand.u32 %v8761, 4294901760
      %v10020 = vsub.f32 %v8761, %v10019
      %10021 = vmatmul.mubr.f32.gmra.mrb[0].mxu0 %v10020
      %v10022 = vpop.f32.mrb[0].mxu0
      %v10023 = vadd.f32 %v9631, %v10022
      %v10024 = vpop.f32.mrb[0].mxu0
      %10025 = vmatprep.mubr.f32.mxu0 0.0
      %v10026 = vand.u32 %v8764, 4294901760
      %v10027 = vsub.f32 %v8764, %v10026
      %10028 = vmatmul.mubr.f32.gmra.mrb[0].mxu0 %v10027
      %v10029 = vpop.f32.mrb[0].mxu0
      %v10030 = vadd.f32 %v9637, %v10029
      %v10031 = vpop.f32.mrb[0].mxu0
      %10032 = vmatprep.mubr.f32.mxu0 0.0
      %v10033 = vand.u32 %v8767, 4294901760
      %v10034 = vsub.f32 %v8767, %v10033
      %10035 = vmatmul.mubr.f32.gmra.mrb[0].mxu0 %v10034
      %v10036 = vpop.f32.mrb[0].mxu0
      %v10037 = vadd.f32 %v9643, %v10036
      %v10038 = vpop.f32.mrb[0].mxu0
      %10039 = vmatprep.mubr.f32.mxu0 0.0
      %v10040 = vand.u32 %v8770, 4294901760
      %v10041 = vsub.f32 %v8770, %v10040
      %10042 = vmatmul.mubr.f32.gmra.mrb[0].mxu0 %v10041
      %v10043 = vpop.f32.mrb[0].mxu0
      %v10044 = vadd.f32 %v9649, %v10043
      %v10045 = vpop.f32.mrb[0].mxu0
      %10046 = vmatprep.mubr.f32.mxu0 0.0
      %v10047 = vand.u32 %v8773, 4294901760
      %v10048 = vsub.f32 %v8773, %v10047
      %10049 = vmatmul.mubr.f32.gmra.mrb[0].mxu0 %v10048
      %v10050 = vpop.f32.mrb[0].mxu0
      %v10051 = vadd.f32 %v9655, %v10050
      %v10052 = vpop.f32.mrb[0].mxu0
      %10053 = vmatprep.mubr.f32.mxu0 0.0
      %v10054 = vand.u32 %v8776, 4294901760
      %v10055 = vsub.f32 %v8776, %v10054
      %10056 = vmatmul.mubr.f32.gmra.mrb[0].mxu0 %v10055
      %v10057 = vpop.f32.mrb[0].mxu0
      %v10058 = vadd.f32 %v9661, %v10057
      %v10059 = vpop.f32.mrb[0].mxu0
      %10060 = vmatprep.mubr.f32.mxu0 0.0
      %v10061 = vand.u32 %v8779, 4294901760
      %v10062 = vsub.f32 %v8779, %v10061
      %10063 = vmatmul.mubr.f32.gmra.mrb[0].mxu0 %v10062
      %v10064 = vpop.f32.mrb[0].mxu0
      %v10065 = vadd.f32 %v9667, %v10064
      %v10066 = vpop.f32.mrb[0].mxu0
      %10067 = vmatprep.mubr.f32.mxu0 0.0
      %v10068 = vand.u32 %v8782, 4294901760
      %v10069 = vsub.f32 %v8782, %v10068
      %10070 = vmatmul.mubr.f32.gmra.mrb[0].mxu0 %v10069
      %v10071 = vpop.f32.mrb[0].mxu0
      %v10072 = vadd.f32 %v9673, %v10071
      %v10073 = vpop.f32.mrb[0].mxu0
      %10074 = vmatprep.mubr.f32.mxu0 0.0
      %v10075 = vand.u32 %v8785, 4294901760
      %v10076 = vsub.f32 %v8785, %v10075
      %10077 = vmatmul.mubr.f32.gmra.mrb[0].mxu0 %v10076
      %v10078 = vpop.f32.mrb[0].mxu0
      %v10079 = vadd.f32 %v9679, %v10078
      %v10080 = vpop.f32.mrb[0].mxu0
      %10081 = vmatprep.mubr.f32.mxu0 0.0
      %v10082 = vand.u32 %v8788, 4294901760
      %v10083 = vsub.f32 %v8788, %v10082
      %10084 = vmatmul.mubr.f32.gmra.mrb[0].mxu0 %v10083
      %v10085 = vpop.f32.mrb[0].mxu0
      %v10086 = vadd.f32 %v9685, %v10085
      %v10087 = vpop.f32.mrb[0].mxu0
      %10088 = vmatprep.mubr.f32.mxu0 0.0
      %v10089 = vand.u32 %v8791, 4294901760
      %v10090 = vsub.f32 %v8791, %v10089
      %10091 = vmatmul.mubr.f32.gmra.mrb[0].mxu0 %v10090
      %v10092 = vpop.f32.mrb[0].mxu0
      %v10093 = vadd.f32 %v9691, %v10092
      %v10094 = vpop.f32.mrb[0].mxu0
      %10095 = vmatprep.mubr.f32.mxu0 0.0
      %v10096 = vand.u32 %v8794, 4294901760
      %v10097 = vsub.f32 %v8794, %v10096
      %10098 = vmatmul.mubr.f32.gmra.mrb[0].mxu0 %v10097
      %v10099 = vpop.f32.mrb[0].mxu0
      %v10100 = vadd.f32 %v9697, %v10099
      %v10101 = vpop.f32.mrb[0].mxu0
      %10102 = vdwg.mxu0
      %10103 = vmatprep.subr.mxu0 0.0
      %v10104 = vand.u32 %v8596, 4294901760
      %10105 = vmatpush1.msra.mxu0 %v10104
      %10106 = vmatprep.subr.mxu0 0.0
      %10107 = vmatpush1.msra.mxu0 0.0
      %10108 = vmatprep.subr.mxu0 0.0
      %10109 = vmatpush1.msra.mxu0 0.0
      %10110 = vmatprep.subr.mxu0 0.0
      %10111 = vmatpush1.msra.mxu0 0.0
      %10112 = vmatprep.subr.mxu0 0.0
      %10113 = vmatpush1.msra.mxu0 0.0
      %10114 = vmatprep.subr.mxu0 0.0
      %10115 = vmatpush1.msra.mxu0 0.0
      %10116 = vmatprep.subr.mxu0 0.0
      %10117 = vmatpush1.msra.mxu0 0.0
      %10118 = vmatprep.subr.mxu0 0.0
      %10119 = vmatpush1.msra.mxu0 0.0
      %10120 = vmatprep.subr.mxu0 0.0
      %10121 = vmatpush1.msra.mxu0 0.0
      %10122 = vmatprep.subr.mxu0 0.0
      %10123 = vmatpush1.msra.mxu0 0.0
      %10124 = vmatprep.subr.mxu0 0.0
      %10125 = vmatpush1.msra.mxu0 0.0
      %10126 = vmatprep.subr.mxu0 0.0
      %10127 = vmatpush1.msra.mxu0 0.0
      %10128 = vmatprep.subr.mxu0 0.0
      %10129 = vmatpush1.msra.mxu0 0.0
      %10130 = vmatprep.subr.mxu0 0.0
      %10131 = vmatpush1.msra.mxu0 0.0
      %10132 = vmatprep.subr.mxu0 0.0
      %10133 = vmatpush1.msra.mxu0 0.0
      %10134 = vmatprep.subr.mxu0 0.0
      %10135 = vmatpush1.msra.mxu0 0.0
      %10136 = vmatprep.subr.mxu0 0.0
      %10137 = vmatpush1.msra.mxu0 0.0
      %10138 = vmatprep.subr.mxu0 0.0
      %10139 = vmatpush1.msra.mxu0 0.0
      %10140 = vmatprep.subr.mxu0 0.0
      %10141 = vmatpush1.msra.mxu0 0.0
      %10142 = vmatprep.subr.mxu0 0.0
      %10143 = vmatpush1.msra.mxu0 0.0
      %10144 = vmatprep.subr.mxu0 0.0
      %10145 = vmatpush1.msra.mxu0 0.0
      %10146 = vmatprep.subr.mxu0 0.0
      %10147 = vmatpush1.msra.mxu0 0.0
      %10148 = vmatprep.subr.mxu0 0.0
      %10149 = vmatpush1.msra.mxu0 0.0
      %10150 = vmatprep.subr.mxu0 0.0
      %10151 = vmatpush1.msra.mxu0 0.0
      %10152 = vmatprep.subr.mxu0 0.0
      %10153 = vmatpush1.msra.mxu0 0.0
      %10154 = vmatprep.subr.mxu0 0.0
      %10155 = vmatpush1.msra.mxu0 0.0
      %10156 = vmatprep.subr.mxu0 0.0
      %10157 = vmatpush1.msra.mxu0 0.0
      %10158 = vmatprep.subr.mxu0 0.0
      %10159 = vmatpush1.msra.mxu0 0.0
      %10160 = vmatprep.subr.mxu0 0.0
      %10161 = vmatpush1.msra.mxu0 0.0
      %10162 = vmatprep.subr.mxu0 0.0
      %10163 = vmatpush1.msra.mxu0 0.0
      %10164 = vmatprep.subr.mxu0 0.0
      %10165 = vmatpush1.msra.mxu0 0.0
      %10166 = vmatprep.subr.mxu0 0.0
      %10167 = vmatpush1.msra.mxu0 0.0
      %10168 = vmatprep.mubr.f32.mxu0 0.0
      %v10169 = vand.u32 %v8653, 4294901760
      %v10170 = vsub.f32 %v8653, %v10169
      %v10171 = vand.u32 %v10170, 4294901760
      %10172 = vmatmul.mubr.f32.gmra.mrb[0].mxu0 %v10171
      %v10173 = vpop.f32.mrb[0].mxu0
      %v10174 = vadd.f32 %v9771, %v10173
      %v10175 = vpop.f32.mrb[0].mxu0
      %10176 = vmatprep.mubr.f32.mxu0 0.0
      %v10177 = vand.u32 %v8656, 4294901760
      %v10178 = vsub.f32 %v8656, %v10177
      %v10179 = vand.u32 %v10178, 4294901760
      %10180 = vmatmul.mubr.f32.gmra.mrb[0].mxu0 %v10179
      %v10181 = vpop.f32.mrb[0].mxu0
      %v10182 = vadd.f32 %v9778, %v10181
      %v10183 = vpop.f32.mrb[0].mxu0
      %10184 = vmatprep.mubr.f32.mxu0 0.0
      %v10185 = vand.u32 %v8659, 4294901760
      %v10186 = vsub.f32 %v8659, %v10185
      %v10187 = vand.u32 %v10186, 4294901760
      %10188 = vmatmul.mubr.f32.gmra.mrb[0].mxu0 %v10187
      %v10189 = vpop.f32.mrb[0].mxu0
      %v10190 = vadd.f32 %v9785, %v10189
      %v10191 = vpop.f32.mrb[0].mxu0
      %10192 = vmatprep.mubr.f32.mxu0 0.0
      %v10193 = vand.u32 %v8662, 4294901760
      %v10194 = vsub.f32 %v8662, %v10193
      %v10195 = vand.u32 %v10194, 4294901760
      %10196 = vmatmul.mubr.f32.gmra.mrb[0].mxu0 %v10195
      %v10197 = vpop.f32.mrb[0].mxu0
      %v10198 = vadd.f32 %v9792, %v10197
      %v10199 = vpop.f32.mrb[0].mxu0
      %10200 = vmatprep.mubr.f32.mxu0 0.0
      %v10201 = vand.u32 %v8665, 4294901760
      %v10202 = vsub.f32 %v8665, %v10201
      %v10203 = vand.u32 %v10202, 4294901760
      %10204 = vmatmul.mubr.f32.gmra.mrb[0].mxu0 %v10203
      %v10205 = vpop.f32.mrb[0].mxu0
      %v10206 = vadd.f32 %v9799, %v10205
      %v10207 = vpop.f32.mrb[0].mxu0
      %10208 = vmatprep.mubr.f32.mxu0 0.0
      %v10209 = vand.u32 %v8668, 4294901760
      %v10210 = vsub.f32 %v8668, %v10209
      %v10211 = vand.u32 %v10210, 4294901760
      %10212 = vmatmul.mubr.f32.gmra.mrb[0].mxu0 %v10211
      %v10213 = vpop.f32.mrb[0].mxu0
      %v10214 = vadd.f32 %v9806, %v10213
      %v10215 = vpop.f32.mrb[0].mxu0
      %10216 = vmatprep.mubr.f32.mxu0 0.0
      %v10217 = vand.u32 %v8671, 4294901760
      %v10218 = vsub.f32 %v8671, %v10217
      %v10219 = vand.u32 %v10218, 4294901760
      %10220 = vmatmul.mubr.f32.gmra.mrb[0].mxu0 %v10219
      %v10221 = vpop.f32.mrb[0].mxu0
      %v10222 = vadd.f32 %v9813, %v10221
      %v10223 = vpop.f32.mrb[0].mxu0
      %10224 = vmatprep.mubr.f32.mxu0 0.0
      %v10225 = vand.u32 %v8674, 4294901760
      %v10226 = vsub.f32 %v8674, %v10225
      %v10227 = vand.u32 %v10226, 4294901760
      %10228 = vmatmul.mubr.f32.gmra.mrb[0].mxu0 %v10227
      %v10229 = vpop.f32.mrb[0].mxu0
      %v10230 = vadd.f32 %v9820, %v10229
      %v10231 = vpop.f32.mrb[0].mxu0
      %10232 = vmatprep.mubr.f32.mxu0 0.0
      %v10233 = vand.u32 %v8677, 4294901760
      %v10234 = vsub.f32 %v8677, %v10233
      %v10235 = vand.u32 %v10234, 4294901760
      %10236 = vmatmul.mubr.f32.gmra.mrb[0].mxu0 %v10235
      %v10237 = vpop.f32.mrb[0].mxu0
      %v10238 = vadd.f32 %v9827, %v10237
      %v10239 = vpop.f32.mrb[0].mxu0
      %10240 = vmatprep.mubr.f32.mxu0 0.0
      %v10241 = vand.u32 %v8680, 4294901760
      %v10242 = vsub.f32 %v8680, %v10241
      %v10243 = vand.u32 %v10242, 4294901760
      %10244 = vmatmul.mubr.f32.gmra.mrb[0].mxu0 %v10243
      %v10245 = vpop.f32.mrb[0].mxu0
      %v10246 = vadd.f32 %v9834, %v10245
      %v10247 = vpop.f32.mrb[0].mxu0
      %10248 = vmatprep.mubr.f32.mxu0 0.0
      %v10249 = vand.u32 %v8683, 4294901760
      %v10250 = vsub.f32 %v8683, %v10249
      %v10251 = vand.u32 %v10250, 4294901760
      %10252 = vmatmul.mubr.f32.gmra.mrb[0].mxu0 %v10251
      %v10253 = vpop.f32.mrb[0].mxu0
      %v10254 = vadd.f32 %v9841, %v10253
      %v10255 = vpop.f32.mrb[0].mxu0
      %10256 = vmatprep.mubr.f32.mxu0 0.0
      %v10257 = vand.u32 %v8686, 4294901760
      %v10258 = vsub.f32 %v8686, %v10257
      %v10259 = vand.u32 %v10258, 4294901760
      %10260 = vmatmul.mubr.f32.gmra.mrb[0].mxu0 %v10259
      %v10261 = vpop.f32.mrb[0].mxu0
      %v10262 = vadd.f32 %v9848, %v10261
      %v10263 = vpop.f32.mrb[0].mxu0
      %10264 = vmatprep.mubr.f32.mxu0 0.0
      %v10265 = vand.u32 %v8689, 4294901760
      %v10266 = vsub.f32 %v8689, %v10265
      %v10267 = vand.u32 %v10266, 4294901760
      %10268 = vmatmul.mubr.f32.gmra.mrb[0].mxu0 %v10267
      %v10269 = vpop.f32.mrb[0].mxu0
      %v10270 = vadd.f32 %v9855, %v10269
      %v10271 = vpop.f32.mrb[0].mxu0
      %10272 = vmatprep.mubr.f32.mxu0 0.0
      %v10273 = vand.u32 %v8692, 4294901760
      %v10274 = vsub.f32 %v8692, %v10273
      %v10275 = vand.u32 %v10274, 4294901760
      %10276 = vmatmul.mubr.f32.gmra.mrb[0].mxu0 %v10275
      %v10277 = vpop.f32.mrb[0].mxu0
      %v10278 = vadd.f32 %v9862, %v10277
      %v10279 = vpop.f32.mrb[0].mxu0
      %10280 = vmatprep.mubr.f32.mxu0 0.0
      %v10281 = vand.u32 %v8695, 4294901760
      %v10282 = vsub.f32 %v8695, %v10281
      %v10283 = vand.u32 %v10282, 4294901760
      %10284 = vmatmul.mubr.f32.gmra.mrb[0].mxu0 %v10283
      %v10285 = vpop.f32.mrb[0].mxu0
      %v10286 = vadd.f32 %v9869, %v10285
      %v10287 = vpop.f32.mrb[0].mxu0
      %10288 = vmatprep.mubr.f32.mxu0 0.0
      %v10289 = vand.u32 %v8698, 4294901760
      %v10290 = vsub.f32 %v8698, %v10289
      %v10291 = vand.u32 %v10290, 4294901760
      %10292 = vmatmul.mubr.f32.gmra.mrb[0].mxu0 %v10291
      %v10293 = vpop.f32.mrb[0].mxu0
      %v10294 = vadd.f32 %v9876, %v10293
      %v10295 = vpop.f32.mrb[0].mxu0
      %10296 = vmatprep.mubr.f32.mxu0 0.0
      %v10297 = vand.u32 %v8701, 4294901760
      %v10298 = vsub.f32 %v8701, %v10297
      %v10299 = vand.u32 %v10298, 4294901760
      %10300 = vmatmul.mubr.f32.gmra.mrb[0].mxu0 %v10299
      %v10301 = vpop.f32.mrb[0].mxu0
      %v10302 = vadd.f32 %v9883, %v10301
      %v10303 = vpop.f32.mrb[0].mxu0
      %10304 = vmatprep.mubr.f32.mxu0 0.0
      %v10305 = vand.u32 %v8704, 4294901760
      %v10306 = vsub.f32 %v8704, %v10305
      %v10307 = vand.u32 %v10306, 4294901760
      %10308 = vmatmul.mubr.f32.gmra.mrb[0].mxu0 %v10307
      %v10309 = vpop.f32.mrb[0].mxu0
      %v10310 = vadd.f32 %v9890, %v10309
      %v10311 = vpop.f32.mrb[0].mxu0
      %10312 = vmatprep.mubr.f32.mxu0 0.0
      %v10313 = vand.u32 %v8707, 4294901760
      %v10314 = vsub.f32 %v8707, %v10313
      %v10315 = vand.u32 %v10314, 4294901760
      %10316 = vmatmul.mubr.f32.gmra.mrb[0].mxu0 %v10315
      %v10317 = vpop.f32.mrb[0].mxu0
      %v10318 = vadd.f32 %v9897, %v10317
      %v10319 = vpop.f32.mrb[0].mxu0
      %10320 = vmatprep.mubr.f32.mxu0 0.0
      %v10321 = vand.u32 %v8710, 4294901760
      %v10322 = vsub.f32 %v8710, %v10321
      %v10323 = vand.u32 %v10322, 4294901760
      %10324 = vmatmul.mubr.f32.gmra.mrb[0].mxu0 %v10323
      %v10325 = vpop.f32.mrb[0].mxu0
      %v10326 = vadd.f32 %v9904, %v10325
      %v10327 = vpop.f32.mrb[0].mxu0
      %10328 = vmatprep.mubr.f32.mxu0 0.0
      %v10329 = vand.u32 %v8713, 4294901760
      %v10330 = vsub.f32 %v8713, %v10329
      %v10331 = vand.u32 %v10330, 4294901760
      %10332 = vmatmul.mubr.f32.gmra.mrb[0].mxu0 %v10331
      %v10333 = vpop.f32.mrb[0].mxu0
      %v10334 = vadd.f32 %v9911, %v10333
      %v10335 = vpop.f32.mrb[0].mxu0
      %10336 = vmatprep.mubr.f32.mxu0 0.0
      %v10337 = vand.u32 %v8716, 4294901760
      %v10338 = vsub.f32 %v8716, %v10337
      %v10339 = vand.u32 %v10338, 4294901760
      %10340 = vmatmul.mubr.f32.gmra.mrb[0].mxu0 %v10339
      %v10341 = vpop.f32.mrb[0].mxu0
      %v10342 = vadd.f32 %v9918, %v10341
      %v10343 = vpop.f32.mrb[0].mxu0
      %10344 = vmatprep.mubr.f32.mxu0 0.0
      %v10345 = vand.u32 %v8719, 4294901760
      %v10346 = vsub.f32 %v8719, %v10345
      %v10347 = vand.u32 %v10346, 4294901760
      %10348 = vmatmul.mubr.f32.gmra.mrb[0].mxu0 %v10347
      %v10349 = vpop.f32.mrb[0].mxu0
      %v10350 = vadd.f32 %v9925, %v10349
      %v10351 = vpop.f32.mrb[0].mxu0
      %10352 = vmatprep.mubr.f32.mxu0 0.0
      %v10353 = vand.u32 %v8722, 4294901760
      %v10354 = vsub.f32 %v8722, %v10353
      %v10355 = vand.u32 %v10354, 4294901760
      %10356 = vmatmul.mubr.f32.gmra.mrb[0].mxu0 %v10355
      %v10357 = vpop.f32.mrb[0].mxu0
      %v10358 = vadd.f32 %v9932, %v10357
      %v10359 = vpop.f32.mrb[0].mxu0
      %10360 = vmatprep.mubr.f32.mxu0 0.0
      %v10361 = vand.u32 %v8725, 4294901760
      %v10362 = vsub.f32 %v8725, %v10361
      %v10363 = vand.u32 %v10362, 4294901760
      %10364 = vmatmul.mubr.f32.gmra.mrb[0].mxu0 %v10363
      %v10365 = vpop.f32.mrb[0].mxu0
      %v10366 = vadd.f32 %v9939, %v10365
      %v10367 = vpop.f32.mrb[0].mxu0
      %10368 = vmatprep.mubr.f32.mxu0 0.0
      %v10369 = vand.u32 %v8728, 4294901760
      %v10370 = vsub.f32 %v8728, %v10369
      %v10371 = vand.u32 %v10370, 4294901760
      %10372 = vmatmul.mubr.f32.gmra.mrb[0].mxu0 %v10371
      %v10373 = vpop.f32.mrb[0].mxu0
      %v10374 = vadd.f32 %v9946, %v10373
      %v10375 = vpop.f32.mrb[0].mxu0
      %10376 = vmatprep.mubr.f32.mxu0 0.0
      %v10377 = vand.u32 %v8731, 4294901760
      %v10378 = vsub.f32 %v8731, %v10377
      %v10379 = vand.u32 %v10378, 4294901760
      %10380 = vmatmul.mubr.f32.gmra.mrb[0].mxu0 %v10379
      %v10381 = vpop.f32.mrb[0].mxu0
      %v10382 = vadd.f32 %v9953, %v10381
      %v10383 = vpop.f32.mrb[0].mxu0
      %10384 = vmatprep.mubr.f32.mxu0 0.0
      %v10385 = vand.u32 %v8734, 4294901760
      %v10386 = vsub.f32 %v8734, %v10385
      %v10387 = vand.u32 %v10386, 4294901760
      %10388 = vmatmul.mubr.f32.gmra.mrb[0].mxu0 %v10387
      %v10389 = vpop.f32.mrb[0].mxu0
      %v10390 = vadd.f32 %v9960, %v10389
      %v10391 = vpop.f32.mrb[0].mxu0
      %10392 = vmatprep.mubr.f32.mxu0 0.0
      %v10393 = vand.u32 %v8737, 4294901760
      %v10394 = vsub.f32 %v8737, %v10393
      %v10395 = vand.u32 %v10394, 4294901760
      %10396 = vmatmul.mubr.f32.gmra.mrb[0].mxu0 %v10395
      %v10397 = vpop.f32.mrb[0].mxu0
      %v10398 = vadd.f32 %v9967, %v10397
      %v10399 = vpop.f32.mrb[0].mxu0
      %10400 = vmatprep.mubr.f32.mxu0 0.0
      %v10401 = vand.u32 %v8740, 4294901760
      %v10402 = vsub.f32 %v8740, %v10401
      %v10403 = vand.u32 %v10402, 4294901760
      %10404 = vmatmul.mubr.f32.gmra.mrb[0].mxu0 %v10403
      %v10405 = vpop.f32.mrb[0].mxu0
      %v10406 = vadd.f32 %v9974, %v10405
      %v10407 = vpop.f32.mrb[0].mxu0
      %10408 = vmatprep.mubr.f32.mxu0 0.0
      %v10409 = vand.u32 %v8743, 4294901760
      %v10410 = vsub.f32 %v8743, %v10409
      %v10411 = vand.u32 %v10410, 4294901760
      %10412 = vmatmul.mubr.f32.gmra.mrb[0].mxu0 %v10411
      %v10413 = vpop.f32.mrb[0].mxu0
      %v10414 = vadd.f32 %v9981, %v10413
      %v10415 = vpop.f32.mrb[0].mxu0
      %10416 = vmatprep.mubr.f32.mxu0 0.0
      %v10417 = vand.u32 %v8746, 4294901760
      %v10418 = vsub.f32 %v8746, %v10417
      %v10419 = vand.u32 %v10418, 4294901760
      %10420 = vmatmul.mubr.f32.gmra.mrb[0].mxu0 %v10419
      %v10421 = vpop.f32.mrb[0].mxu0
      %v10422 = vadd.f32 %v9988, %v10421
      %v10423 = vpop.f32.mrb[0].mxu0
      %10424 = vmatprep.mubr.f32.mxu0 0.0
      %v10425 = vand.u32 %v8749, 4294901760
      %v10426 = vsub.f32 %v8749, %v10425
      %v10427 = vand.u32 %v10426, 4294901760
      %10428 = vmatmul.mubr.f32.gmra.mrb[0].mxu0 %v10427
      %v10429 = vpop.f32.mrb[0].mxu0
      %v10430 = vadd.f32 %v9995, %v10429
      %v10431 = vpop.f32.mrb[0].mxu0
      %10432 = vmatprep.mubr.f32.mxu0 0.0
      %v10433 = vand.u32 %v8752, 4294901760
      %v10434 = vsub.f32 %v8752, %v10433
      %v10435 = vand.u32 %v10434, 4294901760
      %10436 = vmatmul.mubr.f32.gmra.mrb[0].mxu0 %v10435
      %v10437 = vpop.f32.mrb[0].mxu0
      %v10438 = vadd.f32 %v10002, %v10437
      %v10439 = vpop.f32.mrb[0].mxu0
      %10440 = vmatprep.mubr.f32.mxu0 0.0
      %v10441 = vand.u32 %v8755, 4294901760
      %v10442 = vsub.f32 %v8755, %v10441
      %v10443 = vand.u32 %v10442, 4294901760
      %10444 = vmatmul.mubr.f32.gmra.mrb[0].mxu0 %v10443
      %v10445 = vpop.f32.mrb[0].mxu0
      %v10446 = vadd.f32 %v10009, %v10445
      %v10447 = vpop.f32.mrb[0].mxu0
      %10448 = vmatprep.mubr.f32.mxu0 0.0
      %v10449 = vand.u32 %v8758, 4294901760
      %v10450 = vsub.f32 %v8758, %v10449
      %v10451 = vand.u32 %v10450, 4294901760
      %10452 = vmatmul.mubr.f32.gmra.mrb[0].mxu0 %v10451
      %v10453 = vpop.f32.mrb[0].mxu0
      %v10454 = vadd.f32 %v10016, %v10453
      %v10455 = vpop.f32.mrb[0].mxu0
      %10456 = vmatprep.mubr.f32.mxu0 0.0
      %v10457 = vand.u32 %v8761, 4294901760
      %v10458 = vsub.f32 %v8761, %v10457
      %v10459 = vand.u32 %v10458, 4294901760
      %10460 = vmatmul.mubr.f32.gmra.mrb[0].mxu0 %v10459
      %v10461 = vpop.f32.mrb[0].mxu0
      %v10462 = vadd.f32 %v10023, %v10461
      %v10463 = vpop.f32.mrb[0].mxu0
      %10464 = vmatprep.mubr.f32.mxu0 0.0
      %v10465 = vand.u32 %v8764, 4294901760
      %v10466 = vsub.f32 %v8764, %v10465
      %v10467 = vand.u32 %v10466, 4294901760
      %10468 = vmatmul.mubr.f32.gmra.mrb[0].mxu0 %v10467
      %v10469 = vpop.f32.mrb[0].mxu0
      %v10470 = vadd.f32 %v10030, %v10469
      %v10471 = vpop.f32.mrb[0].mxu0
      %10472 = vmatprep.mubr.f32.mxu0 0.0
      %v10473 = vand.u32 %v8767, 4294901760
      %v10474 = vsub.f32 %v8767, %v10473
      %v10475 = vand.u32 %v10474, 4294901760
      %10476 = vmatmul.mubr.f32.gmra.mrb[0].mxu0 %v10475
      %v10477 = vpop.f32.mrb[0].mxu0
      %v10478 = vadd.f32 %v10037, %v10477
      %v10479 = vpop.f32.mrb[0].mxu0
      %10480 = vmatprep.mubr.f32.mxu0 0.0
      %v10481 = vand.u32 %v8770, 4294901760
      %v10482 = vsub.f32 %v8770, %v10481
      %v10483 = vand.u32 %v10482, 4294901760
      %10484 = vmatmul.mubr.f32.gmra.mrb[0].mxu0 %v10483
      %v10485 = vpop.f32.mrb[0].mxu0
      %v10486 = vadd.f32 %v10044, %v10485
      %v10487 = vpop.f32.mrb[0].mxu0
      %10488 = vmatprep.mubr.f32.mxu0 0.0
      %v10489 = vand.u32 %v8773, 4294901760
      %v10490 = vsub.f32 %v8773, %v10489
      %v10491 = vand.u32 %v10490, 4294901760
      %10492 = vmatmul.mubr.f32.gmra.mrb[0].mxu0 %v10491
      %v10493 = vpop.f32.mrb[0].mxu0
      %v10494 = vadd.f32 %v10051, %v10493
      %v10495 = vpop.f32.mrb[0].mxu0
      %10496 = vmatprep.mubr.f32.mxu0 0.0
      %v10497 = vand.u32 %v8776, 4294901760
      %v10498 = vsub.f32 %v8776, %v10497
      %v10499 = vand.u32 %v10498, 4294901760
      %10500 = vmatmul.mubr.f32.gmra.mrb[0].mxu0 %v10499
      %v10501 = vpop.f32.mrb[0].mxu0
      %v10502 = vadd.f32 %v10058, %v10501
      %v10503 = vpop.f32.mrb[0].mxu0
      %10504 = vmatprep.mubr.f32.mxu0 0.0
      %v10505 = vand.u32 %v8779, 4294901760
      %v10506 = vsub.f32 %v8779, %v10505
      %v10507 = vand.u32 %v10506, 4294901760
      %10508 = vmatmul.mubr.f32.gmra.mrb[0].mxu0 %v10507
      %v10509 = vpop.f32.mrb[0].mxu0
      %v10510 = vadd.f32 %v10065, %v10509
      %v10511 = vpop.f32.mrb[0].mxu0
      %10512 = vmatprep.mubr.f32.mxu0 0.0
      %v10513 = vand.u32 %v8782, 4294901760
      %v10514 = vsub.f32 %v8782, %v10513
      %v10515 = vand.u32 %v10514, 4294901760
      %10516 = vmatmul.mubr.f32.gmra.mrb[0].mxu0 %v10515
      %v10517 = vpop.f32.mrb[0].mxu0
      %v10518 = vadd.f32 %v10072, %v10517
      %v10519 = vpop.f32.mrb[0].mxu0
      %10520 = vmatprep.mubr.f32.mxu0 0.0
      %v10521 = vand.u32 %v8785, 4294901760
      %v10522 = vsub.f32 %v8785, %v10521
      %v10523 = vand.u32 %v10522, 4294901760
      %10524 = vmatmul.mubr.f32.gmra.mrb[0].mxu0 %v10523
      %v10525 = vpop.f32.mrb[0].mxu0
      %v10526 = vadd.f32 %v10079, %v10525
      %v10527 = vpop.f32.mrb[0].mxu0
      %10528 = vmatprep.mubr.f32.mxu0 0.0
      %v10529 = vand.u32 %v8788, 4294901760
      %v10530 = vsub.f32 %v8788, %v10529
      %v10531 = vand.u32 %v10530, 4294901760
      %10532 = vmatmul.mubr.f32.gmra.mrb[0].mxu0 %v10531
      %v10533 = vpop.f32.mrb[0].mxu0
      %v10534 = vadd.f32 %v10086, %v10533
      %v10535 = vpop.f32.mrb[0].mxu0
      %10536 = vmatprep.mubr.f32.mxu0 0.0
      %v10537 = vand.u32 %v8791, 4294901760
      %v10538 = vsub.f32 %v8791, %v10537
      %v10539 = vand.u32 %v10538, 4294901760
      %10540 = vmatmul.mubr.f32.gmra.mrb[0].mxu0 %v10539
      %v10541 = vpop.f32.mrb[0].mxu0
      %v10542 = vadd.f32 %v10093, %v10541
      %v10543 = vpop.f32.mrb[0].mxu0
      %10544 = vmatprep.mubr.f32.mxu0 0.0
      %v10545 = vand.u32 %v8794, 4294901760
      %v10546 = vsub.f32 %v8794, %v10545
      %v10547 = vand.u32 %v10546, 4294901760
      %10548 = vmatmul.mubr.f32.gmra.mrb[0].mxu0 %v10547
      %v10549 = vpop.f32.mrb[0].mxu0
      %v10550 = vadd.f32 %v10100, %v10549
      %v10551 = vpop.f32.mrb[0].mxu0
      %10552 = vdwg.mxu0
      %10553 = vmatprep.subr.mxu0 0.0
      %v10554 = vand.u32 %v8596, 4294901760
      %v10555 = vsub.f32 %v8596, %v10554
      %v10556 = vand.u32 %v10555, 4294901760
      %10557 = vmatpush1.msra.mxu0 %v10556
      %10558 = vmatprep.subr.mxu0 0.0
      %10559 = vmatpush1.msra.mxu0 0.0
      %10560 = vmatprep.subr.mxu0 0.0
      %10561 = vmatpush1.msra.mxu0 0.0
      %10562 = vmatprep.subr.mxu0 0.0
      %10563 = vmatpush1.msra.mxu0 0.0
      %10564 = vmatprep.subr.mxu0 0.0
      %10565 = vmatpush1.msra.mxu0 0.0
      %10566 = vmatprep.subr.mxu0 0.0
      %10567 = vmatpush1.msra.mxu0 0.0
      %10568 = vmatprep.subr.mxu0 0.0
      %10569 = vmatpush1.msra.mxu0 0.0
      %10570 = vmatprep.subr.mxu0 0.0
      %10571 = vmatpush1.msra.mxu0 0.0
      %10572 = vmatprep.subr.mxu0 0.0
      %10573 = vmatpush1.msra.mxu0 0.0
      %10574 = vmatprep.subr.mxu0 0.0
      %10575 = vmatpush1.msra.mxu0 0.0
      %10576 = vmatprep.subr.mxu0 0.0
      %10577 = vmatpush1.msra.mxu0 0.0
      %10578 = vmatprep.subr.mxu0 0.0
      %10579 = vmatpush1.msra.mxu0 0.0
      %10580 = vmatprep.subr.mxu0 0.0
      %10581 = vmatpush1.msra.mxu0 0.0
      %10582 = vmatprep.subr.mxu0 0.0
      %10583 = vmatpush1.msra.mxu0 0.0
      %10584 = vmatprep.subr.mxu0 0.0
      %10585 = vmatpush1.msra.mxu0 0.0
      %10586 = vmatprep.subr.mxu0 0.0
      %10587 = vmatpush1.msra.mxu0 0.0
      %10588 = vmatprep.subr.mxu0 0.0
      %10589 = vmatpush1.msra.mxu0 0.0
      %10590 = vmatprep.subr.mxu0 0.0
      %10591 = vmatpush1.msra.mxu0 0.0
      %10592 = vmatprep.subr.mxu0 0.0
      %10593 = vmatpush1.msra.mxu0 0.0
      %10594 = vmatprep.subr.mxu0 0.0
      %10595 = vmatpush1.msra.mxu0 0.0
      %10596 = vmatprep.subr.mxu0 0.0
      %10597 = vmatpush1.msra.mxu0 0.0
      %10598 = vmatprep.subr.mxu0 0.0
      %10599 = vmatpush1.msra.mxu0 0.0
      %10600 = vmatprep.subr.mxu0 0.0
      %10601 = vmatpush1.msra.mxu0 0.0
      %10602 = vmatprep.subr.mxu0 0.0
      %10603 = vmatpush1.msra.mxu0 0.0
      %10604 = vmatprep.subr.mxu0 0.0
      %10605 = vmatpush1.msra.mxu0 0.0
      %10606 = vmatprep.subr.mxu0 0.0
      %10607 = vmatpush1.msra.mxu0 0.0
      %10608 = vmatprep.subr.mxu0 0.0
      %10609 = vmatpush1.msra.mxu0 0.0
      %10610 = vmatprep.subr.mxu0 0.0
      %10611 = vmatpush1.msra.mxu0 0.0
      %10612 = vmatprep.subr.mxu0 0.0
      %10613 = vmatpush1.msra.mxu0 0.0
      %10614 = vmatprep.subr.mxu0 0.0
      %10615 = vmatpush1.msra.mxu0 0.0
      %10616 = vmatprep.subr.mxu0 0.0
      %10617 = vmatpush1.msra.mxu0 0.0
      %10618 = vmatprep.subr.mxu0 0.0
      %10619 = vmatpush1.msra.mxu0 0.0
      %10620 = vmatprep.mubr.f32.mxu0 0.0
      %v10621 = vand.u32 %v8653, 4294901760
      %10622 = vmatmul.mubr.f32.gmra.mrb[0].mxu0 %v10621
      %v10623 = vpop.f32.mrb[0].mxu0
      %v10624 = vadd.f32 %v10174, %v10623
      %v10625 = vpop.f32.mrb[0].mxu0
      %10626 = vmatprep.mubr.f32.mxu0 0.0
      %v10627 = vand.u32 %v8656, 4294901760
      %10628 = vmatmul.mubr.f32.gmra.mrb[0].mxu0 %v10627
      %v10629 = vpop.f32.mrb[0].mxu0
      %v10630 = vadd.f32 %v10182, %v10629
      %v10631 = vpop.f32.mrb[0].mxu0
      %10632 = vmatprep.mubr.f32.mxu0 0.0
      %v10633 = vand.u32 %v8659, 4294901760
      %10634 = vmatmul.mubr.f32.gmra.mrb[0].mxu0 %v10633
      %v10635 = vpop.f32.mrb[0].mxu0
      %v10636 = vadd.f32 %v10190, %v10635
      %v10637 = vpop.f32.mrb[0].mxu0
      %10638 = vmatprep.mubr.f32.mxu0 0.0
      %v10639 = vand.u32 %v8662, 4294901760
      %10640 = vmatmul.mubr.f32.gmra.mrb[0].mxu0 %v10639
      %v10641 = vpop.f32.mrb[0].mxu0
      %v10642 = vadd.f32 %v10198, %v10641
      %v10643 = vpop.f32.mrb[0].mxu0
      %10644 = vmatprep.mubr.f32.mxu0 0.0
      %v10645 = vand.u32 %v8665, 4294901760
      %10646 = vmatmul.mubr.f32.gmra.mrb[0].mxu0 %v10645
      %v10647 = vpop.f32.mrb[0].mxu0
      %v10648 = vadd.f32 %v10206, %v10647
      %v10649 = vpop.f32.mrb[0].mxu0
      %10650 = vmatprep.mubr.f32.mxu0 0.0
      %v10651 = vand.u32 %v8668, 4294901760
      %10652 = vmatmul.mubr.f32.gmra.mrb[0].mxu0 %v10651
      %v10653 = vpop.f32.mrb[0].mxu0
      %v10654 = vadd.f32 %v10214, %v10653
      %v10655 = vpop.f32.mrb[0].mxu0
      %10656 = vmatprep.mubr.f32.mxu0 0.0
      %v10657 = vand.u32 %v8671, 4294901760
      %10658 = vmatmul.mubr.f32.gmra.mrb[0].mxu0 %v10657
      %v10659 = vpop.f32.mrb[0].mxu0
      %v10660 = vadd.f32 %v10222, %v10659
      %v10661 = vpop.f32.mrb[0].mxu0
      %10662 = vmatprep.mubr.f32.mxu0 0.0
      %v10663 = vand.u32 %v8674, 4294901760
      %10664 = vmatmul.mubr.f32.gmra.mrb[0].mxu0 %v10663
      %v10665 = vpop.f32.mrb[0].mxu0
      %v10666 = vadd.f32 %v10230, %v10665
      %v10667 = vpop.f32.mrb[0].mxu0
      %10668 = vmatprep.mubr.f32.mxu0 0.0
      %v10669 = vand.u32 %v8677, 4294901760
      %10670 = vmatmul.mubr.f32.gmra.mrb[0].mxu0 %v10669
      %v10671 = vpop.f32.mrb[0].mxu0
      %v10672 = vadd.f32 %v10238, %v10671
      %v10673 = vpop.f32.mrb[0].mxu0
      %10674 = vmatprep.mubr.f32.mxu0 0.0
      %v10675 = vand.u32 %v8680, 4294901760
      %10676 = vmatmul.mubr.f32.gmra.mrb[0].mxu0 %v10675
      %v10677 = vpop.f32.mrb[0].mxu0
      %v10678 = vadd.f32 %v10246, %v10677
      %v10679 = vpop.f32.mrb[0].mxu0
      %10680 = vmatprep.mubr.f32.mxu0 0.0
      %v10681 = vand.u32 %v8683, 4294901760
      %10682 = vmatmul.mubr.f32.gmra.mrb[0].mxu0 %v10681
      %v10683 = vpop.f32.mrb[0].mxu0
      %v10684 = vadd.f32 %v10254, %v10683
      %v10685 = vpop.f32.mrb[0].mxu0
      %10686 = vmatprep.mubr.f32.mxu0 0.0
      %v10687 = vand.u32 %v8686, 4294901760
      %10688 = vmatmul.mubr.f32.gmra.mrb[0].mxu0 %v10687
      %v10689 = vpop.f32.mrb[0].mxu0
      %v10690 = vadd.f32 %v10262, %v10689
      %v10691 = vpop.f32.mrb[0].mxu0
      %10692 = vmatprep.mubr.f32.mxu0 0.0
      %v10693 = vand.u32 %v8689, 4294901760
      %10694 = vmatmul.mubr.f32.gmra.mrb[0].mxu0 %v10693
      %v10695 = vpop.f32.mrb[0].mxu0
      %v10696 = vadd.f32 %v10270, %v10695
      %v10697 = vpop.f32.mrb[0].mxu0
      %10698 = vmatprep.mubr.f32.mxu0 0.0
      %v10699 = vand.u32 %v8692, 4294901760
      %10700 = vmatmul.mubr.f32.gmra.mrb[0].mxu0 %v10699
      %v10701 = vpop.f32.mrb[0].mxu0
      %v10702 = vadd.f32 %v10278, %v10701
      %v10703 = vpop.f32.mrb[0].mxu0
      %10704 = vmatprep.mubr.f32.mxu0 0.0
      %v10705 = vand.u32 %v8695, 4294901760
      %10706 = vmatmul.mubr.f32.gmra.mrb[0].mxu0 %v10705
      %v10707 = vpop.f32.mrb[0].mxu0
      %v10708 = vadd.f32 %v10286, %v10707
      %v10709 = vpop.f32.mrb[0].mxu0
      %10710 = vmatprep.mubr.f32.mxu0 0.0
      %v10711 = vand.u32 %v8698, 4294901760
      %10712 = vmatmul.mubr.f32.gmra.mrb[0].mxu0 %v10711
      %v10713 = vpop.f32.mrb[0].mxu0
      %v10714 = vadd.f32 %v10294, %v10713
      %v10715 = vpop.f32.mrb[0].mxu0
      %10716 = vmatprep.mubr.f32.mxu0 0.0
      %v10717 = vand.u32 %v8701, 4294901760
      %10718 = vmatmul.mubr.f32.gmra.mrb[0].mxu0 %v10717
      %v10719 = vpop.f32.mrb[0].mxu0
      %v10720 = vadd.f32 %v10302, %v10719
      %v10721 = vpop.f32.mrb[0].mxu0
      %10722 = vmatprep.mubr.f32.mxu0 0.0
      %v10723 = vand.u32 %v8704, 4294901760
      %10724 = vmatmul.mubr.f32.gmra.mrb[0].mxu0 %v10723
      %v10725 = vpop.f32.mrb[0].mxu0
      %v10726 = vadd.f32 %v10310, %v10725
      %v10727 = vpop.f32.mrb[0].mxu0
      %10728 = vmatprep.mubr.f32.mxu0 0.0
      %v10729 = vand.u32 %v8707, 4294901760
      %10730 = vmatmul.mubr.f32.gmra.mrb[0].mxu0 %v10729
      %v10731 = vpop.f32.mrb[0].mxu0
      %v10732 = vadd.f32 %v10318, %v10731
      %v10733 = vpop.f32.mrb[0].mxu0
      %10734 = vmatprep.mubr.f32.mxu0 0.0
      %v10735 = vand.u32 %v8710, 4294901760
      %10736 = vmatmul.mubr.f32.gmra.mrb[0].mxu0 %v10735
      %v10737 = vpop.f32.mrb[0].mxu0
      %v10738 = vadd.f32 %v10326, %v10737
      %v10739 = vpop.f32.mrb[0].mxu0
      %10740 = vmatprep.mubr.f32.mxu0 0.0
      %v10741 = vand.u32 %v8713, 4294901760
      %10742 = vmatmul.mubr.f32.gmra.mrb[0].mxu0 %v10741
      %v10743 = vpop.f32.mrb[0].mxu0
      %v10744 = vadd.f32 %v10334, %v10743
      %v10745 = vpop.f32.mrb[0].mxu0
      %10746 = vmatprep.mubr.f32.mxu0 0.0
      %v10747 = vand.u32 %v8716, 4294901760
      %10748 = vmatmul.mubr.f32.gmra.mrb[0].mxu0 %v10747
      %v10749 = vpop.f32.mrb[0].mxu0
      %v10750 = vadd.f32 %v10342, %v10749
      %v10751 = vpop.f32.mrb[0].mxu0
      %10752 = vmatprep.mubr.f32.mxu0 0.0
      %v10753 = vand.u32 %v8719, 4294901760
      %10754 = vmatmul.mubr.f32.gmra.mrb[0].mxu0 %v10753
      %v10755 = vpop.f32.mrb[0].mxu0
      %v10756 = vadd.f32 %v10350, %v10755
      %v10757 = vpop.f32.mrb[0].mxu0
      %10758 = vmatprep.mubr.f32.mxu0 0.0
      %v10759 = vand.u32 %v8722, 4294901760
      %10760 = vmatmul.mubr.f32.gmra.mrb[0].mxu0 %v10759
      %v10761 = vpop.f32.mrb[0].mxu0
      %v10762 = vadd.f32 %v10358, %v10761
      %v10763 = vpop.f32.mrb[0].mxu0
      %10764 = vmatprep.mubr.f32.mxu0 0.0
      %v10765 = vand.u32 %v8725, 4294901760
      %10766 = vmatmul.mubr.f32.gmra.mrb[0].mxu0 %v10765
      %v10767 = vpop.f32.mrb[0].mxu0
      %v10768 = vadd.f32 %v10366, %v10767
      %v10769 = vpop.f32.mrb[0].mxu0
      %10770 = vmatprep.mubr.f32.mxu0 0.0
      %v10771 = vand.u32 %v8728, 4294901760
      %10772 = vmatmul.mubr.f32.gmra.mrb[0].mxu0 %v10771
      %v10773 = vpop.f32.mrb[0].mxu0
      %v10774 = vadd.f32 %v10374, %v10773
      %v10775 = vpop.f32.mrb[0].mxu0
      %10776 = vmatprep.mubr.f32.mxu0 0.0
      %v10777 = vand.u32 %v8731, 4294901760
      %10778 = vmatmul.mubr.f32.gmra.mrb[0].mxu0 %v10777
      %v10779 = vpop.f32.mrb[0].mxu0
      %v10780 = vadd.f32 %v10382, %v10779
      %v10781 = vpop.f32.mrb[0].mxu0
      %10782 = vmatprep.mubr.f32.mxu0 0.0
      %v10783 = vand.u32 %v8734, 4294901760
      %10784 = vmatmul.mubr.f32.gmra.mrb[0].mxu0 %v10783
      %v10785 = vpop.f32.mrb[0].mxu0
      %v10786 = vadd.f32 %v10390, %v10785
      %v10787 = vpop.f32.mrb[0].mxu0
      %10788 = vmatprep.mubr.f32.mxu0 0.0
      %v10789 = vand.u32 %v8737, 4294901760
      %10790 = vmatmul.mubr.f32.gmra.mrb[0].mxu0 %v10789
      %v10791 = vpop.f32.mrb[0].mxu0
      %v10792 = vadd.f32 %v10398, %v10791
      %v10793 = vpop.f32.mrb[0].mxu0
      %10794 = vmatprep.mubr.f32.mxu0 0.0
      %v10795 = vand.u32 %v8740, 4294901760
      %10796 = vmatmul.mubr.f32.gmra.mrb[0].mxu0 %v10795
      %v10797 = vpop.f32.mrb[0].mxu0
      %v10798 = vadd.f32 %v10406, %v10797
      %v10799 = vpop.f32.mrb[0].mxu0
      %10800 = vmatprep.mubr.f32.mxu0 0.0
      %v10801 = vand.u32 %v8743, 4294901760
      %10802 = vmatmul.mubr.f32.gmra.mrb[0].mxu0 %v10801
      %v10803 = vpop.f32.mrb[0].mxu0
      %v10804 = vadd.f32 %v10414, %v10803
      %v10805 = vpop.f32.mrb[0].mxu0
      %10806 = vmatprep.mubr.f32.mxu0 0.0
      %v10807 = vand.u32 %v8746, 4294901760
      %10808 = vmatmul.mubr.f32.gmra.mrb[0].mxu0 %v10807
      %v10809 = vpop.f32.mrb[0].mxu0
      %v10810 = vadd.f32 %v10422, %v10809
      %v10811 = vpop.f32.mrb[0].mxu0
      %10812 = vmatprep.mubr.f32.mxu0 0.0
      %v10813 = vand.u32 %v8749, 4294901760
      %10814 = vmatmul.mubr.f32.gmra.mrb[0].mxu0 %v10813
      %v10815 = vpop.f32.mrb[0].mxu0
      %v10816 = vadd.f32 %v10430, %v10815
      %v10817 = vpop.f32.mrb[0].mxu0
      %10818 = vmatprep.mubr.f32.mxu0 0.0
      %v10819 = vand.u32 %v8752, 4294901760
      %10820 = vmatmul.mubr.f32.gmra.mrb[0].mxu0 %v10819
      %v10821 = vpop.f32.mrb[0].mxu0
      %v10822 = vadd.f32 %v10438, %v10821
      %v10823 = vpop.f32.mrb[0].mxu0
      %10824 = vmatprep.mubr.f32.mxu0 0.0
      %v10825 = vand.u32 %v8755, 4294901760
      %10826 = vmatmul.mubr.f32.gmra.mrb[0].mxu0 %v10825
      %v10827 = vpop.f32.mrb[0].mxu0
      %v10828 = vadd.f32 %v10446, %v10827
      %v10829 = vpop.f32.mrb[0].mxu0
      %10830 = vmatprep.mubr.f32.mxu0 0.0
      %v10831 = vand.u32 %v8758, 4294901760
      %10832 = vmatmul.mubr.f32.gmra.mrb[0].mxu0 %v10831
      %v10833 = vpop.f32.mrb[0].mxu0
      %v10834 = vadd.f32 %v10454, %v10833
      %v10835 = vpop.f32.mrb[0].mxu0
      %10836 = vmatprep.mubr.f32.mxu0 0.0
      %v10837 = vand.u32 %v8761, 4294901760
      %10838 = vmatmul.mubr.f32.gmra.mrb[0].mxu0 %v10837
      %v10839 = vpop.f32.mrb[0].mxu0
      %v10840 = vadd.f32 %v10462, %v10839
      %v10841 = vpop.f32.mrb[0].mxu0
      %10842 = vmatprep.mubr.f32.mxu0 0.0
      %v10843 = vand.u32 %v8764, 4294901760
      %10844 = vmatmul.mubr.f32.gmra.mrb[0].mxu0 %v10843
      %v10845 = vpop.f32.mrb[0].mxu0
      %v10846 = vadd.f32 %v10470, %v10845
      %v10847 = vpop.f32.mrb[0].mxu0
      %10848 = vmatprep.mubr.f32.mxu0 0.0
      %v10849 = vand.u32 %v8767, 4294901760
      %10850 = vmatmul.mubr.f32.gmra.mrb[0].mxu0 %v10849
      %v10851 = vpop.f32.mrb[0].mxu0
      %v10852 = vadd.f32 %v10478, %v10851
      %v10853 = vpop.f32.mrb[0].mxu0
      %10854 = vmatprep.mubr.f32.mxu0 0.0
      %v10855 = vand.u32 %v8770, 4294901760
      %10856 = vmatmul.mubr.f32.gmra.mrb[0].mxu0 %v10855
      %v10857 = vpop.f32.mrb[0].mxu0
      %v10858 = vadd.f32 %v10486, %v10857
      %v10859 = vpop.f32.mrb[0].mxu0
      %10860 = vmatprep.mubr.f32.mxu0 0.0
      %v10861 = vand.u32 %v8773, 4294901760
      %10862 = vmatmul.mubr.f32.gmra.mrb[0].mxu0 %v10861
      %v10863 = vpop.f32.mrb[0].mxu0
      %v10864 = vadd.f32 %v10494, %v10863
      %v10865 = vpop.f32.mrb[0].mxu0
      %10866 = vmatprep.mubr.f32.mxu0 0.0
      %v10867 = vand.u32 %v8776, 4294901760
      %10868 = vmatmul.mubr.f32.gmra.mrb[0].mxu0 %v10867
      %v10869 = vpop.f32.mrb[0].mxu0
      %v10870 = vadd.f32 %v10502, %v10869
      %v10871 = vpop.f32.mrb[0].mxu0
      %10872 = vmatprep.mubr.f32.mxu0 0.0
      %v10873 = vand.u32 %v8779, 4294901760
      %10874 = vmatmul.mubr.f32.gmra.mrb[0].mxu0 %v10873
      %v10875 = vpop.f32.mrb[0].mxu0
      %v10876 = vadd.f32 %v10510, %v10875
      %v10877 = vpop.f32.mrb[0].mxu0
      %10878 = vmatprep.mubr.f32.mxu0 0.0
      %v10879 = vand.u32 %v8782, 4294901760
      %10880 = vmatmul.mubr.f32.gmra.mrb[0].mxu0 %v10879
      %v10881 = vpop.f32.mrb[0].mxu0
      %v10882 = vadd.f32 %v10518, %v10881
      %v10883 = vpop.f32.mrb[0].mxu0
      %10884 = vmatprep.mubr.f32.mxu0 0.0
      %v10885 = vand.u32 %v8785, 4294901760
      %10886 = vmatmul.mubr.f32.gmra.mrb[0].mxu0 %v10885
      %v10887 = vpop.f32.mrb[0].mxu0
      %v10888 = vadd.f32 %v10526, %v10887
      %v10889 = vpop.f32.mrb[0].mxu0
      %10890 = vmatprep.mubr.f32.mxu0 0.0
      %v10891 = vand.u32 %v8788, 4294901760
      %10892 = vmatmul.mubr.f32.gmra.mrb[0].mxu0 %v10891
      %v10893 = vpop.f32.mrb[0].mxu0
      %v10894 = vadd.f32 %v10534, %v10893
      %v10895 = vpop.f32.mrb[0].mxu0
      %10896 = vmatprep.mubr.f32.mxu0 0.0
      %v10897 = vand.u32 %v8791, 4294901760
      %10898 = vmatmul.mubr.f32.gmra.mrb[0].mxu0 %v10897
      %v10899 = vpop.f32.mrb[0].mxu0
      %v10900 = vadd.f32 %v10542, %v10899
      %v10901 = vpop.f32.mrb[0].mxu0
      %10902 = vmatprep.mubr.f32.mxu0 0.0
      %v10903 = vand.u32 %v8794, 4294901760
      %10904 = vmatmul.mubr.f32.gmra.mrb[0].mxu0 %v10903
      %v10905 = vpop.f32.mrb[0].mxu0
      %v10906 = vadd.f32 %v10550, %v10905
      %v10907 = vpop.f32.mrb[0].mxu0
      %10908 = vdwg.mxu0
      %10909 = vmatprep.subr.mxu0 0.0
      %v10910 = vand.u32 %v8596, 4294901760
      %10911 = vmatpush1.msra.mxu0 %v10910
      %10912 = vmatprep.subr.mxu0 0.0
      %10913 = vmatpush1.msra.mxu0 0.0
      %10914 = vmatprep.subr.mxu0 0.0
      %10915 = vmatpush1.msra.mxu0 0.0
      %10916 = vmatprep.subr.mxu0 0.0
      %10917 = vmatpush1.msra.mxu0 0.0
      %10918 = vmatprep.subr.mxu0 0.0
      %10919 = vmatpush1.msra.mxu0 0.0
      %10920 = vmatprep.subr.mxu0 0.0
      %10921 = vmatpush1.msra.mxu0 0.0
      %10922 = vmatprep.subr.mxu0 0.0
      %10923 = vmatpush1.msra.mxu0 0.0
      %10924 = vmatprep.subr.mxu0 0.0
      %10925 = vmatpush1.msra.mxu0 0.0
      %10926 = vmatprep.subr.mxu0 0.0
      %10927 = vmatpush1.msra.mxu0 0.0
      %10928 = vmatprep.subr.mxu0 0.0
      %10929 = vmatpush1.msra.mxu0 0.0
      %10930 = vmatprep.subr.mxu0 0.0
      %10931 = vmatpush1.msra.mxu0 0.0
      %10932 = vmatprep.subr.mxu0 0.0
      %10933 = vmatpush1.msra.mxu0 0.0
      %10934 = vmatprep.subr.mxu0 0.0
      %10935 = vmatpush1.msra.mxu0 0.0
      %10936 = vmatprep.subr.mxu0 0.0
      %10937 = vmatpush1.msra.mxu0 0.0
      %10938 = vmatprep.subr.mxu0 0.0
      %10939 = vmatpush1.msra.mxu0 0.0
      %10940 = vmatprep.subr.mxu0 0.0
      %10941 = vmatpush1.msra.mxu0 0.0
      %10942 = vmatprep.subr.mxu0 0.0
      %10943 = vmatpush1.msra.mxu0 0.0
      %10944 = vmatprep.subr.mxu0 0.0
      %10945 = vmatpush1.msra.mxu0 0.0
      %10946 = vmatprep.subr.mxu0 0.0
      %10947 = vmatpush1.msra.mxu0 0.0
      %10948 = vmatprep.subr.mxu0 0.0
      %10949 = vmatpush1.msra.mxu0 0.0
      %10950 = vmatprep.subr.mxu0 0.0
      %10951 = vmatpush1.msra.mxu0 0.0
      %10952 = vmatprep.subr.mxu0 0.0
      %10953 = vmatpush1.msra.mxu0 0.0
      %10954 = vmatprep.subr.mxu0 0.0
      %10955 = vmatpush1.msra.mxu0 0.0
      %10956 = vmatprep.subr.mxu0 0.0
      %10957 = vmatpush1.msra.mxu0 0.0
      %10958 = vmatprep.subr.mxu0 0.0
      %10959 = vmatpush1.msra.mxu0 0.0
      %10960 = vmatprep.subr.mxu0 0.0
      %10961 = vmatpush1.msra.mxu0 0.0
      %10962 = vmatprep.subr.mxu0 0.0
      %10963 = vmatpush1.msra.mxu0 0.0
      %10964 = vmatprep.subr.mxu0 0.0
      %10965 = vmatpush1.msra.mxu0 0.0
      %10966 = vmatprep.subr.mxu0 0.0
      %10967 = vmatpush1.msra.mxu0 0.0
      %10968 = vmatprep.subr.mxu0 0.0
      %10969 = vmatpush1.msra.mxu0 0.0
      %10970 = vmatprep.subr.mxu0 0.0
      %10971 = vmatpush1.msra.mxu0 0.0
      %10972 = vmatprep.subr.mxu0 0.0
      %10973 = vmatpush1.msra.mxu0 0.0
      %10974 = vmatprep.mubr.f32.mxu0 0.0
      %v10975 = vand.u32 %v8653, 4294901760
      %10976 = vmatmul.mubr.f32.gmra.mrb[0].mxu0 %v10975
      %v10977 = vpop.f32.mrb[0].mxu0
      %v10978 = vadd.f32 %v10624, %v10977
      %v10979 = vpop.f32.mrb[0].mxu0
      %10980 = vmatprep.mubr.f32.mxu0 0.0
      %v10981 = vand.u32 %v8656, 4294901760
      %10982 = vmatmul.mubr.f32.gmra.mrb[0].mxu0 %v10981
      %v10983 = vpop.f32.mrb[0].mxu0
      %v10984 = vadd.f32 %v10630, %v10983
      %v10985 = vpop.f32.mrb[0].mxu0
      %10986 = vmatprep.mubr.f32.mxu0 0.0
      %v10987 = vand.u32 %v8659, 4294901760
      %10988 = vmatmul.mubr.f32.gmra.mrb[0].mxu0 %v10987
      %v10989 = vpop.f32.mrb[0].mxu0
      %v10990 = vadd.f32 %v10636, %v10989
      %v10991 = vpop.f32.mrb[0].mxu0
      %10992 = vmatprep.mubr.f32.mxu0 0.0
      %v10993 = vand.u32 %v8662, 4294901760
      %10994 = vmatmul.mubr.f32.gmra.mrb[0].mxu0 %v10993
      %v10995 = vpop.f32.mrb[0].mxu0
      %v10996 = vadd.f32 %v10642, %v10995
      %v10997 = vpop.f32.mrb[0].mxu0
      %10998 = vmatprep.mubr.f32.mxu0 0.0
      %v10999 = vand.u32 %v8665, 4294901760
      %11000 = vmatmul.mubr.f32.gmra.mrb[0].mxu0 %v10999
      %v11001 = vpop.f32.mrb[0].mxu0
      %v11002 = vadd.f32 %v10648, %v11001
      %v11003 = vpop.f32.mrb[0].mxu0
      %11004 = vmatprep.mubr.f32.mxu0 0.0
      %v11005 = vand.u32 %v8668, 4294901760
      %11006 = vmatmul.mubr.f32.gmra.mrb[0].mxu0 %v11005
      %v11007 = vpop.f32.mrb[0].mxu0
      %v11008 = vadd.f32 %v10654, %v11007
      %v11009 = vpop.f32.mrb[0].mxu0
      %11010 = vmatprep.mubr.f32.mxu0 0.0
      %v11011 = vand.u32 %v8671, 4294901760
      %11012 = vmatmul.mubr.f32.gmra.mrb[0].mxu0 %v11011
      %v11013 = vpop.f32.mrb[0].mxu0
      %v11014 = vadd.f32 %v10660, %v11013
      %v11015 = vpop.f32.mrb[0].mxu0
      %11016 = vmatprep.mubr.f32.mxu0 0.0
      %v11017 = vand.u32 %v8674, 4294901760
      %11018 = vmatmul.mubr.f32.gmra.mrb[0].mxu0 %v11017
      %v11019 = vpop.f32.mrb[0].mxu0
      %v11020 = vadd.f32 %v10666, %v11019
      %v11021 = vpop.f32.mrb[0].mxu0
      %11022 = vmatprep.mubr.f32.mxu0 0.0
      %v11023 = vand.u32 %v8677, 4294901760
      %11024 = vmatmul.mubr.f32.gmra.mrb[0].mxu0 %v11023
      %v11025 = vpop.f32.mrb[0].mxu0
      %v11026 = vadd.f32 %v10672, %v11025
      %v11027 = vpop.f32.mrb[0].mxu0
      %11028 = vmatprep.mubr.f32.mxu0 0.0
      %v11029 = vand.u32 %v8680, 4294901760
      %11030 = vmatmul.mubr.f32.gmra.mrb[0].mxu0 %v11029
      %v11031 = vpop.f32.mrb[0].mxu0
      %v11032 = vadd.f32 %v10678, %v11031
      %v11033 = vpop.f32.mrb[0].mxu0
      %11034 = vmatprep.mubr.f32.mxu0 0.0
      %v11035 = vand.u32 %v8683, 4294901760
      %11036 = vmatmul.mubr.f32.gmra.mrb[0].mxu0 %v11035
      %v11037 = vpop.f32.mrb[0].mxu0
      %v11038 = vadd.f32 %v10684, %v11037
      %v11039 = vpop.f32.mrb[0].mxu0
      %11040 = vmatprep.mubr.f32.mxu0 0.0
      %v11041 = vand.u32 %v8686, 4294901760
      %11042 = vmatmul.mubr.f32.gmra.mrb[0].mxu0 %v11041
      %v11043 = vpop.f32.mrb[0].mxu0
      %v11044 = vadd.f32 %v10690, %v11043
      %v11045 = vpop.f32.mrb[0].mxu0
      %11046 = vmatprep.mubr.f32.mxu0 0.0
      %v11047 = vand.u32 %v8689, 4294901760
      %11048 = vmatmul.mubr.f32.gmra.mrb[0].mxu0 %v11047
      %v11049 = vpop.f32.mrb[0].mxu0
      %v11050 = vadd.f32 %v10696, %v11049
      %v11051 = vpop.f32.mrb[0].mxu0
      %11052 = vmatprep.mubr.f32.mxu0 0.0
      %v11053 = vand.u32 %v8692, 4294901760
      %11054 = vmatmul.mubr.f32.gmra.mrb[0].mxu0 %v11053
      %v11055 = vpop.f32.mrb[0].mxu0
      %v11056 = vadd.f32 %v10702, %v11055
      %v11057 = vpop.f32.mrb[0].mxu0
      %11058 = vmatprep.mubr.f32.mxu0 0.0
      %v11059 = vand.u32 %v8695, 4294901760
      %11060 = vmatmul.mubr.f32.gmra.mrb[0].mxu0 %v11059
      %v11061 = vpop.f32.mrb[0].mxu0
      %v11062 = vadd.f32 %v10708, %v11061
      %v11063 = vpop.f32.mrb[0].mxu0
      %11064 = vmatprep.mubr.f32.mxu0 0.0
      %v11065 = vand.u32 %v8698, 4294901760
      %11066 = vmatmul.mubr.f32.gmra.mrb[0].mxu0 %v11065
      %v11067 = vpop.f32.mrb[0].mxu0
      %v11068 = vadd.f32 %v10714, %v11067
      %v11069 = vpop.f32.mrb[0].mxu0
      %11070 = vmatprep.mubr.f32.mxu0 0.0
      %v11071 = vand.u32 %v8701, 4294901760
      %11072 = vmatmul.mubr.f32.gmra.mrb[0].mxu0 %v11071
      %v11073 = vpop.f32.mrb[0].mxu0
      %v11074 = vadd.f32 %v10720, %v11073
      %v11075 = vpop.f32.mrb[0].mxu0
      %11076 = vmatprep.mubr.f32.mxu0 0.0
      %v11077 = vand.u32 %v8704, 4294901760
      %11078 = vmatmul.mubr.f32.gmra.mrb[0].mxu0 %v11077
      %v11079 = vpop.f32.mrb[0].mxu0
      %v11080 = vadd.f32 %v10726, %v11079
      %v11081 = vpop.f32.mrb[0].mxu0
      %11082 = vmatprep.mubr.f32.mxu0 0.0
      %v11083 = vand.u32 %v8707, 4294901760
      %11084 = vmatmul.mubr.f32.gmra.mrb[0].mxu0 %v11083
      %v11085 = vpop.f32.mrb[0].mxu0
      %v11086 = vadd.f32 %v10732, %v11085
      %v11087 = vpop.f32.mrb[0].mxu0
      %11088 = vmatprep.mubr.f32.mxu0 0.0
      %v11089 = vand.u32 %v8710, 4294901760
      %11090 = vmatmul.mubr.f32.gmra.mrb[0].mxu0 %v11089
      %v11091 = vpop.f32.mrb[0].mxu0
      %v11092 = vadd.f32 %v10738, %v11091
      %v11093 = vpop.f32.mrb[0].mxu0
      %11094 = vmatprep.mubr.f32.mxu0 0.0
      %v11095 = vand.u32 %v8713, 4294901760
      %11096 = vmatmul.mubr.f32.gmra.mrb[0].mxu0 %v11095
      %v11097 = vpop.f32.mrb[0].mxu0
      %v11098 = vadd.f32 %v10744, %v11097
      %v11099 = vpop.f32.mrb[0].mxu0
      %11100 = vmatprep.mubr.f32.mxu0 0.0
      %v11101 = vand.u32 %v8716, 4294901760
      %11102 = vmatmul.mubr.f32.gmra.mrb[0].mxu0 %v11101
      %v11103 = vpop.f32.mrb[0].mxu0
      %v11104 = vadd.f32 %v10750, %v11103
      %v11105 = vpop.f32.mrb[0].mxu0
      %11106 = vmatprep.mubr.f32.mxu0 0.0
      %v11107 = vand.u32 %v8719, 4294901760
      %11108 = vmatmul.mubr.f32.gmra.mrb[0].mxu0 %v11107
      %v11109 = vpop.f32.mrb[0].mxu0
      %v11110 = vadd.f32 %v10756, %v11109
      %v11111 = vpop.f32.mrb[0].mxu0
      %11112 = vmatprep.mubr.f32.mxu0 0.0
      %v11113 = vand.u32 %v8722, 4294901760
      %11114 = vmatmul.mubr.f32.gmra.mrb[0].mxu0 %v11113
      %v11115 = vpop.f32.mrb[0].mxu0
      %v11116 = vadd.f32 %v10762, %v11115
      %v11117 = vpop.f32.mrb[0].mxu0
      %11118 = vmatprep.mubr.f32.mxu0 0.0
      %v11119 = vand.u32 %v8725, 4294901760
      %11120 = vmatmul.mubr.f32.gmra.mrb[0].mxu0 %v11119
      %v11121 = vpop.f32.mrb[0].mxu0
      %v11122 = vadd.f32 %v10768, %v11121
      %v11123 = vpop.f32.mrb[0].mxu0
      %11124 = vmatprep.mubr.f32.mxu0 0.0
      %v11125 = vand.u32 %v8728, 4294901760
      %11126 = vmatmul.mubr.f32.gmra.mrb[0].mxu0 %v11125
      %v11127 = vpop.f32.mrb[0].mxu0
      %v11128 = vadd.f32 %v10774, %v11127
      %v11129 = vpop.f32.mrb[0].mxu0
      %11130 = vmatprep.mubr.f32.mxu0 0.0
      %v11131 = vand.u32 %v8731, 4294901760
      %11132 = vmatmul.mubr.f32.gmra.mrb[0].mxu0 %v11131
      %v11133 = vpop.f32.mrb[0].mxu0
      %v11134 = vadd.f32 %v10780, %v11133
      %v11135 = vpop.f32.mrb[0].mxu0
      %11136 = vmatprep.mubr.f32.mxu0 0.0
      %v11137 = vand.u32 %v8734, 4294901760
      %11138 = vmatmul.mubr.f32.gmra.mrb[0].mxu0 %v11137
      %v11139 = vpop.f32.mrb[0].mxu0
      %v11140 = vadd.f32 %v10786, %v11139
      %v11141 = vpop.f32.mrb[0].mxu0
      %11142 = vmatprep.mubr.f32.mxu0 0.0
      %v11143 = vand.u32 %v8737, 4294901760
      %11144 = vmatmul.mubr.f32.gmra.mrb[0].mxu0 %v11143
      %v11145 = vpop.f32.mrb[0].mxu0
      %v11146 = vadd.f32 %v10792, %v11145
      %v11147 = vpop.f32.mrb[0].mxu0
      %11148 = vmatprep.mubr.f32.mxu0 0.0
      %v11149 = vand.u32 %v8740, 4294901760
      %11150 = vmatmul.mubr.f32.gmra.mrb[0].mxu0 %v11149
      %v11151 = vpop.f32.mrb[0].mxu0
      %v11152 = vadd.f32 %v10798, %v11151
      %v11153 = vpop.f32.mrb[0].mxu0
      %11154 = vmatprep.mubr.f32.mxu0 0.0
      %v11155 = vand.u32 %v8743, 4294901760
      %11156 = vmatmul.mubr.f32.gmra.mrb[0].mxu0 %v11155
      %v11157 = vpop.f32.mrb[0].mxu0
      %v11158 = vadd.f32 %v10804, %v11157
      %v11159 = vpop.f32.mrb[0].mxu0
      %11160 = vmatprep.mubr.f32.mxu0 0.0
      %v11161 = vand.u32 %v8746, 4294901760
      %11162 = vmatmul.mubr.f32.gmra.mrb[0].mxu0 %v11161
      %v11163 = vpop.f32.mrb[0].mxu0
      %v11164 = vadd.f32 %v10810, %v11163
      %v11165 = vpop.f32.mrb[0].mxu0
      %11166 = vmatprep.mubr.f32.mxu0 0.0
      %v11167 = vand.u32 %v8749, 4294901760
      %11168 = vmatmul.mubr.f32.gmra.mrb[0].mxu0 %v11167
      %v11169 = vpop.f32.mrb[0].mxu0
      %v11170 = vadd.f32 %v10816, %v11169
      %v11171 = vpop.f32.mrb[0].mxu0
      %11172 = vmatprep.mubr.f32.mxu0 0.0
      %v11173 = vand.u32 %v8752, 4294901760
      %11174 = vmatmul.mubr.f32.gmra.mrb[0].mxu0 %v11173
      %v11175 = vpop.f32.mrb[0].mxu0
      %v11176 = vadd.f32 %v10822, %v11175
      %v11177 = vpop.f32.mrb[0].mxu0
      %11178 = vmatprep.mubr.f32.mxu0 0.0
      %v11179 = vand.u32 %v8755, 4294901760
      %11180 = vmatmul.mubr.f32.gmra.mrb[0].mxu0 %v11179
      %v11181 = vpop.f32.mrb[0].mxu0
      %v11182 = vadd.f32 %v10828, %v11181
      %v11183 = vpop.f32.mrb[0].mxu0
      %11184 = vmatprep.mubr.f32.mxu0 0.0
      %v11185 = vand.u32 %v8758, 4294901760
      %11186 = vmatmul.mubr.f32.gmra.mrb[0].mxu0 %v11185
      %v11187 = vpop.f32.mrb[0].mxu0
      %v11188 = vadd.f32 %v10834, %v11187
      %v11189 = vpop.f32.mrb[0].mxu0
      %11190 = vmatprep.mubr.f32.mxu0 0.0
      %v11191 = vand.u32 %v8761, 4294901760
      %11192 = vmatmul.mubr.f32.gmra.mrb[0].mxu0 %v11191
      %v11193 = vpop.f32.mrb[0].mxu0
      %v11194 = vadd.f32 %v10840, %v11193
      %v11195 = vpop.f32.mrb[0].mxu0
      %11196 = vmatprep.mubr.f32.mxu0 0.0
      %v11197 = vand.u32 %v8764, 4294901760
      %11198 = vmatmul.mubr.f32.gmra.mrb[0].mxu0 %v11197
      %v11199 = vpop.f32.mrb[0].mxu0
      %v11200 = vadd.f32 %v10846, %v11199
      %v11201 = vpop.f32.mrb[0].mxu0
      %11202 = vmatprep.mubr.f32.mxu0 0.0
      %v11203 = vand.u32 %v8767, 4294901760
      %11204 = vmatmul.mubr.f32.gmra.mrb[0].mxu0 %v11203
      %v11205 = vpop.f32.mrb[0].mxu0
      %v11206 = vadd.f32 %v10852, %v11205
      %v11207 = vpop.f32.mrb[0].mxu0
      %11208 = vmatprep.mubr.f32.mxu0 0.0
      %v11209 = vand.u32 %v8770, 4294901760
      %11210 = vmatmul.mubr.f32.gmra.mrb[0].mxu0 %v11209
      %v11211 = vpop.f32.mrb[0].mxu0
      %v11212 = vadd.f32 %v10858, %v11211
      %v11213 = vpop.f32.mrb[0].mxu0
      %11214 = vmatprep.mubr.f32.mxu0 0.0
      %v11215 = vand.u32 %v8773, 4294901760
      %11216 = vmatmul.mubr.f32.gmra.mrb[0].mxu0 %v11215
      %v11217 = vpop.f32.mrb[0].mxu0
      %v11218 = vadd.f32 %v10864, %v11217
      %v11219 = vpop.f32.mrb[0].mxu0
      %11220 = vmatprep.mubr.f32.mxu0 0.0
      %v11221 = vand.u32 %v8776, 4294901760
      %11222 = vmatmul.mubr.f32.gmra.mrb[0].mxu0 %v11221
      %v11223 = vpop.f32.mrb[0].mxu0
      %v11224 = vadd.f32 %v10870, %v11223
      %v11225 = vpop.f32.mrb[0].mxu0
      %11226 = vmatprep.mubr.f32.mxu0 0.0
      %v11227 = vand.u32 %v8779, 4294901760
      %11228 = vmatmul.mubr.f32.gmra.mrb[0].mxu0 %v11227
      %v11229 = vpop.f32.mrb[0].mxu0
      %v11230 = vadd.f32 %v10876, %v11229
      %v11231 = vpop.f32.mrb[0].mxu0
      %11232 = vmatprep.mubr.f32.mxu0 0.0
      %v11233 = vand.u32 %v8782, 4294901760
      %11234 = vmatmul.mubr.f32.gmra.mrb[0].mxu0 %v11233
      %v11235 = vpop.f32.mrb[0].mxu0
      %v11236 = vadd.f32 %v10882, %v11235
      %v11237 = vpop.f32.mrb[0].mxu0
      %11238 = vmatprep.mubr.f32.mxu0 0.0
      %v11239 = vand.u32 %v8785, 4294901760
      %11240 = vmatmul.mubr.f32.gmra.mrb[0].mxu0 %v11239
      %v11241 = vpop.f32.mrb[0].mxu0
      %v11242 = vadd.f32 %v10888, %v11241
      %v11243 = vpop.f32.mrb[0].mxu0
      %11244 = vmatprep.mubr.f32.mxu0 0.0
      %v11245 = vand.u32 %v8788, 4294901760
      %11246 = vmatmul.mubr.f32.gmra.mrb[0].mxu0 %v11245
      %v11247 = vpop.f32.mrb[0].mxu0
      %v11248 = vadd.f32 %v10894, %v11247
      %v11249 = vpop.f32.mrb[0].mxu0
      %11250 = vmatprep.mubr.f32.mxu0 0.0
      %v11251 = vand.u32 %v8791, 4294901760
      %11252 = vmatmul.mubr.f32.gmra.mrb[0].mxu0 %v11251
      %v11253 = vpop.f32.mrb[0].mxu0
      %v11254 = vadd.f32 %v10900, %v11253
      %v11255 = vpop.f32.mrb[0].mxu0
      %11256 = vmatprep.mubr.f32.mxu0 0.0
      %v11257 = vand.u32 %v8794, 4294901760
      %11258 = vmatmul.mubr.f32.gmra.mrb[0].mxu0 %v11257
      %v11259 = vpop.f32.mrb[0].mxu0
      %v11260 = vadd.f32 %v10906, %v11259
      %v11261 = vpop.f32.mrb[0].mxu0
      %11262 = vdwg.mxu0
      %v11263 = vadd.f32 %v10978, %v8597
      %v11264 = vadd.f32 %v10984, %v8598
      %v11265 = vadd.f32 %v10990, %v8599
      %v11266 = vadd.f32 %v10996, %v8600
      %v11267 = vadd.f32 %v11002, %v8601
      %v11268 = vadd.f32 %v11008, %v8602
      %v11269 = vadd.f32 %v11014, %v8603
      %v11270 = vadd.f32 %v11020, %v8604
      %v11271 = vadd.f32 %v11026, %v8605
      %v11272 = vadd.f32 %v11032, %v8606
      %v11273 = vadd.f32 %v11038, %v8607
      %v11274 = vadd.f32 %v11044, %v8608
      %v11275 = vadd.f32 %v11050, %v8609
      %v11276 = vadd.f32 %v11056, %v8610
      %v11277 = vadd.f32 %v11062, %v8611
      %v11278 = vadd.f32 %v11068, %v8612
      %v11279 = vadd.f32 %v11074, %v8613
      %v11280 = vadd.f32 %v11080, %v8614
      %v11281 = vadd.f32 %v11086, %v8615
      %v11282 = vadd.f32 %v11092, %v8616
      %v11283 = vadd.f32 %v11098, %v8617
      %v11284 = vadd.f32 %v11104, %v8618
      %v11285 = vadd.f32 %v11110, %v8619
      %v11286 = vadd.f32 %v11116, %v8620
      %v11287 = vadd.f32 %v11122, %v8621
      %v11288 = vadd.f32 %v11128, %v8622
      %v11289 = vadd.f32 %v11134, %v8623
      %v11290 = vadd.f32 %v11140, %v8624
      %v11291 = vadd.f32 %v11146, %v8625
      %v11292 = vadd.f32 %v11152, %v8626
      %v11293 = vadd.f32 %v11158, %v8627
      %v11294 = vadd.f32 %v11164, %v8628
      %v11295 = vadd.f32 %v11170, %v8629
      %v11296 = vadd.f32 %v11176, %v8630
      %v11297 = vadd.f32 %v11182, %v8631
      %v11298 = vadd.f32 %v11188, %v8632
      %v11299 = vadd.f32 %v11194, %v8633
      %v11300 = vadd.f32 %v11200, %v8634
      %v11301 = vadd.f32 %v11206, %v8635
      %v11302 = vadd.f32 %v11212, %v8636
      %v11303 = vadd.f32 %v11218, %v8637
      %v11304 = vadd.f32 %v11224, %v8638
      %v11305 = vadd.f32 %v11230, %v8639
      %v11306 = vadd.f32 %v11236, %v8640
      %v11307 = vadd.f32 %v11242, %v8641
      %v11308 = vadd.f32 %v11248, %v8642
      %v11309 = vadd.f32 %v11254, %v8643
      %v11310 = vadd.f32 %v11260, %v8644
      %v11311 = vmax.f32 %v11263, 0.0
      %v11312 = vmax.f32 %v11264, 0.0
      %v11313 = vmax.f32 %v11265, 0.0
      %v11314 = vmax.f32 %v11266, 0.0
      %v11315 = vmax.f32 %v11267, 0.0
      %v11316 = vmax.f32 %v11268, 0.0
      %v11317 = vmax.f32 %v11269, 0.0
      %v11318 = vmax.f32 %v11270, 0.0
      %v11319 = vmax.f32 %v11271, 0.0
      %v11320 = vmax.f32 %v11272, 0.0
      %v11321 = vmax.f32 %v11273, 0.0
      %v11322 = vmax.f32 %v11274, 0.0
      %v11323 = vmax.f32 %v11275, 0.0
      %v11324 = vmax.f32 %v11276, 0.0
      %v11325 = vmax.f32 %v11277, 0.0
      %v11326 = vmax.f32 %v11278, 0.0
      %v11327 = vmax.f32 %v11279, 0.0
      %v11328 = vmax.f32 %v11280, 0.0
      %v11329 = vmax.f32 %v11281, 0.0
      %v11330 = vmax.f32 %v11282, 0.0
      %v11331 = vmax.f32 %v11283, 0.0
      %v11332 = vmax.f32 %v11284, 0.0
      %v11333 = vmax.f32 %v11285, 0.0
      %v11334 = vmax.f32 %v11286, 0.0
      %v11335 = vmax.f32 %v11287, 0.0
      %v11336 = vmax.f32 %v11288, 0.0
      %v11337 = vmax.f32 %v11289, 0.0
      %v11338 = vmax.f32 %v11290, 0.0
      %v11339 = vmax.f32 %v11291, 0.0
      %v11340 = vmax.f32 %v11292, 0.0
      %v11341 = vmax.f32 %v11293, 0.0
      %v11342 = vmax.f32 %v11294, 0.0
      %v11343 = vmax.f32 %v11295, 0.0
      %v11344 = vmax.f32 %v11296, 0.0
      %v11345 = vmax.f32 %v11297, 0.0
      %v11346 = vmax.f32 %v11298, 0.0
      %v11347 = vmax.f32 %v11299, 0.0
      %v11348 = vmax.f32 %v11300, 0.0
      %v11349 = vmax.f32 %v11301, 0.0
      %v11350 = vmax.f32 %v11302, 0.0
      %v11351 = vmax.f32 %v11303, 0.0
      %v11352 = vmax.f32 %v11304, 0.0
      %v11353 = vmax.f32 %v11305, 0.0
      %v11354 = vmax.f32 %v11306, 0.0
      %v11355 = vmax.f32 %v11307, 0.0
      %v11356 = vmax.f32 %v11308, 0.0
      %v11357 = vmax.f32 %v11309, 0.0
      %v11358 = vmax.f32 %v11310, 0.0
      %11359 = vst.msk [vmem:[%s305] sm:$0xff] %vm374, %v11311
      %11360 = vst.msk [vmem:[%s305 + $0x8] sm:$0xff] %vm374, %v11312
      %11361 = vst.msk [vmem:[%s305 + $0x10] sm:$0xff] %vm374, %v11313
      %11362 = vst.msk [vmem:[%s305 + $0x18] sm:$0xff] %vm374, %v11314
      %11363 = vst.msk [vmem:[%s305 + $0x20] sm:$0xff] %vm374, %v11315
      %11364 = vst.msk [vmem:[%s305 + $0x28] sm:$0xff] %vm374, %v11316
      %11365 = vst.msk [vmem:[%s305 + $0x30] sm:$0xff] %vm374, %v11317
      %11366 = vst.msk [vmem:[%s305 + $0x38] sm:$0xff] %vm374, %v11318
      %11367 = vst.msk [vmem:[%s305 + $0x40] sm:$0xff] %vm374, %v11319
      %11368 = vst.msk [vmem:[%s305 + $0x48] sm:$0xff] %vm374, %v11320
      %11369 = vst.msk [vmem:[%s305 + $0x50] sm:$0xff] %vm374, %v11321
      %11370 = vst.msk [vmem:[%s305 + $0x58] sm:$0xff] %vm374, %v11322
      %11371 = vst.msk [vmem:[%s305 + $0x60] sm:$0xff] %vm374, %v11323
      %11372 = vst.msk [vmem:[%s305 + $0x68] sm:$0xff] %vm374, %v11324
      %11373 = vst.msk [vmem:[%s305 + $0x70] sm:$0xff] %vm374, %v11325
      %11374 = vst.msk [vmem:[%s305 + $0x78] sm:$0xff] %vm374, %v11326
      %11375 = vst.msk [vmem:[%s305 + $0x80] sm:$0xff] %vm374, %v11327
      %11376 = vst.msk [vmem:[%s305 + $0x88] sm:$0xff] %vm374, %v11328
      %11377 = vst.msk [vmem:[%s305 + $0x90] sm:$0xff] %vm374, %v11329
      %11378 = vst.msk [vmem:[%s305 + $0x98] sm:$0xff] %vm374, %v11330
      %11379 = vst.msk [vmem:[%s305 + $0xa0] sm:$0xff] %vm374, %v11331
      %11380 = vst.msk [vmem:[%s305 + $0xa8] sm:$0xff] %vm374, %v11332
      %11381 = vst.msk [vmem:[%s305 + $0xb0] sm:$0xff] %vm374, %v11333
      %11382 = vst.msk [vmem:[%s305 + $0xb8] sm:$0xff] %vm374, %v11334
      %11383 = vst.msk [vmem:[%s305 + $0xc0] sm:$0xff] %vm374, %v11335
      %11384 = vst.msk [vmem:[%s305 + $0xc8] sm:$0xff] %vm374, %v11336
      %11385 = vst.msk [vmem:[%s305 + $0xd0] sm:$0xff] %vm374, %v11337
      %11386 = vst.msk [vmem:[%s305 + $0xd8] sm:$0xff] %vm374, %v11338
      %11387 = vst.msk [vmem:[%s305 + $0xe0] sm:$0xff] %vm374, %v11339
      %11388 = vst.msk [vmem:[%s305 + $0xe8] sm:$0xff] %vm374, %v11340
      %11389 = vst.msk [vmem:[%s305 + $0xf0] sm:$0xff] %vm374, %v11341
      %11390 = vst.msk [vmem:[%s305 + $0xf8] sm:$0xff] %vm374, %v11342
      %11391 = vst.msk [vmem:[%s305 + $0x100] sm:$0xff] %vm374, %v11343
      %11392 = vst.msk [vmem:[%s305 + $0x108] sm:$0xff] %vm374, %v11344
      %11393 = vst.msk [vmem:[%s305 + $0x110] sm:$0xff] %vm374, %v11345
      %11394 = vst.msk [vmem:[%s305 + $0x118] sm:$0xff] %vm374, %v11346
      %11395 = vst.msk [vmem:[%s305 + $0x120] sm:$0xff] %vm374, %v11347
      %11396 = vst.msk [vmem:[%s305 + $0x128] sm:$0xff] %vm374, %v11348
      %11397 = vst.msk [vmem:[%s305 + $0x130] sm:$0xff] %vm374, %v11349
      %11398 = vst.msk [vmem:[%s305 + $0x138] sm:$0xff] %vm374, %v11350
      %11399 = vst.msk [vmem:[%s305 + $0x140] sm:$0xff] %vm374, %v11351
      %11400 = vst.msk [vmem:[%s305 + $0x148] sm:$0xff] %vm374, %v11352
      %11401 = vst.msk [vmem:[%s305 + $0x150] sm:$0xff] %vm374, %v11353
      %11402 = vst.msk [vmem:[%s305 + $0x158] sm:$0xff] %vm374, %v11354
      %11403 = vst.msk [vmem:[%s305 + $0x160] sm:$0xff] %vm374, %v11355
      %11404 = vst.msk [vmem:[%s305 + $0x168] sm:$0xff] %vm374, %v11356
      %11405 = vst.msk [vmem:[%s305 + $0x170] sm:$0xff] %vm374, %v11357
      %11406 = vst.msk [vmem:[%s305 + $0x178] sm:$0xff] %vm374, %v11358
      %p11407 = scmp.lt.s32.totalorder %s19, 1
      %s11408 = scalar_select %p11407, %s19, 1
      %s11409 = smul.addr %s11408, 48
      %s11410 = smul.addr %s11409, 8
      %s11411 = scalar_lea.vmem %s8, %s11410
      // Predicated region
      $region53: #{bottleneck_forward.1} parent=51 // pred_check
        %p11412 = pneg %p210
      $region54: #{bottleneck_forward.1} parent=51 // pred_check_branch
        %11414 = sbr.rel (%p11412) target = $region56
      $region55: #{bottleneck_forward.1} parent=51 // pred_region
        _
      $region56: #{bottleneck_forward.1} parent=51 // pred_fallthru
        _
    $region52: #{bottleneck_forward.1} parent=5 // pred_fallthru
      _
    %p11415 = scmp.le.s32.totalorder 2, %s14
    // Predicated region
    $region57: #{bottleneck_forward.1} parent=5 // pred_check
      %p11416 = pneg %p11415
    $region58: #{bottleneck_forward.1} parent=5 // pred_check_branch
      %11418 = sbr.rel (%p11416) target = $region60
    $region59: #{bottleneck_forward.1} parent=5 // pred_region
      %s11419 = ssub.s32 %s14, 2
      // Predicated region
      $region61: #{bottleneck_forward.1} parent=59 // pred_check
        %p11420 = pneg %p216
      $region62: #{bottleneck_forward.1} parent=59 // pred_check_branch
        %11422 = sbr.rel (%p11420) target = $region64
      $region63: #{bottleneck_forward.1} parent=59 // pred_region
        %p11423 = scmp.lt.s32.totalorder %s20, 1
        %s11424 = scalar_select %p11423, %s20, 1
        %s11425 = smul.addr %s11424, 48
        %s11426 = smul.addr %s11425, 8
        %s11427 = scalar_lea.vmem %s8, %s11426
      $region64: #{bottleneck_forward.1} parent=59 // pred_fallthru
        _
    $region60: #{bottleneck_forward.1} parent=5 // pred_fallthru
      _
  $region6: #{bottleneck_forward.1} parent=0 // loop_footer
    %s18 = sadd.s32 1, %s14
  $region7: #{bottleneck_forward.1} parent=0 // loop_footer_branch
    %13 = sbr.rel target = $region3
  $region8: #{bottleneck_forward.1} parent=0 // loop_exit
    _

</llo_original>
